<compile_context>
chip_gen: v6e
topology: v6e:2x2x1
jax: 0.10.0
libtpu: 0.0.40
codegen_flags: <defaults>
</compile_context>

<pallas_src>
import functools
import math

import jax
import jax.numpy as jnp
from jax.experimental import pallas as pl
from jax.experimental.pallas import tpu as pltpu  # noqa: F401  (interpret-mode debugging)


# ----------------------------------------------------------------------------
# In-kernel helpers
# ----------------------------------------------------------------------------
def _gelu(x):
    # tanh-form GELU: single EUP tanh instead of a VALU polynomial erf chain.
    c = 0.7978845608028654  # sqrt(2/pi)
    return 0.5 * x * (1.0 + jnp.tanh(c * (x + 0.044715 * x * x * x)))


def _softmax_rows(s):
    m = jnp.max(s, axis=-1, keepdims=True)
    p = jnp.exp(s - m)
    return p * pl.reciprocal(jnp.sum(p, axis=-1, keepdims=True), approx=True)


# ----------------------------------------------------------------------------
# Kernel 1: coarse encoder + two-way transformer stand-in + hypernetwork MLPs
# ----------------------------------------------------------------------------
def _decoder_core_kernel(
        xc_ref, xi_ref, posb_ref, tok_ref,
        cew_ref, ceb_ref, ceg_ref, cebb_ref,
        wq_ref, bq_ref, wk_ref, bk_ref, wv_ref, bv_ref, wo_ref, bo_ref,
        w1_ref, b1_ref, w2_ref, b2_ref,
        wq2_ref, bq2_ref, wk2_ref, bk2_ref, wv2_ref, bv2_ref, wo2_ref, bo2_ref,
        hw1_ref, hb1_ref, hw2_ref, hb2_ref, hw3_ref, hb3_ref,
        src_out_ref, hyper_out_ref,
        *, B, HW, Nmask, eps):
    f32 = jnp.float32

    # ---- corse_encoder: 1x1 conv (broadcast-FMA over Nmask inputs, K is tiny),
    #      LayerNorm2d over C, GELU ----
    xc = xc_ref[...]                       # (B*HW, Nmask)
    cew = cew_ref[...]                     # (Nmask, C)
    y = xc[:, 0:1] * cew[0:1, :]
    for m in range(1, Nmask):
        y = y + xc[:, m:m + 1] * cew[m:m + 1, :]
    y = y + ceb_ref[...]
    u = jnp.mean(y, axis=-1, keepdims=True)
    d = y - u
    s = jnp.mean(d * d, axis=-1, keepdims=True)
    y = d * jax.lax.rsqrt(s + eps) * ceg_ref[...] + cebb_ref[...]
    y = _gelu(y)
    src = y + xi_ref[...]                  # (B*HW, C)

    posb = posb_ref[...]
    kin = src + posb
    # src-side projections, batch flattened into rows (M = B*HW)
    kk = jnp.dot(kin, wk_ref[...], preferred_element_type=f32) + bk_ref[...]
    vv = jnp.dot(src, wv_ref[...], preferred_element_type=f32) + bv_ref[...]
    q2a = jnp.dot(kin, wq2_ref[...], preferred_element_type=f32) + bq2_ref[...]  # scale folded

    for b in range(B):
        tok_b = tok_ref[b]                 # (Nt, C)
        kb = kk[b * HW:(b + 1) * HW, :]
        vb = vv[b * HW:(b + 1) * HW, :]
        # tokens -> image cross attention (softmax scale folded into wq/bq)
        qb = jnp.dot(tok_b, wq_ref[...], preferred_element_type=f32) + bq_ref[...]
        s1 = jax.lax.dot_general(qb, kb, (((1,), (1,)), ((), ())),
                                 preferred_element_type=f32)       # (Nt, HW)
        a1 = jnp.dot(_softmax_rows(s1), vb, preferred_element_type=f32)
        a1 = jnp.dot(a1, wo_ref[...], preferred_element_type=f32) + bo_ref[...]
        qtok = tok_b + a1
        # token MLP
        mlp = jnp.maximum(
            jnp.dot(qtok, w1_ref[...], preferred_element_type=f32) + b1_ref[...], 0.0)
        mlp = jnp.dot(mlp, w2_ref[...], preferred_element_type=f32) + b2_ref[...]
        qtok = qtok + mlp
        # image -> tokens cross attention
        q2b = q2a[b * HW:(b + 1) * HW, :]
        k2 = jnp.dot(qtok, wk2_ref[...], preferred_element_type=f32) + bk2_ref[...]
        v2 = jnp.dot(qtok, wv2_ref[...], preferred_element_type=f32) + bv2_ref[...]
        s2 = jax.lax.dot_general(q2b, k2, (((1,), (1,)), ((), ())),
                                 preferred_element_type=f32)       # (HW, Nt)
        a2 = jnp.dot(_softmax_rows(s2), v2, preferred_element_type=f32)
        a2 = jnp.dot(a2, wo2_ref[...], preferred_element_type=f32) + bo2_ref[...]
        src_out_ref[b * HW:(b + 1) * HW, :] = src[b * HW:(b + 1) * HW, :] + a2

        # hypernetwork MLPs on the mask tokens (stacked over Nmask, no extra launches)
        for m in range(Nmask):
            t = qtok[m:m + 1, :]
            t = jnp.maximum(
                jnp.dot(t, hw1_ref[m], preferred_element_type=f32) + hb1_ref[m], 0.0)
            t = jnp.maximum(
                jnp.dot(t, hw2_ref[m], preferred_element_type=f32) + hb2_ref[m], 0.0)
            t = jnp.dot(t, hw3_ref[m], preferred_element_type=f32) + hb3_ref[m]
            hyper_out_ref[b * Nmask + m:b * Nmask + m + 1, :] = t


# ----------------------------------------------------------------------------
# Kernel 2: output upscaling + hyper mask product + bilinear resize
# ----------------------------------------------------------------------------
def _upscale_mask_resize_kernel(
        srcw_ref, hyper_ref, w1_ref, b1_ref, g_ref, lng_ref, lnb_ref,
        w2_ref, b2_ref, mwT_ref, mhP_ref, masks_ref,
        *, B, Nmask, h, w, C8, Hout, Wout, eps):
    f32 = jnp.float32
    # first ConvTranspose2d(2,2) as one wide matmul; columns = (j, di, dj, c4)
    y1 = jnp.dot(srcw_ref[...], w1_ref[...], preferred_element_type=f32) + b1_ref[...]
    # LayerNorm2d(C/4): per-output-pixel mean/var via a block-diagonal group matrix
    g = g_ref[...]
    mu = jnp.dot(y1, g, preferred_element_type=f32)
    d = y1 - mu
    var = jnp.dot(d * d, g, preferred_element_type=f32)
    y = _gelu(d * jax.lax.rsqrt(var + eps) * lng_ref[...] + lnb_ref[...])
    # second ConvTranspose2d(2,2); columns = (c8, dr, j, dc); then GELU
    y2 = _gelu(jnp.dot(y, w2_ref[...], preferred_element_type=f32) + b2_ref[...])

    hyper = hyper_ref[...]                  # (B*Nmask, C8)
    mwT = mwT_ref[...]                      # (4w, Wout), rows ordered (j, dc)
    slab = 16 * w                           # lanes per c8 slab: (dr, j, dc)
    drw = 4 * w                             # lanes per dr block: (j, dc)
    for b in range(B):
        y2b = y2[b * h:(b + 1) * h, :]      # (h, C8*slab)
        for m in range(Nmask):
            bm = b * Nmask + m
            hv = hyper[bm:bm + 1, :]        # (1, C8)
            # masks = hyper_in @ upscaled : K=C8 contraction as VPU broadcast-FMAs
            mc = y2b[:, 0:slab] * hv[:, 0:1]
            for c8 in range(1, C8):
                mc = mc + y2b[:, c8 * slab:(c8 + 1) * slab] * hv[:, c8:c8 + 1]
            # bilinear resize (align_corners=True): out = sum_dr MhP[dr] @ mc_dr @ Mw.T
            out = jnp.zeros((Hout, Wout), f32)
            for dr in range(4):
                inner = jnp.dot(mc[:, dr * drw:(dr + 1) * drw], mwT,
                                preferred_element_type=f32)        # (h, Wout)
                out = out + jnp.dot(mhP_ref[dr], inner, preferred_element_type=f32)
            masks_ref[bm] = out


# ----------------------------------------------------------------------------
# Plain-JAX glue (trace-time constants)
# ----------------------------------------------------------------------------
def build_2d_sincos_pos_nhwc(h, w, embed_dim, temperature=10000.0):
    # Matches build_2d_sincos_position_embedding, kept channels-last (h, w, C).
    assert embed_dim % 4 == 0
    gy, gx = jnp.meshgrid(jnp.arange(h, dtype=jnp.float32),
                          jnp.arange(w, dtype=jnp.float32), indexing="ij")
    omega = jnp.arange(embed_dim // 4, dtype=jnp.float32) / (embed_dim // 4)
    omega = 1.0 / temperature ** omega
    y = gy[..., None] * omega
    x = gx[..., None] * omega
    pos_y = jnp.concatenate([jnp.sin(y), jnp.cos(y)], axis=-1)
    pos_x = jnp.concatenate([jnp.sin(x), jnp.cos(x)], axis=-1)
    return jnp.concatenate([pos_y, pos_x], axis=-1)   # (h, w, C)


def interp_matrix(n_out, n_in):
    # 1-D bilinear interpolation matrix, align_corners=True (as in the reference).
    coords = jnp.arange(n_out, dtype=jnp.float32) * (n_in - 1) / (n_out - 1)
    lo = jnp.clip(jnp.floor(coords).astype(jnp.int32), 0, n_in - 2)
    frac = coords - lo.astype(jnp.float32)
    m = ((1.0 - frac)[:, None] * jax.nn.one_hot(lo, n_in, dtype=jnp.float32)
         + frac[:, None] * jax.nn.one_hot(lo + 1, n_in, dtype=jnp.float32))
    return m   # (n_out, n_in)


# ----------------------------------------------------------------------------
# MaskDecoder forward (2 fused pallas_calls)
# ----------------------------------------------------------------------------
def mask_decoder_forward(params, image_embeddings, corse_embeddings, text_embeddings,
                         img_size):
    f32 = jnp.float32
    B, C, h, w = image_embeddings.shape
    Nmask = params["mask_tokens"].shape[0]
    C4, C8 = C // 4, C // 8
    HW = h * w
    Hout = Wout = img_size

    def row(v):
        return jnp.asarray(v, f32).reshape(1, -1)

    # ---- NCHW -> channels-last rows (b, i, j) x C ----
    xi = jnp.transpose(image_embeddings, (0, 2, 3, 1)).reshape(B * HW, C).astype(f32)
    xc = jnp.transpose(corse_embeddings, (0, 2, 3, 1)).reshape(B * HW, Nmask).astype(f32)

    # ---- positional encoding (constant), tokens ----
    pos = build_2d_sincos_pos_nhwc(h, w, C).reshape(HW, C)
    posb = jnp.tile(pos, (B, 1))                               # (B*HW, C)
    tokens = jnp.concatenate(
        [jnp.broadcast_to(params["mask_tokens"][None], (B, Nmask, C)),
         text_embeddings.astype(f32)], axis=1)                 # (B, Nt, C)

    # ---- corse_encoder Conv2d(Nmask, C, 1) weight (PyTorch layout (Cout, Cin, 1, 1)) ----
    ce_w = params["ce_w"][:, :, 0, 0].T                        # (Nmask, C)

    # ---- transformer stand-in weights; fold softmax scale into the q projections ----
    t = params["tfm"]
    scale = 1.0 / math.sqrt(C)

    # ---- packed output_upscaling operators (trace-time constants) ----
    W1t, b1 = params["up1_w"], params["up1_b"]                 # (C, C4, 2, 2), (C4,)
    W2t, b2 = params["up2_w"], params["up2_b"]                 # (C4, C8, 2, 2), (C8,)
    # ConvT #1: block-diagonal over image column j; output columns (j, di, dj, c4)
    W1p = jnp.transpose(W1t, (0, 2, 3, 1)).reshape(C, 4 * C4)
    W1w = jnp.kron(jnp.eye(w, dtype=f32), W1p)                 # (w*C, w*4*C4)
    b1w = jnp.tile(b1, 4 * w).reshape(1, -1)
    # LayerNorm2d(C4) as a segmented reduce: block-diagonal group-mean matrix
    Gblk = jnp.kron(jnp.eye(4 * w, dtype=f32), jnp.full((C4, C4), 1.0 / C4, f32))
    lng = jnp.tile(params["up_ln_g"], 4 * w).reshape(1, -1)
    lnb = jnp.tile(params["up_ln_b"], 4 * w).reshape(1, -1)
    # ConvT #2: rows (j, di, dj, c4) -> cols (c8, dr, j, dc) with dr=2*di+ei, dc=2*dj+ej,
    # so the 4x4 sub-pixel interleave is absorbed into the weight layout.
    W2n6 = jnp.zeros((2, 2, C4, C8, 4, 4), f32)
    for di in range(2):
        for dj in range(2):
            for er in range(2):
                for ec in range(2):
                    W2n6 = W2n6.at[di, dj, :, :, 2 * di + er, 2 * dj + ec].set(
                        W2t[:, :, er, ec])
    W2w = jnp.einsum("abcxyz,jk->jabcxykz", W2n6, jnp.eye(w, dtype=f32)).reshape(
        w * 4 * C4, C8 * 4 * w * 4)
    b2w = jnp.repeat(b2, 4 * w * 4).reshape(1, -1)

    # ---- bilinear (align_corners=True) interpolation operators ----
    Mh = interp_matrix(Hout, 4 * h)                            # (Hout, 4h)
    Mw = interp_matrix(Wout, 4 * w)                            # (Wout, 4w)
    MhP = Mh.reshape(Hout, h, 4).transpose(2, 0, 1)            # (4, Hout, h)
    MwT = Mw.T                                                 # (4w, Wout)

    # ---- kernel 1: coarse-encoder + transformer + hypernetworks ----
    src_rows, hyper = pl.pallas_call(
        functools.partial(_decoder_core_kernel, B=B, HW=HW, Nmask=Nmask, eps=1e-6),
        out_shape=(jax.ShapeDtypeStruct((B * HW, C), f32),
                   jax.ShapeDtypeStruct((B * Nmask, C8), f32)),
    )(xc, xi, posb, tokens,
      ce_w, row(params["ce_b"]), row(params["ce_ln_g"]), row(params["ce_ln_b"]),
      t["wq"] * scale, row(t["bq"]) * scale,
      t["wk"], row(t["bk"]), t["wv"], row(t["bv"]), t["wo"], row(t["bo"]),
      t["w1"], row(t["b1"]), t["w2"], row(t["b2"]),
      t["wq2"] * scale, row(t["bq2"]) * scale,
      t["wk2"], row(t["bk2"]), t["wv2"], row(t["bv2"]), t["wo2"], row(t["bo2"]),
      params["hyp_w1"], params["hyp_b1"].reshape(Nmask, 1, C),
      params["hyp_w2"], params["hyp_b2"].reshape(Nmask, 1, C),
      params["hyp_w3"], params["hyp_b3"].reshape(Nmask, 1, C8))

    # ---- kernel 2: upscaling + mask product + bilinear resize ----
    srcw = src_rows.reshape(B * h, w * C)                      # free row-major reshape
    masks = pl.pallas_call(
        functools.partial(_upscale_mask_resize_kernel, B=B, Nmask=Nmask, h=h, w=w,
                          C8=C8, Hout=Hout, Wout=Wout, eps=1e-6),
        out_shape=jax.ShapeDtypeStruct((B * Nmask, Hout, Wout), f32),
    )(srcw, hyper, W1w, b1w, Gblk, lng, lnb, W2w, b2w, MwT, MhP)
    return masks.reshape(B, Nmask, Hout, Wout)


# ----------------------------------------------------------------------------
# Deterministic synthetic parameters (PyTorch-native layouts)
# ----------------------------------------------------------------------------
def init_params(key, C, Nmask, tfm_hidden):
    C4, C8 = C // 4, C // 8
    keys = iter(jax.random.split(key, 64))

    def w(shape, scale=0.05):
        return scale * jax.random.normal(next(keys), shape, jnp.float32)

    p = {}
    p["mask_tokens"] = w((Nmask, C), 1.0)
    # corse_encoder: Conv2d(Nmask, C, 1) + LayerNorm2d(C)
    p["ce_w"] = w((C, Nmask, 1, 1))                 # PyTorch (Cout, Cin, 1, 1)
    p["ce_b"] = w((C,))
    p["ce_ln_g"] = jnp.ones((C,), jnp.float32)
    p["ce_ln_b"] = jnp.zeros((C,), jnp.float32)
    # output_upscaling: ConvT(C,C/4,2,2) + LN2d(C/4) + ConvT(C/4,C/8,2,2)
    p["up1_w"] = w((C, C4, 2, 2))                   # PyTorch ConvT (Cin, Cout, kH, kW)
    p["up1_b"] = w((C4,))
    p["up_ln_g"] = jnp.ones((C4,), jnp.float32)
    p["up_ln_b"] = jnp.zeros((C4,), jnp.float32)
    p["up2_w"] = w((C4, C8, 2, 2))
    p["up2_b"] = w((C8,))
    # hypernetwork MLPs (stacked over mask tokens): C -> C -> C -> C/8
    p["hyp_w1"] = w((Nmask, C, C)); p["hyp_b1"] = w((Nmask, C))
    p["hyp_w2"] = w((Nmask, C, C)); p["hyp_b2"] = w((Nmask, C))
    p["hyp_w3"] = w((Nmask, C, C8)); p["hyp_b3"] = w((Nmask, C8))
    # transformer stand-in
    t = {}
    for n in ["q", "k", "v", "o", "q2", "k2", "v2", "o2"]:
        t["w" + n] = w((C, C))
        t["b" + n] = w((C,))
    t["w1"] = w((C, tfm_hidden)); t["b1"] = w((tfm_hidden,))
    t["w2"] = w((tfm_hidden, C)); t["b2"] = w((C,))
    p["tfm"] = t
    return p


# ----------------------------------------------------------------------------
if __name__ == "__main__":
    B, C, h, w = 2, 32, 8, 8          # transformer_dim = 32 (divisible by 4 and 8)
    Nmask = 1                         # num_multimask_outputs
    Nt_text = 4                       # number of text tokens
    img_size = 48                     # MaskDecoder.H == W

    key = jax.random.PRNGKey(0)
    k1, k2, k3, kp = jax.random.split(key, 4)
    image_embeddings = jax.random.normal(k1, (B, C, h, w), jnp.float32)
    corse_embeddings = jax.random.normal(k2, (B, Nmask, h, w), jnp.float32)
    text_embeddings = jax.random.normal(k3, (B, Nt_text, C), jnp.float32)

    params = init_params(kp, C, Nmask, tfm_hidden=2 * C)

    fwd = jax.jit(functools.partial(mask_decoder_forward, img_size=img_size))
    masks = fwd(params, image_embeddings, corse_embeddings, text_embeddings)
    jax.block_until_ready(masks)
    assert masks.shape == (B, Nmask, img_size, img_size), masks.shape
    assert bool(jnp.all(jnp.isfinite(masks)))
    print("KERNEL_OK")
</pallas_src>

<mosaic_0001>
module attributes {stable_mosaic.version = 11 : i64} {
  func.func @_decoder_core_kernel(%arg0: memref<128x1xf32, #tpu.memory_space<vmem>>, %arg1: memref<128x32xf32, #tpu.memory_space<vmem>>, %arg2: memref<128x32xf32, #tpu.memory_space<vmem>>, %arg3: memref<2x5x32xf32, #tpu.memory_space<vmem>>, %arg4: memref<1x32xf32, #tpu.memory_space<vmem>>, %arg5: memref<1x32xf32, #tpu.memory_space<vmem>>, %arg6: memref<1x32xf32, #tpu.memory_space<vmem>>, %arg7: memref<1x32xf32, #tpu.memory_space<vmem>>, %arg8: memref<32x32xf32, #tpu.memory_space<vmem>>, %arg9: memref<1x32xf32, #tpu.memory_space<vmem>>, %arg10: memref<32x32xf32, #tpu.memory_space<vmem>>, %arg11: memref<1x32xf32, #tpu.memory_space<vmem>>, %arg12: memref<32x32xf32, #tpu.memory_space<vmem>>, %arg13: memref<1x32xf32, #tpu.memory_space<vmem>>, %arg14: memref<32x32xf32, #tpu.memory_space<vmem>>, %arg15: memref<1x32xf32, #tpu.memory_space<vmem>>, %arg16: memref<32x64xf32, #tpu.memory_space<vmem>>, %arg17: memref<1x64xf32, #tpu.memory_space<vmem>>, %arg18: memref<64x32xf32, #tpu.memory_space<vmem>>, %arg19: memref<1x32xf32, #tpu.memory_space<vmem>>, %arg20: memref<32x32xf32, #tpu.memory_space<vmem>>, %arg21: memref<1x32xf32, #tpu.memory_space<vmem>>, %arg22: memref<32x32xf32, #tpu.memory_space<vmem>>, %arg23: memref<1x32xf32, #tpu.memory_space<vmem>>, %arg24: memref<32x32xf32, #tpu.memory_space<vmem>>, %arg25: memref<1x32xf32, #tpu.memory_space<vmem>>, %arg26: memref<32x32xf32, #tpu.memory_space<vmem>>, %arg27: memref<1x32xf32, #tpu.memory_space<vmem>>, %arg28: memref<1x32x32xf32, #tpu.memory_space<vmem>>, %arg29: memref<1x1x32xf32, #tpu.memory_space<vmem>>, %arg30: memref<1x32x32xf32, #tpu.memory_space<vmem>>, %arg31: memref<1x1x32xf32, #tpu.memory_space<vmem>>, %arg32: memref<1x32x4xf32, #tpu.memory_space<vmem>>, %arg33: memref<1x1x4xf32, #tpu.memory_space<vmem>>, %arg34: memref<128x32xf32, #tpu.memory_space<vmem>>, %arg35: memref<2x4xf32, #tpu.memory_space<vmem>>) attributes {dimension_semantics = [], scalar_prefetch = 0 : i64, scratch_operands = 0 : i64, tpu.core_type = #tpu.core_type<tc>} {
    %c0 = arith.constant 0 : index
    %c0_0 = arith.constant 0 : index
    %0 = vector.load %arg0[%c0, %c0_0] : memref<128x1xf32, #tpu.memory_space<vmem>>, vector<128x1xf32>
    %c0_1 = arith.constant 0 : index
    %c0_2 = arith.constant 0 : index
    %1 = vector.load %arg4[%c0_1, %c0_2] : memref<1x32xf32, #tpu.memory_space<vmem>>, vector<1x32xf32>
    %2 = vector.broadcast %0 : vector<128x1xf32> to vector<128x32xf32>
    %3 = vector.broadcast %1 : vector<1x32xf32> to vector<128x32xf32>
    %4 = arith.mulf %2, %3 : vector<128x32xf32>
    %c0_3 = arith.constant 0 : index
    %c0_4 = arith.constant 0 : index
    %5 = vector.load %arg5[%c0_3, %c0_4] : memref<1x32xf32, #tpu.memory_space<vmem>>, vector<1x32xf32>
    %6 = vector.broadcast %5 : vector<1x32xf32> to vector<128x32xf32>
    %7 = arith.addf %4, %6 : vector<128x32xf32>
    %cst = arith.constant dense<0.000000e+00> : vector<128xf32>
    %8 = vector.multi_reduction <add>, %7, %cst [1] : vector<128x32xf32> to vector<128xf32>
    %9 = vector.shape_cast %8 : vector<128xf32> to vector<128x1xf32>
    %cst_5 = arith.constant 3.200000e+01 : f32
    %10 = vector.broadcast %cst_5 : f32 to vector<128x1xf32>
    %11 = arith.divf %9, %10 : vector<128x1xf32>
    %12 = vector.broadcast %11 : vector<128x1xf32> to vector<128x32xf32>
    %13 = arith.subf %7, %12 : vector<128x32xf32>
    %14 = arith.mulf %13, %13 : vector<128x32xf32>
    %cst_6 = arith.constant dense<0.000000e+00> : vector<128xf32>
    %15 = vector.multi_reduction <add>, %14, %cst_6 [1] : vector<128x32xf32> to vector<128xf32>
    %16 = vector.shape_cast %15 : vector<128xf32> to vector<128x1xf32>
    %cst_7 = arith.constant 3.200000e+01 : f32
    %17 = vector.broadcast %cst_7 : f32 to vector<128x1xf32>
    %18 = arith.divf %16, %17 : vector<128x1xf32>
    %cst_8 = arith.constant 9.99999997E-7 : f32
    %19 = vector.broadcast %cst_8 : f32 to vector<128x1xf32>
    %20 = arith.addf %18, %19 : vector<128x1xf32>
    %21 = math.rsqrt %20 : vector<128x1xf32>
    %22 = vector.broadcast %21 : vector<128x1xf32> to vector<128x32xf32>
    %23 = arith.mulf %13, %22 : vector<128x32xf32>
    %c0_9 = arith.constant 0 : index
    %c0_10 = arith.constant 0 : index
    %24 = vector.load %arg6[%c0_9, %c0_10] : memref<1x32xf32, #tpu.memory_space<vmem>>, vector<1x32xf32>
    %25 = vector.broadcast %24 : vector<1x32xf32> to vector<128x32xf32>
    %26 = arith.mulf %23, %25 : vector<128x32xf32>
    %c0_11 = arith.constant 0 : index
    %c0_12 = arith.constant 0 : index
    %27 = vector.load %arg7[%c0_11, %c0_12] : memref<1x32xf32, #tpu.memory_space<vmem>>, vector<1x32xf32>
    %28 = vector.broadcast %27 : vector<1x32xf32> to vector<128x32xf32>
    %29 = arith.addf %26, %28 : vector<128x32xf32>
    %cst_13 = arith.constant 5.000000e-01 : f32
    %30 = vector.broadcast %cst_13 : f32 to vector<128x32xf32>
    %31 = arith.mulf %30, %29 : vector<128x32xf32>
    %cst_14 = arith.constant 4.471500e-02 : f32
    %32 = vector.broadcast %cst_14 : f32 to vector<128x32xf32>
    %33 = arith.mulf %32, %29 : vector<128x32xf32>
    %34 = arith.mulf %33, %29 : vector<128x32xf32>
    %35 = arith.mulf %34, %29 : vector<128x32xf32>
    %36 = arith.addf %29, %35 : vector<128x32xf32>
    %cst_15 = arith.constant 0.797884583 : f32
    %37 = vector.broadcast %cst_15 : f32 to vector<128x32xf32>
    %38 = arith.mulf %37, %36 : vector<128x32xf32>
    %39 = math.tanh %38 : vector<128x32xf32>
    %cst_16 = arith.constant 1.000000e+00 : f32
    %40 = vector.broadcast %cst_16 : f32 to vector<128x32xf32>
    %41 = arith.addf %40, %39 : vector<128x32xf32>
    %42 = arith.mulf %31, %41 : vector<128x32xf32>
    %c0_17 = arith.constant 0 : index
    %c0_18 = arith.constant 0 : index
    %43 = vector.load %arg1[%c0_17, %c0_18] : memref<128x32xf32, #tpu.memory_space<vmem>>, vector<128x32xf32>
    %44 = arith.addf %42, %43 : vector<128x32xf32>
    %c0_19 = arith.constant 0 : index
    %c0_20 = arith.constant 0 : index
    %45 = vector.load %arg2[%c0_19, %c0_20] : memref<128x32xf32, #tpu.memory_space<vmem>>, vector<128x32xf32>
    %46 = arith.addf %44, %45 : vector<128x32xf32>
    %c0_21 = arith.constant 0 : index
    %c0_22 = arith.constant 0 : index
    %47 = vector.load %arg10[%c0_21, %c0_22] : memref<32x32xf32, #tpu.memory_space<vmem>>, vector<32x32xf32>
    %cst_23 = arith.constant dense<0.000000e+00> : vector<128x32xf32>
    %48 = tpu.matmul %46, %47, %cst_23 {dimension_numbers = #tpu.dot_dimension_numbers<[1], [0], [0], [1], [0, 0, 1, 1], [], []>} : vector<128x32xf32>, vector<32x32xf32>, vector<128x32xf32> -> vector<128x32xf32>
    %c0_24 = arith.constant 0 : index
    %c0_25 = arith.constant 0 : index
    %49 = vector.load %arg11[%c0_24, %c0_25] : memref<1x32xf32, #tpu.memory_space<vmem>>, vector<1x32xf32>
    %50 = vector.broadcast %49 : vector<1x32xf32> to vector<128x32xf32>
    %51 = arith.addf %48, %50 : vector<128x32xf32>
    %c0_26 = arith.constant 0 : index
    %c0_27 = arith.constant 0 : index
    %52 = vector.load %arg12[%c0_26, %c0_27] : memref<32x32xf32, #tpu.memory_space<vmem>>, vector<32x32xf32>
    %cst_28 = arith.constant dense<0.000000e+00> : vector<128x32xf32>
    %53 = tpu.matmul %44, %52, %cst_28 {dimension_numbers = #tpu.dot_dimension_numbers<[1], [0], [0], [1], [0, 0, 1, 1], [], []>} : vector<128x32xf32>, vector<32x32xf32>, vector<128x32xf32> -> vector<128x32xf32>
    %c0_29 = arith.constant 0 : index
    %c0_30 = arith.constant 0 : index
    %54 = vector.load %arg13[%c0_29, %c0_30] : memref<1x32xf32, #tpu.memory_space<vmem>>, vector<1x32xf32>
    %55 = vector.broadcast %54 : vector<1x32xf32> to vector<128x32xf32>
    %56 = arith.addf %53, %55 : vector<128x32xf32>
    %c0_31 = arith.constant 0 : index
    %c0_32 = arith.constant 0 : index
    %57 = vector.load %arg20[%c0_31, %c0_32] : memref<32x32xf32, #tpu.memory_space<vmem>>, vector<32x32xf32>
    %cst_33 = arith.constant dense<0.000000e+00> : vector<128x32xf32>
    %58 = tpu.matmul %46, %57, %cst_33 {dimension_numbers = #tpu.dot_dimension_numbers<[1], [0], [0], [1], [0, 0, 1, 1], [], []>} : vector<128x32xf32>, vector<32x32xf32>, vector<128x32xf32> -> vector<128x32xf32>
    %c0_34 = arith.constant 0 : index
    %c0_35 = arith.constant 0 : index
    %59 = vector.load %arg21[%c0_34, %c0_35] : memref<1x32xf32, #tpu.memory_space<vmem>>, vector<1x32xf32>
    %60 = vector.broadcast %59 : vector<1x32xf32> to vector<128x32xf32>
    %61 = arith.addf %58, %60 : vector<128x32xf32>
    %c0_36 = arith.constant 0 : index
    %c0_37 = arith.constant 0 : index
    %c0_38 = arith.constant 0 : index
    %62 = vector.load %arg3[%c0_36, %c0_37, %c0_38] : memref<2x5x32xf32, #tpu.memory_space<vmem>>, vector<1x5x32xf32>
    %63 = vector.shape_cast %62 : vector<1x5x32xf32> to vector<5x32xf32>
    %64 = vector.extract_strided_slice %51 {offsets = [0, 0], sizes = [64, 32], strides = [1, 1]} : vector<128x32xf32> to vector<64x32xf32>
    %65 = vector.extract_strided_slice %56 {offsets = [0, 0], sizes = [64, 32], strides = [1, 1]} : vector<128x32xf32> to vector<64x32xf32>
    %c0_39 = arith.constant 0 : index
    %c0_40 = arith.constant 0 : index
    %66 = vector.load %arg8[%c0_39, %c0_40] : memref<32x32xf32, #tpu.memory_space<vmem>>, vector<32x32xf32>
    %cst_41 = arith.constant dense<0.000000e+00> : vector<5x32xf32>
    %67 = tpu.matmul %63, %66, %cst_41 {dimension_numbers = #tpu.dot_dimension_numbers<[1], [0], [0], [1], [0, 0, 1, 1], [], []>} : vector<5x32xf32>, vector<32x32xf32>, vector<5x32xf32> -> vector<5x32xf32>
    %c0_42 = arith.constant 0 : index
    %c0_43 = arith.constant 0 : index
    %68 = vector.load %arg9[%c0_42, %c0_43] : memref<1x32xf32, #tpu.memory_space<vmem>>, vector<1x32xf32>
    %69 = vector.broadcast %68 : vector<1x32xf32> to vector<5x32xf32>
    %70 = arith.addf %67, %69 : vector<5x32xf32>
    %cst_44 = arith.constant dense<0.000000e+00> : vector<5x64xf32>
    %71 = tpu.matmul %70, %64, %cst_44 {dimension_numbers = #tpu.dot_dimension_numbers<[1], [1], [0], [0], [0, 0, 1, 0], [], []>} : vector<5x32xf32>, vector<64x32xf32>, vector<5x64xf32> -> vector<5x64xf32>
    %cst_45 = arith.constant dense<0xFF800000> : vector<5xf32>
    %72 = vector.multi_reduction <maximumf>, %71, %cst_45 [1] : vector<5x64xf32> to vector<5xf32>
    %73 = vector.shape_cast %72 : vector<5xf32> to vector<5x1xf32>
    %74 = vector.broadcast %73 : vector<5x1xf32> to vector<5x64xf32>
    %75 = arith.subf %71, %74 : vector<5x64xf32>
    %76 = math.exp %75 : vector<5x64xf32>
    %cst_46 = arith.constant dense<0.000000e+00> : vector<5xf32>
    %77 = vector.multi_reduction <add>, %76, %cst_46 [1] : vector<5x64xf32> to vector<5xf32>
    %78 = vector.shape_cast %77 : vector<5xf32> to vector<5x1xf32>
    %79 = tpu.reciprocal %78 {approx = true} : vector<5x1xf32> -> vector<5x1xf32>
    %80 = vector.broadcast %79 : vector<5x1xf32> to vector<5x64xf32>
    %81 = arith.mulf %76, %80 : vector<5x64xf32>
    %cst_47 = arith.constant dense<0.000000e+00> : vector<5x32xf32>
    %82 = tpu.matmul %81, %65, %cst_47 {dimension_numbers = #tpu.dot_dimension_numbers<[1], [0], [0], [1], [0, 0, 1, 1], [], []>} : vector<5x64xf32>, vector<64x32xf32>, vector<5x32xf32> -> vector<5x32xf32>
    %c0_48 = arith.constant 0 : index
    %c0_49 = arith.constant 0 : index
    %83 = vector.load %arg14[%c0_48, %c0_49] : memref<32x32xf32, #tpu.memory_space<vmem>>, vector<32x32xf32>
    %cst_50 = arith.constant dense<0.000000e+00> : vector<5x32xf32>
    %84 = tpu.matmul %82, %83, %cst_50 {dimension_numbers = #tpu.dot_dimension_numbers<[1], [0], [0], [1], [0, 0, 1, 1], [], []>} : vector<5x32xf32>, vector<32x32xf32>, vector<5x32xf32> -> vector<5x32xf32>
    %c0_51 = arith.constant 0 : index
    %c0_52 = arith.constant 0 : index
    %85 = vector.load %arg15[%c0_51, %c0_52] : memref<1x32xf32, #tpu.memory_space<vmem>>, vector<1x32xf32>
    %86 = vector.broadcast %85 : vector<1x32xf32> to vector<5x32xf32>
    %87 = arith.addf %84, %86 : vector<5x32xf32>
    %88 = arith.addf %63, %87 : vector<5x32xf32>
    %c0_53 = arith.constant 0 : index
    %c0_54 = arith.constant 0 : index
    %89 = vector.load %arg16[%c0_53, %c0_54] : memref<32x64xf32, #tpu.memory_space<vmem>>, vector<32x64xf32>
    %cst_55 = arith.constant dense<0.000000e+00> : vector<5x64xf32>
    %90 = tpu.matmul %88, %89, %cst_55 {dimension_numbers = #tpu.dot_dimension_numbers<[1], [0], [0], [1], [0, 0, 1, 1], [], []>} : vector<5x32xf32>, vector<32x64xf32>, vector<5x64xf32> -> vector<5x64xf32>
    %c0_56 = arith.constant 0 : index
    %c0_57 = arith.constant 0 : index
    %91 = vector.load %arg17[%c0_56, %c0_57] : memref<1x64xf32, #tpu.memory_space<vmem>>, vector<1x64xf32>
    %92 = vector.broadcast %91 : vector<1x64xf32> to vector<5x64xf32>
    %93 = arith.addf %90, %92 : vector<5x64xf32>
    %cst_58 = arith.constant 0.000000e+00 : f32
    %94 = vector.broadcast %cst_58 : f32 to vector<5x64xf32>
    %95 = arith.maximumf %93, %94 : vector<5x64xf32>
    %c0_59 = arith.constant 0 : index
    %c0_60 = arith.constant 0 : index
    %96 = vector.load %arg18[%c0_59, %c0_60] : memref<64x32xf32, #tpu.memory_space<vmem>>, vector<64x32xf32>
    %cst_61 = arith.constant dense<0.000000e+00> : vector<5x32xf32>
    %97 = tpu.matmul %95, %96, %cst_61 {dimension_numbers = #tpu.dot_dimension_numbers<[1], [0], [0], [1], [0, 0, 1, 1], [], []>} : vector<5x64xf32>, vector<64x32xf32>, vector<5x32xf32> -> vector<5x32xf32>
    %c0_62 = arith.constant 0 : index
    %c0_63 = arith.constant 0 : index
    %98 = vector.load %arg19[%c0_62, %c0_63] : memref<1x32xf32, #tpu.memory_space<vmem>>, vector<1x32xf32>
    %99 = vector.broadcast %98 : vector<1x32xf32> to vector<5x32xf32>
    %100 = arith.addf %97, %99 : vector<5x32xf32>
    %101 = arith.addf %88, %100 : vector<5x32xf32>
    %102 = vector.extract_strided_slice %61 {offsets = [0, 0], sizes = [64, 32], strides = [1, 1]} : vector<128x32xf32> to vector<64x32xf32>
    %c0_64 = arith.constant 0 : index
    %c0_65 = arith.constant 0 : index
    %103 = vector.load %arg22[%c0_64, %c0_65] : memref<32x32xf32, #tpu.memory_space<vmem>>, vector<32x32xf32>
    %cst_66 = arith.constant dense<0.000000e+00> : vector<5x32xf32>
    %104 = tpu.matmul %101, %103, %cst_66 {dimension_numbers = #tpu.dot_dimension_numbers<[1], [0], [0], [1], [0, 0, 1, 1], [], []>} : vector<5x32xf32>, vector<32x32xf32>, vector<5x32xf32> -> vector<5x32xf32>
    %c0_67 = arith.constant 0 : index
    %c0_68 = arith.constant 0 : index
    %105 = vector.load %arg23[%c0_67, %c0_68] : memref<1x32xf32, #tpu.memory_space<vmem>>, vector<1x32xf32>
    %106 = vector.broadcast %105 : vector<1x32xf32> to vector<5x32xf32>
    %107 = arith.addf %104, %106 : vector<5x32xf32>
    %c0_69 = arith.constant 0 : index
    %c0_70 = arith.constant 0 : index
    %108 = vector.load %arg24[%c0_69, %c0_70] : memref<32x32xf32, #tpu.memory_space<vmem>>, vector<32x32xf32>
    %cst_71 = arith.constant dense<0.000000e+00> : vector<5x32xf32>
    %109 = tpu.matmul %101, %108, %cst_71 {dimension_numbers = #tpu.dot_dimension_numbers<[1], [0], [0], [1], [0, 0, 1, 1], [], []>} : vector<5x32xf32>, vector<32x32xf32>, vector<5x32xf32> -> vector<5x32xf32>
    %c0_72 = arith.constant 0 : index
    %c0_73 = arith.constant 0 : index
    %110 = vector.load %arg25[%c0_72, %c0_73] : memref<1x32xf32, #tpu.memory_space<vmem>>, vector<1x32xf32>
    %111 = vector.broadcast %110 : vector<1x32xf32> to vector<5x32xf32>
    %112 = arith.addf %109, %111 : vector<5x32xf32>
    %cst_74 = arith.constant dense<0.000000e+00> : vector<64x5xf32>
    %113 = tpu.matmul %102, %107, %cst_74 {dimension_numbers = #tpu.dot_dimension_numbers<[1], [1], [0], [0], [0, 0, 1, 0], [], []>} : vector<64x32xf32>, vector<5x32xf32>, vector<64x5xf32> -> vector<64x5xf32>
    %cst_75 = arith.constant dense<0xFF800000> : vector<64xf32>
    %114 = vector.multi_reduction <maximumf>, %113, %cst_75 [1] : vector<64x5xf32> to vector<64xf32>
    %115 = vector.shape_cast %114 : vector<64xf32> to vector<64x1xf32>
    %116 = vector.broadcast %115 : vector<64x1xf32> to vector<64x5xf32>
    %117 = arith.subf %113, %116 : vector<64x5xf32>
    %118 = math.exp %117 : vector<64x5xf32>
    %cst_76 = arith.constant dense<0.000000e+00> : vector<64xf32>
    %119 = vector.multi_reduction <add>, %118, %cst_76 [1] : vector<64x5xf32> to vector<64xf32>
    %120 = vector.shape_cast %119 : vector<64xf32> to vector<64x1xf32>
    %121 = tpu.reciprocal %120 {approx = true} : vector<64x1xf32> -> vector<64x1xf32>
    %122 = vector.broadcast %121 : vector<64x1xf32> to vector<64x5xf32>
    %123 = arith.mulf %118, %122 : vector<64x5xf32>
    %cst_77 = arith.constant dense<0.000000e+00> : vector<64x32xf32>
    %124 = tpu.matmul %123, %112, %cst_77 {dimension_numbers = #tpu.dot_dimension_numbers<[1], [0], [0], [1], [0, 0, 1, 1], [], []>} : vector<64x5xf32>, vector<5x32xf32>, vector<64x32xf32> -> vector<64x32xf32>
    %c0_78 = arith.constant 0 : index
    %c0_79 = arith.constant 0 : index
    %125 = vector.load %arg26[%c0_78, %c0_79] : memref<32x32xf32, #tpu.memory_space<vmem>>, vector<32x32xf32>
    %cst_80 = arith.constant dense<0.000000e+00> : vector<64x32xf32>
    %126 = tpu.matmul %124, %125, %cst_80 {dimension_numbers = #tpu.dot_dimension_numbers<[1], [0], [0], [1], [0, 0, 1, 1], [], []>} : vector<64x32xf32>, vector<32x32xf32>, vector<64x32xf32> -> vector<64x32xf32>
    %c0_81 = arith.constant 0 : index
    %c0_82 = arith.constant 0 : index
    %127 = vector.load %arg27[%c0_81, %c0_82] : memref<1x32xf32, #tpu.memory_space<vmem>>, vector<1x32xf32>
    %128 = vector.broadcast %127 : vector<1x32xf32> to vector<64x32xf32>
    %129 = arith.addf %126, %128 : vector<64x32xf32>
    %130 = vector.extract_strided_slice %44 {offsets = [0, 0], sizes = [64, 32], strides = [1, 1]} : vector<128x32xf32> to vector<64x32xf32>
    %131 = arith.addf %130, %129 : vector<64x32xf32>
    %c0_83 = arith.constant 0 : index
    %c0_84 = arith.constant 0 : index
    %132 = vector.load %arg34[%c0_83, %c0_84] : memref<128x32xf32, #tpu.memory_space<vmem>>, vector<64x32xf32>
    tpu.vector_store %arg34[%c0_83, %c0_84], %131 {strides = array<i32>} : memref<128x32xf32, #tpu.memory_space<vmem>>, vector<64x32xf32>,
    %133 = vector.extract_strided_slice %101 {offsets = [0, 0], sizes = [1, 32], strides = [1, 1]} : vector<5x32xf32> to vector<1x32xf32>
    %c0_85 = arith.constant 0 : index
    %c0_86 = arith.constant 0 : index
    %c0_87 = arith.constant 0 : index
    %134 = vector.load %arg28[%c0_85, %c0_86, %c0_87] : memref<1x32x32xf32, #tpu.memory_space<vmem>>, vector<1x32x32xf32>
    %135 = vector.shape_cast %134 : vector<1x32x32xf32> to vector<32x32xf32>
    %cst_88 = arith.constant dense<0.000000e+00> : vector<1x32xf32>
    %136 = tpu.matmul %133, %135, %cst_88 {dimension_numbers = #tpu.dot_dimension_numbers<[1], [0], [0], [1], [0, 0, 1, 1], [], []>} : vector<1x32xf32>, vector<32x32xf32>, vector<1x32xf32> -> vector<1x32xf32>
    %c0_89 = arith.constant 0 : index
    %c0_90 = arith.constant 0 : index
    %c0_91 = arith.constant 0 : index
    %137 = vector.load %arg29[%c0_89, %c0_90, %c0_91] : memref<1x1x32xf32, #tpu.memory_space<vmem>>, vector<1x1x32xf32>
    %138 = vector.shape_cast %137 : vector<1x1x32xf32> to vector<1x32xf32>
    %139 = arith.addf %136, %138 : vector<1x32xf32>
    %cst_92 = arith.constant 0.000000e+00 : f32
    %140 = vector.broadcast %cst_92 : f32 to vector<1x32xf32>
    %141 = arith.maximumf %139, %140 : vector<1x32xf32>
    %c0_93 = arith.constant 0 : index
    %c0_94 = arith.constant 0 : index
    %c0_95 = arith.constant 0 : index
    %142 = vector.load %arg30[%c0_93, %c0_94, %c0_95] : memref<1x32x32xf32, #tpu.memory_space<vmem>>, vector<1x32x32xf32>
    %143 = vector.shape_cast %142 : vector<1x32x32xf32> to vector<32x32xf32>
    %cst_96 = arith.constant dense<0.000000e+00> : vector<1x32xf32>
    %144 = tpu.matmul %141, %143, %cst_96 {dimension_numbers = #tpu.dot_dimension_numbers<[1], [0], [0], [1], [0, 0, 1, 1], [], []>} : vector<1x32xf32>, vector<32x32xf32>, vector<1x32xf32> -> vector<1x32xf32>
    %c0_97 = arith.constant 0 : index
    %c0_98 = arith.constant 0 : index
    %c0_99 = arith.constant 0 : index
    %145 = vector.load %arg31[%c0_97, %c0_98, %c0_99] : memref<1x1x32xf32, #tpu.memory_space<vmem>>, vector<1x1x32xf32>
    %146 = vector.shape_cast %145 : vector<1x1x32xf32> to vector<1x32xf32>
    %147 = arith.addf %144, %146 : vector<1x32xf32>
    %cst_100 = arith.constant 0.000000e+00 : f32
    %148 = vector.broadcast %cst_100 : f32 to vector<1x32xf32>
    %149 = arith.maximumf %147, %148 : vector<1x32xf32>
    %c0_101 = arith.constant 0 : index
    %c0_102 = arith.constant 0 : index
    %c0_103 = arith.constant 0 : index
    %150 = vector.load %arg32[%c0_101, %c0_102, %c0_103] : memref<1x32x4xf32, #tpu.memory_space<vmem>>, vector<1x32x4xf32>
    %151 = vector.shape_cast %150 : vector<1x32x4xf32> to vector<32x4xf32>
    %cst_104 = arith.constant dense<0.000000e+00> : vector<1x4xf32>
    %152 = tpu.matmul %149, %151, %cst_104 {dimension_numbers = #tpu.dot_dimension_numbers<[1], [0], [0], [1], [0, 0, 1, 1], [], []>} : vector<1x32xf32>, vector<32x4xf32>, vector<1x4xf32> -> vector<1x4xf32>
    %c0_105 = arith.constant 0 : index
    %c0_106 = arith.constant 0 : index
    %c0_107 = arith.constant 0 : index
    %153 = vector.load %arg33[%c0_105, %c0_106, %c0_107] : memref<1x1x4xf32, #tpu.memory_space<vmem>>, vector<1x1x4xf32>
    %154 = vector.shape_cast %153 : vector<1x1x4xf32> to vector<1x4xf32>
    %155 = arith.addf %152, %154 : vector<1x4xf32>
    %c0_108 = arith.constant 0 : index
    %c0_109 = arith.constant 0 : index
    %156 = vector.load %arg35[%c0_108, %c0_109] : memref<2x4xf32, #tpu.memory_space<vmem>>, vector<1x4xf32>
    tpu.vector_store %arg35[%c0_108, %c0_109], %155 {strides = array<i32>} : memref<2x4xf32, #tpu.memory_space<vmem>>, vector<1x4xf32>,
    %c1 = arith.constant 1 : index
    %c0_110 = arith.constant 0 : index
    %c0_111 = arith.constant 0 : index
    %157 = vector.load %arg3[%c1, %c0_110, %c0_111] : memref<2x5x32xf32, #tpu.memory_space<vmem>>, vector<1x5x32xf32>
    %158 = vector.shape_cast %157 : vector<1x5x32xf32> to vector<5x32xf32>
    %159 = vector.extract_strided_slice %51 {offsets = [64, 0], sizes = [64, 32], strides = [1, 1]} : vector<128x32xf32> to vector<64x32xf32>
    %160 = vector.extract_strided_slice %56 {offsets = [64, 0], sizes = [64, 32], strides = [1, 1]} : vector<128x32xf32> to vector<64x32xf32>
    %c0_112 = arith.constant 0 : index
    %c0_113 = arith.constant 0 : index
    %161 = vector.load %arg8[%c0_112, %c0_113] : memref<32x32xf32, #tpu.memory_space<vmem>>, vector<32x32xf32>
    %cst_114 = arith.constant dense<0.000000e+00> : vector<5x32xf32>
    %162 = tpu.matmul %158, %161, %cst_114 {dimension_numbers = #tpu.dot_dimension_numbers<[1], [0], [0], [1], [0, 0, 1, 1], [], []>} : vector<5x32xf32>, vector<32x32xf32>, vector<5x32xf32> -> vector<5x32xf32>
    %c0_115 = arith.constant 0 : index
    %c0_116 = arith.constant 0 : index
    %163 = vector.load %arg9[%c0_115, %c0_116] : memref<1x32xf32, #tpu.memory_space<vmem>>, vector<1x32xf32>
    %164 = vector.broadcast %163 : vector<1x32xf32> to vector<5x32xf32>
    %165 = arith.addf %162, %164 : vector<5x32xf32>
    %cst_117 = arith.constant dense<0.000000e+00> : vector<5x64xf32>
    %166 = tpu.matmul %165, %159, %cst_117 {dimension_numbers = #tpu.dot_dimension_numbers<[1], [1], [0], [0], [0, 0, 1, 0], [], []>} : vector<5x32xf32>, vector<64x32xf32>, vector<5x64xf32> -> vector<5x64xf32>
    %cst_118 = arith.constant dense<0xFF800000> : vector<5xf32>
    %167 = vector.multi_reduction <maximumf>, %166, %cst_118 [1] : vector<5x64xf32> to vector<5xf32>
    %168 = vector.shape_cast %167 : vector<5xf32> to vector<5x1xf32>
    %169 = vector.broadcast %168 : vector<5x1xf32> to vector<5x64xf32>
    %170 = arith.subf %166, %169 : vector<5x64xf32>
    %171 = math.exp %170 : vector<5x64xf32>
    %cst_119 = arith.constant dense<0.000000e+00> : vector<5xf32>
    %172 = vector.multi_reduction <add>, %171, %cst_119 [1] : vector<5x64xf32> to vector<5xf32>
    %173 = vector.shape_cast %172 : vector<5xf32> to vector<5x1xf32>
    %174 = tpu.reciprocal %173 {approx = true} : vector<5x1xf32> -> vector<5x1xf32>
    %175 = vector.broadcast %174 : vector<5x1xf32> to vector<5x64xf32>
    %176 = arith.mulf %171, %175 : vector<5x64xf32>
    %cst_120 = arith.constant dense<0.000000e+00> : vector<5x32xf32>
    %177 = tpu.matmul %176, %160, %cst_120 {dimension_numbers = #tpu.dot_dimension_numbers<[1], [0], [0], [1], [0, 0, 1, 1], [], []>} : vector<5x64xf32>, vector<64x32xf32>, vector<5x32xf32> -> vector<5x32xf32>
    %c0_121 = arith.constant 0 : index
    %c0_122 = arith.constant 0 : index
    %178 = vector.load %arg14[%c0_121, %c0_122] : memref<32x32xf32, #tpu.memory_space<vmem>>, vector<32x32xf32>
    %cst_123 = arith.constant dense<0.000000e+00> : vector<5x32xf32>
    %179 = tpu.matmul %177, %178, %cst_123 {dimension_numbers = #tpu.dot_dimension_numbers<[1], [0], [0], [1], [0, 0, 1, 1], [], []>} : vector<5x32xf32>, vector<32x32xf32>, vector<5x32xf32> -> vector<5x32xf32>
    %c0_124 = arith.constant 0 : index
    %c0_125 = arith.constant 0 : index
    %180 = vector.load %arg15[%c0_124, %c0_125] : memref<1x32xf32, #tpu.memory_space<vmem>>, vector<1x32xf32>
    %181 = vector.broadcast %180 : vector<1x32xf32> to vector<5x32xf32>
    %182 = arith.addf %179, %181 : vector<5x32xf32>
    %183 = arith.addf %158, %182 : vector<5x32xf32>
    %c0_126 = arith.constant 0 : index
    %c0_127 = arith.constant 0 : index
    %184 = vector.load %arg16[%c0_126, %c0_127] : memref<32x64xf32, #tpu.memory_space<vmem>>, vector<32x64xf32>
    %cst_128 = arith.constant dense<0.000000e+00> : vector<5x64xf32>
    %185 = tpu.matmul %183, %184, %cst_128 {dimension_numbers = #tpu.dot_dimension_numbers<[1], [0], [0], [1], [0, 0, 1, 1], [], []>} : vector<5x32xf32>, vector<32x64xf32>, vector<5x64xf32> -> vector<5x64xf32>
    %c0_129 = arith.constant 0 : index
    %c0_130 = arith.constant 0 : index
    %186 = vector.load %arg17[%c0_129, %c0_130] : memref<1x64xf32, #tpu.memory_space<vmem>>, vector<1x64xf32>
    %187 = vector.broadcast %186 : vector<1x64xf32> to vector<5x64xf32>
    %188 = arith.addf %185, %187 : vector<5x64xf32>
    %cst_131 = arith.constant 0.000000e+00 : f32
    %189 = vector.broadcast %cst_131 : f32 to vector<5x64xf32>
    %190 = arith.maximumf %188, %189 : vector<5x64xf32>
    %c0_132 = arith.constant 0 : index
    %c0_133 = arith.constant 0 : index
    %191 = vector.load %arg18[%c0_132, %c0_133] : memref<64x32xf32, #tpu.memory_space<vmem>>, vector<64x32xf32>
    %cst_134 = arith.constant dense<0.000000e+00> : vector<5x32xf32>
    %192 = tpu.matmul %190, %191, %cst_134 {dimension_numbers = #tpu.dot_dimension_numbers<[1], [0], [0], [1], [0, 0, 1, 1], [], []>} : vector<5x64xf32>, vector<64x32xf32>, vector<5x32xf32> -> vector<5x32xf32>
    %c0_135 = arith.constant 0 : index
    %c0_136 = arith.constant 0 : index
    %193 = vector.load %arg19[%c0_135, %c0_136] : memref<1x32xf32, #tpu.memory_space<vmem>>, vector<1x32xf32>
    %194 = vector.broadcast %193 : vector<1x32xf32> to vector<5x32xf32>
    %195 = arith.addf %192, %194 : vector<5x32xf32>
    %196 = arith.addf %183, %195 : vector<5x32xf32>
    %197 = vector.extract_strided_slice %61 {offsets = [64, 0], sizes = [64, 32], strides = [1, 1]} : vector<128x32xf32> to vector<64x32xf32>
    %c0_137 = arith.constant 0 : index
    %c0_138 = arith.constant 0 : index
    %198 = vector.load %arg22[%c0_137, %c0_138] : memref<32x32xf32, #tpu.memory_space<vmem>>, vector<32x32xf32>
    %cst_139 = arith.constant dense<0.000000e+00> : vector<5x32xf32>
    %199 = tpu.matmul %196, %198, %cst_139 {dimension_numbers = #tpu.dot_dimension_numbers<[1], [0], [0], [1], [0, 0, 1, 1], [], []>} : vector<5x32xf32>, vector<32x32xf32>, vector<5x32xf32> -> vector<5x32xf32>
    %c0_140 = arith.constant 0 : index
    %c0_141 = arith.constant 0 : index
    %200 = vector.load %arg23[%c0_140, %c0_141] : memref<1x32xf32, #tpu.memory_space<vmem>>, vector<1x32xf32>
    %201 = vector.broadcast %200 : vector<1x32xf32> to vector<5x32xf32>
    %202 = arith.addf %199, %201 : vector<5x32xf32>
    %c0_142 = arith.constant 0 : index
    %c0_143 = arith.constant 0 : index
    %203 = vector.load %arg24[%c0_142, %c0_143] : memref<32x32xf32, #tpu.memory_space<vmem>>, vector<32x32xf32>
    %cst_144 = arith.constant dense<0.000000e+00> : vector<5x32xf32>
    %204 = tpu.matmul %196, %203, %cst_144 {dimension_numbers = #tpu.dot_dimension_numbers<[1], [0], [0], [1], [0, 0, 1, 1], [], []>} : vector<5x32xf32>, vector<32x32xf32>, vector<5x32xf32> -> vector<5x32xf32>
    %c0_145 = arith.constant 0 : index
    %c0_146 = arith.constant 0 : index
    %205 = vector.load %arg25[%c0_145, %c0_146] : memref<1x32xf32, #tpu.memory_space<vmem>>, vector<1x32xf32>
    %206 = vector.broadcast %205 : vector<1x32xf32> to vector<5x32xf32>
    %207 = arith.addf %204, %206 : vector<5x32xf32>
    %cst_147 = arith.constant dense<0.000000e+00> : vector<64x5xf32>
    %208 = tpu.matmul %197, %202, %cst_147 {dimension_numbers = #tpu.dot_dimension_numbers<[1], [1], [0], [0], [0, 0, 1, 0], [], []>} : vector<64x32xf32>, vector<5x32xf32>, vector<64x5xf32> -> vector<64x5xf32>
    %cst_148 = arith.constant dense<0xFF800000> : vector<64xf32>
    %209 = vector.multi_reduction <maximumf>, %208, %cst_148 [1] : vector<64x5xf32> to vector<64xf32>
    %210 = vector.shape_cast %209 : vector<64xf32> to vector<64x1xf32>
    %211 = vector.broadcast %210 : vector<64x1xf32> to vector<64x5xf32>
    %212 = arith.subf %208, %211 : vector<64x5xf32>
    %213 = math.exp %212 : vector<64x5xf32>
    %cst_149 = arith.constant dense<0.000000e+00> : vector<64xf32>
    %214 = vector.multi_reduction <add>, %213, %cst_149 [1] : vector<64x5xf32> to vector<64xf32>
    %215 = vector.shape_cast %214 : vector<64xf32> to vector<64x1xf32>
    %216 = tpu.reciprocal %215 {approx = true} : vector<64x1xf32> -> vector<64x1xf32>
    %217 = vector.broadcast %216 : vector<64x1xf32> to vector<64x5xf32>
    %218 = arith.mulf %213, %217 : vector<64x5xf32>
    %cst_150 = arith.constant dense<0.000000e+00> : vector<64x32xf32>
    %219 = tpu.matmul %218, %207, %cst_150 {dimension_numbers = #tpu.dot_dimension_numbers<[1], [0], [0], [1], [0, 0, 1, 1], [], []>} : vector<64x5xf32>, vector<5x32xf32>, vector<64x32xf32> -> vector<64x32xf32>
    %c0_151 = arith.constant 0 : index
    %c0_152 = arith.constant 0 : index
    %220 = vector.load %arg26[%c0_151, %c0_152] : memref<32x32xf32, #tpu.memory_space<vmem>>, vector<32x32xf32>
    %cst_153 = arith.constant dense<0.000000e+00> : vector<64x32xf32>
    %221 = tpu.matmul %219, %220, %cst_153 {dimension_numbers = #tpu.dot_dimension_numbers<[1], [0], [0], [1], [0, 0, 1, 1], [], []>} : vector<64x32xf32>, vector<32x32xf32>, vector<64x32xf32> -> vector<64x32xf32>
    %c0_154 = arith.constant 0 : index
    %c0_155 = arith.constant 0 : index
    %222 = vector.load %arg27[%c0_154, %c0_155] : memref<1x32xf32, #tpu.memory_space<vmem>>, vector<1x32xf32>
    %223 = vector.broadcast %222 : vector<1x32xf32> to vector<64x32xf32>
    %224 = arith.addf %221, %223 : vector<64x32xf32>
    %225 = vector.extract_strided_slice %44 {offsets = [64, 0], sizes = [64, 32], strides = [1, 1]} : vector<128x32xf32> to vector<64x32xf32>
    %226 = arith.addf %225, %224 : vector<64x32xf32>
    %c64 = arith.constant 64 : index
    %c0_156 = arith.constant 0 : index
    %227 = vector.load %arg34[%c64, %c0_156] : memref<128x32xf32, #tpu.memory_space<vmem>>, vector<64x32xf32>
    tpu.vector_store %arg34[%c64, %c0_156], %226 {strides = array<i32>} : memref<128x32xf32, #tpu.memory_space<vmem>>, vector<64x32xf32>,
    %228 = vector.extract_strided_slice %196 {offsets = [0, 0], sizes = [1, 32], strides = [1, 1]} : vector<5x32xf32> to vector<1x32xf32>
    %c0_157 = arith.constant 0 : index
    %c0_158 = arith.constant 0 : index
    %c0_159 = arith.constant 0 : index
    %229 = vector.load %arg28[%c0_157, %c0_158, %c0_159] : memref<1x32x32xf32, #tpu.memory_space<vmem>>, vector<1x32x32xf32>
    %230 = vector.shape_cast %229 : vector<1x32x32xf32> to vector<32x32xf32>
    %cst_160 = arith.constant dense<0.000000e+00> : vector<1x32xf32>
    %231 = tpu.matmul %228, %230, %cst_160 {dimension_numbers = #tpu.dot_dimension_numbers<[1], [0], [0], [1], [0, 0, 1, 1], [], []>} : vector<1x32xf32>, vector<32x32xf32>, vector<1x32xf32> -> vector<1x32xf32>
    %c0_161 = arith.constant 0 : index
    %c0_162 = arith.constant 0 : index
    %c0_163 = arith.constant 0 : index
    %232 = vector.load %arg29[%c0_161, %c0_162, %c0_163] : memref<1x1x32xf32, #tpu.memory_space<vmem>>, vector<1x1x32xf32>
    %233 = vector.shape_cast %232 : vector<1x1x32xf32> to vector<1x32xf32>
    %234 = arith.addf %231, %233 : vector<1x32xf32>
    %cst_164 = arith.constant 0.000000e+00 : f32
    %235 = vector.broadcast %cst_164 : f32 to vector<1x32xf32>
    %236 = arith.maximumf %234, %235 : vector<1x32xf32>
    %c0_165 = arith.constant 0 : index
    %c0_166 = arith.constant 0 : index
    %c0_167 = arith.constant 0 : index
    %237 = vector.load %arg30[%c0_165, %c0_166, %c0_167] : memref<1x32x32xf32, #tpu.memory_space<vmem>>, vector<1x32x32xf32>
    %238 = vector.shape_cast %237 : vector<1x32x32xf32> to vector<32x32xf32>
    %cst_168 = arith.constant dense<0.000000e+00> : vector<1x32xf32>
    %239 = tpu.matmul %236, %238, %cst_168 {dimension_numbers = #tpu.dot_dimension_numbers<[1], [0], [0], [1], [0, 0, 1, 1], [], []>} : vector<1x32xf32>, vector<32x32xf32>, vector<1x32xf32> -> vector<1x32xf32>
    %c0_169 = arith.constant 0 : index
    %c0_170 = arith.constant 0 : index
    %c0_171 = arith.constant 0 : index
    %240 = vector.load %arg31[%c0_169, %c0_170, %c0_171] : memref<1x1x32xf32, #tpu.memory_space<vmem>>, vector<1x1x32xf32>
    %241 = vector.shape_cast %240 : vector<1x1x32xf32> to vector<1x32xf32>
    %242 = arith.addf %239, %241 : vector<1x32xf32>
    %cst_172 = arith.constant 0.000000e+00 : f32
    %243 = vector.broadcast %cst_172 : f32 to vector<1x32xf32>
    %244 = arith.maximumf %242, %243 : vector<1x32xf32>
    %c0_173 = arith.constant 0 : index
    %c0_174 = arith.constant 0 : index
    %c0_175 = arith.constant 0 : index
    %245 = vector.load %arg32[%c0_173, %c0_174, %c0_175] : memref<1x32x4xf32, #tpu.memory_space<vmem>>, vector<1x32x4xf32>
    %246 = vector.shape_cast %245 : vector<1x32x4xf32> to vector<32x4xf32>
    %cst_176 = arith.constant dense<0.000000e+00> : vector<1x4xf32>
    %247 = tpu.matmul %244, %246, %cst_176 {dimension_numbers = #tpu.dot_dimension_numbers<[1], [0], [0], [1], [0, 0, 1, 1], [], []>} : vector<1x32xf32>, vector<32x4xf32>, vector<1x4xf32> -> vector<1x4xf32>
    %c0_177 = arith.constant 0 : index
    %c0_178 = arith.constant 0 : index
    %c0_179 = arith.constant 0 : index
    %248 = vector.load %arg33[%c0_177, %c0_178, %c0_179] : memref<1x1x4xf32, #tpu.memory_space<vmem>>, vector<1x1x4xf32>
    %249 = vector.shape_cast %248 : vector<1x1x4xf32> to vector<1x4xf32>
    %250 = arith.addf %247, %249 : vector<1x4xf32>
    %c1_180 = arith.constant 1 : index
    %c0_181 = arith.constant 0 : index
    %251 = vector.load %arg35[%c1_180, %c0_181] : memref<2x4xf32, #tpu.memory_space<vmem>>, vector<1x4xf32>
    tpu.vector_store %arg35[%c1_180, %c0_181], %250 {strides = array<i32>} : memref<2x4xf32, #tpu.memory_space<vmem>>, vector<1x4xf32>,
    return
  }
}

module attributes {stable_mosaic.version = 11 : i64} {
  func.func @_upscale_mask_resize_kernel(%arg0: memref<16x256xf32, #tpu.memory_space<vmem>>, %arg1: memref<2x4xf32, #tpu.memory_space<vmem>>, %arg2: memref<256x256xf32, #tpu.memory_space<vmem>>, %arg3: memref<1x256xf32, #tpu.memory_space<vmem>>, %arg4: memref<256x256xf32, #tpu.memory_space<vmem>>, %arg5: memref<1x256xf32, #tpu.memory_space<vmem>>, %arg6: memref<1x256xf32, #tpu.memory_space<vmem>>, %arg7: memref<256x512xf32, #tpu.memory_space<vmem>>, %arg8: memref<1x512xf32, #tpu.memory_space<vmem>>, %arg9: memref<32x48xf32, #tpu.memory_space<vmem>>, %arg10: memref<4x48x8xf32, #tpu.memory_space<vmem>>, %arg11: memref<2x48x48xf32, #tpu.memory_space<vmem>>) attributes {dimension_semantics = [], scalar_prefetch = 0 : i64, scratch_operands = 0 : i64, tpu.core_type = #tpu.core_type<tc>} {
    %c0 = arith.constant 0 : index
    %c0_0 = arith.constant 0 : index
    %0 = vector.load %arg0[%c0, %c0_0] : memref<16x256xf32, #tpu.memory_space<vmem>>, vector<16x256xf32>
    %c0_1 = arith.constant 0 : index
    %c0_2 = arith.constant 0 : index
    %1 = vector.load %arg2[%c0_1, %c0_2] : memref<256x256xf32, #tpu.memory_space<vmem>>, vector<256x256xf32>
    %cst = arith.constant dense<0.000000e+00> : vector<16x256xf32>
    %2 = tpu.matmul %0, %1, %cst {dimension_numbers = #tpu.dot_dimension_numbers<[1], [0], [0], [1], [0, 0, 1, 1], [], []>} : vector<16x256xf32>, vector<256x256xf32>, vector<16x256xf32> -> vector<16x256xf32>
    %c0_3 = arith.constant 0 : index
    %c0_4 = arith.constant 0 : index
    %3 = vector.load %arg3[%c0_3, %c0_4] : memref<1x256xf32, #tpu.memory_space<vmem>>, vector<1x256xf32>
    %4 = vector.broadcast %3 : vector<1x256xf32> to vector<16x256xf32>
    %5 = arith.addf %2, %4 : vector<16x256xf32>
    %c0_5 = arith.constant 0 : index
    %c0_6 = arith.constant 0 : index
    %6 = vector.load %arg4[%c0_5, %c0_6] : memref<256x256xf32, #tpu.memory_space<vmem>>, vector<256x256xf32>
    %cst_7 = arith.constant dense<0.000000e+00> : vector<16x256xf32>
    %7 = tpu.matmul %5, %6, %cst_7 {dimension_numbers = #tpu.dot_dimension_numbers<[1], [0], [0], [1], [0, 0, 1, 1], [], []>} : vector<16x256xf32>, vector<256x256xf32>, vector<16x256xf32> -> vector<16x256xf32>
    %8 = arith.subf %5, %7 : vector<16x256xf32>
    %9 = arith.mulf %8, %8 : vector<16x256xf32>
    %cst_8 = arith.constant dense<0.000000e+00> : vector<16x256xf32>
    %10 = tpu.matmul %9, %6, %cst_8 {dimension_numbers = #tpu.dot_dimension_numbers<[1], [0], [0], [1], [0, 0, 1, 1], [], []>} : vector<16x256xf32>, vector<256x256xf32>, vector<16x256xf32> -> vector<16x256xf32>
    %cst_9 = arith.constant 9.99999997E-7 : f32
    %11 = vector.broadcast %cst_9 : f32 to vector<16x256xf32>
    %12 = arith.addf %10, %11 : vector<16x256xf32>
    %13 = math.rsqrt %12 : vector<16x256xf32>
    %14 = arith.mulf %8, %13 : vector<16x256xf32>
    %c0_10 = arith.constant 0 : index
    %c0_11 = arith.constant 0 : index
    %15 = vector.load %arg5[%c0_10, %c0_11] : memref<1x256xf32, #tpu.memory_space<vmem>>, vector<1x256xf32>
    %16 = vector.broadcast %15 : vector<1x256xf32> to vector<16x256xf32>
    %17 = arith.mulf %14, %16 : vector<16x256xf32>
    %c0_12 = arith.constant 0 : index
    %c0_13 = arith.constant 0 : index
    %18 = vector.load %arg6[%c0_12, %c0_13] : memref<1x256xf32, #tpu.memory_space<vmem>>, vector<1x256xf32>
    %19 = vector.broadcast %18 : vector<1x256xf32> to vector<16x256xf32>
    %20 = arith.addf %17, %19 : vector<16x256xf32>
    %cst_14 = arith.constant 5.000000e-01 : f32
    %21 = vector.broadcast %cst_14 : f32 to vector<16x256xf32>
    %22 = arith.mulf %21, %20 : vector<16x256xf32>
    %cst_15 = arith.constant 4.471500e-02 : f32
    %23 = vector.broadcast %cst_15 : f32 to vector<16x256xf32>
    %24 = arith.mulf %23, %20 : vector<16x256xf32>
    %25 = arith.mulf %24, %20 : vector<16x256xf32>
    %26 = arith.mulf %25, %20 : vector<16x256xf32>
    %27 = arith.addf %20, %26 : vector<16x256xf32>
    %cst_16 = arith.constant 0.797884583 : f32
    %28 = vector.broadcast %cst_16 : f32 to vector<16x256xf32>
    %29 = arith.mulf %28, %27 : vector<16x256xf32>
    %30 = math.tanh %29 : vector<16x256xf32>
    %cst_17 = arith.constant 1.000000e+00 : f32
    %31 = vector.broadcast %cst_17 : f32 to vector<16x256xf32>
    %32 = arith.addf %31, %30 : vector<16x256xf32>
    %33 = arith.mulf %22, %32 : vector<16x256xf32>
    %c0_18 = arith.constant 0 : index
    %c0_19 = arith.constant 0 : index
    %34 = vector.load %arg7[%c0_18, %c0_19] : memref<256x512xf32, #tpu.memory_space<vmem>>, vector<256x512xf32>
    %cst_20 = arith.constant dense<0.000000e+00> : vector<16x512xf32>
    %35 = tpu.matmul %33, %34, %cst_20 {dimension_numbers = #tpu.dot_dimension_numbers<[1], [0], [0], [1], [0, 0, 1, 1], [], []>} : vector<16x256xf32>, vector<256x512xf32>, vector<16x512xf32> -> vector<16x512xf32>
    %c0_21 = arith.constant 0 : index
    %c0_22 = arith.constant 0 : index
    %36 = vector.load %arg8[%c0_21, %c0_22] : memref<1x512xf32, #tpu.memory_space<vmem>>, vector<1x512xf32>
    %37 = vector.broadcast %36 : vector<1x512xf32> to vector<16x512xf32>
    %38 = arith.addf %35, %37 : vector<16x512xf32>
    %cst_23 = arith.constant 5.000000e-01 : f32
    %39 = vector.broadcast %cst_23 : f32 to vector<16x512xf32>
    %40 = arith.mulf %39, %38 : vector<16x512xf32>
    %cst_24 = arith.constant 4.471500e-02 : f32
    %41 = vector.broadcast %cst_24 : f32 to vector<16x512xf32>
    %42 = arith.mulf %41, %38 : vector<16x512xf32>
    %43 = arith.mulf %42, %38 : vector<16x512xf32>
    %44 = arith.mulf %43, %38 : vector<16x512xf32>
    %45 = arith.addf %38, %44 : vector<16x512xf32>
    %cst_25 = arith.constant 0.797884583 : f32
    %46 = vector.broadcast %cst_25 : f32 to vector<16x512xf32>
    %47 = arith.mulf %46, %45 : vector<16x512xf32>
    %48 = math.tanh %47 : vector<16x512xf32>
    %cst_26 = arith.constant 1.000000e+00 : f32
    %49 = vector.broadcast %cst_26 : f32 to vector<16x512xf32>
    %50 = arith.addf %49, %48 : vector<16x512xf32>
    %51 = arith.mulf %40, %50 : vector<16x512xf32>
    %c0_27 = arith.constant 0 : index
    %c0_28 = arith.constant 0 : index
    %52 = vector.load %arg1[%c0_27, %c0_28] : memref<2x4xf32, #tpu.memory_space<vmem>>, vector<2x4xf32>
    %c0_29 = arith.constant 0 : index
    %c0_30 = arith.constant 0 : index
    %53 = vector.load %arg9[%c0_29, %c0_30] : memref<32x48xf32, #tpu.memory_space<vmem>>, vector<32x48xf32>
    %54 = vector.extract_strided_slice %51 {offsets = [0, 0], sizes = [8, 512], strides = [1, 1]} : vector<16x512xf32> to vector<8x512xf32>
    %55 = vector.extract_strided_slice %52 {offsets = [0, 0], sizes = [1, 4], strides = [1, 1]} : vector<2x4xf32> to vector<1x4xf32>
    %56 = vector.extract_strided_slice %54 {offsets = [0, 0], sizes = [8, 128], strides = [1, 1]} : vector<8x512xf32> to vector<8x128xf32>
    %57 = vector.extract_strided_slice %55 {offsets = [0, 0], sizes = [1, 1], strides = [1, 1]} : vector<1x4xf32> to vector<1x1xf32>
    %58 = vector.broadcast %57 : vector<1x1xf32> to vector<8x128xf32>
    %59 = arith.mulf %56, %58 : vector<8x128xf32>
    %60 = vector.extract_strided_slice %54 {offsets = [0, 128], sizes = [8, 128], strides = [1, 1]} : vector<8x512xf32> to vector<8x128xf32>
    %61 = vector.extract_strided_slice %55 {offsets = [0, 1], sizes = [1, 1], strides = [1, 1]} : vector<1x4xf32> to vector<1x1xf32>
    %62 = vector.broadcast %61 : vector<1x1xf32> to vector<8x128xf32>
    %63 = arith.mulf %60, %62 : vector<8x128xf32>
    %64 = arith.addf %59, %63 : vector<8x128xf32>
    %65 = vector.extract_strided_slice %54 {offsets = [0, 256], sizes = [8, 128], strides = [1, 1]} : vector<8x512xf32> to vector<8x128xf32>
    %66 = vector.extract_strided_slice %55 {offsets = [0, 2], sizes = [1, 1], strides = [1, 1]} : vector<1x4xf32> to vector<1x1xf32>
    %67 = vector.broadcast %66 : vector<1x1xf32> to vector<8x128xf32>
    %68 = arith.mulf %65, %67 : vector<8x128xf32>
    %69 = arith.addf %64, %68 : vector<8x128xf32>
    %70 = vector.extract_strided_slice %54 {offsets = [0, 384], sizes = [8, 128], strides = [1, 1]} : vector<8x512xf32> to vector<8x128xf32>
    %71 = vector.extract_strided_slice %55 {offsets = [0, 3], sizes = [1, 1], strides = [1, 1]} : vector<1x4xf32> to vector<1x1xf32>
    %72 = vector.broadcast %71 : vector<1x1xf32> to vector<8x128xf32>
    %73 = arith.mulf %70, %72 : vector<8x128xf32>
    %74 = arith.addf %69, %73 : vector<8x128xf32>
    %cst_31 = arith.constant 0.000000e+00 : f32
    %75 = vector.broadcast %cst_31 : f32 to vector<48x48xf32>
    %76 = vector.extract_strided_slice %74 {offsets = [0, 0], sizes = [8, 32], strides = [1, 1]} : vector<8x128xf32> to vector<8x32xf32>
    %cst_32 = arith.constant dense<0.000000e+00> : vector<8x48xf32>
    %77 = tpu.matmul %76, %53, %cst_32 {dimension_numbers = #tpu.dot_dimension_numbers<[1], [0], [0], [1], [0, 0, 1, 1], [], []>} : vector<8x32xf32>, vector<32x48xf32>, vector<8x48xf32> -> vector<8x48xf32>
    %c0_33 = arith.constant 0 : index
    %c0_34 = arith.constant 0 : index
    %c0_35 = arith.constant 0 : index
    %78 = vector.load %arg10[%c0_33, %c0_34, %c0_35] : memref<4x48x8xf32, #tpu.memory_space<vmem>>, vector<1x48x8xf32>
    %79 = vector.shape_cast %78 : vector<1x48x8xf32> to vector<48x8xf32>
    %cst_36 = arith.constant dense<0.000000e+00> : vector<48x48xf32>
    %80 = tpu.matmul %79, %77, %cst_36 {dimension_numbers = #tpu.dot_dimension_numbers<[1], [0], [0], [1], [0, 0, 1, 1], [], []>} : vector<48x8xf32>, vector<8x48xf32>, vector<48x48xf32> -> vector<48x48xf32>
    %81 = arith.addf %75, %80 : vector<48x48xf32>
    %82 = vector.extract_strided_slice %74 {offsets = [0, 32], sizes = [8, 32], strides = [1, 1]} : vector<8x128xf32> to vector<8x32xf32>
    %cst_37 = arith.constant dense<0.000000e+00> : vector<8x48xf32>
    %83 = tpu.matmul %82, %53, %cst_37 {dimension_numbers = #tpu.dot_dimension_numbers<[1], [0], [0], [1], [0, 0, 1, 1], [], []>} : vector<8x32xf32>, vector<32x48xf32>, vector<8x48xf32> -> vector<8x48xf32>
    %c1 = arith.constant 1 : index
    %c0_38 = arith.constant 0 : index
    %c0_39 = arith.constant 0 : index
    %84 = vector.load %arg10[%c1, %c0_38, %c0_39] : memref<4x48x8xf32, #tpu.memory_space<vmem>>, vector<1x48x8xf32>
    %85 = vector.shape_cast %84 : vector<1x48x8xf32> to vector<48x8xf32>
    %cst_40 = arith.constant dense<0.000000e+00> : vector<48x48xf32>
    %86 = tpu.matmul %85, %83, %cst_40 {dimension_numbers = #tpu.dot_dimension_numbers<[1], [0], [0], [1], [0, 0, 1, 1], [], []>} : vector<48x8xf32>, vector<8x48xf32>, vector<48x48xf32> -> vector<48x48xf32>
    %87 = arith.addf %81, %86 : vector<48x48xf32>
    %88 = vector.extract_strided_slice %74 {offsets = [0, 64], sizes = [8, 32], strides = [1, 1]} : vector<8x128xf32> to vector<8x32xf32>
    %cst_41 = arith.constant dense<0.000000e+00> : vector<8x48xf32>
    %89 = tpu.matmul %88, %53, %cst_41 {dimension_numbers = #tpu.dot_dimension_numbers<[1], [0], [0], [1], [0, 0, 1, 1], [], []>} : vector<8x32xf32>, vector<32x48xf32>, vector<8x48xf32> -> vector<8x48xf32>
    %c2 = arith.constant 2 : index
    %c0_42 = arith.constant 0 : index
    %c0_43 = arith.constant 0 : index
    %90 = vector.load %arg10[%c2, %c0_42, %c0_43] : memref<4x48x8xf32, #tpu.memory_space<vmem>>, vector<1x48x8xf32>
    %91 = vector.shape_cast %90 : vector<1x48x8xf32> to vector<48x8xf32>
    %cst_44 = arith.constant dense<0.000000e+00> : vector<48x48xf32>
    %92 = tpu.matmul %91, %89, %cst_44 {dimension_numbers = #tpu.dot_dimension_numbers<[1], [0], [0], [1], [0, 0, 1, 1], [], []>} : vector<48x8xf32>, vector<8x48xf32>, vector<48x48xf32> -> vector<48x48xf32>
    %93 = arith.addf %87, %92 : vector<48x48xf32>
    %94 = vector.extract_strided_slice %74 {offsets = [0, 96], sizes = [8, 32], strides = [1, 1]} : vector<8x128xf32> to vector<8x32xf32>
    %cst_45 = arith.constant dense<0.000000e+00> : vector<8x48xf32>
    %95 = tpu.matmul %94, %53, %cst_45 {dimension_numbers = #tpu.dot_dimension_numbers<[1], [0], [0], [1], [0, 0, 1, 1], [], []>} : vector<8x32xf32>, vector<32x48xf32>, vector<8x48xf32> -> vector<8x48xf32>
    %c3 = arith.constant 3 : index
    %c0_46 = arith.constant 0 : index
    %c0_47 = arith.constant 0 : index
    %96 = vector.load %arg10[%c3, %c0_46, %c0_47] : memref<4x48x8xf32, #tpu.memory_space<vmem>>, vector<1x48x8xf32>
    %97 = vector.shape_cast %96 : vector<1x48x8xf32> to vector<48x8xf32>
    %cst_48 = arith.constant dense<0.000000e+00> : vector<48x48xf32>
    %98 = tpu.matmul %97, %95, %cst_48 {dimension_numbers = #tpu.dot_dimension_numbers<[1], [0], [0], [1], [0, 0, 1, 1], [], []>} : vector<48x8xf32>, vector<8x48xf32>, vector<48x48xf32> -> vector<48x48xf32>
    %99 = arith.addf %93, %98 : vector<48x48xf32>
    %c0_49 = arith.constant 0 : index
    %c0_50 = arith.constant 0 : index
    %c0_51 = arith.constant 0 : index
    %100 = vector.load %arg11[%c0_49, %c0_50, %c0_51] : memref<2x48x48xf32, #tpu.memory_space<vmem>>, vector<1x48x48xf32>
    %101 = vector.shape_cast %100 : vector<1x48x48xf32> to vector<48x48xf32>
    %102 = vector.shape_cast %99 : vector<48x48xf32> to vector<1x48x48xf32>
    tpu.vector_store %arg11[%c0_49, %c0_50, %c0_51], %102 {strides = array<i32>} : memref<2x48x48xf32, #tpu.memory_space<vmem>>, vector<1x48x48xf32>,
    %103 = vector.extract_strided_slice %51 {offsets = [8, 0], sizes = [8, 512], strides = [1, 1]} : vector<16x512xf32> to vector<8x512xf32>
    %104 = vector.extract_strided_slice %52 {offsets = [1, 0], sizes = [1, 4], strides = [1, 1]} : vector<2x4xf32> to vector<1x4xf32>
    %105 = vector.extract_strided_slice %103 {offsets = [0, 0], sizes = [8, 128], strides = [1, 1]} : vector<8x512xf32> to vector<8x128xf32>
    %106 = vector.extract_strided_slice %104 {offsets = [0, 0], sizes = [1, 1], strides = [1, 1]} : vector<1x4xf32> to vector<1x1xf32>
    %107 = vector.broadcast %106 : vector<1x1xf32> to vector<8x128xf32>
    %108 = arith.mulf %105, %107 : vector<8x128xf32>
    %109 = vector.extract_strided_slice %103 {offsets = [0, 128], sizes = [8, 128], strides = [1, 1]} : vector<8x512xf32> to vector<8x128xf32>
    %110 = vector.extract_strided_slice %104 {offsets = [0, 1], sizes = [1, 1], strides = [1, 1]} : vector<1x4xf32> to vector<1x1xf32>
    %111 = vector.broadcast %110 : vector<1x1xf32> to vector<8x128xf32>
    %112 = arith.mulf %109, %111 : vector<8x128xf32>
    %113 = arith.addf %108, %112 : vector<8x128xf32>
    %114 = vector.extract_strided_slice %103 {offsets = [0, 256], sizes = [8, 128], strides = [1, 1]} : vector<8x512xf32> to vector<8x128xf32>
    %115 = vector.extract_strided_slice %104 {offsets = [0, 2], sizes = [1, 1], strides = [1, 1]} : vector<1x4xf32> to vector<1x1xf32>
    %116 = vector.broadcast %115 : vector<1x1xf32> to vector<8x128xf32>
    %117 = arith.mulf %114, %116 : vector<8x128xf32>
    %118 = arith.addf %113, %117 : vector<8x128xf32>
    %119 = vector.extract_strided_slice %103 {offsets = [0, 384], sizes = [8, 128], strides = [1, 1]} : vector<8x512xf32> to vector<8x128xf32>
    %120 = vector.extract_strided_slice %104 {offsets = [0, 3], sizes = [1, 1], strides = [1, 1]} : vector<1x4xf32> to vector<1x1xf32>
    %121 = vector.broadcast %120 : vector<1x1xf32> to vector<8x128xf32>
    %122 = arith.mulf %119, %121 : vector<8x128xf32>
    %123 = arith.addf %118, %122 : vector<8x128xf32>
    %cst_52 = arith.constant 0.000000e+00 : f32
    %124 = vector.broadcast %cst_52 : f32 to vector<48x48xf32>
    %125 = vector.extract_strided_slice %123 {offsets = [0, 0], sizes = [8, 32], strides = [1, 1]} : vector<8x128xf32> to vector<8x32xf32>
    %cst_53 = arith.constant dense<0.000000e+00> : vector<8x48xf32>
    %126 = tpu.matmul %125, %53, %cst_53 {dimension_numbers = #tpu.dot_dimension_numbers<[1], [0], [0], [1], [0, 0, 1, 1], [], []>} : vector<8x32xf32>, vector<32x48xf32>, vector<8x48xf32> -> vector<8x48xf32>
    %c0_54 = arith.constant 0 : index
    %c0_55 = arith.constant 0 : index
    %c0_56 = arith.constant 0 : index
    %127 = vector.load %arg10[%c0_54, %c0_55, %c0_56] : memref<4x48x8xf32, #tpu.memory_space<vmem>>, vector<1x48x8xf32>
    %128 = vector.shape_cast %127 : vector<1x48x8xf32> to vector<48x8xf32>
    %cst_57 = arith.constant dense<0.000000e+00> : vector<48x48xf32>
    %129 = tpu.matmul %128, %126, %cst_57 {dimension_numbers = #tpu.dot_dimension_numbers<[1], [0], [0], [1], [0, 0, 1, 1], [], []>} : vector<48x8xf32>, vector<8x48xf32>, vector<48x48xf32> -> vector<48x48xf32>
    %130 = arith.addf %124, %129 : vector<48x48xf32>
    %131 = vector.extract_strided_slice %123 {offsets = [0, 32], sizes = [8, 32], strides = [1, 1]} : vector<8x128xf32> to vector<8x32xf32>
    %cst_58 = arith.constant dense<0.000000e+00> : vector<8x48xf32>
    %132 = tpu.matmul %131, %53, %cst_58 {dimension_numbers = #tpu.dot_dimension_numbers<[1], [0], [0], [1], [0, 0, 1, 1], [], []>} : vector<8x32xf32>, vector<32x48xf32>, vector<8x48xf32> -> vector<8x48xf32>
    %c1_59 = arith.constant 1 : index
    %c0_60 = arith.constant 0 : index
    %c0_61 = arith.constant 0 : index
    %133 = vector.load %arg10[%c1_59, %c0_60, %c0_61] : memref<4x48x8xf32, #tpu.memory_space<vmem>>, vector<1x48x8xf32>
    %134 = vector.shape_cast %133 : vector<1x48x8xf32> to vector<48x8xf32>
    %cst_62 = arith.constant dense<0.000000e+00> : vector<48x48xf32>
    %135 = tpu.matmul %134, %132, %cst_62 {dimension_numbers = #tpu.dot_dimension_numbers<[1], [0], [0], [1], [0, 0, 1, 1], [], []>} : vector<48x8xf32>, vector<8x48xf32>, vector<48x48xf32> -> vector<48x48xf32>
    %136 = arith.addf %130, %135 : vector<48x48xf32>
    %137 = vector.extract_strided_slice %123 {offsets = [0, 64], sizes = [8, 32], strides = [1, 1]} : vector<8x128xf32> to vector<8x32xf32>
    %cst_63 = arith.constant dense<0.000000e+00> : vector<8x48xf32>
    %138 = tpu.matmul %137, %53, %cst_63 {dimension_numbers = #tpu.dot_dimension_numbers<[1], [0], [0], [1], [0, 0, 1, 1], [], []>} : vector<8x32xf32>, vector<32x48xf32>, vector<8x48xf32> -> vector<8x48xf32>
    %c2_64 = arith.constant 2 : index
    %c0_65 = arith.constant 0 : index
    %c0_66 = arith.constant 0 : index
    %139 = vector.load %arg10[%c2_64, %c0_65, %c0_66] : memref<4x48x8xf32, #tpu.memory_space<vmem>>, vector<1x48x8xf32>
    %140 = vector.shape_cast %139 : vector<1x48x8xf32> to vector<48x8xf32>
    %cst_67 = arith.constant dense<0.000000e+00> : vector<48x48xf32>
    %141 = tpu.matmul %140, %138, %cst_67 {dimension_numbers = #tpu.dot_dimension_numbers<[1], [0], [0], [1], [0, 0, 1, 1], [], []>} : vector<48x8xf32>, vector<8x48xf32>, vector<48x48xf32> -> vector<48x48xf32>
    %142 = arith.addf %136, %141 : vector<48x48xf32>
    %143 = vector.extract_strided_slice %123 {offsets = [0, 96], sizes = [8, 32], strides = [1, 1]} : vector<8x128xf32> to vector<8x32xf32>
    %cst_68 = arith.constant dense<0.000000e+00> : vector<8x48xf32>
    %144 = tpu.matmul %143, %53, %cst_68 {dimension_numbers = #tpu.dot_dimension_numbers<[1], [0], [0], [1], [0, 0, 1, 1], [], []>} : vector<8x32xf32>, vector<32x48xf32>, vector<8x48xf32> -> vector<8x48xf32>
    %c3_69 = arith.constant 3 : index
    %c0_70 = arith.constant 0 : index
    %c0_71 = arith.constant 0 : index
    %145 = vector.load %arg10[%c3_69, %c0_70, %c0_71] : memref<4x48x8xf32, #tpu.memory_space<vmem>>, vector<1x48x8xf32>
    %146 = vector.shape_cast %145 : vector<1x48x8xf32> to vector<48x8xf32>
    %cst_72 = arith.constant dense<0.000000e+00> : vector<48x48xf32>
    %147 = tpu.matmul %146, %144, %cst_72 {dimension_numbers = #tpu.dot_dimension_numbers<[1], [0], [0], [1], [0, 0, 1, 1], [], []>} : vector<48x8xf32>, vector<8x48xf32>, vector<48x48xf32> -> vector<48x48xf32>
    %148 = arith.addf %142, %147 : vector<48x48xf32>
    %c1_73 = arith.constant 1 : index
    %c0_74 = arith.constant 0 : index
    %c0_75 = arith.constant 0 : index
    %149 = vector.load %arg11[%c1_73, %c0_74, %c0_75] : memref<2x48x48xf32, #tpu.memory_space<vmem>>, vector<1x48x48xf32>
    %150 = vector.shape_cast %149 : vector<1x48x48xf32> to vector<48x48xf32>
    %151 = vector.shape_cast %148 : vector<48x48xf32> to vector<1x48x48xf32>
    tpu.vector_store %arg11[%c1_73, %c0_74, %c0_75], %151 {strides = array<i32>} : memref<2x48x48xf32, #tpu.memory_space<vmem>>, vector<1x48x48xf32>,
    return
  }
}

</mosaic_0001>

<llo_original>
// kernel: tile.26
$region0: #{tile.26}
  #allocation0 [shape = 's32[1]{0}', space=sflag, size = 0x4, scoped, tag = 'scoped memory for tile.26']
  %s0 = inlined_call_operand.vmem [shape: f32[8], index: 0, kind: input, shape index: {}]
  %s1 = inlined_call_operand.vmem [shape: f32[32,8], index: 1, kind: output, shape index: {}]
  // Predicated region
  $region2: #{tile.26} parent=0 // pred_check
    _
  $region3: #{tile.26} parent=0 // pred_check_branch
    %3 = sbr.rel (0) target = $region5
  $region4: #{tile.26} parent=0 // pred_region
    _
  $region5: #{tile.26} parent=0 // pred_fallthru
    _
  %v4 = vld [vmem:[%s0] ss:$0 sm:$0xff]
  %5 = vst [vmem:[%s1] sm:$0xff] %v4
  %s6 = scalar_lea.vmem %s1, 8
  %7 = vst [vmem:[%s6] sm:$0xff] %v4
  %s8 = scalar_lea.vmem %s1, 16
  %9 = vst [vmem:[%s8] sm:$0xff] %v4
  %s10 = scalar_lea.vmem %s1, 24
  %11 = vst [vmem:[%s10] sm:$0xff] %v4

// kernel: tile.27
$region0: #{tile.27}
  %s0 = inlined_call_operand.vmem [shape: f32[32,8], index: 0, kind: input, shape index: {}]
  %s1 = inlined_call_operand.vmem [shape: f32[1,256], index: 1, kind: output, shape index: {}]
  $region1: #{tile.27} parent=0
    #allocation0 [shape = 'u8[8192]{0}', space=vmem, size = 0x2000, scoped, tag = 'scoped mem for output reshape']
    %s2 = smov 3
    %v3 = vld [vmem:[%s0] ss:$16 sm:%s2]
    %vm4 = vcmask 64512
    %5 = vst.msk [vmem:[#allocation0] ss:$8 sm:$0x3] %vm4, %v3
    %s6 = scalar_lea.vmem %s0, 15
    %s7 = smov 3
    %v8 = vld [vmem:[%s6] ss:$16 sm:%s7]
    %9 = vrot.lane.b32.xlu0 %v8, 120
    %v10 = vpop.permute.xlu0 %9
    %vm11 = vcmask 1048512
    %12 = vst.msk [vmem:[#allocation0] ss:$8 sm:$0x3] %vm11, %v10
    %s13 = scalar_lea.vmem %s0, 14
    %s14 = smov 3
    %v15 = vld [vmem:[%s13] ss:$16 sm:%s14]
    %16 = vrot.lane.b32.xlu0 %v15, 112
    %v17 = vpop.permute.xlu0 %16
    %vm18 = vcmask 982912
    %19 = vst.msk [vmem:[#allocation0] ss:$8 sm:$0x3] %vm18, %v17
    %s20 = scalar_lea.vmem %s0, 13
    %s21 = smov 3
    %v22 = vld [vmem:[%s20] ss:$16 sm:%s21]
    %23 = vrot.lane.b32.xlu0 %v22, 104
    %v24 = vpop.permute.xlu0 %23
    %vm25 = vcmask 917312
    %26 = vst.msk [vmem:[#allocation0] ss:$8 sm:$0x3] %vm25, %v24
    %s27 = scalar_lea.vmem %s0, 12
    %s28 = smov 3
    %v29 = vld [vmem:[%s27] ss:$16 sm:%s28]
    %30 = vrot.lane.b32.xlu0 %v29, 96
    %v31 = vpop.permute.xlu0 %30
    %vm32 = vcmask 851712
    %33 = vst.msk [vmem:[#allocation0] ss:$8 sm:$0x3] %vm32, %v31
    %s34 = scalar_lea.vmem %s0, 11
    %s35 = smov 3
    %v36 = vld [vmem:[%s34] ss:$16 sm:%s35]
    %37 = vrot.lane.b32.xlu0 %v36, 88
    %v38 = vpop.permute.xlu0 %37
    %vm39 = vcmask 786112
    %40 = vst.msk [vmem:[#allocation0] ss:$8 sm:$0x3] %vm39, %v38
    %s41 = scalar_lea.vmem %s0, 10
    %s42 = smov 3
    %v43 = vld [vmem:[%s41] ss:$16 sm:%s42]
    %44 = vrot.lane.b32.xlu0 %v43, 80
    %v45 = vpop.permute.xlu0 %44
    %vm46 = vcmask 720512
    %47 = vst.msk [vmem:[#allocation0] ss:$8 sm:$0x3] %vm46, %v45
    %s48 = scalar_lea.vmem %s0, 9
    %s49 = smov 3
    %v50 = vld [vmem:[%s48] ss:$16 sm:%s49]
    %51 = vrot.lane.b32.xlu0 %v50, 72
    %v52 = vpop.permute.xlu0 %51
    %vm53 = vcmask 654912
    %54 = vst.msk [vmem:[#allocation0] ss:$8 sm:$0x3] %vm53, %v52
    %s55 = scalar_lea.vmem %s0, 8
    %s56 = smov 3
    %v57 = vld [vmem:[%s55] ss:$16 sm:%s56]
    %58 = vrot.lane.b32.xlu0 %v57, 64
    %v59 = vpop.permute.xlu0 %58
    %vm60 = vcmask 589312
    %61 = vst.msk [vmem:[#allocation0] ss:$8 sm:$0x3] %vm60, %v59
    %s62 = scalar_lea.vmem %s0, 7
    %s63 = smov 3
    %v64 = vld [vmem:[%s62] ss:$16 sm:%s63]
    %65 = vrot.lane.b32.xlu0 %v64, 56
    %v66 = vpop.permute.xlu0 %65
    %vm67 = vcmask 523712
    %68 = vst.msk [vmem:[#allocation0] ss:$8 sm:$0x3] %vm67, %v66
    %s69 = scalar_lea.vmem %s0, 6
    %s70 = smov 3
    %v71 = vld [vmem:[%s69] ss:$16 sm:%s70]
    %72 = vrot.lane.b32.xlu0 %v71, 48
    %v73 = vpop.permute.xlu0 %72
    %vm74 = vcmask 458112
    %75 = vst.msk [vmem:[#allocation0] ss:$8 sm:$0x3] %vm74, %v73
    %s76 = scalar_lea.vmem %s0, 5
    %s77 = smov 3
    %v78 = vld [vmem:[%s76] ss:$16 sm:%s77]
    %79 = vrot.lane.b32.xlu0 %v78, 40
    %v80 = vpop.permute.xlu0 %79
    %vm81 = vcmask 392512
    %82 = vst.msk [vmem:[#allocation0] ss:$8 sm:$0x3] %vm81, %v80
    %s83 = scalar_lea.vmem %s0, 4
    %s84 = smov 3
    %v85 = vld [vmem:[%s83] ss:$16 sm:%s84]
    %86 = vrot.lane.b32.xlu0 %v85, 32
    %v87 = vpop.permute.xlu0 %86
    %vm88 = vcmask 326912
    %89 = vst.msk [vmem:[#allocation0] ss:$8 sm:$0x3] %vm88, %v87
    %s90 = scalar_lea.vmem %s0, 3
    %s91 = smov 3
    %v92 = vld [vmem:[%s90] ss:$16 sm:%s91]
    %93 = vrot.lane.b32.xlu0 %v92, 24
    %v94 = vpop.permute.xlu0 %93
    %vm95 = vcmask 261312
    %96 = vst.msk [vmem:[#allocation0] ss:$8 sm:$0x3] %vm95, %v94
    %s97 = scalar_lea.vmem %s0, 2
    %s98 = smov 3
    %v99 = vld [vmem:[%s97] ss:$16 sm:%s98]
    %100 = vrot.lane.b32.xlu0 %v99, 16
    %v101 = vpop.permute.xlu0 %100
    %vm102 = vcmask 195712
    %103 = vst.msk [vmem:[#allocation0] ss:$8 sm:$0x3] %vm102, %v101
    %s104 = scalar_lea.vmem %s0, 1
    %s105 = smov 3
    %v106 = vld [vmem:[%s104] ss:$16 sm:%s105]
    %107 = vrot.lane.b32.xlu0 %v106, 8
    %v108 = vpop.permute.xlu0 %107
    %vm109 = vcmask 130112
    %110 = vst.msk [vmem:[#allocation0] ss:$8 sm:$0x3] %vm109, %v108
    %s112 = sshll.u32 1, 1
    %s113 = ssub.s32 %s112, 1
    %v115 = vld [vmem:[#allocation0] sm:%s113]
    %s116 = sshll.u32 1, 1
    %s117 = ssub.s32 %s116, 1
    %118 = vst [vmem:[%s1] sm:%s117] %v115
    %s119 = scalar_lea.vmem [#allocation0], 8
    %v120 = vld [vmem:[%s119] sm:%s113]
    %s121 = sshll.u32 1, 1
    %s122 = ssub.s32 %s121, 1
    %s123 = scalar_lea.vmem %s1, 1
    %124 = vst [vmem:[%s123] sm:%s122] %v120

// kernel: mask_decoder_forward.2
$region0: #{mask_decoder_forward.2}
  #allocation0 [shape = 'u32[]', space=smem, size = 0x4, offset = 0x4, fixed_abs, tag = 'smem constant byte address 0x4 - core index']
  #allocation1 [shape = 'u32[144,128]{1,0:T(1,128)}', space=vmem, size = 0x12000, scoped, tag = 'internal scratch']
  %s0 = inlined_call_operand.smem [shape: u32[36], index: -1, kind: input, shape index: {}]
  %s1 = sld [smem:[%s0]]
  %s2 = scalar_lea.smem %s0, 1
  %s3 = sld [smem:[%s2]]
  %s4 = scalar_lea.smem %s0, 2
  %s5 = sld [smem:[%s4]]
  %s6 = scalar_lea.smem %s0, 3
  %s7 = sld [smem:[%s6]]
  %s8 = scalar_lea.smem %s0, 4
  %s9 = sld [smem:[%s8]]
  %s10 = scalar_lea.smem %s0, 5
  %s11 = sld [smem:[%s10]]
  %s12 = scalar_lea.smem %s0, 6
  %s13 = sld [smem:[%s12]]
  %s14 = scalar_lea.smem %s0, 7
  %s15 = sld [smem:[%s14]]
  %s16 = scalar_lea.smem %s0, 8
  %s17 = sld [smem:[%s16]]
  %s18 = scalar_lea.smem %s0, 9
  %s19 = sld [smem:[%s18]]
  %s20 = scalar_lea.smem %s0, 10
  %s21 = sld [smem:[%s20]]
  %s22 = scalar_lea.smem %s0, 11
  %s23 = sld [smem:[%s22]]
  %s24 = scalar_lea.smem %s0, 12
  %s25 = sld [smem:[%s24]]
  %s26 = scalar_lea.smem %s0, 13
  %s27 = sld [smem:[%s26]]
  %s28 = scalar_lea.smem %s0, 14
  %s29 = sld [smem:[%s28]]
  %s30 = scalar_lea.smem %s0, 15
  %s31 = sld [smem:[%s30]]
  %s32 = scalar_lea.smem %s0, 16
  %s33 = sld [smem:[%s32]]
  %s34 = scalar_lea.smem %s0, 17
  %s35 = sld [smem:[%s34]]
  %s36 = scalar_lea.smem %s0, 18
  %s37 = sld [smem:[%s36]]
  %s38 = scalar_lea.smem %s0, 19
  %s39 = sld [smem:[%s38]]
  %s40 = scalar_lea.smem %s0, 20
  %s41 = sld [smem:[%s40]]
  %s42 = scalar_lea.smem %s0, 21
  %s43 = sld [smem:[%s42]]
  %s44 = scalar_lea.smem %s0, 22
  %s45 = sld [smem:[%s44]]
  %s46 = scalar_lea.smem %s0, 23
  %s47 = sld [smem:[%s46]]
  %s48 = scalar_lea.smem %s0, 24
  %s49 = sld [smem:[%s48]]
  %s50 = scalar_lea.smem %s0, 25
  %s51 = sld [smem:[%s50]]
  %s52 = scalar_lea.smem %s0, 26
  %s53 = sld [smem:[%s52]]
  %s54 = scalar_lea.smem %s0, 27
  %s55 = sld [smem:[%s54]]
  %s56 = scalar_lea.smem %s0, 28
  %s57 = sld [smem:[%s56]]
  %s58 = scalar_lea.smem %s0, 29
  %s59 = sld [smem:[%s58]]
  %s60 = scalar_lea.smem %s0, 30
  %s61 = sld [smem:[%s60]]
  %s62 = scalar_lea.smem %s0, 31
  %s63 = sld [smem:[%s62]]
  %s64 = scalar_lea.smem %s0, 32
  %s65 = sld [smem:[%s64]]
  %s66 = scalar_lea.smem %s0, 33
  %s67 = sld [smem:[%s66]]
  %s68 = scalar_lea.smem %s0, 34
  %s69 = sld [smem:[%s68]]
  %s70 = scalar_lea.smem %s0, 35
  %s71 = sld [smem:[%s70]]
  %72 = xla_tuple %s69, %s71
  %s73 = sld [smem:[#allocation0]]
  $region154: #{mask_decoder_forward.2} parent=0
    _
  %s75 = ssub.s32 1, %s73
  %s76 = scalar_select 0, %s75, %s73
  // Predicated region
  $region2: #{mask_decoder_forward.2} parent=0 // pred_check
    _
  $region3: #{mask_decoder_forward.2} parent=0 // pred_check_branch
    %78 = sbr.rel (0) target = $region5
  $region4: #{mask_decoder_forward.2} parent=0 // pred_region
    _
  $region5: #{mask_decoder_forward.2} parent=0 // pred_fallthru
    _
  // Predicated region
  $region6: #{mask_decoder_forward.2} parent=0 // pred_check
    _
  $region7: #{mask_decoder_forward.2} parent=0 // pred_check_branch
    %80 = sbr.rel (0) target = $region9
  $region8: #{mask_decoder_forward.2} parent=0 // pred_region
    _
  $region9: #{mask_decoder_forward.2} parent=0 // pred_fallthru
    _
  // Predicated region
  $region10: #{mask_decoder_forward.2} parent=0 // pred_check
    _
  $region11: #{mask_decoder_forward.2} parent=0 // pred_check_branch
    %82 = sbr.rel (0) target = $region13
  $region12: #{mask_decoder_forward.2} parent=0 // pred_region
    _
  $region13: #{mask_decoder_forward.2} parent=0 // pred_fallthru
    _
  // Predicated region
  $region14: #{mask_decoder_forward.2} parent=0 // pred_check
    _
  $region15: #{mask_decoder_forward.2} parent=0 // pred_check_branch
    %84 = sbr.rel (0) target = $region17
  $region16: #{mask_decoder_forward.2} parent=0 // pred_region
    _
  $region17: #{mask_decoder_forward.2} parent=0 // pred_fallthru
    _
  // Predicated region
  $region18: #{mask_decoder_forward.2} parent=0 // pred_check
    _
  $region19: #{mask_decoder_forward.2} parent=0 // pred_check_branch
    %86 = sbr.rel (0) target = $region21
  $region20: #{mask_decoder_forward.2} parent=0 // pred_region
    _
  $region21: #{mask_decoder_forward.2} parent=0 // pred_fallthru
    _
  // Predicated region
  $region22: #{mask_decoder_forward.2} parent=0 // pred_check
    _
  $region23: #{mask_decoder_forward.2} parent=0 // pred_check_branch
    %88 = sbr.rel (0) target = $region25
  $region24: #{mask_decoder_forward.2} parent=0 // pred_region
    _
  $region25: #{mask_decoder_forward.2} parent=0 // pred_fallthru
    _
  // Predicated region
  $region26: #{mask_decoder_forward.2} parent=0 // pred_check
    _
  $region27: #{mask_decoder_forward.2} parent=0 // pred_check_branch
    %90 = sbr.rel (0) target = $region29
  $region28: #{mask_decoder_forward.2} parent=0 // pred_region
    _
  $region29: #{mask_decoder_forward.2} parent=0 // pred_fallthru
    _
  // Predicated region
  $region30: #{mask_decoder_forward.2} parent=0 // pred_check
    _
  $region31: #{mask_decoder_forward.2} parent=0 // pred_check_branch
    %92 = sbr.rel (0) target = $region33
  $region32: #{mask_decoder_forward.2} parent=0 // pred_region
    _
  $region33: #{mask_decoder_forward.2} parent=0 // pred_fallthru
    _
  // Predicated region
  $region34: #{mask_decoder_forward.2} parent=0 // pred_check
    _
  $region35: #{mask_decoder_forward.2} parent=0 // pred_check_branch
    %94 = sbr.rel (0) target = $region37
  $region36: #{mask_decoder_forward.2} parent=0 // pred_region
    _
  $region37: #{mask_decoder_forward.2} parent=0 // pred_fallthru
    _
  // Predicated region
  $region38: #{mask_decoder_forward.2} parent=0 // pred_check
    _
  $region39: #{mask_decoder_forward.2} parent=0 // pred_check_branch
    %96 = sbr.rel (0) target = $region41
  $region40: #{mask_decoder_forward.2} parent=0 // pred_region
    _
  $region41: #{mask_decoder_forward.2} parent=0 // pred_fallthru
    _
  // Predicated region
  $region42: #{mask_decoder_forward.2} parent=0 // pred_check
    _
  $region43: #{mask_decoder_forward.2} parent=0 // pred_check_branch
    %98 = sbr.rel (0) target = $region45
  $region44: #{mask_decoder_forward.2} parent=0 // pred_region
    _
  $region45: #{mask_decoder_forward.2} parent=0 // pred_fallthru
    _
  // Predicated region
  $region46: #{mask_decoder_forward.2} parent=0 // pred_check
    _
  $region47: #{mask_decoder_forward.2} parent=0 // pred_check_branch
    %100 = sbr.rel (0) target = $region49
  $region48: #{mask_decoder_forward.2} parent=0 // pred_region
    _
  $region49: #{mask_decoder_forward.2} parent=0 // pred_fallthru
    _
  // Predicated region
  $region50: #{mask_decoder_forward.2} parent=0 // pred_check
    _
  $region51: #{mask_decoder_forward.2} parent=0 // pred_check_branch
    %102 = sbr.rel (0) target = $region53
  $region52: #{mask_decoder_forward.2} parent=0 // pred_region
    _
  $region53: #{mask_decoder_forward.2} parent=0 // pred_fallthru
    _
  // Predicated region
  $region54: #{mask_decoder_forward.2} parent=0 // pred_check
    _
  $region55: #{mask_decoder_forward.2} parent=0 // pred_check_branch
    %104 = sbr.rel (0) target = $region57
  $region56: #{mask_decoder_forward.2} parent=0 // pred_region
    _
  $region57: #{mask_decoder_forward.2} parent=0 // pred_fallthru
    _
  // Predicated region
  $region58: #{mask_decoder_forward.2} parent=0 // pred_check
    _
  $region59: #{mask_decoder_forward.2} parent=0 // pred_check_branch
    %106 = sbr.rel (0) target = $region61
  $region60: #{mask_decoder_forward.2} parent=0 // pred_region
    _
  $region61: #{mask_decoder_forward.2} parent=0 // pred_fallthru
    _
  // Predicated region
  $region62: #{mask_decoder_forward.2} parent=0 // pred_check
    _
  $region63: #{mask_decoder_forward.2} parent=0 // pred_check_branch
    %108 = sbr.rel (0) target = $region65
  $region64: #{mask_decoder_forward.2} parent=0 // pred_region
    _
  $region65: #{mask_decoder_forward.2} parent=0 // pred_fallthru
    _
  // Predicated region
  $region66: #{mask_decoder_forward.2} parent=0 // pred_check
    _
  $region67: #{mask_decoder_forward.2} parent=0 // pred_check_branch
    %110 = sbr.rel (0) target = $region69
  $region68: #{mask_decoder_forward.2} parent=0 // pred_region
    _
  $region69: #{mask_decoder_forward.2} parent=0 // pred_fallthru
    _
  // Predicated region
  $region70: #{mask_decoder_forward.2} parent=0 // pred_check
    _
  $region71: #{mask_decoder_forward.2} parent=0 // pred_check_branch
    %112 = sbr.rel (0) target = $region73
  $region72: #{mask_decoder_forward.2} parent=0 // pred_region
    _
  $region73: #{mask_decoder_forward.2} parent=0 // pred_fallthru
    _
  // Predicated region
  $region74: #{mask_decoder_forward.2} parent=0 // pred_check
    _
  $region75: #{mask_decoder_forward.2} parent=0 // pred_check_branch
    %114 = sbr.rel (0) target = $region77
  $region76: #{mask_decoder_forward.2} parent=0 // pred_region
    _
  $region77: #{mask_decoder_forward.2} parent=0 // pred_fallthru
    _
  // Predicated region
  $region78: #{mask_decoder_forward.2} parent=0 // pred_check
    _
  $region79: #{mask_decoder_forward.2} parent=0 // pred_check_branch
    %116 = sbr.rel (0) target = $region81
  $region80: #{mask_decoder_forward.2} parent=0 // pred_region
    _
  $region81: #{mask_decoder_forward.2} parent=0 // pred_fallthru
    _
  // Predicated region
  $region82: #{mask_decoder_forward.2} parent=0 // pred_check
    _
  $region83: #{mask_decoder_forward.2} parent=0 // pred_check_branch
    %118 = sbr.rel (0) target = $region85
  $region84: #{mask_decoder_forward.2} parent=0 // pred_region
    _
  $region85: #{mask_decoder_forward.2} parent=0 // pred_fallthru
    _
  // Predicated region
  $region86: #{mask_decoder_forward.2} parent=0 // pred_check
    _
  $region87: #{mask_decoder_forward.2} parent=0 // pred_check_branch
    %120 = sbr.rel (0) target = $region89
  $region88: #{mask_decoder_forward.2} parent=0 // pred_region
    _
  $region89: #{mask_decoder_forward.2} parent=0 // pred_fallthru
    _
  // Predicated region
  $region90: #{mask_decoder_forward.2} parent=0 // pred_check
    _
  $region91: #{mask_decoder_forward.2} parent=0 // pred_check_branch
    %122 = sbr.rel (0) target = $region93
  $region92: #{mask_decoder_forward.2} parent=0 // pred_region
    _
  $region93: #{mask_decoder_forward.2} parent=0 // pred_fallthru
    _
  // Predicated region
  $region94: #{mask_decoder_forward.2} parent=0 // pred_check
    _
  $region95: #{mask_decoder_forward.2} parent=0 // pred_check_branch
    %124 = sbr.rel (0) target = $region97
  $region96: #{mask_decoder_forward.2} parent=0 // pred_region
    _
  $region97: #{mask_decoder_forward.2} parent=0 // pred_fallthru
    _
  // Predicated region
  $region98: #{mask_decoder_forward.2} parent=0 // pred_check
    _
  $region99: #{mask_decoder_forward.2} parent=0 // pred_check_branch
    %126 = sbr.rel (0) target = $region101
  $region100: #{mask_decoder_forward.2} parent=0 // pred_region
    _
  $region101: #{mask_decoder_forward.2} parent=0 // pred_fallthru
    _
  // Predicated region
  $region102: #{mask_decoder_forward.2} parent=0 // pred_check
    _
  $region103: #{mask_decoder_forward.2} parent=0 // pred_check_branch
    %128 = sbr.rel (0) target = $region105
  $region104: #{mask_decoder_forward.2} parent=0 // pred_region
    _
  $region105: #{mask_decoder_forward.2} parent=0 // pred_fallthru
    _
  // Predicated region
  $region106: #{mask_decoder_forward.2} parent=0 // pred_check
    _
  $region107: #{mask_decoder_forward.2} parent=0 // pred_check_branch
    %130 = sbr.rel (0) target = $region109
  $region108: #{mask_decoder_forward.2} parent=0 // pred_region
    _
  $region109: #{mask_decoder_forward.2} parent=0 // pred_fallthru
    _
  // Predicated region
  $region110: #{mask_decoder_forward.2} parent=0 // pred_check
    _
  $region111: #{mask_decoder_forward.2} parent=0 // pred_check_branch
    %132 = sbr.rel (0) target = $region113
  $region112: #{mask_decoder_forward.2} parent=0 // pred_region
    _
  $region113: #{mask_decoder_forward.2} parent=0 // pred_fallthru
    _
  // Predicated region
  $region114: #{mask_decoder_forward.2} parent=0 // pred_check
    _
  $region115: #{mask_decoder_forward.2} parent=0 // pred_check_branch
    %134 = sbr.rel (0) target = $region117
  $region116: #{mask_decoder_forward.2} parent=0 // pred_region
    _
  $region117: #{mask_decoder_forward.2} parent=0 // pred_fallthru
    _
  // Predicated region
  $region118: #{mask_decoder_forward.2} parent=0 // pred_check
    _
  $region119: #{mask_decoder_forward.2} parent=0 // pred_check_branch
    %136 = sbr.rel (0) target = $region121
  $region120: #{mask_decoder_forward.2} parent=0 // pred_region
    _
  $region121: #{mask_decoder_forward.2} parent=0 // pred_fallthru
    _
  // Predicated region
  $region122: #{mask_decoder_forward.2} parent=0 // pred_check
    _
  $region123: #{mask_decoder_forward.2} parent=0 // pred_check_branch
    %138 = sbr.rel (0) target = $region125
  $region124: #{mask_decoder_forward.2} parent=0 // pred_region
    _
  $region125: #{mask_decoder_forward.2} parent=0 // pred_fallthru
    _
  // Predicated region
  $region126: #{mask_decoder_forward.2} parent=0 // pred_check
    _
  $region127: #{mask_decoder_forward.2} parent=0 // pred_check_branch
    %140 = sbr.rel (0) target = $region129
  $region128: #{mask_decoder_forward.2} parent=0 // pred_region
    _
  $region129: #{mask_decoder_forward.2} parent=0 // pred_fallthru
    _
  // Predicated region
  $region130: #{mask_decoder_forward.2} parent=0 // pred_check
    _
  $region131: #{mask_decoder_forward.2} parent=0 // pred_check_branch
    %142 = sbr.rel (0) target = $region133
  $region132: #{mask_decoder_forward.2} parent=0 // pred_region
    _
  $region133: #{mask_decoder_forward.2} parent=0 // pred_fallthru
    _
  // Predicated region
  $region134: #{mask_decoder_forward.2} parent=0 // pred_check
    _
  $region135: #{mask_decoder_forward.2} parent=0 // pred_check_branch
    %144 = sbr.rel (0) target = $region137
  $region136: #{mask_decoder_forward.2} parent=0 // pred_region
    _
  $region137: #{mask_decoder_forward.2} parent=0 // pred_fallthru
    _
  %v145 = vld [vmem:[%s1] sm:$0xff]
  %v146 = vld [vmem:[%s1 + $0x8] sm:$0xff]
  %v147 = vld [vmem:[%s1 + $0x10] sm:$0xff]
  %v148 = vld [vmem:[%s1 + $0x18] sm:$0xff]
  %v149 = vld [vmem:[%s1 + $0x20] sm:$0xff]
  %v150 = vld [vmem:[%s1 + $0x28] sm:$0xff]
  %v151 = vld [vmem:[%s1 + $0x30] sm:$0xff]
  %v152 = vld [vmem:[%s1 + $0x38] sm:$0xff]
  %v153 = vld [vmem:[%s1 + $0x40] sm:$0xff]
  %v154 = vld [vmem:[%s1 + $0x48] sm:$0xff]
  %v155 = vld [vmem:[%s1 + $0x50] sm:$0xff]
  %v156 = vld [vmem:[%s1 + $0x58] sm:$0xff]
  %v157 = vld [vmem:[%s1 + $0x60] sm:$0xff]
  %v158 = vld [vmem:[%s1 + $0x68] sm:$0xff]
  %v159 = vld [vmem:[%s1 + $0x70] sm:$0xff]
  %v160 = vld [vmem:[%s1 + $0x78] sm:$0xff]
  %v161 = vld [vmem:[%s9] sm:$0x1]
  %163 = vset.pattern.permute.xlu0 0
  %164 = vperm.xlu0 %163, %v145
  %v165 = vpop.permute.xlu0 %164
  %168 = vset.pattern.permute.xlu0 0
  %169 = vperm.xlu0 %168, %v146
  %v170 = vpop.permute.xlu0 %169
  %173 = vset.pattern.permute.xlu0 0
  %174 = vperm.xlu0 %173, %v147
  %v175 = vpop.permute.xlu0 %174
  %178 = vset.pattern.permute.xlu0 0
  %179 = vperm.xlu0 %178, %v148
  %v180 = vpop.permute.xlu0 %179
  %183 = vset.pattern.permute.xlu0 0
  %184 = vperm.xlu0 %183, %v149
  %v185 = vpop.permute.xlu0 %184
  %188 = vset.pattern.permute.xlu0 0
  %189 = vperm.xlu0 %188, %v150
  %v190 = vpop.permute.xlu0 %189
  %193 = vset.pattern.permute.xlu0 0
  %194 = vperm.xlu0 %193, %v151
  %v195 = vpop.permute.xlu0 %194
  %198 = vset.pattern.permute.xlu0 0
  %199 = vperm.xlu0 %198, %v152
  %v200 = vpop.permute.xlu0 %199
  %203 = vset.pattern.permute.xlu0 0
  %204 = vperm.xlu0 %203, %v153
  %v205 = vpop.permute.xlu0 %204
  %208 = vset.pattern.permute.xlu0 0
  %209 = vperm.xlu0 %208, %v154
  %v210 = vpop.permute.xlu0 %209
  %213 = vset.pattern.permute.xlu0 0
  %214 = vperm.xlu0 %213, %v155
  %v215 = vpop.permute.xlu0 %214
  %218 = vset.pattern.permute.xlu0 0
  %219 = vperm.xlu0 %218, %v156
  %v220 = vpop.permute.xlu0 %219
  %223 = vset.pattern.permute.xlu0 0
  %224 = vperm.xlu0 %223, %v157
  %v225 = vpop.permute.xlu0 %224
  %228 = vset.pattern.permute.xlu0 0
  %229 = vperm.xlu0 %228, %v158
  %v230 = vpop.permute.xlu0 %229
  %233 = vset.pattern.permute.xlu0 0
  %234 = vperm.xlu0 %233, %v159
  %v235 = vpop.permute.xlu0 %234
  %238 = vset.pattern.permute.xlu0 0
  %239 = vperm.xlu0 %238, %v160
  %v240 = vpop.permute.xlu0 %239
  %v243 = vlaneseq
  %v244 = vshrl.u32 %v243, 7
  %v245 = vsub.s32 0, %v244
  %v246 = vrot.slane %v161, %v245
  %v248 = vmul.f32 %v165, %v246
  %v249 = vmul.f32 %v170, %v246
  %v250 = vmul.f32 %v175, %v246
  %v251 = vmul.f32 %v180, %v246
  %v252 = vmul.f32 %v185, %v246
  %v253 = vmul.f32 %v190, %v246
  %v254 = vmul.f32 %v195, %v246
  %v255 = vmul.f32 %v200, %v246
  %v256 = vmul.f32 %v205, %v246
  %v257 = vmul.f32 %v210, %v246
  %v258 = vmul.f32 %v215, %v246
  %v259 = vmul.f32 %v220, %v246
  %v260 = vmul.f32 %v225, %v246
  %v261 = vmul.f32 %v230, %v246
  %v262 = vmul.f32 %v235, %v246
  %v263 = vmul.f32 %v240, %v246
  %v264 = vld [vmem:[%s11] sm:$0x1]
  %v266 = vlaneseq
  %v267 = vshrl.u32 %v266, 7
  %v268 = vsub.s32 0, %v267
  %v269 = vrot.slane %v264, %v268
  %v271 = vadd.f32 %v248, %v269
  %v272 = vadd.f32 %v249, %v269
  %v273 = vadd.f32 %v250, %v269
  %v274 = vadd.f32 %v251, %v269
  %v275 = vadd.f32 %v252, %v269
  %v276 = vadd.f32 %v253, %v269
  %v277 = vadd.f32 %v254, %v269
  %v278 = vadd.f32 %v255, %v269
  %v279 = vadd.f32 %v256, %v269
  %v280 = vadd.f32 %v257, %v269
  %v281 = vadd.f32 %v258, %v269
  %v282 = vadd.f32 %v259, %v269
  %v283 = vadd.f32 %v260, %v269
  %v284 = vadd.f32 %v261, %v269
  %v285 = vadd.f32 %v262, %v269
  %v286 = vadd.f32 %v263, %v269
  %vm287 = vcmask 261120
  %v288 = vsel %vm287, %v271, 0.0
  %289 = vadd.xlane.f32.xlu0 %v288
  %v290 = vpop.xlane.xlu0 %289
  %v291 = vsel %vm287, %v272, 0.0
  %292 = vadd.xlane.f32.xlu0 %v291
  %v293 = vpop.xlane.xlu0 %292
  %v294 = vsel %vm287, %v273, 0.0
  %295 = vadd.xlane.f32.xlu0 %v294
  %v296 = vpop.xlane.xlu0 %295
  %v297 = vsel %vm287, %v274, 0.0
  %298 = vadd.xlane.f32.xlu0 %v297
  %v299 = vpop.xlane.xlu0 %298
  %v300 = vsel %vm287, %v275, 0.0
  %301 = vadd.xlane.f32.xlu0 %v300
  %v302 = vpop.xlane.xlu0 %301
  %v303 = vsel %vm287, %v276, 0.0
  %304 = vadd.xlane.f32.xlu0 %v303
  %v305 = vpop.xlane.xlu0 %304
  %v306 = vsel %vm287, %v277, 0.0
  %307 = vadd.xlane.f32.xlu0 %v306
  %v308 = vpop.xlane.xlu0 %307
  %v309 = vsel %vm287, %v278, 0.0
  %310 = vadd.xlane.f32.xlu0 %v309
  %v311 = vpop.xlane.xlu0 %310
  %v312 = vsel %vm287, %v279, 0.0
  %313 = vadd.xlane.f32.xlu0 %v312
  %v314 = vpop.xlane.xlu0 %313
  %v315 = vsel %vm287, %v280, 0.0
  %316 = vadd.xlane.f32.xlu0 %v315
  %v317 = vpop.xlane.xlu0 %316
  %v318 = vsel %vm287, %v281, 0.0
  %319 = vadd.xlane.f32.xlu0 %v318
  %v320 = vpop.xlane.xlu0 %319
  %v321 = vsel %vm287, %v282, 0.0
  %322 = vadd.xlane.f32.xlu0 %v321
  %v323 = vpop.xlane.xlu0 %322
  %v324 = vsel %vm287, %v283, 0.0
  %325 = vadd.xlane.f32.xlu0 %v324
  %v326 = vpop.xlane.xlu0 %325
  %v327 = vsel %vm287, %v284, 0.0
  %328 = vadd.xlane.f32.xlu0 %v327
  %v329 = vpop.xlane.xlu0 %328
  %v330 = vsel %vm287, %v285, 0.0
  %331 = vadd.xlane.f32.xlu0 %v330
  %v332 = vpop.xlane.xlu0 %331
  %v333 = vsel %vm287, %v286, 0.0
  %334 = vadd.xlane.f32.xlu0 %v333
  %v335 = vpop.xlane.xlu0 %334
  %v336 = vrcp.pop 32.0
  %v337 = vmul.f32 %v290, %v336
  %v338 = vmul.f32 %v293, %v336
  %v339 = vmul.f32 %v296, %v336
  %v340 = vmul.f32 %v299, %v336
  %v341 = vmul.f32 %v302, %v336
  %v342 = vmul.f32 %v305, %v336
  %v343 = vmul.f32 %v308, %v336
  %v344 = vmul.f32 %v311, %v336
  %v345 = vmul.f32 %v314, %v336
  %v346 = vmul.f32 %v317, %v336
  %v347 = vmul.f32 %v320, %v336
  %v348 = vmul.f32 %v323, %v336
  %v349 = vmul.f32 %v326, %v336
  %v350 = vmul.f32 %v329, %v336
  %v351 = vmul.f32 %v332, %v336
  %v352 = vmul.f32 %v335, %v336
  %v353 = vsub.f32 %v271, %v337
  %v354 = vsub.f32 %v272, %v338
  %v355 = vsub.f32 %v273, %v339
  %v356 = vsub.f32 %v274, %v340
  %v357 = vsub.f32 %v275, %v341
  %v358 = vsub.f32 %v276, %v342
  %v359 = vsub.f32 %v277, %v343
  %v360 = vsub.f32 %v278, %v344
  %v361 = vsub.f32 %v279, %v345
  %v362 = vsub.f32 %v280, %v346
  %v363 = vsub.f32 %v281, %v347
  %v364 = vsub.f32 %v282, %v348
  %v365 = vsub.f32 %v283, %v349
  %v366 = vsub.f32 %v284, %v350
  %v367 = vsub.f32 %v285, %v351
  %v368 = vsub.f32 %v286, %v352
  %v369 = vmul.f32 %v353, %v353
  %v370 = vmul.f32 %v354, %v354
  %v371 = vmul.f32 %v355, %v355
  %v372 = vmul.f32 %v356, %v356
  %v373 = vmul.f32 %v357, %v357
  %v374 = vmul.f32 %v358, %v358
  %v375 = vmul.f32 %v359, %v359
  %v376 = vmul.f32 %v360, %v360
  %v377 = vmul.f32 %v361, %v361
  %v378 = vmul.f32 %v362, %v362
  %v379 = vmul.f32 %v363, %v363
  %v380 = vmul.f32 %v364, %v364
  %v381 = vmul.f32 %v365, %v365
  %v382 = vmul.f32 %v366, %v366
  %v383 = vmul.f32 %v367, %v367
  %v384 = vmul.f32 %v368, %v368
  %v385 = vsel %vm287, %v369, 0.0
  %386 = vadd.xlane.f32.xlu0 %v385
  %v387 = vpop.xlane.xlu0 %386
  %v388 = vsel %vm287, %v370, 0.0
  %389 = vadd.xlane.f32.xlu0 %v388
  %v390 = vpop.xlane.xlu0 %389
  %v391 = vsel %vm287, %v371, 0.0
  %392 = vadd.xlane.f32.xlu0 %v391
  %v393 = vpop.xlane.xlu0 %392
  %v394 = vsel %vm287, %v372, 0.0
  %395 = vadd.xlane.f32.xlu0 %v394
  %v396 = vpop.xlane.xlu0 %395
  %v397 = vsel %vm287, %v373, 0.0
  %398 = vadd.xlane.f32.xlu0 %v397
  %v399 = vpop.xlane.xlu0 %398
  %v400 = vsel %vm287, %v374, 0.0
  %401 = vadd.xlane.f32.xlu0 %v400
  %v402 = vpop.xlane.xlu0 %401
  %v403 = vsel %vm287, %v375, 0.0
  %404 = vadd.xlane.f32.xlu0 %v403
  %v405 = vpop.xlane.xlu0 %404
  %v406 = vsel %vm287, %v376, 0.0
  %407 = vadd.xlane.f32.xlu0 %v406
  %v408 = vpop.xlane.xlu0 %407
  %v409 = vsel %vm287, %v377, 0.0
  %410 = vadd.xlane.f32.xlu0 %v409
  %v411 = vpop.xlane.xlu0 %410
  %v412 = vsel %vm287, %v378, 0.0
  %413 = vadd.xlane.f32.xlu0 %v412
  %v414 = vpop.xlane.xlu0 %413
  %v415 = vsel %vm287, %v379, 0.0
  %416 = vadd.xlane.f32.xlu0 %v415
  %v417 = vpop.xlane.xlu0 %416
  %v418 = vsel %vm287, %v380, 0.0
  %419 = vadd.xlane.f32.xlu0 %v418
  %v420 = vpop.xlane.xlu0 %419
  %v421 = vsel %vm287, %v381, 0.0
  %422 = vadd.xlane.f32.xlu0 %v421
  %v423 = vpop.xlane.xlu0 %422
  %v424 = vsel %vm287, %v382, 0.0
  %425 = vadd.xlane.f32.xlu0 %v424
  %v426 = vpop.xlane.xlu0 %425
  %v427 = vsel %vm287, %v383, 0.0
  %428 = vadd.xlane.f32.xlu0 %v427
  %v429 = vpop.xlane.xlu0 %428
  %v430 = vsel %vm287, %v384, 0.0
  %431 = vadd.xlane.f32.xlu0 %v430
  %v432 = vpop.xlane.xlu0 %431
  %v433 = vmul.f32 %v387, %v336
  %v434 = vmul.f32 %v390, %v336
  %v435 = vmul.f32 %v393, %v336
  %v436 = vmul.f32 %v396, %v336
  %v437 = vmul.f32 %v399, %v336
  %v438 = vmul.f32 %v402, %v336
  %v439 = vmul.f32 %v405, %v336
  %v440 = vmul.f32 %v408, %v336
  %v441 = vmul.f32 %v411, %v336
  %v442 = vmul.f32 %v414, %v336
  %v443 = vmul.f32 %v417, %v336
  %v444 = vmul.f32 %v420, %v336
  %v445 = vmul.f32 %v423, %v336
  %v446 = vmul.f32 %v426, %v336
  %v447 = vmul.f32 %v429, %v336
  %v448 = vmul.f32 %v432, %v336
  %v449 = vadd.f32 %v433, 1e-06
  %v450 = vadd.f32 %v434, 1e-06
  %v451 = vadd.f32 %v435, 1e-06
  %v452 = vadd.f32 %v436, 1e-06
  %v453 = vadd.f32 %v437, 1e-06
  %v454 = vadd.f32 %v438, 1e-06
  %v455 = vadd.f32 %v439, 1e-06
  %v456 = vadd.f32 %v440, 1e-06
  %v457 = vadd.f32 %v441, 1e-06
  %v458 = vadd.f32 %v442, 1e-06
  %v459 = vadd.f32 %v443, 1e-06
  %v460 = vadd.f32 %v444, 1e-06
  %v461 = vadd.f32 %v445, 1e-06
  %v462 = vadd.f32 %v446, 1e-06
  %v463 = vadd.f32 %v447, 1e-06
  %v464 = vadd.f32 %v448, 1e-06
  %v465 = vrsqrt.pop %v449
  %v466 = vrsqrt.pop %v450
  %v467 = vrsqrt.pop %v451
  %v468 = vrsqrt.pop %v452
  %v469 = vrsqrt.pop %v453
  %v470 = vrsqrt.pop %v454
  %v471 = vrsqrt.pop %v455
  %v472 = vrsqrt.pop %v456
  %v473 = vrsqrt.pop %v457
  %v474 = vrsqrt.pop %v458
  %v475 = vrsqrt.pop %v459
  %v476 = vrsqrt.pop %v460
  %v477 = vrsqrt.pop %v461
  %v478 = vrsqrt.pop %v462
  %v479 = vrsqrt.pop %v463
  %v480 = vrsqrt.pop %v464
  %v481 = vmul.f32 %v353, %v465
  %v482 = vmul.f32 %v354, %v466
  %v483 = vmul.f32 %v355, %v467
  %v484 = vmul.f32 %v356, %v468
  %v485 = vmul.f32 %v357, %v469
  %v486 = vmul.f32 %v358, %v470
  %v487 = vmul.f32 %v359, %v471
  %v488 = vmul.f32 %v360, %v472
  %v489 = vmul.f32 %v361, %v473
  %v490 = vmul.f32 %v362, %v474
  %v491 = vmul.f32 %v363, %v475
  %v492 = vmul.f32 %v364, %v476
  %v493 = vmul.f32 %v365, %v477
  %v494 = vmul.f32 %v366, %v478
  %v495 = vmul.f32 %v367, %v479
  %v496 = vmul.f32 %v368, %v480
  %v497 = vld [vmem:[%s13] sm:$0x1]
  %v499 = vlaneseq
  %v500 = vshrl.u32 %v499, 7
  %v501 = vsub.s32 0, %v500
  %v502 = vrot.slane %v497, %v501
  %v504 = vmul.f32 %v481, %v502
  %v505 = vmul.f32 %v482, %v502
  %v506 = vmul.f32 %v483, %v502
  %v507 = vmul.f32 %v484, %v502
  %v508 = vmul.f32 %v485, %v502
  %v509 = vmul.f32 %v486, %v502
  %v510 = vmul.f32 %v487, %v502
  %v511 = vmul.f32 %v488, %v502
  %v512 = vmul.f32 %v489, %v502
  %v513 = vmul.f32 %v490, %v502
  %v514 = vmul.f32 %v491, %v502
  %v515 = vmul.f32 %v492, %v502
  %v516 = vmul.f32 %v493, %v502
  %v517 = vmul.f32 %v494, %v502
  %v518 = vmul.f32 %v495, %v502
  %v519 = vmul.f32 %v496, %v502
  %v520 = vld [vmem:[%s15] sm:$0x1]
  %v522 = vlaneseq
  %v523 = vshrl.u32 %v522, 7
  %v524 = vsub.s32 0, %v523
  %v525 = vrot.slane %v520, %v524
  %v527 = vadd.f32 %v504, %v525
  %v528 = vadd.f32 %v505, %v525
  %v529 = vadd.f32 %v506, %v525
  %v530 = vadd.f32 %v507, %v525
  %v531 = vadd.f32 %v508, %v525
  %v532 = vadd.f32 %v509, %v525
  %v533 = vadd.f32 %v510, %v525
  %v534 = vadd.f32 %v511, %v525
  %v535 = vadd.f32 %v512, %v525
  %v536 = vadd.f32 %v513, %v525
  %v537 = vadd.f32 %v514, %v525
  %v538 = vadd.f32 %v515, %v525
  %v539 = vadd.f32 %v516, %v525
  %v540 = vadd.f32 %v517, %v525
  %v541 = vadd.f32 %v518, %v525
  %v542 = vadd.f32 %v519, %v525
  %v543 = vmul.f32 %v527, 0.5
  %v544 = vmul.f32 %v528, 0.5
  %v545 = vmul.f32 %v529, 0.5
  %v546 = vmul.f32 %v530, 0.5
  %v547 = vmul.f32 %v531, 0.5
  %v548 = vmul.f32 %v532, 0.5
  %v549 = vmul.f32 %v533, 0.5
  %v550 = vmul.f32 %v534, 0.5
  %v551 = vmul.f32 %v535, 0.5
  %v552 = vmul.f32 %v536, 0.5
  %v553 = vmul.f32 %v537, 0.5
  %v554 = vmul.f32 %v538, 0.5
  %v555 = vmul.f32 %v539, 0.5
  %v556 = vmul.f32 %v540, 0.5
  %v557 = vmul.f32 %v541, 0.5
  %v558 = vmul.f32 %v542, 0.5
  %v559 = vmul.f32 %v527, 0.044715
  %v560 = vmul.f32 %v528, 0.044715
  %v561 = vmul.f32 %v529, 0.044715
  %v562 = vmul.f32 %v530, 0.044715
  %v563 = vmul.f32 %v531, 0.044715
  %v564 = vmul.f32 %v532, 0.044715
  %v565 = vmul.f32 %v533, 0.044715
  %v566 = vmul.f32 %v534, 0.044715
  %v567 = vmul.f32 %v535, 0.044715
  %v568 = vmul.f32 %v536, 0.044715
  %v569 = vmul.f32 %v537, 0.044715
  %v570 = vmul.f32 %v538, 0.044715
  %v571 = vmul.f32 %v539, 0.044715
  %v572 = vmul.f32 %v540, 0.044715
  %v573 = vmul.f32 %v541, 0.044715
  %v574 = vmul.f32 %v542, 0.044715
  %v575 = vmul.f32 %v559, %v527
  %v576 = vmul.f32 %v560, %v528
  %v577 = vmul.f32 %v561, %v529
  %v578 = vmul.f32 %v562, %v530
  %v579 = vmul.f32 %v563, %v531
  %v580 = vmul.f32 %v564, %v532
  %v581 = vmul.f32 %v565, %v533
  %v582 = vmul.f32 %v566, %v534
  %v583 = vmul.f32 %v567, %v535
  %v584 = vmul.f32 %v568, %v536
  %v585 = vmul.f32 %v569, %v537
  %v586 = vmul.f32 %v570, %v538
  %v587 = vmul.f32 %v571, %v539
  %v588 = vmul.f32 %v572, %v540
  %v589 = vmul.f32 %v573, %v541
  %v590 = vmul.f32 %v574, %v542
  %v591 = vmul.f32 %v575, %v527
  %v592 = vmul.f32 %v576, %v528
  %v593 = vmul.f32 %v577, %v529
  %v594 = vmul.f32 %v578, %v530
  %v595 = vmul.f32 %v579, %v531
  %v596 = vmul.f32 %v580, %v532
  %v597 = vmul.f32 %v581, %v533
  %v598 = vmul.f32 %v582, %v534
  %v599 = vmul.f32 %v583, %v535
  %v600 = vmul.f32 %v584, %v536
  %v601 = vmul.f32 %v585, %v537
  %v602 = vmul.f32 %v586, %v538
  %v603 = vmul.f32 %v587, %v539
  %v604 = vmul.f32 %v588, %v540
  %v605 = vmul.f32 %v589, %v541
  %v606 = vmul.f32 %v590, %v542
  %v607 = vadd.f32 %v527, %v591
  %v608 = vadd.f32 %v528, %v592
  %v609 = vadd.f32 %v529, %v593
  %v610 = vadd.f32 %v530, %v594
  %v611 = vadd.f32 %v531, %v595
  %v612 = vadd.f32 %v532, %v596
  %v613 = vadd.f32 %v533, %v597
  %v614 = vadd.f32 %v534, %v598
  %v615 = vadd.f32 %v535, %v599
  %v616 = vadd.f32 %v536, %v600
  %v617 = vadd.f32 %v537, %v601
  %v618 = vadd.f32 %v538, %v602
  %v619 = vadd.f32 %v539, %v603
  %v620 = vadd.f32 %v540, %v604
  %v621 = vadd.f32 %v541, %v605
  %v622 = vadd.f32 %v542, %v606
  %v623 = vmul.f32 %v607, 0.7978846
  %v624 = vmul.f32 %v608, 0.7978846
  %v625 = vmul.f32 %v609, 0.7978846
  %v626 = vmul.f32 %v610, 0.7978846
  %v627 = vmul.f32 %v611, 0.7978846
  %v628 = vmul.f32 %v612, 0.7978846
  %v629 = vmul.f32 %v613, 0.7978846
  %v630 = vmul.f32 %v614, 0.7978846
  %v631 = vmul.f32 %v615, 0.7978846
  %v632 = vmul.f32 %v616, 0.7978846
  %v633 = vmul.f32 %v617, 0.7978846
  %v634 = vmul.f32 %v618, 0.7978846
  %v635 = vmul.f32 %v619, 0.7978846
  %v636 = vmul.f32 %v620, 0.7978846
  %v637 = vmul.f32 %v621, 0.7978846
  %v638 = vmul.f32 %v622, 0.7978846
  %v639 = vtanh.pop %v623
  %v640 = vtanh.pop %v624
  %v641 = vtanh.pop %v625
  %v642 = vtanh.pop %v626
  %v643 = vtanh.pop %v627
  %v644 = vtanh.pop %v628
  %v645 = vtanh.pop %v629
  %v646 = vtanh.pop %v630
  %v647 = vtanh.pop %v631
  %v648 = vtanh.pop %v632
  %v649 = vtanh.pop %v633
  %v650 = vtanh.pop %v634
  %v651 = vtanh.pop %v635
  %v652 = vtanh.pop %v636
  %v653 = vtanh.pop %v637
  %v654 = vtanh.pop %v638
  %v655 = vadd.f32 %v639, 1.0
  %v656 = vadd.f32 %v640, 1.0
  %v657 = vadd.f32 %v641, 1.0
  %v658 = vadd.f32 %v642, 1.0
  %v659 = vadd.f32 %v643, 1.0
  %v660 = vadd.f32 %v644, 1.0
  %v661 = vadd.f32 %v645, 1.0
  %v662 = vadd.f32 %v646, 1.0
  %v663 = vadd.f32 %v647, 1.0
  %v664 = vadd.f32 %v648, 1.0
  %v665 = vadd.f32 %v649, 1.0
  %v666 = vadd.f32 %v650, 1.0
  %v667 = vadd.f32 %v651, 1.0
  %v668 = vadd.f32 %v652, 1.0
  %v669 = vadd.f32 %v653, 1.0
  %v670 = vadd.f32 %v654, 1.0
  %v671 = vmul.f32 %v543, %v655
  %v672 = vmul.f32 %v544, %v656
  %v673 = vmul.f32 %v545, %v657
  %v674 = vmul.f32 %v546, %v658
  %v675 = vmul.f32 %v547, %v659
  %v676 = vmul.f32 %v548, %v660
  %v677 = vmul.f32 %v549, %v661
  %v678 = vmul.f32 %v550, %v662
  %v679 = vmul.f32 %v551, %v663
  %v680 = vmul.f32 %v552, %v664
  %v681 = vmul.f32 %v553, %v665
  %v682 = vmul.f32 %v554, %v666
  %v683 = vmul.f32 %v555, %v667
  %v684 = vmul.f32 %v556, %v668
  %v685 = vmul.f32 %v557, %v669
  %v686 = vmul.f32 %v558, %v670
  %v687 = vld [vmem:[%s3] sm:$0xff]
  %v688 = vld [vmem:[%s3 + $0x8] sm:$0xff]
  %v689 = vld [vmem:[%s3 + $0x10] sm:$0xff]
  %v690 = vld [vmem:[%s3 + $0x18] sm:$0xff]
  %v691 = vld [vmem:[%s3 + $0x20] sm:$0xff]
  %v692 = vld [vmem:[%s3 + $0x28] sm:$0xff]
  %v693 = vld [vmem:[%s3 + $0x30] sm:$0xff]
  %v694 = vld [vmem:[%s3 + $0x38] sm:$0xff]
  %v695 = vld [vmem:[%s3 + $0x40] sm:$0xff]
  %v696 = vld [vmem:[%s3 + $0x48] sm:$0xff]
  %v697 = vld [vmem:[%s3 + $0x50] sm:$0xff]
  %v698 = vld [vmem:[%s3 + $0x58] sm:$0xff]
  %v699 = vld [vmem:[%s3 + $0x60] sm:$0xff]
  %v700 = vld [vmem:[%s3 + $0x68] sm:$0xff]
  %v701 = vld [vmem:[%s3 + $0x70] sm:$0xff]
  %v702 = vld [vmem:[%s3 + $0x78] sm:$0xff]
  %v703 = vadd.f32 %v671, %v687
  %v704 = vadd.f32 %v672, %v688
  %v705 = vadd.f32 %v673, %v689
  %v706 = vadd.f32 %v674, %v690
  %v707 = vadd.f32 %v675, %v691
  %v708 = vadd.f32 %v676, %v692
  %v709 = vadd.f32 %v677, %v693
  %v710 = vadd.f32 %v678, %v694
  %v711 = vadd.f32 %v679, %v695
  %v712 = vadd.f32 %v680, %v696
  %v713 = vadd.f32 %v681, %v697
  %v714 = vadd.f32 %v682, %v698
  %v715 = vadd.f32 %v683, %v699
  %v716 = vadd.f32 %v684, %v700
  %v717 = vadd.f32 %v685, %v701
  %v718 = vadd.f32 %v686, %v702
  %v719 = vld [vmem:[%s5] sm:$0xff]
  %v720 = vld [vmem:[%s5 + $0x8] sm:$0xff]
  %v721 = vld [vmem:[%s5 + $0x10] sm:$0xff]
  %v722 = vld [vmem:[%s5 + $0x18] sm:$0xff]
  %v723 = vld [vmem:[%s5 + $0x20] sm:$0xff]
  %v724 = vld [vmem:[%s5 + $0x28] sm:$0xff]
  %v725 = vld [vmem:[%s5 + $0x30] sm:$0xff]
  %v726 = vld [vmem:[%s5 + $0x38] sm:$0xff]
  %v727 = vld [vmem:[%s5 + $0x40] sm:$0xff]
  %v728 = vld [vmem:[%s5 + $0x48] sm:$0xff]
  %v729 = vld [vmem:[%s5 + $0x50] sm:$0xff]
  %v730 = vld [vmem:[%s5 + $0x58] sm:$0xff]
  %v731 = vld [vmem:[%s5 + $0x60] sm:$0xff]
  %v732 = vld [vmem:[%s5 + $0x68] sm:$0xff]
  %v733 = vld [vmem:[%s5 + $0x70] sm:$0xff]
  %v734 = vld [vmem:[%s5 + $0x78] sm:$0xff]
  %v735 = vadd.f32 %v703, %v719
  %v736 = vadd.f32 %v704, %v720
  %v737 = vadd.f32 %v705, %v721
  %v738 = vadd.f32 %v706, %v722
  %v739 = vadd.f32 %v707, %v723
  %v740 = vadd.f32 %v708, %v724
  %v741 = vadd.f32 %v709, %v725
  %v742 = vadd.f32 %v710, %v726
  %v743 = vadd.f32 %v711, %v727
  %v744 = vadd.f32 %v712, %v728
  %v745 = vadd.f32 %v713, %v729
  %v746 = vadd.f32 %v714, %v730
  %v747 = vadd.f32 %v715, %v731
  %v748 = vadd.f32 %v716, %v732
  %v749 = vadd.f32 %v717, %v733
  %v750 = vadd.f32 %v718, %v734
  %v751 = vld [vmem:[%s21] sm:$0xff]
  %v752 = vld [vmem:[%s21 + $0x8] sm:$0xff]
  %v753 = vld [vmem:[%s21 + $0x10] sm:$0xff]
  %v754 = vld [vmem:[%s21 + $0x18] sm:$0xff]
  %v755 = vld [vmem:[%s23] sm:$0x1]
  %v757 = vlaneseq
  %v758 = vshrl.u32 %v757, 7
  %v759 = vsub.s32 0, %v758
  %v760 = vrot.slane %v755, %v759
  %v763 = vsel %vm287, %v735, 0
  %v766 = vsel %vm287, %v736, 0
  %v769 = vsel %vm287, %v737, 0
  %v772 = vsel %vm287, %v738, 0
  %v775 = vsel %vm287, %v739, 0
  %v778 = vsel %vm287, %v740, 0
  %v781 = vsel %vm287, %v741, 0
  %v784 = vsel %vm287, %v742, 0
  %v787 = vsel %vm287, %v743, 0
  %v790 = vsel %vm287, %v744, 0
  %v793 = vsel %vm287, %v745, 0
  %v796 = vsel %vm287, %v746, 0
  %v799 = vsel %vm287, %v747, 0
  %v802 = vsel %vm287, %v748, 0
  %v805 = vsel %vm287, %v749, 0
  %v808 = vsel %vm287, %v750, 0
  %810 = vmatprep.subr.mxu0 0.0
  %811 = vmatpush1.msra.mxu0 0.0
  %812 = vmatprep.subr.mxu0 0.0
  %813 = vmatpush1.msra.mxu0 0.0
  %814 = vmatprep.subr.mxu0 0.0
  %815 = vmatpush1.msra.mxu0 0.0
  %816 = vmatprep.subr.mxu0 0.0
  %817 = vmatpush1.msra.mxu0 0.0
  %818 = vmatprep.subr.mxu0 0.0
  %819 = vmatpush1.msra.mxu0 0.0
  %820 = vmatprep.subr.mxu0 0.0
  %821 = vmatpush1.msra.mxu0 0.0
  %822 = vmatprep.subr.mxu0 0.0
  %823 = vmatpush1.msra.mxu0 0.0
  %824 = vmatprep.subr.mxu0 0.0
  %825 = vmatpush1.msra.mxu0 0.0
  %826 = vmatprep.subr.mxu0 0.0
  %827 = vmatpush1.msra.mxu0 0.0
  %828 = vmatprep.subr.mxu0 0.0
  %829 = vmatpush1.msra.mxu0 0.0
  %830 = vmatprep.subr.mxu0 0.0
  %831 = vmatpush1.msra.mxu0 0.0
  %832 = vmatprep.subr.mxu0 0.0
  %833 = vmatpush1.msra.mxu0 0.0
  %834 = vmatprep.subr.mxu0 0.0
  %835 = vmatpush1.msra.mxu0 %v754
  %836 = vmatprep.subr.mxu0 0.0
  %837 = vmatpush1.msra.mxu0 %v753
  %838 = vmatprep.subr.mxu0 0.0
  %839 = vmatpush1.msra.mxu0 %v752
  %840 = vmatprep.subr.mxu0 0.0
  %841 = vmatpush1.msra.mxu0 %v751
  %842 = vmatprep.subr.mxu0 0.0
  %843 = vmatpush2.msra.mxu0 0.0
  %844 = vmatprep.subr.mxu0 0.0
  %845 = vmatpush2.msra.mxu0 0.0
  %846 = vmatprep.subr.mxu0 0.0
  %847 = vmatpush2.msra.mxu0 0.0
  %848 = vmatprep.subr.mxu0 0.0
  %849 = vmatpush2.msra.mxu0 0.0
  %850 = vmatprep.subr.mxu0 0.0
  %851 = vmatpush2.msra.mxu0 0.0
  %852 = vmatprep.subr.mxu0 0.0
  %853 = vmatpush2.msra.mxu0 0.0
  %854 = vmatprep.subr.mxu0 0.0
  %855 = vmatpush2.msra.mxu0 0.0
  %856 = vmatprep.subr.mxu0 0.0
  %857 = vmatpush2.msra.mxu0 0.0
  %858 = vmatprep.subr.mxu0 0.0
  %859 = vmatpush2.msra.mxu0 0.0
  %860 = vmatprep.subr.mxu0 0.0
  %861 = vmatpush2.msra.mxu0 0.0
  %862 = vmatprep.subr.mxu0 0.0
  %863 = vmatpush2.msra.mxu0 0.0
  %864 = vmatprep.subr.mxu0 0.0
  %865 = vmatpush2.msra.mxu0 0.0
  %866 = vmatprep.subr.mxu0 0.0
  %867 = vmatpush2.msra.mxu0 0.0
  %868 = vmatprep.subr.mxu0 0.0
  %869 = vmatpush2.msra.mxu0 0.0
  %870 = vmatprep.subr.mxu0 0.0
  %871 = vmatpush2.msra.mxu0 0.0
  %872 = vmatprep.subr.mxu0 0.0
  %873 = vmatpush2.msra.mxu0 0.0
  %874 = vmatprep.mubr.f32.mxu0 0.0
  %875 = vmatmul.mubr.f32.gmra.mxu0 %v763
  %v876 = vpop.f32.mrf.mxu0
  %v877 = vadd.f32 %v760, %v876
  %v878 = vpop.f32.mrf.mxu0
  %879 = vmatprep.mubr.f32.mxu0 0.0
  %880 = vmatmul.mubr.f32.gmra.mxu0 %v766
  %v881 = vpop.f32.mrf.mxu0
  %v882 = vadd.f32 %v760, %v881
  %v883 = vpop.f32.mrf.mxu0
  %884 = vmatprep.mubr.f32.mxu0 0.0
  %885 = vmatmul.mubr.f32.gmra.mxu0 %v769
  %v886 = vpop.f32.mrf.mxu0
  %v887 = vadd.f32 %v760, %v886
  %v888 = vpop.f32.mrf.mxu0
  %889 = vmatprep.mubr.f32.mxu0 0.0
  %890 = vmatmul.mubr.f32.gmra.mxu0 %v772
  %v891 = vpop.f32.mrf.mxu0
  %v892 = vadd.f32 %v760, %v891
  %v893 = vpop.f32.mrf.mxu0
  %894 = vmatprep.mubr.f32.mxu0 0.0
  %895 = vmatmul.mubr.f32.gmra.mxu0 %v775
  %v896 = vpop.f32.mrf.mxu0
  %v897 = vadd.f32 %v760, %v896
  %v898 = vpop.f32.mrf.mxu0
  %899 = vmatprep.mubr.f32.mxu0 0.0
  %900 = vmatmul.mubr.f32.gmra.mxu0 %v778
  %v901 = vpop.f32.mrf.mxu0
  %v902 = vadd.f32 %v760, %v901
  %v903 = vpop.f32.mrf.mxu0
  %904 = vmatprep.mubr.f32.mxu0 0.0
  %905 = vmatmul.mubr.f32.gmra.mxu0 %v781
  %v906 = vpop.f32.mrf.mxu0
  %v907 = vadd.f32 %v760, %v906
  %v908 = vpop.f32.mrf.mxu0
  %909 = vmatprep.mubr.f32.mxu0 0.0
  %910 = vmatmul.mubr.f32.gmra.mxu0 %v784
  %v911 = vpop.f32.mrf.mxu0
  %v912 = vadd.f32 %v760, %v911
  %v913 = vpop.f32.mrf.mxu0
  %914 = vmatprep.mubr.f32.mxu0 0.0
  %915 = vmatmul.mubr.f32.gmra.mxu0 %v787
  %v916 = vpop.f32.mrf.mxu0
  %v917 = vadd.f32 %v760, %v916
  %v918 = vpop.f32.mrf.mxu0
  %919 = vmatprep.mubr.f32.mxu0 0.0
  %920 = vmatmul.mubr.f32.gmra.mxu0 %v790
  %v921 = vpop.f32.mrf.mxu0
  %v922 = vadd.f32 %v760, %v921
  %v923 = vpop.f32.mrf.mxu0
  %924 = vmatprep.mubr.f32.mxu0 0.0
  %925 = vmatmul.mubr.f32.gmra.mxu0 %v793
  %v926 = vpop.f32.mrf.mxu0
  %v927 = vadd.f32 %v760, %v926
  %v928 = vpop.f32.mrf.mxu0
  %929 = vmatprep.mubr.f32.mxu0 0.0
  %930 = vmatmul.mubr.f32.gmra.mxu0 %v796
  %v931 = vpop.f32.mrf.mxu0
  %v932 = vadd.f32 %v760, %v931
  %v933 = vpop.f32.mrf.mxu0
  %934 = vmatprep.mubr.f32.mxu0 0.0
  %935 = vmatmul.mubr.f32.gmra.mxu0 %v799
  %v936 = vpop.f32.mrf.mxu0
  %v937 = vadd.f32 %v760, %v936
  %v938 = vpop.f32.mrf.mxu0
  %939 = vmatprep.mubr.f32.mxu0 0.0
  %940 = vmatmul.mubr.f32.gmra.mxu0 %v802
  %v941 = vpop.f32.mrf.mxu0
  %v942 = vadd.f32 %v760, %v941
  %v943 = vpop.f32.mrf.mxu0
  %944 = vmatprep.mubr.f32.mxu0 0.0
  %945 = vmatmul.mubr.f32.gmra.mxu0 %v805
  %v946 = vpop.f32.mrf.mxu0
  %v947 = vadd.f32 %v760, %v946
  %v948 = vpop.f32.mrf.mxu0
  %949 = vmatprep.mubr.f32.mxu0 0.0
  %950 = vmatmul.mubr.f32.gmra.mxu0 %v808
  %v951 = vpop.f32.mrf.mxu0
  %v952 = vadd.f32 %v760, %v951
  %v953 = vpop.f32.mrf.mxu0
  %954 = vdwg.mxu0
  %v955 = vld [vmem:[%s25] sm:$0xff]
  %v956 = vld [vmem:[%s25 + $0x8] sm:$0xff]
  %v957 = vld [vmem:[%s25 + $0x10] sm:$0xff]
  %v958 = vld [vmem:[%s25 + $0x18] sm:$0xff]
  %v959 = vld [vmem:[%s27] sm:$0x1]
  %v961 = vlaneseq
  %v962 = vshrl.u32 %v961, 7
  %v963 = vsub.s32 0, %v962
  %v964 = vrot.slane %v959, %v963
  %v967 = vsel %vm287, %v703, 0
  %v970 = vsel %vm287, %v704, 0
  %v973 = vsel %vm287, %v705, 0
  %v976 = vsel %vm287, %v706, 0
  %v979 = vsel %vm287, %v707, 0
  %v982 = vsel %vm287, %v708, 0
  %v985 = vsel %vm287, %v709, 0
  %v988 = vsel %vm287, %v710, 0
  %v991 = vsel %vm287, %v711, 0
  %v994 = vsel %vm287, %v712, 0
  %v997 = vsel %vm287, %v713, 0
  %v1000 = vsel %vm287, %v714, 0
  %v1003 = vsel %vm287, %v715, 0
  %v1006 = vsel %vm287, %v716, 0
  %v1009 = vsel %vm287, %v717, 0
  %v1012 = vsel %vm287, %v718, 0
  %1014 = vmatprep.subr.mxu0 0.0
  %1015 = vmatpush1.msra.mxu0 0.0
  %1016 = vmatprep.subr.mxu0 0.0
  %1017 = vmatpush1.msra.mxu0 0.0
  %1018 = vmatprep.subr.mxu0 0.0
  %1019 = vmatpush1.msra.mxu0 0.0
  %1020 = vmatprep.subr.mxu0 0.0
  %1021 = vmatpush1.msra.mxu0 0.0
  %1022 = vmatprep.subr.mxu0 0.0
  %1023 = vmatpush1.msra.mxu0 0.0
  %1024 = vmatprep.subr.mxu0 0.0
  %1025 = vmatpush1.msra.mxu0 0.0
  %1026 = vmatprep.subr.mxu0 0.0
  %1027 = vmatpush1.msra.mxu0 0.0
  %1028 = vmatprep.subr.mxu0 0.0
  %1029 = vmatpush1.msra.mxu0 0.0
  %1030 = vmatprep.subr.mxu0 0.0
  %1031 = vmatpush1.msra.mxu0 0.0
  %1032 = vmatprep.subr.mxu0 0.0
  %1033 = vmatpush1.msra.mxu0 0.0
  %1034 = vmatprep.subr.mxu0 0.0
  %1035 = vmatpush1.msra.mxu0 0.0
  %1036 = vmatprep.subr.mxu0 0.0
  %1037 = vmatpush1.msra.mxu0 0.0
  %1038 = vmatprep.subr.mxu0 0.0
  %1039 = vmatpush1.msra.mxu0 %v958
  %1040 = vmatprep.subr.mxu0 0.0
  %1041 = vmatpush1.msra.mxu0 %v957
  %1042 = vmatprep.subr.mxu0 0.0
  %1043 = vmatpush1.msra.mxu0 %v956
  %1044 = vmatprep.subr.mxu0 0.0
  %1045 = vmatpush1.msra.mxu0 %v955
  %1046 = vmatprep.subr.mxu0 0.0
  %1047 = vmatpush2.msra.mxu0 0.0
  %1048 = vmatprep.subr.mxu0 0.0
  %1049 = vmatpush2.msra.mxu0 0.0
  %1050 = vmatprep.subr.mxu0 0.0
  %1051 = vmatpush2.msra.mxu0 0.0
  %1052 = vmatprep.subr.mxu0 0.0
  %1053 = vmatpush2.msra.mxu0 0.0
  %1054 = vmatprep.subr.mxu0 0.0
  %1055 = vmatpush2.msra.mxu0 0.0
  %1056 = vmatprep.subr.mxu0 0.0
  %1057 = vmatpush2.msra.mxu0 0.0
  %1058 = vmatprep.subr.mxu0 0.0
  %1059 = vmatpush2.msra.mxu0 0.0
  %1060 = vmatprep.subr.mxu0 0.0
  %1061 = vmatpush2.msra.mxu0 0.0
  %1062 = vmatprep.subr.mxu0 0.0
  %1063 = vmatpush2.msra.mxu0 0.0
  %1064 = vmatprep.subr.mxu0 0.0
  %1065 = vmatpush2.msra.mxu0 0.0
  %1066 = vmatprep.subr.mxu0 0.0
  %1067 = vmatpush2.msra.mxu0 0.0
  %1068 = vmatprep.subr.mxu0 0.0
  %1069 = vmatpush2.msra.mxu0 0.0
  %1070 = vmatprep.subr.mxu0 0.0
  %1071 = vmatpush2.msra.mxu0 0.0
  %1072 = vmatprep.subr.mxu0 0.0
  %1073 = vmatpush2.msra.mxu0 0.0
  %1074 = vmatprep.subr.mxu0 0.0
  %1075 = vmatpush2.msra.mxu0 0.0
  %1076 = vmatprep.subr.mxu0 0.0
  %1077 = vmatpush2.msra.mxu0 0.0
  %1078 = vmatprep.mubr.f32.mxu0 0.0
  %1079 = vmatmul.mubr.f32.gmra.mxu0 %v967
  %v1080 = vpop.f32.mrf.mxu0
  %v1081 = vadd.f32 %v964, %v1080
  %v1082 = vpop.f32.mrf.mxu0
  %1083 = vmatprep.mubr.f32.mxu0 0.0
  %1084 = vmatmul.mubr.f32.gmra.mxu0 %v970
  %v1085 = vpop.f32.mrf.mxu0
  %v1086 = vadd.f32 %v964, %v1085
  %v1087 = vpop.f32.mrf.mxu0
  %1088 = vmatprep.mubr.f32.mxu0 0.0
  %1089 = vmatmul.mubr.f32.gmra.mxu0 %v973
  %v1090 = vpop.f32.mrf.mxu0
  %v1091 = vadd.f32 %v964, %v1090
  %v1092 = vpop.f32.mrf.mxu0
  %1093 = vmatprep.mubr.f32.mxu0 0.0
  %1094 = vmatmul.mubr.f32.gmra.mxu0 %v976
  %v1095 = vpop.f32.mrf.mxu0
  %v1096 = vadd.f32 %v964, %v1095
  %v1097 = vpop.f32.mrf.mxu0
  %1098 = vmatprep.mubr.f32.mxu0 0.0
  %1099 = vmatmul.mubr.f32.gmra.mxu0 %v979
  %v1100 = vpop.f32.mrf.mxu0
  %v1101 = vadd.f32 %v964, %v1100
  %v1102 = vpop.f32.mrf.mxu0
  %1103 = vmatprep.mubr.f32.mxu0 0.0
  %1104 = vmatmul.mubr.f32.gmra.mxu0 %v982
  %v1105 = vpop.f32.mrf.mxu0
  %v1106 = vadd.f32 %v964, %v1105
  %v1107 = vpop.f32.mrf.mxu0
  %1108 = vmatprep.mubr.f32.mxu0 0.0
  %1109 = vmatmul.mubr.f32.gmra.mxu0 %v985
  %v1110 = vpop.f32.mrf.mxu0
  %v1111 = vadd.f32 %v964, %v1110
  %v1112 = vpop.f32.mrf.mxu0
  %1113 = vmatprep.mubr.f32.mxu0 0.0
  %1114 = vmatmul.mubr.f32.gmra.mxu0 %v988
  %v1115 = vpop.f32.mrf.mxu0
  %v1116 = vadd.f32 %v964, %v1115
  %v1117 = vpop.f32.mrf.mxu0
  %1118 = vmatprep.mubr.f32.mxu0 0.0
  %1119 = vmatmul.mubr.f32.gmra.mxu0 %v991
  %v1120 = vpop.f32.mrf.mxu0
  %v1121 = vadd.f32 %v964, %v1120
  %v1122 = vpop.f32.mrf.mxu0
  %1123 = vmatprep.mubr.f32.mxu0 0.0
  %1124 = vmatmul.mubr.f32.gmra.mxu0 %v994
  %v1125 = vpop.f32.mrf.mxu0
  %v1126 = vadd.f32 %v964, %v1125
  %v1127 = vpop.f32.mrf.mxu0
  %1128 = vmatprep.mubr.f32.mxu0 0.0
  %1129 = vmatmul.mubr.f32.gmra.mxu0 %v997
  %v1130 = vpop.f32.mrf.mxu0
  %v1131 = vadd.f32 %v964, %v1130
  %v1132 = vpop.f32.mrf.mxu0
  %1133 = vmatprep.mubr.f32.mxu0 0.0
  %1134 = vmatmul.mubr.f32.gmra.mxu0 %v1000
  %v1135 = vpop.f32.mrf.mxu0
  %v1136 = vadd.f32 %v964, %v1135
  %v1137 = vpop.f32.mrf.mxu0
  %1138 = vmatprep.mubr.f32.mxu0 0.0
  %1139 = vmatmul.mubr.f32.gmra.mxu0 %v1003
  %v1140 = vpop.f32.mrf.mxu0
  %v1141 = vadd.f32 %v964, %v1140
  %v1142 = vpop.f32.mrf.mxu0
  %1143 = vmatprep.mubr.f32.mxu0 0.0
  %1144 = vmatmul.mubr.f32.gmra.mxu0 %v1006
  %v1145 = vpop.f32.mrf.mxu0
  %v1146 = vadd.f32 %v964, %v1145
  %v1147 = vpop.f32.mrf.mxu0
  %1148 = vmatprep.mubr.f32.mxu0 0.0
  %1149 = vmatmul.mubr.f32.gmra.mxu0 %v1009
  %v1150 = vpop.f32.mrf.mxu0
  %v1151 = vadd.f32 %v964, %v1150
  %v1152 = vpop.f32.mrf.mxu0
  %1153 = vmatprep.mubr.f32.mxu0 0.0
  %1154 = vmatmul.mubr.f32.gmra.mxu0 %v1012
  %v1155 = vpop.f32.mrf.mxu0
  %v1156 = vadd.f32 %v964, %v1155
  %v1157 = vpop.f32.mrf.mxu0
  %1158 = vdwg.mxu0
  %v1159 = vld [vmem:[%s41] sm:$0xff]
  %v1160 = vld [vmem:[%s41 + $0x8] sm:$0xff]
  %v1161 = vld [vmem:[%s41 + $0x10] sm:$0xff]
  %v1162 = vld [vmem:[%s41 + $0x18] sm:$0xff]
  %v1163 = vld [vmem:[%s43] sm:$0x1]
  %v1165 = vlaneseq
  %v1166 = vshrl.u32 %v1165, 7
  %v1167 = vsub.s32 0, %v1166
  %v1168 = vrot.slane %v1163, %v1167
  %1170 = vmatprep.subr.mxu0 0.0
  %1171 = vmatpush1.msra.mxu0 0.0
  %1172 = vmatprep.subr.mxu0 0.0
  %1173 = vmatpush1.msra.mxu0 0.0
  %1174 = vmatprep.subr.mxu0 0.0
  %1175 = vmatpush1.msra.mxu0 0.0
  %1176 = vmatprep.subr.mxu0 0.0
  %1177 = vmatpush1.msra.mxu0 0.0
  %1178 = vmatprep.subr.mxu0 0.0
  %1179 = vmatpush1.msra.mxu0 0.0
  %1180 = vmatprep.subr.mxu0 0.0
  %1181 = vmatpush1.msra.mxu0 0.0
  %1182 = vmatprep.subr.mxu0 0.0
  %1183 = vmatpush1.msra.mxu0 0.0
  %1184 = vmatprep.subr.mxu0 0.0
  %1185 = vmatpush1.msra.mxu0 0.0
  %1186 = vmatprep.subr.mxu0 0.0
  %1187 = vmatpush1.msra.mxu0 0.0
  %1188 = vmatprep.subr.mxu0 0.0
  %1189 = vmatpush1.msra.mxu0 0.0
  %1190 = vmatprep.subr.mxu0 0.0
  %1191 = vmatpush1.msra.mxu0 0.0
  %1192 = vmatprep.subr.mxu0 0.0
  %1193 = vmatpush1.msra.mxu0 0.0
  %1194 = vmatprep.subr.mxu0 0.0
  %1195 = vmatpush1.msra.mxu0 %v1162
  %1196 = vmatprep.subr.mxu0 0.0
  %1197 = vmatpush1.msra.mxu0 %v1161
  %1198 = vmatprep.subr.mxu0 0.0
  %1199 = vmatpush1.msra.mxu0 %v1160
  %1200 = vmatprep.subr.mxu0 0.0
  %1201 = vmatpush1.msra.mxu0 %v1159
  %1202 = vmatprep.subr.mxu0 0.0
  %1203 = vmatpush2.msra.mxu0 0.0
  %1204 = vmatprep.subr.mxu0 0.0
  %1205 = vmatpush2.msra.mxu0 0.0
  %1206 = vmatprep.subr.mxu0 0.0
  %1207 = vmatpush2.msra.mxu0 0.0
  %1208 = vmatprep.subr.mxu0 0.0
  %1209 = vmatpush2.msra.mxu0 0.0
  %1210 = vmatprep.subr.mxu0 0.0
  %1211 = vmatpush2.msra.mxu0 0.0
  %1212 = vmatprep.subr.mxu0 0.0
  %1213 = vmatpush2.msra.mxu0 0.0
  %1214 = vmatprep.subr.mxu0 0.0
  %1215 = vmatpush2.msra.mxu0 0.0
  %1216 = vmatprep.subr.mxu0 0.0
  %1217 = vmatpush2.msra.mxu0 0.0
  %1218 = vmatprep.subr.mxu0 0.0
  %1219 = vmatpush2.msra.mxu0 0.0
  %1220 = vmatprep.subr.mxu0 0.0
  %1221 = vmatpush2.msra.mxu0 0.0
  %1222 = vmatprep.subr.mxu0 0.0
  %1223 = vmatpush2.msra.mxu0 0.0
  %1224 = vmatprep.subr.mxu0 0.0
  %1225 = vmatpush2.msra.mxu0 0.0
  %1226 = vmatprep.subr.mxu0 0.0
  %1227 = vmatpush2.msra.mxu0 0.0
  %1228 = vmatprep.subr.mxu0 0.0
  %1229 = vmatpush2.msra.mxu0 0.0
  %1230 = vmatprep.subr.mxu0 0.0
  %1231 = vmatpush2.msra.mxu0 0.0
  %1232 = vmatprep.subr.mxu0 0.0
  %1233 = vmatpush2.msra.mxu0 0.0
  %1234 = vmatprep.mubr.f32.mxu0 0.0
  %1235 = vmatmul.mubr.f32.gmra.mxu0 %v763
  %v1236 = vpop.f32.mrf.mxu0
  %v1237 = vadd.f32 %v1168, %v1236
  %v1238 = vpop.f32.mrf.mxu0
  %1239 = vmatprep.mubr.f32.mxu0 0.0
  %1240 = vmatmul.mubr.f32.gmra.mxu0 %v766
  %v1241 = vpop.f32.mrf.mxu0
  %v1242 = vadd.f32 %v1168, %v1241
  %v1243 = vpop.f32.mrf.mxu0
  %1244 = vmatprep.mubr.f32.mxu0 0.0
  %1245 = vmatmul.mubr.f32.gmra.mxu0 %v769
  %v1246 = vpop.f32.mrf.mxu0
  %v1247 = vadd.f32 %v1168, %v1246
  %v1248 = vpop.f32.mrf.mxu0
  %1249 = vmatprep.mubr.f32.mxu0 0.0
  %1250 = vmatmul.mubr.f32.gmra.mxu0 %v772
  %v1251 = vpop.f32.mrf.mxu0
  %v1252 = vadd.f32 %v1168, %v1251
  %v1253 = vpop.f32.mrf.mxu0
  %1254 = vmatprep.mubr.f32.mxu0 0.0
  %1255 = vmatmul.mubr.f32.gmra.mxu0 %v775
  %v1256 = vpop.f32.mrf.mxu0
  %v1257 = vadd.f32 %v1168, %v1256
  %v1258 = vpop.f32.mrf.mxu0
  %1259 = vmatprep.mubr.f32.mxu0 0.0
  %1260 = vmatmul.mubr.f32.gmra.mxu0 %v778
  %v1261 = vpop.f32.mrf.mxu0
  %v1262 = vadd.f32 %v1168, %v1261
  %v1263 = vpop.f32.mrf.mxu0
  %1264 = vmatprep.mubr.f32.mxu0 0.0
  %1265 = vmatmul.mubr.f32.gmra.mxu0 %v781
  %v1266 = vpop.f32.mrf.mxu0
  %v1267 = vadd.f32 %v1168, %v1266
  %v1268 = vpop.f32.mrf.mxu0
  %1269 = vmatprep.mubr.f32.mxu0 0.0
  %1270 = vmatmul.mubr.f32.gmra.mxu0 %v784
  %v1271 = vpop.f32.mrf.mxu0
  %v1272 = vadd.f32 %v1168, %v1271
  %v1273 = vpop.f32.mrf.mxu0
  %1274 = vmatprep.mubr.f32.mxu0 0.0
  %1275 = vmatmul.mubr.f32.gmra.mxu0 %v787
  %v1276 = vpop.f32.mrf.mxu0
  %v1277 = vadd.f32 %v1168, %v1276
  %v1278 = vpop.f32.mrf.mxu0
  %1279 = vmatprep.mubr.f32.mxu0 0.0
  %1280 = vmatmul.mubr.f32.gmra.mxu0 %v790
  %v1281 = vpop.f32.mrf.mxu0
  %v1282 = vadd.f32 %v1168, %v1281
  %v1283 = vpop.f32.mrf.mxu0
  %1284 = vmatprep.mubr.f32.mxu0 0.0
  %1285 = vmatmul.mubr.f32.gmra.mxu0 %v793
  %v1286 = vpop.f32.mrf.mxu0
  %v1287 = vadd.f32 %v1168, %v1286
  %v1288 = vpop.f32.mrf.mxu0
  %1289 = vmatprep.mubr.f32.mxu0 0.0
  %1290 = vmatmul.mubr.f32.gmra.mxu0 %v796
  %v1291 = vpop.f32.mrf.mxu0
  %v1292 = vadd.f32 %v1168, %v1291
  %v1293 = vpop.f32.mrf.mxu0
  %1294 = vmatprep.mubr.f32.mxu0 0.0
  %1295 = vmatmul.mubr.f32.gmra.mxu0 %v799
  %v1296 = vpop.f32.mrf.mxu0
  %v1297 = vadd.f32 %v1168, %v1296
  %v1298 = vpop.f32.mrf.mxu0
  %1299 = vmatprep.mubr.f32.mxu0 0.0
  %1300 = vmatmul.mubr.f32.gmra.mxu0 %v802
  %v1301 = vpop.f32.mrf.mxu0
  %v1302 = vadd.f32 %v1168, %v1301
  %v1303 = vpop.f32.mrf.mxu0
  %1304 = vmatprep.mubr.f32.mxu0 0.0
  %1305 = vmatmul.mubr.f32.gmra.mxu0 %v805
  %v1306 = vpop.f32.mrf.mxu0
  %v1307 = vadd.f32 %v1168, %v1306
  %v1308 = vpop.f32.mrf.mxu0
  %1309 = vmatprep.mubr.f32.mxu0 0.0
  %1310 = vmatmul.mubr.f32.gmra.mxu0 %v808
  %v1311 = vpop.f32.mrf.mxu0
  %v1312 = vadd.f32 %v1168, %v1311
  %v1313 = vpop.f32.mrf.mxu0
  %1314 = vdwg.mxu0
  %v1315 = vld [vmem:[%s7] sm:$0x1f]
  %v1316 = vld [vmem:[%s17] sm:$0xff]
  %v1317 = vld [vmem:[%s17 + $0x8] sm:$0xff]
  %v1318 = vld [vmem:[%s17 + $0x10] sm:$0xff]
  %v1319 = vld [vmem:[%s17 + $0x18] sm:$0xff]
  %v1320 = vld [vmem:[%s19] sm:$0x1]
  %v1322 = vlaneseq
  %v1323 = vshrl.u32 %v1322, 7
  %v1324 = vsub.s32 0, %v1323
  %v1325 = vrot.slane %v1320, %v1324
  %v1328 = vsel %vm287, %v1315, 0
  %1330 = vmatprep.subr.mxu0 0.0
  %1331 = vmatpush1.msra.mxu0 0.0
  %1332 = vmatprep.subr.mxu0 0.0
  %1333 = vmatpush1.msra.mxu0 0.0
  %1334 = vmatprep.subr.mxu0 0.0
  %1335 = vmatpush1.msra.mxu0 0.0
  %1336 = vmatprep.subr.mxu0 0.0
  %1337 = vmatpush1.msra.mxu0 0.0
  %1338 = vmatprep.subr.mxu0 0.0
  %1339 = vmatpush1.msra.mxu0 0.0
  %1340 = vmatprep.subr.mxu0 0.0
  %1341 = vmatpush1.msra.mxu0 0.0
  %1342 = vmatprep.subr.mxu0 0.0
  %1343 = vmatpush1.msra.mxu0 0.0
  %1344 = vmatprep.subr.mxu0 0.0
  %1345 = vmatpush1.msra.mxu0 0.0
  %1346 = vmatprep.subr.mxu0 0.0
  %1347 = vmatpush1.msra.mxu0 0.0
  %1348 = vmatprep.subr.mxu0 0.0
  %1349 = vmatpush1.msra.mxu0 0.0
  %1350 = vmatprep.subr.mxu0 0.0
  %1351 = vmatpush1.msra.mxu0 0.0
  %1352 = vmatprep.subr.mxu0 0.0
  %1353 = vmatpush1.msra.mxu0 0.0
  %1354 = vmatprep.subr.mxu0 0.0
  %1355 = vmatpush1.msra.mxu0 %v1319
  %1356 = vmatprep.subr.mxu0 0.0
  %1357 = vmatpush1.msra.mxu0 %v1318
  %1358 = vmatprep.subr.mxu0 0.0
  %1359 = vmatpush1.msra.mxu0 %v1317
  %1360 = vmatprep.subr.mxu0 0.0
  %1361 = vmatpush1.msra.mxu0 %v1316
  %1362 = vmatprep.subr.mxu0 0.0
  %1363 = vmatpush2.msra.mxu0 0.0
  %1364 = vmatprep.subr.mxu0 0.0
  %1365 = vmatpush2.msra.mxu0 0.0
  %1366 = vmatprep.subr.mxu0 0.0
  %1367 = vmatpush2.msra.mxu0 0.0
  %1368 = vmatprep.subr.mxu0 0.0
  %1369 = vmatpush2.msra.mxu0 0.0
  %1370 = vmatprep.subr.mxu0 0.0
  %1371 = vmatpush2.msra.mxu0 0.0
  %1372 = vmatprep.subr.mxu0 0.0
  %1373 = vmatpush2.msra.mxu0 0.0
  %1374 = vmatprep.subr.mxu0 0.0
  %1375 = vmatpush2.msra.mxu0 0.0
  %1376 = vmatprep.subr.mxu0 0.0
  %1377 = vmatpush2.msra.mxu0 0.0
  %1378 = vmatprep.subr.mxu0 0.0
  %1379 = vmatpush2.msra.mxu0 0.0
  %1380 = vmatprep.subr.mxu0 0.0
  %1381 = vmatpush2.msra.mxu0 0.0
  %1382 = vmatprep.subr.mxu0 0.0
  %1383 = vmatpush2.msra.mxu0 0.0
  %1384 = vmatprep.subr.mxu0 0.0
  %1385 = vmatpush2.msra.mxu0 0.0
  %1386 = vmatprep.subr.mxu0 0.0
  %1387 = vmatpush2.msra.mxu0 0.0
  %1388 = vmatprep.subr.mxu0 0.0
  %1389 = vmatpush2.msra.mxu0 0.0
  %1390 = vmatprep.subr.mxu0 0.0
  %1391 = vmatpush2.msra.mxu0 0.0
  %1392 = vmatprep.subr.mxu0 0.0
  %1393 = vmatpush2.msra.mxu0 0.0
  %1394 = vmatprep.mubr.f32.mxu0 0.0
  %1395 = vmatmul.mubr.f32.gmra.mxu0 %v1328
  %v1396 = vpop.f32.mrf.mxu0
  %v1397 = vadd.f32 %v1325, %v1396
  %v1398 = vpop.f32.mrf.mxu0
  %1399 = vdwg.mxu0
  %v1401 = vsel %vm287, %v1397, 0
  %v1404 = vsel %vm287, %v877, 0
  %v1407 = vsel %vm287, %v882, 0
  %v1410 = vsel %vm287, %v887, 0
  %v1413 = vsel %vm287, %v892, 0
  %v1416 = vsel %vm287, %v897, 0
  %v1419 = vsel %vm287, %v902, 0
  %v1422 = vsel %vm287, %v907, 0
  %v1425 = vsel %vm287, %v912, 0
  %1427 = vmatprep.subr.mxu0 0.0
  %1428 = vmatpush1.xpose.msra.mxu0 0.0
  %1429 = vmatprep.subr.mxu0 0.0
  %1430 = vmatpush1.xpose.msra.mxu0 0.0
  %1431 = vmatprep.subr.mxu0 0.0
  %1432 = vmatpush1.xpose.msra.mxu0 0.0
  %1433 = vmatprep.subr.mxu0 0.0
  %1434 = vmatpush1.xpose.msra.mxu0 0.0
  %1435 = vmatprep.subr.mxu0 0.0
  %1436 = vmatpush1.xpose.msra.mxu0 0.0
  %1437 = vmatprep.subr.mxu0 0.0
  %1438 = vmatpush1.xpose.msra.mxu0 0.0
  %1439 = vmatprep.subr.mxu0 0.0
  %1440 = vmatpush1.xpose.msra.mxu0 0.0
  %1441 = vmatprep.subr.mxu0 0.0
  %1442 = vmatpush1.xpose.msra.mxu0 0.0
  %1443 = vmatprep.subr.mxu0 0.0
  %1444 = vmatpush1.xpose.msra.mxu0 %v1425
  %1445 = vmatprep.subr.mxu0 0.0
  %1446 = vmatpush1.xpose.msra.mxu0 %v1422
  %1447 = vmatprep.subr.mxu0 0.0
  %1448 = vmatpush1.xpose.msra.mxu0 %v1419
  %1449 = vmatprep.subr.mxu0 0.0
  %1450 = vmatpush1.xpose.msra.mxu0 %v1416
  %1451 = vmatprep.subr.mxu0 0.0
  %1452 = vmatpush1.xpose.msra.mxu0 %v1413
  %1453 = vmatprep.subr.mxu0 0.0
  %1454 = vmatpush1.xpose.msra.mxu0 %v1410
  %1455 = vmatprep.subr.mxu0 0.0
  %1456 = vmatpush1.xpose.msra.mxu0 %v1407
  %1457 = vmatprep.subr.mxu0 0.0
  %1458 = vmatpush1.xpose.msra.mxu0 %v1404
  %1459 = vmatprep.subr.mxu0 0.0
  %1460 = vmatpush2.xpose.msra.mxu0 0.0
  %1461 = vmatprep.subr.mxu0 0.0
  %1462 = vmatpush2.xpose.msra.mxu0 0.0
  %1463 = vmatprep.subr.mxu0 0.0
  %1464 = vmatpush2.xpose.msra.mxu0 0.0
  %1465 = vmatprep.subr.mxu0 0.0
  %1466 = vmatpush2.xpose.msra.mxu0 0.0
  %1467 = vmatprep.subr.mxu0 0.0
  %1468 = vmatpush2.xpose.msra.mxu0 0.0
  %1469 = vmatprep.subr.mxu0 0.0
  %1470 = vmatpush2.xpose.msra.mxu0 0.0
  %1471 = vmatprep.subr.mxu0 0.0
  %1472 = vmatpush2.xpose.msra.mxu0 0.0
  %1473 = vmatprep.subr.mxu0 0.0
  %1474 = vmatpush2.xpose.msra.mxu0 0.0
  %1475 = vmatprep.subr.mxu0 0.0
  %1476 = vmatpush2.xpose.msra.mxu0 0.0
  %1477 = vmatprep.subr.mxu0 0.0
  %1478 = vmatpush2.xpose.msra.mxu0 0.0
  %1479 = vmatprep.subr.mxu0 0.0
  %1480 = vmatpush2.xpose.msra.mxu0 0.0
  %1481 = vmatprep.subr.mxu0 0.0
  %1482 = vmatpush2.xpose.msra.mxu0 0.0
  %1483 = vmatprep.subr.mxu0 0.0
  %1484 = vmatpush2.xpose.msra.mxu0 0.0
  %1485 = vmatprep.subr.mxu0 0.0
  %1486 = vmatpush2.xpose.msra.mxu0 0.0
  %1487 = vmatprep.subr.mxu0 0.0
  %1488 = vmatpush2.xpose.msra.mxu0 0.0
  %1489 = vmatprep.subr.mxu0 0.0
  %1490 = vmatpush2.xpose.msra.mxu0 0.0
  %1491 = vmatprep.mubr.f32.mxu0 0.0
  %1492 = vmatmul.mubr.f32.gmra.mxu0 %v1401
  %v1493 = vpop.f32.mrf.mxu0
  %v1494 = vadd.f32 0.0, %v1493
  %v1495 = vpop.f32.mrf.mxu0
  %1496 = vdwg.mxu0
  %vm1497 = vcmask 520192
  %v1498 = vsel %vm1497, %v1494, -inf
  %1499 = vmax.xlane.f32.xlu0 %v1498
  %v1500 = vpop.xlane.xlu0 %1499
  %v1501 = vsub.f32 %v1494, %v1500
  %v1502 = vmul.f32 %v1501, 1.442695
  %v1503 = vpow.pop %v1502
  %v1504 = vsel %vm1497, %v1503, 0.0
  %1505 = vadd.xlane.f32.xlu0 %v1504
  %v1506 = vpop.xlane.xlu0 %1505
  %v1507 = vrcp.pop %v1506
  %v1508 = vmul.f32 %v1503, %v1507
  %vm1509 = vcmask 523264
  %v1511 = vsel %vm1509, %v1508, 0
  %1513 = vmatprep.subr.mxu0 0.0
  %1514 = vmatpush1.msra.mxu0 0.0
  %1515 = vmatprep.subr.mxu0 0.0
  %1516 = vmatpush1.msra.mxu0 0.0
  %1517 = vmatprep.subr.mxu0 0.0
  %1518 = vmatpush1.msra.mxu0 0.0
  %1519 = vmatprep.subr.mxu0 0.0
  %1520 = vmatpush1.msra.mxu0 0.0
  %1521 = vmatprep.subr.mxu0 0.0
  %1522 = vmatpush1.msra.mxu0 0.0
  %1523 = vmatprep.subr.mxu0 0.0
  %1524 = vmatpush1.msra.mxu0 0.0
  %1525 = vmatprep.subr.mxu0 0.0
  %1526 = vmatpush1.msra.mxu0 0.0
  %1527 = vmatprep.subr.mxu0 0.0
  %1528 = vmatpush1.msra.mxu0 0.0
  %1529 = vmatprep.subr.mxu0 0.0
  %1530 = vmatpush1.msra.mxu0 %v1116
  %1531 = vmatprep.subr.mxu0 0.0
  %1532 = vmatpush1.msra.mxu0 %v1111
  %1533 = vmatprep.subr.mxu0 0.0
  %1534 = vmatpush1.msra.mxu0 %v1106
  %1535 = vmatprep.subr.mxu0 0.0
  %1536 = vmatpush1.msra.mxu0 %v1101
  %1537 = vmatprep.subr.mxu0 0.0
  %1538 = vmatpush1.msra.mxu0 %v1096
  %1539 = vmatprep.subr.mxu0 0.0
  %1540 = vmatpush1.msra.mxu0 %v1091
  %1541 = vmatprep.subr.mxu0 0.0
  %1542 = vmatpush1.msra.mxu0 %v1086
  %1543 = vmatprep.subr.mxu0 0.0
  %1544 = vmatpush1.msra.mxu0 %v1081
  %1545 = vmatprep.subr.mxu0 0.0
  %1546 = vmatpush2.msra.mxu0 0.0
  %1547 = vmatprep.subr.mxu0 0.0
  %1548 = vmatpush2.msra.mxu0 0.0
  %1549 = vmatprep.subr.mxu0 0.0
  %1550 = vmatpush2.msra.mxu0 0.0
  %1551 = vmatprep.subr.mxu0 0.0
  %1552 = vmatpush2.msra.mxu0 0.0
  %1553 = vmatprep.subr.mxu0 0.0
  %1554 = vmatpush2.msra.mxu0 0.0
  %1555 = vmatprep.subr.mxu0 0.0
  %1556 = vmatpush2.msra.mxu0 0.0
  %1557 = vmatprep.subr.mxu0 0.0
  %1558 = vmatpush2.msra.mxu0 0.0
  %1559 = vmatprep.subr.mxu0 0.0
  %1560 = vmatpush2.msra.mxu0 0.0
  %1561 = vmatprep.subr.mxu0 0.0
  %1562 = vmatpush2.msra.mxu0 0.0
  %1563 = vmatprep.subr.mxu0 0.0
  %1564 = vmatpush2.msra.mxu0 0.0
  %1565 = vmatprep.subr.mxu0 0.0
  %1566 = vmatpush2.msra.mxu0 0.0
  %1567 = vmatprep.subr.mxu0 0.0
  %1568 = vmatpush2.msra.mxu0 0.0
  %1569 = vmatprep.subr.mxu0 0.0
  %1570 = vmatpush2.msra.mxu0 0.0
  %1571 = vmatprep.subr.mxu0 0.0
  %1572 = vmatpush2.msra.mxu0 0.0
  %1573 = vmatprep.subr.mxu0 0.0
  %1574 = vmatpush2.msra.mxu0 0.0
  %1575 = vmatprep.subr.mxu0 0.0
  %1576 = vmatpush2.msra.mxu0 0.0
  %1577 = vmatprep.mubr.f32.mxu0 0.0
  %1578 = vmatmul.mubr.f32.gmra.mxu0 %v1511
  %v1579 = vpop.f32.mrf.mxu0
  %v1580 = vadd.f32 0.0, %v1579
  %v1581 = vpop.f32.mrf.mxu0
  %1582 = vdwg.mxu0
  %v1583 = vld [vmem:[%s29] sm:$0xff]
  %v1584 = vld [vmem:[%s29 + $0x8] sm:$0xff]
  %v1585 = vld [vmem:[%s29 + $0x10] sm:$0xff]
  %v1586 = vld [vmem:[%s29 + $0x18] sm:$0xff]
  %v1587 = vld [vmem:[%s31] sm:$0x1]
  %v1589 = vlaneseq
  %v1590 = vshrl.u32 %v1589, 7
  %v1591 = vsub.s32 0, %v1590
  %v1592 = vrot.slane %v1587, %v1591
  %v1595 = vsel %vm287, %v1580, 0
  %1597 = vmatprep.subr.mxu0 0.0
  %1598 = vmatpush1.msra.mxu0 0.0
  %1599 = vmatprep.subr.mxu0 0.0
  %1600 = vmatpush1.msra.mxu0 0.0
  %1601 = vmatprep.subr.mxu0 0.0
  %1602 = vmatpush1.msra.mxu0 0.0
  %1603 = vmatprep.subr.mxu0 0.0
  %1604 = vmatpush1.msra.mxu0 0.0
  %1605 = vmatprep.subr.mxu0 0.0
  %1606 = vmatpush1.msra.mxu0 0.0
  %1607 = vmatprep.subr.mxu0 0.0
  %1608 = vmatpush1.msra.mxu0 0.0
  %1609 = vmatprep.subr.mxu0 0.0
  %1610 = vmatpush1.msra.mxu0 0.0
  %1611 = vmatprep.subr.mxu0 0.0
  %1612 = vmatpush1.msra.mxu0 0.0
  %1613 = vmatprep.subr.mxu0 0.0
  %1614 = vmatpush1.msra.mxu0 0.0
  %1615 = vmatprep.subr.mxu0 0.0
  %1616 = vmatpush1.msra.mxu0 0.0
  %1617 = vmatprep.subr.mxu0 0.0
  %1618 = vmatpush1.msra.mxu0 0.0
  %1619 = vmatprep.subr.mxu0 0.0
  %1620 = vmatpush1.msra.mxu0 0.0
  %1621 = vmatprep.subr.mxu0 0.0
  %1622 = vmatpush1.msra.mxu0 %v1586
  %1623 = vmatprep.subr.mxu0 0.0
  %1624 = vmatpush1.msra.mxu0 %v1585
  %1625 = vmatprep.subr.mxu0 0.0
  %1626 = vmatpush1.msra.mxu0 %v1584
  %1627 = vmatprep.subr.mxu0 0.0
  %1628 = vmatpush1.msra.mxu0 %v1583
  %1629 = vmatprep.subr.mxu0 0.0
  %1630 = vmatpush2.msra.mxu0 0.0
  %1631 = vmatprep.subr.mxu0 0.0
  %1632 = vmatpush2.msra.mxu0 0.0
  %1633 = vmatprep.subr.mxu0 0.0
  %1634 = vmatpush2.msra.mxu0 0.0
  %1635 = vmatprep.subr.mxu0 0.0
  %1636 = vmatpush2.msra.mxu0 0.0
  %1637 = vmatprep.subr.mxu0 0.0
  %1638 = vmatpush2.msra.mxu0 0.0
  %1639 = vmatprep.subr.mxu0 0.0
  %1640 = vmatpush2.msra.mxu0 0.0
  %1641 = vmatprep.subr.mxu0 0.0
  %1642 = vmatpush2.msra.mxu0 0.0
  %1643 = vmatprep.subr.mxu0 0.0
  %1644 = vmatpush2.msra.mxu0 0.0
  %1645 = vmatprep.subr.mxu0 0.0
  %1646 = vmatpush2.msra.mxu0 0.0
  %1647 = vmatprep.subr.mxu0 0.0
  %1648 = vmatpush2.msra.mxu0 0.0
  %1649 = vmatprep.subr.mxu0 0.0
  %1650 = vmatpush2.msra.mxu0 0.0
  %1651 = vmatprep.subr.mxu0 0.0
  %1652 = vmatpush2.msra.mxu0 0.0
  %1653 = vmatprep.subr.mxu0 0.0
  %1654 = vmatpush2.msra.mxu0 0.0
  %1655 = vmatprep.subr.mxu0 0.0
  %1656 = vmatpush2.msra.mxu0 0.0
  %1657 = vmatprep.subr.mxu0 0.0
  %1658 = vmatpush2.msra.mxu0 0.0
  %1659 = vmatprep.subr.mxu0 0.0
  %1660 = vmatpush2.msra.mxu0 0.0
  %1661 = vmatprep.mubr.f32.mxu0 0.0
  %1662 = vmatmul.mubr.f32.gmra.mxu0 %v1595
  %v1663 = vpop.f32.mrf.mxu0
  %v1664 = vadd.f32 %v1592, %v1663
  %v1665 = vpop.f32.mrf.mxu0
  %1666 = vdwg.mxu0
  %v1667 = vadd.f32 %v1315, %v1664
  %v1668 = vld [vmem:[%s33] sm:$0xff]
  %v1669 = vld [vmem:[%s33 + $0x8] sm:$0xff]
  %v1670 = vld [vmem:[%s33 + $0x10] sm:$0xff]
  %v1671 = vld [vmem:[%s33 + $0x18] sm:$0xff]
  %v1672 = vld [vmem:[%s35] sm:$0x1]
  %v1674 = vlaneseq
  %v1675 = vshrl.u32 %v1674, 7
  %v1676 = vsub.s32 0, %v1675
  %v1677 = vrot.slane %v1672, %v1676
  %v1680 = vsel %vm287, %v1667, 0
  %1682 = vmatprep.subr.mxu0 0.0
  %1683 = vmatpush1.msra.mxu0 0.0
  %1684 = vmatprep.subr.mxu0 0.0
  %1685 = vmatpush1.msra.mxu0 0.0
  %1686 = vmatprep.subr.mxu0 0.0
  %1687 = vmatpush1.msra.mxu0 0.0
  %1688 = vmatprep.subr.mxu0 0.0
  %1689 = vmatpush1.msra.mxu0 0.0
  %1690 = vmatprep.subr.mxu0 0.0
  %1691 = vmatpush1.msra.mxu0 0.0
  %1692 = vmatprep.subr.mxu0 0.0
  %1693 = vmatpush1.msra.mxu0 0.0
  %1694 = vmatprep.subr.mxu0 0.0
  %1695 = vmatpush1.msra.mxu0 0.0
  %1696 = vmatprep.subr.mxu0 0.0
  %1697 = vmatpush1.msra.mxu0 0.0
  %1698 = vmatprep.subr.mxu0 0.0
  %1699 = vmatpush1.msra.mxu0 0.0
  %1700 = vmatprep.subr.mxu0 0.0
  %1701 = vmatpush1.msra.mxu0 0.0
  %1702 = vmatprep.subr.mxu0 0.0
  %1703 = vmatpush1.msra.mxu0 0.0
  %1704 = vmatprep.subr.mxu0 0.0
  %1705 = vmatpush1.msra.mxu0 0.0
  %1706 = vmatprep.subr.mxu0 0.0
  %1707 = vmatpush1.msra.mxu0 %v1671
  %1708 = vmatprep.subr.mxu0 0.0
  %1709 = vmatpush1.msra.mxu0 %v1670
  %1710 = vmatprep.subr.mxu0 0.0
  %1711 = vmatpush1.msra.mxu0 %v1669
  %1712 = vmatprep.subr.mxu0 0.0
  %1713 = vmatpush1.msra.mxu0 %v1668
  %1714 = vmatprep.subr.mxu0 0.0
  %1715 = vmatpush2.msra.mxu0 0.0
  %1716 = vmatprep.subr.mxu0 0.0
  %1717 = vmatpush2.msra.mxu0 0.0
  %1718 = vmatprep.subr.mxu0 0.0
  %1719 = vmatpush2.msra.mxu0 0.0
  %1720 = vmatprep.subr.mxu0 0.0
  %1721 = vmatpush2.msra.mxu0 0.0
  %1722 = vmatprep.subr.mxu0 0.0
  %1723 = vmatpush2.msra.mxu0 0.0
  %1724 = vmatprep.subr.mxu0 0.0
  %1725 = vmatpush2.msra.mxu0 0.0
  %1726 = vmatprep.subr.mxu0 0.0
  %1727 = vmatpush2.msra.mxu0 0.0
  %1728 = vmatprep.subr.mxu0 0.0
  %1729 = vmatpush2.msra.mxu0 0.0
  %1730 = vmatprep.subr.mxu0 0.0
  %1731 = vmatpush2.msra.mxu0 0.0
  %1732 = vmatprep.subr.mxu0 0.0
  %1733 = vmatpush2.msra.mxu0 0.0
  %1734 = vmatprep.subr.mxu0 0.0
  %1735 = vmatpush2.msra.mxu0 0.0
  %1736 = vmatprep.subr.mxu0 0.0
  %1737 = vmatpush2.msra.mxu0 0.0
  %1738 = vmatprep.subr.mxu0 0.0
  %1739 = vmatpush2.msra.mxu0 0.0
  %1740 = vmatprep.subr.mxu0 0.0
  %1741 = vmatpush2.msra.mxu0 0.0
  %1742 = vmatprep.subr.mxu0 0.0
  %1743 = vmatpush2.msra.mxu0 0.0
  %1744 = vmatprep.subr.mxu0 0.0
  %1745 = vmatpush2.msra.mxu0 0.0
  %1746 = vmatprep.mubr.f32.mxu0 0.0
  %1747 = vmatmul.mubr.f32.gmra.mxu0 %v1680
  %v1748 = vpop.f32.mrf.mxu0
  %v1749 = vadd.f32 %v1677, %v1748
  %v1750 = vpop.f32.mrf.mxu0
  %1751 = vdwg.mxu0
  %v1752 = vmax.f32 %v1749, 0.0
  %v1753 = vld [vmem:[%s37] sm:$0xff]
  %v1754 = vld [vmem:[%s37 + $0x8] sm:$0xff]
  %v1755 = vld [vmem:[%s37 + $0x10] sm:$0xff]
  %v1756 = vld [vmem:[%s37 + $0x18] sm:$0xff]
  %v1757 = vld [vmem:[%s37 + $0x20] sm:$0xff]
  %v1758 = vld [vmem:[%s37 + $0x28] sm:$0xff]
  %v1759 = vld [vmem:[%s37 + $0x30] sm:$0xff]
  %v1760 = vld [vmem:[%s37 + $0x38] sm:$0xff]
  %v1761 = vld [vmem:[%s39] sm:$0x1]
  %v1763 = vlaneseq
  %v1764 = vshrl.u32 %v1763, 7
  %v1765 = vsub.s32 0, %v1764
  %v1766 = vrot.slane %v1761, %v1765
  %v1769 = vsel %vm1509, %v1752, 0
  %1771 = vmatprep.subr.mxu0 0.0
  %1772 = vmatpush1.msra.mxu0 0.0
  %1773 = vmatprep.subr.mxu0 0.0
  %1774 = vmatpush1.msra.mxu0 0.0
  %1775 = vmatprep.subr.mxu0 0.0
  %1776 = vmatpush1.msra.mxu0 0.0
  %1777 = vmatprep.subr.mxu0 0.0
  %1778 = vmatpush1.msra.mxu0 0.0
  %1779 = vmatprep.subr.mxu0 0.0
  %1780 = vmatpush1.msra.mxu0 0.0
  %1781 = vmatprep.subr.mxu0 0.0
  %1782 = vmatpush1.msra.mxu0 0.0
  %1783 = vmatprep.subr.mxu0 0.0
  %1784 = vmatpush1.msra.mxu0 0.0
  %1785 = vmatprep.subr.mxu0 0.0
  %1786 = vmatpush1.msra.mxu0 0.0
  %1787 = vmatprep.subr.mxu0 0.0
  %1788 = vmatpush1.msra.mxu0 %v1760
  %1789 = vmatprep.subr.mxu0 0.0
  %1790 = vmatpush1.msra.mxu0 %v1759
  %1791 = vmatprep.subr.mxu0 0.0
  %1792 = vmatpush1.msra.mxu0 %v1758
  %1793 = vmatprep.subr.mxu0 0.0
  %1794 = vmatpush1.msra.mxu0 %v1757
  %1795 = vmatprep.subr.mxu0 0.0
  %1796 = vmatpush1.msra.mxu0 %v1756
  %1797 = vmatprep.subr.mxu0 0.0
  %1798 = vmatpush1.msra.mxu0 %v1755
  %1799 = vmatprep.subr.mxu0 0.0
  %1800 = vmatpush1.msra.mxu0 %v1754
  %1801 = vmatprep.subr.mxu0 0.0
  %1802 = vmatpush1.msra.mxu0 %v1753
  %1803 = vmatprep.subr.mxu0 0.0
  %1804 = vmatpush2.msra.mxu0 0.0
  %1805 = vmatprep.subr.mxu0 0.0
  %1806 = vmatpush2.msra.mxu0 0.0
  %1807 = vmatprep.subr.mxu0 0.0
  %1808 = vmatpush2.msra.mxu0 0.0
  %1809 = vmatprep.subr.mxu0 0.0
  %1810 = vmatpush2.msra.mxu0 0.0
  %1811 = vmatprep.subr.mxu0 0.0
  %1812 = vmatpush2.msra.mxu0 0.0
  %1813 = vmatprep.subr.mxu0 0.0
  %1814 = vmatpush2.msra.mxu0 0.0
  %1815 = vmatprep.subr.mxu0 0.0
  %1816 = vmatpush2.msra.mxu0 0.0
  %1817 = vmatprep.subr.mxu0 0.0
  %1818 = vmatpush2.msra.mxu0 0.0
  %1819 = vmatprep.subr.mxu0 0.0
  %1820 = vmatpush2.msra.mxu0 0.0
  %1821 = vmatprep.subr.mxu0 0.0
  %1822 = vmatpush2.msra.mxu0 0.0
  %1823 = vmatprep.subr.mxu0 0.0
  %1824 = vmatpush2.msra.mxu0 0.0
  %1825 = vmatprep.subr.mxu0 0.0
  %1826 = vmatpush2.msra.mxu0 0.0
  %1827 = vmatprep.subr.mxu0 0.0
  %1828 = vmatpush2.msra.mxu0 0.0
  %1829 = vmatprep.subr.mxu0 0.0
  %1830 = vmatpush2.msra.mxu0 0.0
  %1831 = vmatprep.subr.mxu0 0.0
  %1832 = vmatpush2.msra.mxu0 0.0
  %1833 = vmatprep.subr.mxu0 0.0
  %1834 = vmatpush2.msra.mxu0 0.0
  %1835 = vmatprep.mubr.f32.mxu0 0.0
  %1836 = vmatmul.mubr.f32.gmra.mxu0 %v1769
  %v1837 = vpop.f32.mrf.mxu0
  %v1838 = vadd.f32 %v1766, %v1837
  %v1839 = vpop.f32.mrf.mxu0
  %1840 = vdwg.mxu0
  %v1841 = vadd.f32 %v1667, %v1838
  %v1842 = vld [vmem:[%s45] sm:$0xff]
  %v1843 = vld [vmem:[%s45 + $0x8] sm:$0xff]
  %v1844 = vld [vmem:[%s45 + $0x10] sm:$0xff]
  %v1845 = vld [vmem:[%s45 + $0x18] sm:$0xff]
  %v1846 = vld [vmem:[%s47] sm:$0x1]
  %v1848 = vlaneseq
  %v1849 = vshrl.u32 %v1848, 7
  %v1850 = vsub.s32 0, %v1849
  %v1851 = vrot.slane %v1846, %v1850
  %v1854 = vsel %vm287, %v1841, 0
  %1856 = vmatprep.subr.mxu0 0.0
  %1857 = vmatpush1.msra.mxu0 0.0
  %1858 = vmatprep.subr.mxu0 0.0
  %1859 = vmatpush1.msra.mxu0 0.0
  %1860 = vmatprep.subr.mxu0 0.0
  %1861 = vmatpush1.msra.mxu0 0.0
  %1862 = vmatprep.subr.mxu0 0.0
  %1863 = vmatpush1.msra.mxu0 0.0
  %1864 = vmatprep.subr.mxu0 0.0
  %1865 = vmatpush1.msra.mxu0 0.0
  %1866 = vmatprep.subr.mxu0 0.0
  %1867 = vmatpush1.msra.mxu0 0.0
  %1868 = vmatprep.subr.mxu0 0.0
  %1869 = vmatpush1.msra.mxu0 0.0
  %1870 = vmatprep.subr.mxu0 0.0
  %1871 = vmatpush1.msra.mxu0 0.0
  %1872 = vmatprep.subr.mxu0 0.0
  %1873 = vmatpush1.msra.mxu0 0.0
  %1874 = vmatprep.subr.mxu0 0.0
  %1875 = vmatpush1.msra.mxu0 0.0
  %1876 = vmatprep.subr.mxu0 0.0
  %1877 = vmatpush1.msra.mxu0 0.0
  %1878 = vmatprep.subr.mxu0 0.0
  %1879 = vmatpush1.msra.mxu0 0.0
  %1880 = vmatprep.subr.mxu0 0.0
  %1881 = vmatpush1.msra.mxu0 %v1845
  %1882 = vmatprep.subr.mxu0 0.0
  %1883 = vmatpush1.msra.mxu0 %v1844
  %1884 = vmatprep.subr.mxu0 0.0
  %1885 = vmatpush1.msra.mxu0 %v1843
  %1886 = vmatprep.subr.mxu0 0.0
  %1887 = vmatpush1.msra.mxu0 %v1842
  %1888 = vmatprep.subr.mxu0 0.0
  %1889 = vmatpush2.msra.mxu0 0.0
  %1890 = vmatprep.subr.mxu0 0.0
  %1891 = vmatpush2.msra.mxu0 0.0
  %1892 = vmatprep.subr.mxu0 0.0
  %1893 = vmatpush2.msra.mxu0 0.0
  %1894 = vmatprep.subr.mxu0 0.0
  %1895 = vmatpush2.msra.mxu0 0.0
  %1896 = vmatprep.subr.mxu0 0.0
  %1897 = vmatpush2.msra.mxu0 0.0
  %1898 = vmatprep.subr.mxu0 0.0
  %1899 = vmatpush2.msra.mxu0 0.0
  %1900 = vmatprep.subr.mxu0 0.0
  %1901 = vmatpush2.msra.mxu0 0.0
  %1902 = vmatprep.subr.mxu0 0.0
  %1903 = vmatpush2.msra.mxu0 0.0
  %1904 = vmatprep.subr.mxu0 0.0
  %1905 = vmatpush2.msra.mxu0 0.0
  %1906 = vmatprep.subr.mxu0 0.0
  %1907 = vmatpush2.msra.mxu0 0.0
  %1908 = vmatprep.subr.mxu0 0.0
  %1909 = vmatpush2.msra.mxu0 0.0
  %1910 = vmatprep.subr.mxu0 0.0
  %1911 = vmatpush2.msra.mxu0 0.0
  %1912 = vmatprep.subr.mxu0 0.0
  %1913 = vmatpush2.msra.mxu0 0.0
  %1914 = vmatprep.subr.mxu0 0.0
  %1915 = vmatpush2.msra.mxu0 0.0
  %1916 = vmatprep.subr.mxu0 0.0
  %1917 = vmatpush2.msra.mxu0 0.0
  %1918 = vmatprep.subr.mxu0 0.0
  %1919 = vmatpush2.msra.mxu0 0.0
  %1920 = vmatprep.mubr.f32.mxu0 0.0
  %1921 = vmatmul.mubr.f32.gmra.mxu0 %v1854
  %v1922 = vpop.f32.mrf.mxu0
  %v1923 = vadd.f32 %v1851, %v1922
  %v1924 = vpop.f32.mrf.mxu0
  %1925 = vdwg.mxu0
  %v1926 = vld [vmem:[%s49] sm:$0xff]
  %v1927 = vld [vmem:[%s49 + $0x8] sm:$0xff]
  %v1928 = vld [vmem:[%s49 + $0x10] sm:$0xff]
  %v1929 = vld [vmem:[%s49 + $0x18] sm:$0xff]
  %v1930 = vld [vmem:[%s51] sm:$0x1]
  %v1932 = vlaneseq
  %v1933 = vshrl.u32 %v1932, 7
  %v1934 = vsub.s32 0, %v1933
  %v1935 = vrot.slane %v1930, %v1934
  %1937 = vmatprep.subr.mxu0 0.0
  %1938 = vmatpush1.msra.mxu0 0.0
  %1939 = vmatprep.subr.mxu0 0.0
  %1940 = vmatpush1.msra.mxu0 0.0
  %1941 = vmatprep.subr.mxu0 0.0
  %1942 = vmatpush1.msra.mxu0 0.0
  %1943 = vmatprep.subr.mxu0 0.0
  %1944 = vmatpush1.msra.mxu0 0.0
  %1945 = vmatprep.subr.mxu0 0.0
  %1946 = vmatpush1.msra.mxu0 0.0
  %1947 = vmatprep.subr.mxu0 0.0
  %1948 = vmatpush1.msra.mxu0 0.0
  %1949 = vmatprep.subr.mxu0 0.0
  %1950 = vmatpush1.msra.mxu0 0.0
  %1951 = vmatprep.subr.mxu0 0.0
  %1952 = vmatpush1.msra.mxu0 0.0
  %1953 = vmatprep.subr.mxu0 0.0
  %1954 = vmatpush1.msra.mxu0 0.0
  %1955 = vmatprep.subr.mxu0 0.0
  %1956 = vmatpush1.msra.mxu0 0.0
  %1957 = vmatprep.subr.mxu0 0.0
  %1958 = vmatpush1.msra.mxu0 0.0
  %1959 = vmatprep.subr.mxu0 0.0
  %1960 = vmatpush1.msra.mxu0 0.0
  %1961 = vmatprep.subr.mxu0 0.0
  %1962 = vmatpush1.msra.mxu0 %v1929
  %1963 = vmatprep.subr.mxu0 0.0
  %1964 = vmatpush1.msra.mxu0 %v1928
  %1965 = vmatprep.subr.mxu0 0.0
  %1966 = vmatpush1.msra.mxu0 %v1927
  %1967 = vmatprep.subr.mxu0 0.0
  %1968 = vmatpush1.msra.mxu0 %v1926
  %1969 = vmatprep.subr.mxu0 0.0
  %1970 = vmatpush2.msra.mxu0 0.0
  %1971 = vmatprep.subr.mxu0 0.0
  %1972 = vmatpush2.msra.mxu0 0.0
  %1973 = vmatprep.subr.mxu0 0.0
  %1974 = vmatpush2.msra.mxu0 0.0
  %1975 = vmatprep.subr.mxu0 0.0
  %1976 = vmatpush2.msra.mxu0 0.0
  %1977 = vmatprep.subr.mxu0 0.0
  %1978 = vmatpush2.msra.mxu0 0.0
  %1979 = vmatprep.subr.mxu0 0.0
  %1980 = vmatpush2.msra.mxu0 0.0
  %1981 = vmatprep.subr.mxu0 0.0
  %1982 = vmatpush2.msra.mxu0 0.0
  %1983 = vmatprep.subr.mxu0 0.0
  %1984 = vmatpush2.msra.mxu0 0.0
  %1985 = vmatprep.subr.mxu0 0.0
  %1986 = vmatpush2.msra.mxu0 0.0
  %1987 = vmatprep.subr.mxu0 0.0
  %1988 = vmatpush2.msra.mxu0 0.0
  %1989 = vmatprep.subr.mxu0 0.0
  %1990 = vmatpush2.msra.mxu0 0.0
  %1991 = vmatprep.subr.mxu0 0.0
  %1992 = vmatpush2.msra.mxu0 0.0
  %1993 = vmatprep.subr.mxu0 0.0
  %1994 = vmatpush2.msra.mxu0 0.0
  %1995 = vmatprep.subr.mxu0 0.0
  %1996 = vmatpush2.msra.mxu0 0.0
  %1997 = vmatprep.subr.mxu0 0.0
  %1998 = vmatpush2.msra.mxu0 0.0
  %1999 = vmatprep.subr.mxu0 0.0
  %2000 = vmatpush2.msra.mxu0 0.0
  %2001 = vmatprep.mubr.f32.mxu0 0.0
  %2002 = vmatmul.mubr.f32.gmra.mxu0 %v1854
  %v2003 = vpop.f32.mrf.mxu0
  %v2004 = vadd.f32 %v1935, %v2003
  %v2005 = vpop.f32.mrf.mxu0
  %2006 = vdwg.mxu0
  %v2008 = vsel %vm287, %v1237, 0
  %v2011 = vsel %vm287, %v1242, 0
  %v2014 = vsel %vm287, %v1247, 0
  %v2017 = vsel %vm287, %v1252, 0
  %v2020 = vsel %vm287, %v1257, 0
  %v2023 = vsel %vm287, %v1262, 0
  %v2026 = vsel %vm287, %v1267, 0
  %v2029 = vsel %vm287, %v1272, 0
  %v2032 = vsel %vm287, %v1923, 0
  %2034 = vmatprep.subr.mxu0 0.0
  %2035 = vmatpush1.xpose.msra.mxu0 0.0
  %2036 = vmatprep.subr.mxu0 0.0
  %2037 = vmatpush1.xpose.msra.mxu0 0.0
  %2038 = vmatprep.subr.mxu0 0.0
  %2039 = vmatpush1.xpose.msra.mxu0 0.0
  %2040 = vmatprep.subr.mxu0 0.0
  %2041 = vmatpush1.xpose.msra.mxu0 0.0
  %2042 = vmatprep.subr.mxu0 0.0
  %2043 = vmatpush1.xpose.msra.mxu0 0.0
  %2044 = vmatprep.subr.mxu0 0.0
  %2045 = vmatpush1.xpose.msra.mxu0 0.0
  %2046 = vmatprep.subr.mxu0 0.0
  %2047 = vmatpush1.xpose.msra.mxu0 0.0
  %2048 = vmatprep.subr.mxu0 0.0
  %2049 = vmatpush1.xpose.msra.mxu0 0.0
  %2050 = vmatprep.subr.mxu0 0.0
  %2051 = vmatpush1.xpose.msra.mxu0 0.0
  %2052 = vmatprep.subr.mxu0 0.0
  %2053 = vmatpush1.xpose.msra.mxu0 0.0
  %2054 = vmatprep.subr.mxu0 0.0
  %2055 = vmatpush1.xpose.msra.mxu0 0.0
  %2056 = vmatprep.subr.mxu0 0.0
  %2057 = vmatpush1.xpose.msra.mxu0 0.0
  %2058 = vmatprep.subr.mxu0 0.0
  %2059 = vmatpush1.xpose.msra.mxu0 0.0
  %2060 = vmatprep.subr.mxu0 0.0
  %2061 = vmatpush1.xpose.msra.mxu0 0.0
  %2062 = vmatprep.subr.mxu0 0.0
  %2063 = vmatpush1.xpose.msra.mxu0 0.0
  %2064 = vmatprep.subr.mxu0 0.0
  %2065 = vmatpush1.xpose.msra.mxu0 %v2032
  %2066 = vmatprep.subr.mxu0 0.0
  %2067 = vmatpush2.xpose.msra.mxu0 0.0
  %2068 = vmatprep.subr.mxu0 0.0
  %2069 = vmatpush2.xpose.msra.mxu0 0.0
  %2070 = vmatprep.subr.mxu0 0.0
  %2071 = vmatpush2.xpose.msra.mxu0 0.0
  %2072 = vmatprep.subr.mxu0 0.0
  %2073 = vmatpush2.xpose.msra.mxu0 0.0
  %2074 = vmatprep.subr.mxu0 0.0
  %2075 = vmatpush2.xpose.msra.mxu0 0.0
  %2076 = vmatprep.subr.mxu0 0.0
  %2077 = vmatpush2.xpose.msra.mxu0 0.0
  %2078 = vmatprep.subr.mxu0 0.0
  %2079 = vmatpush2.xpose.msra.mxu0 0.0
  %2080 = vmatprep.subr.mxu0 0.0
  %2081 = vmatpush2.xpose.msra.mxu0 0.0
  %2082 = vmatprep.subr.mxu0 0.0
  %2083 = vmatpush2.xpose.msra.mxu0 0.0
  %2084 = vmatprep.subr.mxu0 0.0
  %2085 = vmatpush2.xpose.msra.mxu0 0.0
  %2086 = vmatprep.subr.mxu0 0.0
  %2087 = vmatpush2.xpose.msra.mxu0 0.0
  %2088 = vmatprep.subr.mxu0 0.0
  %2089 = vmatpush2.xpose.msra.mxu0 0.0
  %2090 = vmatprep.subr.mxu0 0.0
  %2091 = vmatpush2.xpose.msra.mxu0 0.0
  %2092 = vmatprep.subr.mxu0 0.0
  %2093 = vmatpush2.xpose.msra.mxu0 0.0
  %2094 = vmatprep.subr.mxu0 0.0
  %2095 = vmatpush2.xpose.msra.mxu0 0.0
  %2096 = vmatprep.subr.mxu0 0.0
  %2097 = vmatpush2.xpose.msra.mxu0 0.0
  %2098 = vmatprep.mubr.f32.mxu0 0.0
  %2099 = vmatmul.mubr.f32.gmra.mxu0 %v2008
  %v2100 = vpop.f32.mrf.mxu0
  %v2101 = vadd.f32 0.0, %v2100
  %v2102 = vpop.f32.mrf.mxu0
  %2103 = vmatprep.mubr.f32.mxu0 0.0
  %2104 = vmatmul.mubr.f32.gmra.mxu0 %v2011
  %v2105 = vpop.f32.mrf.mxu0
  %v2106 = vadd.f32 0.0, %v2105
  %v2107 = vpop.f32.mrf.mxu0
  %2108 = vmatprep.mubr.f32.mxu0 0.0
  %2109 = vmatmul.mubr.f32.gmra.mxu0 %v2014
  %v2110 = vpop.f32.mrf.mxu0
  %v2111 = vadd.f32 0.0, %v2110
  %v2112 = vpop.f32.mrf.mxu0
  %2113 = vmatprep.mubr.f32.mxu0 0.0
  %2114 = vmatmul.mubr.f32.gmra.mxu0 %v2017
  %v2115 = vpop.f32.mrf.mxu0
  %v2116 = vadd.f32 0.0, %v2115
  %v2117 = vpop.f32.mrf.mxu0
  %2118 = vmatprep.mubr.f32.mxu0 0.0
  %2119 = vmatmul.mubr.f32.gmra.mxu0 %v2020
  %v2120 = vpop.f32.mrf.mxu0
  %v2121 = vadd.f32 0.0, %v2120
  %v2122 = vpop.f32.mrf.mxu0
  %2123 = vmatprep.mubr.f32.mxu0 0.0
  %2124 = vmatmul.mubr.f32.gmra.mxu0 %v2023
  %v2125 = vpop.f32.mrf.mxu0
  %v2126 = vadd.f32 0.0, %v2125
  %v2127 = vpop.f32.mrf.mxu0
  %2128 = vmatprep.mubr.f32.mxu0 0.0
  %2129 = vmatmul.mubr.f32.gmra.mxu0 %v2026
  %v2130 = vpop.f32.mrf.mxu0
  %v2131 = vadd.f32 0.0, %v2130
  %v2132 = vpop.f32.mrf.mxu0
  %2133 = vmatprep.mubr.f32.mxu0 0.0
  %2134 = vmatmul.mubr.f32.gmra.mxu0 %v2029
  %v2135 = vpop.f32.mrf.mxu0
  %v2136 = vadd.f32 0.0, %v2135
  %v2137 = vpop.f32.mrf.mxu0
  %2138 = vdwg.mxu0
  %vm2139 = vcmask 39936
  %v2140 = vsel %vm2139, %v2101, -inf
  %2141 = vmax.xlane.f32.xlu0 %v2140
  %v2142 = vpop.xlane.xlu0 %2141
  %v2143 = vsel %vm2139, %v2106, -inf
  %2144 = vmax.xlane.f32.xlu0 %v2143
  %v2145 = vpop.xlane.xlu0 %2144
  %v2146 = vsel %vm2139, %v2111, -inf
  %2147 = vmax.xlane.f32.xlu0 %v2146
  %v2148 = vpop.xlane.xlu0 %2147
  %v2149 = vsel %vm2139, %v2116, -inf
  %2150 = vmax.xlane.f32.xlu0 %v2149
  %v2151 = vpop.xlane.xlu0 %2150
  %v2152 = vsel %vm2139, %v2121, -inf
  %2153 = vmax.xlane.f32.xlu0 %v2152
  %v2154 = vpop.xlane.xlu0 %2153
  %v2155 = vsel %vm2139, %v2126, -inf
  %2156 = vmax.xlane.f32.xlu0 %v2155
  %v2157 = vpop.xlane.xlu0 %2156
  %v2158 = vsel %vm2139, %v2131, -inf
  %2159 = vmax.xlane.f32.xlu0 %v2158
  %v2160 = vpop.xlane.xlu0 %2159
  %v2161 = vsel %vm2139, %v2136, -inf
  %2162 = vmax.xlane.f32.xlu0 %v2161
  %v2163 = vpop.xlane.xlu0 %2162
  %v2164 = vsub.f32 %v2101, %v2142
  %v2165 = vsub.f32 %v2106, %v2145
  %v2166 = vsub.f32 %v2111, %v2148
  %v2167 = vsub.f32 %v2116, %v2151
  %v2168 = vsub.f32 %v2121, %v2154
  %v2169 = vsub.f32 %v2126, %v2157
  %v2170 = vsub.f32 %v2131, %v2160
  %v2171 = vsub.f32 %v2136, %v2163
  %v2172 = vmul.f32 %v2164, 1.442695
  %v2173 = vpow.pop %v2172
  %v2174 = vmul.f32 %v2165, 1.442695
  %v2175 = vpow.pop %v2174
  %v2176 = vmul.f32 %v2166, 1.442695
  %v2177 = vpow.pop %v2176
  %v2178 = vmul.f32 %v2167, 1.442695
  %v2179 = vpow.pop %v2178
  %v2180 = vmul.f32 %v2168, 1.442695
  %v2181 = vpow.pop %v2180
  %v2182 = vmul.f32 %v2169, 1.442695
  %v2183 = vpow.pop %v2182
  %v2184 = vmul.f32 %v2170, 1.442695
  %v2185 = vpow.pop %v2184
  %v2186 = vmul.f32 %v2171, 1.442695
  %v2187 = vpow.pop %v2186
  %v2188 = vsel %vm2139, %v2173, 0.0
  %2189 = vadd.xlane.f32.xlu0 %v2188
  %v2190 = vpop.xlane.xlu0 %2189
  %v2191 = vsel %vm2139, %v2175, 0.0
  %2192 = vadd.xlane.f32.xlu0 %v2191
  %v2193 = vpop.xlane.xlu0 %2192
  %v2194 = vsel %vm2139, %v2177, 0.0
  %2195 = vadd.xlane.f32.xlu0 %v2194
  %v2196 = vpop.xlane.xlu0 %2195
  %v2197 = vsel %vm2139, %v2179, 0.0
  %2198 = vadd.xlane.f32.xlu0 %v2197
  %v2199 = vpop.xlane.xlu0 %2198
  %v2200 = vsel %vm2139, %v2181, 0.0
  %2201 = vadd.xlane.f32.xlu0 %v2200
  %v2202 = vpop.xlane.xlu0 %2201
  %v2203 = vsel %vm2139, %v2183, 0.0
  %2204 = vadd.xlane.f32.xlu0 %v2203
  %v2205 = vpop.xlane.xlu0 %2204
  %v2206 = vsel %vm2139, %v2185, 0.0
  %2207 = vadd.xlane.f32.xlu0 %v2206
  %v2208 = vpop.xlane.xlu0 %2207
  %v2209 = vsel %vm2139, %v2187, 0.0
  %2210 = vadd.xlane.f32.xlu0 %v2209
  %v2211 = vpop.xlane.xlu0 %2210
  %v2212 = vrcp.pop %v2190
  %v2213 = vrcp.pop %v2193
  %v2214 = vrcp.pop %v2196
  %v2215 = vrcp.pop %v2199
  %v2216 = vrcp.pop %v2202
  %v2217 = vrcp.pop %v2205
  %v2218 = vrcp.pop %v2208
  %v2219 = vrcp.pop %v2211
  %v2220 = vmul.f32 %v2173, %v2212
  %v2221 = vmul.f32 %v2175, %v2213
  %v2222 = vmul.f32 %v2177, %v2214
  %v2223 = vmul.f32 %v2179, %v2215
  %v2224 = vmul.f32 %v2181, %v2216
  %v2225 = vmul.f32 %v2183, %v2217
  %v2226 = vmul.f32 %v2185, %v2218
  %v2227 = vmul.f32 %v2187, %v2219
  %v2229 = vsel %vm2139, %v2220, 0
  %v2232 = vsel %vm2139, %v2221, 0
  %v2235 = vsel %vm2139, %v2222, 0
  %v2238 = vsel %vm2139, %v2223, 0
  %v2241 = vsel %vm2139, %v2224, 0
  %v2244 = vsel %vm2139, %v2225, 0
  %v2247 = vsel %vm2139, %v2226, 0
  %v2250 = vsel %vm2139, %v2227, 0
  %vm2252 = vcmask 1044480
  %v2254 = vsel %vm2252, %v2004, 0
  %2256 = vmatprep.subr.mxu0 0.0
  %2257 = vmatpush1.msra.mxu0 0.0
  %2258 = vmatprep.subr.mxu0 0.0
  %2259 = vmatpush1.msra.mxu0 0.0
  %2260 = vmatprep.subr.mxu0 0.0
  %2261 = vmatpush1.msra.mxu0 0.0
  %2262 = vmatprep.subr.mxu0 0.0
  %2263 = vmatpush1.msra.mxu0 0.0
  %2264 = vmatprep.subr.mxu0 0.0
  %2265 = vmatpush1.msra.mxu0 0.0
  %2266 = vmatprep.subr.mxu0 0.0
  %2267 = vmatpush1.msra.mxu0 0.0
  %2268 = vmatprep.subr.mxu0 0.0
  %2269 = vmatpush1.msra.mxu0 0.0
  %2270 = vmatprep.subr.mxu0 0.0
  %2271 = vmatpush1.msra.mxu0 0.0
  %2272 = vmatprep.subr.mxu0 0.0
  %2273 = vmatpush1.msra.mxu0 0.0
  %2274 = vmatprep.subr.mxu0 0.0
  %2275 = vmatpush1.msra.mxu0 0.0
  %2276 = vmatprep.subr.mxu0 0.0
  %2277 = vmatpush1.msra.mxu0 0.0
  %2278 = vmatprep.subr.mxu0 0.0
  %2279 = vmatpush1.msra.mxu0 0.0
  %2280 = vmatprep.subr.mxu0 0.0
  %2281 = vmatpush1.msra.mxu0 0.0
  %2282 = vmatprep.subr.mxu0 0.0
  %2283 = vmatpush1.msra.mxu0 0.0
  %2284 = vmatprep.subr.mxu0 0.0
  %2285 = vmatpush1.msra.mxu0 0.0
  %2286 = vmatprep.subr.mxu0 0.0
  %2287 = vmatpush1.msra.mxu0 %v2254
  %2288 = vmatprep.subr.mxu0 0.0
  %2289 = vmatpush2.msra.mxu0 0.0
  %2290 = vmatprep.subr.mxu0 0.0
  %2291 = vmatpush2.msra.mxu0 0.0
  %2292 = vmatprep.subr.mxu0 0.0
  %2293 = vmatpush2.msra.mxu0 0.0
  %2294 = vmatprep.subr.mxu0 0.0
  %2295 = vmatpush2.msra.mxu0 0.0
  %2296 = vmatprep.subr.mxu0 0.0
  %2297 = vmatpush2.msra.mxu0 0.0
  %2298 = vmatprep.subr.mxu0 0.0
  %2299 = vmatpush2.msra.mxu0 0.0
  %2300 = vmatprep.subr.mxu0 0.0
  %2301 = vmatpush2.msra.mxu0 0.0
  %2302 = vmatprep.subr.mxu0 0.0
  %2303 = vmatpush2.msra.mxu0 0.0
  %2304 = vmatprep.subr.mxu0 0.0
  %2305 = vmatpush2.msra.mxu0 0.0
  %2306 = vmatprep.subr.mxu0 0.0
  %2307 = vmatpush2.msra.mxu0 0.0
  %2308 = vmatprep.subr.mxu0 0.0
  %2309 = vmatpush2.msra.mxu0 0.0
  %2310 = vmatprep.subr.mxu0 0.0
  %2311 = vmatpush2.msra.mxu0 0.0
  %2312 = vmatprep.subr.mxu0 0.0
  %2313 = vmatpush2.msra.mxu0 0.0
  %2314 = vmatprep.subr.mxu0 0.0
  %2315 = vmatpush2.msra.mxu0 0.0
  %2316 = vmatprep.subr.mxu0 0.0
  %2317 = vmatpush2.msra.mxu0 0.0
  %2318 = vmatprep.subr.mxu0 0.0
  %2319 = vmatpush2.msra.mxu0 0.0
  %2320 = vmatprep.mubr.f32.mxu0 0.0
  %2321 = vmatmul.mubr.f32.gmra.mxu0 %v2229
  %v2322 = vpop.f32.mrf.mxu0
  %v2323 = vadd.f32 0.0, %v2322
  %v2324 = vpop.f32.mrf.mxu0
  %2325 = vmatprep.mubr.f32.mxu0 0.0
  %2326 = vmatmul.mubr.f32.gmra.mxu0 %v2232
  %v2327 = vpop.f32.mrf.mxu0
  %v2328 = vadd.f32 0.0, %v2327
  %v2329 = vpop.f32.mrf.mxu0
  %2330 = vmatprep.mubr.f32.mxu0 0.0
  %2331 = vmatmul.mubr.f32.gmra.mxu0 %v2235
  %v2332 = vpop.f32.mrf.mxu0
  %v2333 = vadd.f32 0.0, %v2332
  %v2334 = vpop.f32.mrf.mxu0
  %2335 = vmatprep.mubr.f32.mxu0 0.0
  %2336 = vmatmul.mubr.f32.gmra.mxu0 %v2238
  %v2337 = vpop.f32.mrf.mxu0
  %v2338 = vadd.f32 0.0, %v2337
  %v2339 = vpop.f32.mrf.mxu0
  %2340 = vmatprep.mubr.f32.mxu0 0.0
  %2341 = vmatmul.mubr.f32.gmra.mxu0 %v2241
  %v2342 = vpop.f32.mrf.mxu0
  %v2343 = vadd.f32 0.0, %v2342
  %v2344 = vpop.f32.mrf.mxu0
  %2345 = vmatprep.mubr.f32.mxu0 0.0
  %2346 = vmatmul.mubr.f32.gmra.mxu0 %v2244
  %v2347 = vpop.f32.mrf.mxu0
  %v2348 = vadd.f32 0.0, %v2347
  %v2349 = vpop.f32.mrf.mxu0
  %2350 = vmatprep.mubr.f32.mxu0 0.0
  %2351 = vmatmul.mubr.f32.gmra.mxu0 %v2247
  %v2352 = vpop.f32.mrf.mxu0
  %v2353 = vadd.f32 0.0, %v2352
  %v2354 = vpop.f32.mrf.mxu0
  %2355 = vmatprep.mubr.f32.mxu0 0.0
  %2356 = vmatmul.mubr.f32.gmra.mxu0 %v2250
  %v2357 = vpop.f32.mrf.mxu0
  %v2358 = vadd.f32 0.0, %v2357
  %v2359 = vpop.f32.mrf.mxu0
  %2360 = vdwg.mxu0
  %v2361 = vld [vmem:[%s53] sm:$0xff]
  %v2362 = vld [vmem:[%s53 + $0x8] sm:$0xff]
  %v2363 = vld [vmem:[%s53 + $0x10] sm:$0xff]
  %v2364 = vld [vmem:[%s53 + $0x18] sm:$0xff]
  %v2365 = vld [vmem:[%s55] sm:$0x1]
  %v2367 = vlaneseq
  %v2368 = vshrl.u32 %v2367, 7
  %v2369 = vsub.s32 0, %v2368
  %v2370 = vrot.slane %v2365, %v2369
  %v2373 = vsel %vm287, %v2323, 0
  %v2376 = vsel %vm287, %v2328, 0
  %v2379 = vsel %vm287, %v2333, 0
  %v2382 = vsel %vm287, %v2338, 0
  %v2385 = vsel %vm287, %v2343, 0
  %v2388 = vsel %vm287, %v2348, 0
  %v2391 = vsel %vm287, %v2353, 0
  %v2394 = vsel %vm287, %v2358, 0
  %2396 = vmatprep.subr.mxu0 0.0
  %2397 = vmatpush1.msra.mxu0 0.0
  %2398 = vmatprep.subr.mxu0 0.0
  %2399 = vmatpush1.msra.mxu0 0.0
  %2400 = vmatprep.subr.mxu0 0.0
  %2401 = vmatpush1.msra.mxu0 0.0
  %2402 = vmatprep.subr.mxu0 0.0
  %2403 = vmatpush1.msra.mxu0 0.0
  %2404 = vmatprep.subr.mxu0 0.0
  %2405 = vmatpush1.msra.mxu0 0.0
  %2406 = vmatprep.subr.mxu0 0.0
  %2407 = vmatpush1.msra.mxu0 0.0
  %2408 = vmatprep.subr.mxu0 0.0
  %2409 = vmatpush1.msra.mxu0 0.0
  %2410 = vmatprep.subr.mxu0 0.0
  %2411 = vmatpush1.msra.mxu0 0.0
  %2412 = vmatprep.subr.mxu0 0.0
  %2413 = vmatpush1.msra.mxu0 0.0
  %2414 = vmatprep.subr.mxu0 0.0
  %2415 = vmatpush1.msra.mxu0 0.0
  %2416 = vmatprep.subr.mxu0 0.0
  %2417 = vmatpush1.msra.mxu0 0.0
  %2418 = vmatprep.subr.mxu0 0.0
  %2419 = vmatpush1.msra.mxu0 0.0
  %2420 = vmatprep.subr.mxu0 0.0
  %2421 = vmatpush1.msra.mxu0 %v2364
  %2422 = vmatprep.subr.mxu0 0.0
  %2423 = vmatpush1.msra.mxu0 %v2363
  %2424 = vmatprep.subr.mxu0 0.0
  %2425 = vmatpush1.msra.mxu0 %v2362
  %2426 = vmatprep.subr.mxu0 0.0
  %2427 = vmatpush1.msra.mxu0 %v2361
  %2428 = vmatprep.subr.mxu0 0.0
  %2429 = vmatpush2.msra.mxu0 0.0
  %2430 = vmatprep.subr.mxu0 0.0
  %2431 = vmatpush2.msra.mxu0 0.0
  %2432 = vmatprep.subr.mxu0 0.0
  %2433 = vmatpush2.msra.mxu0 0.0
  %2434 = vmatprep.subr.mxu0 0.0
  %2435 = vmatpush2.msra.mxu0 0.0
  %2436 = vmatprep.subr.mxu0 0.0
  %2437 = vmatpush2.msra.mxu0 0.0
  %2438 = vmatprep.subr.mxu0 0.0
  %2439 = vmatpush2.msra.mxu0 0.0
  %2440 = vmatprep.subr.mxu0 0.0
  %2441 = vmatpush2.msra.mxu0 0.0
  %2442 = vmatprep.subr.mxu0 0.0
  %2443 = vmatpush2.msra.mxu0 0.0
  %2444 = vmatprep.subr.mxu0 0.0
  %2445 = vmatpush2.msra.mxu0 0.0
  %2446 = vmatprep.subr.mxu0 0.0
  %2447 = vmatpush2.msra.mxu0 0.0
  %2448 = vmatprep.subr.mxu0 0.0
  %2449 = vmatpush2.msra.mxu0 0.0
  %2450 = vmatprep.subr.mxu0 0.0
  %2451 = vmatpush2.msra.mxu0 0.0
  %2452 = vmatprep.subr.mxu0 0.0
  %2453 = vmatpush2.msra.mxu0 0.0
  %2454 = vmatprep.subr.mxu0 0.0
  %2455 = vmatpush2.msra.mxu0 0.0
  %2456 = vmatprep.subr.mxu0 0.0
  %2457 = vmatpush2.msra.mxu0 0.0
  %2458 = vmatprep.subr.mxu0 0.0
  %2459 = vmatpush2.msra.mxu0 0.0
  %2460 = vmatprep.mubr.f32.mxu0 0.0
  %2461 = vmatmul.mubr.f32.gmra.mxu0 %v2373
  %v2462 = vpop.f32.mrf.mxu0
  %v2463 = vadd.f32 %v2370, %v2462
  %v2464 = vpop.f32.mrf.mxu0
  %2465 = vmatprep.mubr.f32.mxu0 0.0
  %2466 = vmatmul.mubr.f32.gmra.mxu0 %v2376
  %v2467 = vpop.f32.mrf.mxu0
  %v2468 = vadd.f32 %v2370, %v2467
  %v2469 = vpop.f32.mrf.mxu0
  %2470 = vmatprep.mubr.f32.mxu0 0.0
  %2471 = vmatmul.mubr.f32.gmra.mxu0 %v2379
  %v2472 = vpop.f32.mrf.mxu0
  %v2473 = vadd.f32 %v2370, %v2472
  %v2474 = vpop.f32.mrf.mxu0
  %2475 = vmatprep.mubr.f32.mxu0 0.0
  %2476 = vmatmul.mubr.f32.gmra.mxu0 %v2382
  %v2477 = vpop.f32.mrf.mxu0
  %v2478 = vadd.f32 %v2370, %v2477
  %v2479 = vpop.f32.mrf.mxu0
  %2480 = vmatprep.mubr.f32.mxu0 0.0
  %2481 = vmatmul.mubr.f32.gmra.mxu0 %v2385
  %v2482 = vpop.f32.mrf.mxu0
  %v2483 = vadd.f32 %v2370, %v2482
  %v2484 = vpop.f32.mrf.mxu0
  %2485 = vmatprep.mubr.f32.mxu0 0.0
  %2486 = vmatmul.mubr.f32.gmra.mxu0 %v2388
  %v2487 = vpop.f32.mrf.mxu0
  %v2488 = vadd.f32 %v2370, %v2487
  %v2489 = vpop.f32.mrf.mxu0
  %2490 = vmatprep.mubr.f32.mxu0 0.0
  %2491 = vmatmul.mubr.f32.gmra.mxu0 %v2391
  %v2492 = vpop.f32.mrf.mxu0
  %v2493 = vadd.f32 %v2370, %v2492
  %v2494 = vpop.f32.mrf.mxu0
  %2495 = vmatprep.mubr.f32.mxu0 0.0
  %2496 = vmatmul.mubr.f32.gmra.mxu0 %v2394
  %v2497 = vpop.f32.mrf.mxu0
  %v2498 = vadd.f32 %v2370, %v2497
  %v2499 = vpop.f32.mrf.mxu0
  %2500 = vdwg.mxu0
  %v2501 = vadd.f32 %v703, %v2463
  %v2502 = vadd.f32 %v704, %v2468
  %v2503 = vadd.f32 %v705, %v2473
  %v2504 = vadd.f32 %v706, %v2478
  %v2505 = vadd.f32 %v707, %v2483
  %v2506 = vadd.f32 %v708, %v2488
  %v2507 = vadd.f32 %v709, %v2493
  %v2508 = vadd.f32 %v710, %v2498
  %2509 = vst.msk [vmem:[%s69] sm:$0xff] %vm287, %v2501
  %2510 = vst.msk [vmem:[%s69 + $0x8] sm:$0xff] %vm287, %v2502
  %2511 = vst.msk [vmem:[%s69 + $0x10] sm:$0xff] %vm287, %v2503
  %2512 = vst.msk [vmem:[%s69 + $0x18] sm:$0xff] %vm287, %v2504
  %2513 = vst.msk [vmem:[%s69 + $0x20] sm:$0xff] %vm287, %v2505
  %2514 = vst.msk [vmem:[%s69 + $0x28] sm:$0xff] %vm287, %v2506
  %2515 = vst.msk [vmem:[%s69 + $0x30] sm:$0xff] %vm287, %v2507
  %2516 = vst.msk [vmem:[%s69 + $0x38] sm:$0xff] %vm287, %v2508
  %v2517 = vld [vmem:[%s57] sm:$0xff]
  %v2518 = vld [vmem:[%s57 + $0x8] sm:$0xff]
  %v2519 = vld [vmem:[%s57 + $0x10] sm:$0xff]
  %v2520 = vld [vmem:[%s57 + $0x18] sm:$0xff]
  %v2521 = vld [vmem:[%s59] sm:$0x1]
  %2522 = vmatprep.subr.mxu0 0.0
  %2523 = vmatpush1.msra.mxu0 0.0
  %2524 = vmatprep.subr.mxu0 0.0
  %2525 = vmatpush1.msra.mxu0 0.0
  %2526 = vmatprep.subr.mxu0 0.0
  %2527 = vmatpush1.msra.mxu0 0.0
  %2528 = vmatprep.subr.mxu0 0.0
  %2529 = vmatpush1.msra.mxu0 0.0
  %2530 = vmatprep.subr.mxu0 0.0
  %2531 = vmatpush1.msra.mxu0 0.0
  %2532 = vmatprep.subr.mxu0 0.0
  %2533 = vmatpush1.msra.mxu0 0.0
  %2534 = vmatprep.subr.mxu0 0.0
  %2535 = vmatpush1.msra.mxu0 0.0
  %2536 = vmatprep.subr.mxu0 0.0
  %2537 = vmatpush1.msra.mxu0 0.0
  %2538 = vmatprep.subr.mxu0 0.0
  %2539 = vmatpush1.msra.mxu0 0.0
  %2540 = vmatprep.subr.mxu0 0.0
  %2541 = vmatpush1.msra.mxu0 0.0
  %2542 = vmatprep.subr.mxu0 0.0
  %2543 = vmatpush1.msra.mxu0 0.0
  %2544 = vmatprep.subr.mxu0 0.0
  %2545 = vmatpush1.msra.mxu0 0.0
  %2546 = vmatprep.subr.mxu0 0.0
  %2547 = vmatpush1.msra.mxu0 %v2520
  %2548 = vmatprep.subr.mxu0 0.0
  %2549 = vmatpush1.msra.mxu0 %v2519
  %2550 = vmatprep.subr.mxu0 0.0
  %2551 = vmatpush1.msra.mxu0 %v2518
  %2552 = vmatprep.subr.mxu0 0.0
  %2553 = vmatpush1.msra.mxu0 %v2517
  %2554 = vmatprep.subr.mxu0 0.0
  %2555 = vmatpush2.msra.mxu0 0.0
  %2556 = vmatprep.subr.mxu0 0.0
  %2557 = vmatpush2.msra.mxu0 0.0
  %2558 = vmatprep.subr.mxu0 0.0
  %2559 = vmatpush2.msra.mxu0 0.0
  %2560 = vmatprep.subr.mxu0 0.0
  %2561 = vmatpush2.msra.mxu0 0.0
  %2562 = vmatprep.subr.mxu0 0.0
  %2563 = vmatpush2.msra.mxu0 0.0
  %2564 = vmatprep.subr.mxu0 0.0
  %2565 = vmatpush2.msra.mxu0 0.0
  %2566 = vmatprep.subr.mxu0 0.0
  %2567 = vmatpush2.msra.mxu0 0.0
  %2568 = vmatprep.subr.mxu0 0.0
  %2569 = vmatpush2.msra.mxu0 0.0
  %2570 = vmatprep.subr.mxu0 0.0
  %2571 = vmatpush2.msra.mxu0 0.0
  %2572 = vmatprep.subr.mxu0 0.0
  %2573 = vmatpush2.msra.mxu0 0.0
  %2574 = vmatprep.subr.mxu0 0.0
  %2575 = vmatpush2.msra.mxu0 0.0
  %2576 = vmatprep.subr.mxu0 0.0
  %2577 = vmatpush2.msra.mxu0 0.0
  %2578 = vmatprep.subr.mxu0 0.0
  %2579 = vmatpush2.msra.mxu0 0.0
  %2580 = vmatprep.subr.mxu0 0.0
  %2581 = vmatpush2.msra.mxu0 0.0
  %2582 = vmatprep.subr.mxu0 0.0
  %2583 = vmatpush2.msra.mxu0 0.0
  %2584 = vmatprep.subr.mxu0 0.0
  %2585 = vmatpush2.msra.mxu0 0.0
  %2586 = vmatprep.mubr.f32.mxu0 0.0
  %2587 = vmatmul.mubr.f32.gmra.mxu0 %v1854
  %v2588 = vpop.f32.mrf.mxu0
  %v2589 = vadd.f32 %v2521, %v2588
  %v2590 = vpop.f32.mrf.mxu0
  %2591 = vdwg.mxu0
  %v2592 = vmax.f32 %v2589, 0.0
  %v2593 = vld [vmem:[%s61] sm:$0xff]
  %v2594 = vld [vmem:[%s61 + $0x8] sm:$0xff]
  %v2595 = vld [vmem:[%s61 + $0x10] sm:$0xff]
  %v2596 = vld [vmem:[%s61 + $0x18] sm:$0xff]
  %v2597 = vld [vmem:[%s63] sm:$0x1]
  %v2599 = vsel %vm287, %v2592, 0
  %2601 = vmatprep.subr.mxu0 0.0
  %2602 = vmatpush1.msra.mxu0 0.0
  %2603 = vmatprep.subr.mxu0 0.0
  %2604 = vmatpush1.msra.mxu0 0.0
  %2605 = vmatprep.subr.mxu0 0.0
  %2606 = vmatpush1.msra.mxu0 0.0
  %2607 = vmatprep.subr.mxu0 0.0
  %2608 = vmatpush1.msra.mxu0 0.0
  %2609 = vmatprep.subr.mxu0 0.0
  %2610 = vmatpush1.msra.mxu0 0.0
  %2611 = vmatprep.subr.mxu0 0.0
  %2612 = vmatpush1.msra.mxu0 0.0
  %2613 = vmatprep.subr.mxu0 0.0
  %2614 = vmatpush1.msra.mxu0 0.0
  %2615 = vmatprep.subr.mxu0 0.0
  %2616 = vmatpush1.msra.mxu0 0.0
  %2617 = vmatprep.subr.mxu0 0.0
  %2618 = vmatpush1.msra.mxu0 0.0
  %2619 = vmatprep.subr.mxu0 0.0
  %2620 = vmatpush1.msra.mxu0 0.0
  %2621 = vmatprep.subr.mxu0 0.0
  %2622 = vmatpush1.msra.mxu0 0.0
  %2623 = vmatprep.subr.mxu0 0.0
  %2624 = vmatpush1.msra.mxu0 0.0
  %2625 = vmatprep.subr.mxu0 0.0
  %2626 = vmatpush1.msra.mxu0 %v2596
  %2627 = vmatprep.subr.mxu0 0.0
  %2628 = vmatpush1.msra.mxu0 %v2595
  %2629 = vmatprep.subr.mxu0 0.0
  %2630 = vmatpush1.msra.mxu0 %v2594
  %2631 = vmatprep.subr.mxu0 0.0
  %2632 = vmatpush1.msra.mxu0 %v2593
  %2633 = vmatprep.subr.mxu0 0.0
  %2634 = vmatpush2.msra.mxu0 0.0
  %2635 = vmatprep.subr.mxu0 0.0
  %2636 = vmatpush2.msra.mxu0 0.0
  %2637 = vmatprep.subr.mxu0 0.0
  %2638 = vmatpush2.msra.mxu0 0.0
  %2639 = vmatprep.subr.mxu0 0.0
  %2640 = vmatpush2.msra.mxu0 0.0
  %2641 = vmatprep.subr.mxu0 0.0
  %2642 = vmatpush2.msra.mxu0 0.0
  %2643 = vmatprep.subr.mxu0 0.0
  %2644 = vmatpush2.msra.mxu0 0.0
  %2645 = vmatprep.subr.mxu0 0.0
  %2646 = vmatpush2.msra.mxu0 0.0
  %2647 = vmatprep.subr.mxu0 0.0
  %2648 = vmatpush2.msra.mxu0 0.0
  %2649 = vmatprep.subr.mxu0 0.0
  %2650 = vmatpush2.msra.mxu0 0.0
  %2651 = vmatprep.subr.mxu0 0.0
  %2652 = vmatpush2.msra.mxu0 0.0
  %2653 = vmatprep.subr.mxu0 0.0
  %2654 = vmatpush2.msra.mxu0 0.0
  %2655 = vmatprep.subr.mxu0 0.0
  %2656 = vmatpush2.msra.mxu0 0.0
  %2657 = vmatprep.subr.mxu0 0.0
  %2658 = vmatpush2.msra.mxu0 0.0
  %2659 = vmatprep.subr.mxu0 0.0
  %2660 = vmatpush2.msra.mxu0 0.0
  %2661 = vmatprep.subr.mxu0 0.0
  %2662 = vmatpush2.msra.mxu0 0.0
  %2663 = vmatprep.subr.mxu0 0.0
  %2664 = vmatpush2.msra.mxu0 0.0
  %2665 = vmatprep.mubr.f32.mxu0 0.0
  %2666 = vmatmul.mubr.f32.gmra.mxu0 %v2599
  %v2667 = vpop.f32.mrf.mxu0
  %v2668 = vadd.f32 %v2597, %v2667
  %v2669 = vpop.f32.mrf.mxu0
  %2670 = vdwg.mxu0
  %v2671 = vmax.f32 %v2668, 0.0
  %v2672 = vld [vmem:[%s65] sm:$0xff]
  %v2673 = vld [vmem:[%s65 + $0x8] sm:$0xff]
  %v2674 = vld [vmem:[%s65 + $0x10] sm:$0xff]
  %v2675 = vld [vmem:[%s65 + $0x18] sm:$0xff]
  %v2676 = vld [vmem:[%s67] sm:$0x1]
  %v2678 = vsel %vm287, %v2671, 0
  %2680 = vmatprep.subr.mxu0 0.0
  %2681 = vmatpush1.msra.mxu0 0.0
  %2682 = vmatprep.subr.mxu0 0.0
  %2683 = vmatpush1.msra.mxu0 0.0
  %2684 = vmatprep.subr.mxu0 0.0
  %2685 = vmatpush1.msra.mxu0 0.0
  %2686 = vmatprep.subr.mxu0 0.0
  %2687 = vmatpush1.msra.mxu0 0.0
  %2688 = vmatprep.subr.mxu0 0.0
  %2689 = vmatpush1.msra.mxu0 0.0
  %2690 = vmatprep.subr.mxu0 0.0
  %2691 = vmatpush1.msra.mxu0 0.0
  %2692 = vmatprep.subr.mxu0 0.0
  %2693 = vmatpush1.msra.mxu0 0.0
  %2694 = vmatprep.subr.mxu0 0.0
  %2695 = vmatpush1.msra.mxu0 0.0
  %2696 = vmatprep.subr.mxu0 0.0
  %2697 = vmatpush1.msra.mxu0 0.0
  %2698 = vmatprep.subr.mxu0 0.0
  %2699 = vmatpush1.msra.mxu0 0.0
  %2700 = vmatprep.subr.mxu0 0.0
  %2701 = vmatpush1.msra.mxu0 0.0
  %2702 = vmatprep.subr.mxu0 0.0
  %2703 = vmatpush1.msra.mxu0 0.0
  %2704 = vmatprep.subr.mxu0 0.0
  %2705 = vmatpush1.msra.mxu0 %v2675
  %2706 = vmatprep.subr.mxu0 0.0
  %2707 = vmatpush1.msra.mxu0 %v2674
  %2708 = vmatprep.subr.mxu0 0.0
  %2709 = vmatpush1.msra.mxu0 %v2673
  %2710 = vmatprep.subr.mxu0 0.0
  %2711 = vmatpush1.msra.mxu0 %v2672
  %2712 = vmatprep.subr.mxu0 0.0
  %2713 = vmatpush2.msra.mxu0 0.0
  %2714 = vmatprep.subr.mxu0 0.0
  %2715 = vmatpush2.msra.mxu0 0.0
  %2716 = vmatprep.subr.mxu0 0.0
  %2717 = vmatpush2.msra.mxu0 0.0
  %2718 = vmatprep.subr.mxu0 0.0
  %2719 = vmatpush2.msra.mxu0 0.0
  %2720 = vmatprep.subr.mxu0 0.0
  %2721 = vmatpush2.msra.mxu0 0.0
  %2722 = vmatprep.subr.mxu0 0.0
  %2723 = vmatpush2.msra.mxu0 0.0
  %2724 = vmatprep.subr.mxu0 0.0
  %2725 = vmatpush2.msra.mxu0 0.0
  %2726 = vmatprep.subr.mxu0 0.0
  %2727 = vmatpush2.msra.mxu0 0.0
  %2728 = vmatprep.subr.mxu0 0.0
  %2729 = vmatpush2.msra.mxu0 0.0
  %2730 = vmatprep.subr.mxu0 0.0
  %2731 = vmatpush2.msra.mxu0 0.0
  %2732 = vmatprep.subr.mxu0 0.0
  %2733 = vmatpush2.msra.mxu0 0.0
  %2734 = vmatprep.subr.mxu0 0.0
  %2735 = vmatpush2.msra.mxu0 0.0
  %2736 = vmatprep.subr.mxu0 0.0
  %2737 = vmatpush2.msra.mxu0 0.0
  %2738 = vmatprep.subr.mxu0 0.0
  %2739 = vmatpush2.msra.mxu0 0.0
  %2740 = vmatprep.subr.mxu0 0.0
  %2741 = vmatpush2.msra.mxu0 0.0
  %2742 = vmatprep.subr.mxu0 0.0
  %2743 = vmatpush2.msra.mxu0 0.0
  %2744 = vmatprep.mubr.f32.mxu0 0.0
  %2745 = vmatmul.mubr.f32.gmra.mxu0 %v2678
  %v2746 = vpop.f32.mrf.mxu0
  %v2747 = vadd.f32 %v2676, %v2746
  %v2748 = vpop.f32.mrf.mxu0
  %2749 = vdwg.mxu0
  %vm2750 = vcmask 24576
  %2751 = vst.msk [vmem:[%s71] sm:$0x1] %vm2750, %v2747
  %s2752 = scalar_lea.vmem %s7, 8
  %v2753 = vld [vmem:[%s2752] sm:$0x1f]
  %v2754 = vld [vmem:[%s17] sm:$0xff]
  %v2755 = vld [vmem:[%s17 + $0x8] sm:$0xff]
  %v2756 = vld [vmem:[%s17 + $0x10] sm:$0xff]
  %v2757 = vld [vmem:[%s17 + $0x18] sm:$0xff]
  %v2758 = vld [vmem:[%s19] sm:$0x1]
  %v2760 = vlaneseq
  %v2761 = vshrl.u32 %v2760, 7
  %v2762 = vsub.s32 0, %v2761
  %v2763 = vrot.slane %v2758, %v2762
  %v2766 = vsel %vm287, %v2753, 0
  %2768 = vmatprep.subr.mxu0 0.0
  %2769 = vmatpush1.msra.mxu0 0.0
  %2770 = vmatprep.subr.mxu0 0.0
  %2771 = vmatpush1.msra.mxu0 0.0
  %2772 = vmatprep.subr.mxu0 0.0
  %2773 = vmatpush1.msra.mxu0 0.0
  %2774 = vmatprep.subr.mxu0 0.0
  %2775 = vmatpush1.msra.mxu0 0.0
  %2776 = vmatprep.subr.mxu0 0.0
  %2777 = vmatpush1.msra.mxu0 0.0
  %2778 = vmatprep.subr.mxu0 0.0
  %2779 = vmatpush1.msra.mxu0 0.0
  %2780 = vmatprep.subr.mxu0 0.0
  %2781 = vmatpush1.msra.mxu0 0.0
  %2782 = vmatprep.subr.mxu0 0.0
  %2783 = vmatpush1.msra.mxu0 0.0
  %2784 = vmatprep.subr.mxu0 0.0
  %2785 = vmatpush1.msra.mxu0 0.0
  %2786 = vmatprep.subr.mxu0 0.0
  %2787 = vmatpush1.msra.mxu0 0.0
  %2788 = vmatprep.subr.mxu0 0.0
  %2789 = vmatpush1.msra.mxu0 0.0
  %2790 = vmatprep.subr.mxu0 0.0
  %2791 = vmatpush1.msra.mxu0 0.0
  %2792 = vmatprep.subr.mxu0 0.0
  %2793 = vmatpush1.msra.mxu0 %v2757
  %2794 = vmatprep.subr.mxu0 0.0
  %2795 = vmatpush1.msra.mxu0 %v2756
  %2796 = vmatprep.subr.mxu0 0.0
  %2797 = vmatpush1.msra.mxu0 %v2755
  %2798 = vmatprep.subr.mxu0 0.0
  %2799 = vmatpush1.msra.mxu0 %v2754
  %2800 = vmatprep.subr.mxu0 0.0
  %2801 = vmatpush2.msra.mxu0 0.0
  %2802 = vmatprep.subr.mxu0 0.0
  %2803 = vmatpush2.msra.mxu0 0.0
  %2804 = vmatprep.subr.mxu0 0.0
  %2805 = vmatpush2.msra.mxu0 0.0
  %2806 = vmatprep.subr.mxu0 0.0
  %2807 = vmatpush2.msra.mxu0 0.0
  %2808 = vmatprep.subr.mxu0 0.0
  %2809 = vmatpush2.msra.mxu0 0.0
  %2810 = vmatprep.subr.mxu0 0.0
  %2811 = vmatpush2.msra.mxu0 0.0
  %2812 = vmatprep.subr.mxu0 0.0
  %2813 = vmatpush2.msra.mxu0 0.0
  %2814 = vmatprep.subr.mxu0 0.0
  %2815 = vmatpush2.msra.mxu0 0.0
  %2816 = vmatprep.subr.mxu0 0.0
  %2817 = vmatpush2.msra.mxu0 0.0
  %2818 = vmatprep.subr.mxu0 0.0
  %2819 = vmatpush2.msra.mxu0 0.0
  %2820 = vmatprep.subr.mxu0 0.0
  %2821 = vmatpush2.msra.mxu0 0.0
  %2822 = vmatprep.subr.mxu0 0.0
  %2823 = vmatpush2.msra.mxu0 0.0
  %2824 = vmatprep.subr.mxu0 0.0
  %2825 = vmatpush2.msra.mxu0 0.0
  %2826 = vmatprep.subr.mxu0 0.0
  %2827 = vmatpush2.msra.mxu0 0.0
  %2828 = vmatprep.subr.mxu0 0.0
  %2829 = vmatpush2.msra.mxu0 0.0
  %2830 = vmatprep.subr.mxu0 0.0
  %2831 = vmatpush2.msra.mxu0 0.0
  %2832 = vmatprep.mubr.f32.mxu0 0.0
  %2833 = vmatmul.mubr.f32.gmra.mxu0 %v2766
  %v2834 = vpop.f32.mrf.mxu0
  %v2835 = vadd.f32 %v2763, %v2834
  %v2836 = vpop.f32.mrf.mxu0
  %2837 = vdwg.mxu0
  %v2839 = vsel %vm287, %v2835, 0
  %v2842 = vsel %vm287, %v917, 0
  %v2845 = vsel %vm287, %v922, 0
  %v2848 = vsel %vm287, %v927, 0
  %v2851 = vsel %vm287, %v932, 0
  %v2854 = vsel %vm287, %v937, 0
  %v2857 = vsel %vm287, %v942, 0
  %v2860 = vsel %vm287, %v947, 0
  %v2863 = vsel %vm287, %v952, 0
  %2865 = vmatprep.subr.mxu0 0.0
  %2866 = vmatpush1.xpose.msra.mxu0 0.0
  %2867 = vmatprep.subr.mxu0 0.0
  %2868 = vmatpush1.xpose.msra.mxu0 0.0
  %2869 = vmatprep.subr.mxu0 0.0
  %2870 = vmatpush1.xpose.msra.mxu0 0.0
  %2871 = vmatprep.subr.mxu0 0.0
  %2872 = vmatpush1.xpose.msra.mxu0 0.0
  %2873 = vmatprep.subr.mxu0 0.0
  %2874 = vmatpush1.xpose.msra.mxu0 0.0
  %2875 = vmatprep.subr.mxu0 0.0
  %2876 = vmatpush1.xpose.msra.mxu0 0.0
  %2877 = vmatprep.subr.mxu0 0.0
  %2878 = vmatpush1.xpose.msra.mxu0 0.0
  %2879 = vmatprep.subr.mxu0 0.0
  %2880 = vmatpush1.xpose.msra.mxu0 0.0
  %2881 = vmatprep.subr.mxu0 0.0
  %2882 = vmatpush1.xpose.msra.mxu0 %v2863
  %2883 = vmatprep.subr.mxu0 0.0
  %2884 = vmatpush1.xpose.msra.mxu0 %v2860
  %2885 = vmatprep.subr.mxu0 0.0
  %2886 = vmatpush1.xpose.msra.mxu0 %v2857
  %2887 = vmatprep.subr.mxu0 0.0
  %2888 = vmatpush1.xpose.msra.mxu0 %v2854
  %2889 = vmatprep.subr.mxu0 0.0
  %2890 = vmatpush1.xpose.msra.mxu0 %v2851
  %2891 = vmatprep.subr.mxu0 0.0
  %2892 = vmatpush1.xpose.msra.mxu0 %v2848
  %2893 = vmatprep.subr.mxu0 0.0
  %2894 = vmatpush1.xpose.msra.mxu0 %v2845
  %2895 = vmatprep.subr.mxu0 0.0
  %2896 = vmatpush1.xpose.msra.mxu0 %v2842
  %2897 = vmatprep.subr.mxu0 0.0
  %2898 = vmatpush2.xpose.msra.mxu0 0.0
  %2899 = vmatprep.subr.mxu0 0.0
  %2900 = vmatpush2.xpose.msra.mxu0 0.0
  %2901 = vmatprep.subr.mxu0 0.0
  %2902 = vmatpush2.xpose.msra.mxu0 0.0
  %2903 = vmatprep.subr.mxu0 0.0
  %2904 = vmatpush2.xpose.msra.mxu0 0.0
  %2905 = vmatprep.subr.mxu0 0.0
  %2906 = vmatpush2.xpose.msra.mxu0 0.0
  %2907 = vmatprep.subr.mxu0 0.0
  %2908 = vmatpush2.xpose.msra.mxu0 0.0
  %2909 = vmatprep.subr.mxu0 0.0
  %2910 = vmatpush2.xpose.msra.mxu0 0.0
  %2911 = vmatprep.subr.mxu0 0.0
  %2912 = vmatpush2.xpose.msra.mxu0 0.0
  %2913 = vmatprep.subr.mxu0 0.0
  %2914 = vmatpush2.xpose.msra.mxu0 0.0
  %2915 = vmatprep.subr.mxu0 0.0
  %2916 = vmatpush2.xpose.msra.mxu0 0.0
  %2917 = vmatprep.subr.mxu0 0.0
  %2918 = vmatpush2.xpose.msra.mxu0 0.0
  %2919 = vmatprep.subr.mxu0 0.0
  %2920 = vmatpush2.xpose.msra.mxu0 0.0
  %2921 = vmatprep.subr.mxu0 0.0
  %2922 = vmatpush2.xpose.msra.mxu0 0.0
  %2923 = vmatprep.subr.mxu0 0.0
  %2924 = vmatpush2.xpose.msra.mxu0 0.0
  %2925 = vmatprep.subr.mxu0 0.0
  %2926 = vmatpush2.xpose.msra.mxu0 0.0
  %2927 = vmatprep.subr.mxu0 0.0
  %2928 = vmatpush2.xpose.msra.mxu0 0.0
  %2929 = vmatprep.mubr.f32.mxu0 0.0
  %2930 = vmatmul.mubr.f32.gmra.mxu0 %v2839
  %v2931 = vpop.f32.mrf.mxu0
  %v2932 = vadd.f32 0.0, %v2931
  %v2933 = vpop.f32.mrf.mxu0
  %2934 = vdwg.mxu0
  %v2935 = vsel %vm1497, %v2932, -inf
  %2936 = vmax.xlane.f32.xlu0 %v2935
  %v2937 = vpop.xlane.xlu0 %2936
  %v2938 = vsub.f32 %v2932, %v2937
  %v2939 = vmul.f32 %v2938, 1.442695
  %v2940 = vpow.pop %v2939
  %v2941 = vsel %vm1497, %v2940, 0.0
  %2942 = vadd.xlane.f32.xlu0 %v2941
  %v2943 = vpop.xlane.xlu0 %2942
  %v2944 = vrcp.pop %v2943
  %v2945 = vmul.f32 %v2940, %v2944
  %v2947 = vsel %vm1509, %v2945, 0
  %2949 = vmatprep.subr.mxu0 0.0
  %2950 = vmatpush1.msra.mxu0 0.0
  %2951 = vmatprep.subr.mxu0 0.0
  %2952 = vmatpush1.msra.mxu0 0.0
  %2953 = vmatprep.subr.mxu0 0.0
  %2954 = vmatpush1.msra.mxu0 0.0
  %2955 = vmatprep.subr.mxu0 0.0
  %2956 = vmatpush1.msra.mxu0 0.0
  %2957 = vmatprep.subr.mxu0 0.0
  %2958 = vmatpush1.msra.mxu0 0.0
  %2959 = vmatprep.subr.mxu0 0.0
  %2960 = vmatpush1.msra.mxu0 0.0
  %2961 = vmatprep.subr.mxu0 0.0
  %2962 = vmatpush1.msra.mxu0 0.0
  %2963 = vmatprep.subr.mxu0 0.0
  %2964 = vmatpush1.msra.mxu0 0.0
  %2965 = vmatprep.subr.mxu0 0.0
  %2966 = vmatpush1.msra.mxu0 %v1156
  %2967 = vmatprep.subr.mxu0 0.0
  %2968 = vmatpush1.msra.mxu0 %v1151
  %2969 = vmatprep.subr.mxu0 0.0
  %2970 = vmatpush1.msra.mxu0 %v1146
  %2971 = vmatprep.subr.mxu0 0.0
  %2972 = vmatpush1.msra.mxu0 %v1141
  %2973 = vmatprep.subr.mxu0 0.0
  %2974 = vmatpush1.msra.mxu0 %v1136
  %2975 = vmatprep.subr.mxu0 0.0
  %2976 = vmatpush1.msra.mxu0 %v1131
  %2977 = vmatprep.subr.mxu0 0.0
  %2978 = vmatpush1.msra.mxu0 %v1126
  %2979 = vmatprep.subr.mxu0 0.0
  %2980 = vmatpush1.msra.mxu0 %v1121
  %2981 = vmatprep.subr.mxu0 0.0
  %2982 = vmatpush2.msra.mxu0 0.0
  %2983 = vmatprep.subr.mxu0 0.0
  %2984 = vmatpush2.msra.mxu0 0.0
  %2985 = vmatprep.subr.mxu0 0.0
  %2986 = vmatpush2.msra.mxu0 0.0
  %2987 = vmatprep.subr.mxu0 0.0
  %2988 = vmatpush2.msra.mxu0 0.0
  %2989 = vmatprep.subr.mxu0 0.0
  %2990 = vmatpush2.msra.mxu0 0.0
  %2991 = vmatprep.subr.mxu0 0.0
  %2992 = vmatpush2.msra.mxu0 0.0
  %2993 = vmatprep.subr.mxu0 0.0
  %2994 = vmatpush2.msra.mxu0 0.0
  %2995 = vmatprep.subr.mxu0 0.0
  %2996 = vmatpush2.msra.mxu0 0.0
  %2997 = vmatprep.subr.mxu0 0.0
  %2998 = vmatpush2.msra.mxu0 0.0
  %2999 = vmatprep.subr.mxu0 0.0
  %3000 = vmatpush2.msra.mxu0 0.0
  %3001 = vmatprep.subr.mxu0 0.0
  %3002 = vmatpush2.msra.mxu0 0.0
  %3003 = vmatprep.subr.mxu0 0.0
  %3004 = vmatpush2.msra.mxu0 0.0
  %3005 = vmatprep.subr.mxu0 0.0
  %3006 = vmatpush2.msra.mxu0 0.0
  %3007 = vmatprep.subr.mxu0 0.0
  %3008 = vmatpush2.msra.mxu0 0.0
  %3009 = vmatprep.subr.mxu0 0.0
  %3010 = vmatpush2.msra.mxu0 0.0
  %3011 = vmatprep.subr.mxu0 0.0
  %3012 = vmatpush2.msra.mxu0 0.0
  %3013 = vmatprep.mubr.f32.mxu0 0.0
  %3014 = vmatmul.mubr.f32.gmra.mxu0 %v2947
  %v3015 = vpop.f32.mrf.mxu0
  %v3016 = vadd.f32 0.0, %v3015
  %v3017 = vpop.f32.mrf.mxu0
  %3018 = vdwg.mxu0
  %v3019 = vld [vmem:[%s29] sm:$0xff]
  %v3020 = vld [vmem:[%s29 + $0x8] sm:$0xff]
  %v3021 = vld [vmem:[%s29 + $0x10] sm:$0xff]
  %v3022 = vld [vmem:[%s29 + $0x18] sm:$0xff]
  %v3023 = vld [vmem:[%s31] sm:$0x1]
  %v3025 = vlaneseq
  %v3026 = vshrl.u32 %v3025, 7
  %v3027 = vsub.s32 0, %v3026
  %v3028 = vrot.slane %v3023, %v3027
  %v3031 = vsel %vm287, %v3016, 0
  %3033 = vmatprep.subr.mxu0 0.0
  %3034 = vmatpush1.msra.mxu0 0.0
  %3035 = vmatprep.subr.mxu0 0.0
  %3036 = vmatpush1.msra.mxu0 0.0
  %3037 = vmatprep.subr.mxu0 0.0
  %3038 = vmatpush1.msra.mxu0 0.0
  %3039 = vmatprep.subr.mxu0 0.0
  %3040 = vmatpush1.msra.mxu0 0.0
  %3041 = vmatprep.subr.mxu0 0.0
  %3042 = vmatpush1.msra.mxu0 0.0
  %3043 = vmatprep.subr.mxu0 0.0
  %3044 = vmatpush1.msra.mxu0 0.0
  %3045 = vmatprep.subr.mxu0 0.0
  %3046 = vmatpush1.msra.mxu0 0.0
  %3047 = vmatprep.subr.mxu0 0.0
  %3048 = vmatpush1.msra.mxu0 0.0
  %3049 = vmatprep.subr.mxu0 0.0
  %3050 = vmatpush1.msra.mxu0 0.0
  %3051 = vmatprep.subr.mxu0 0.0
  %3052 = vmatpush1.msra.mxu0 0.0
  %3053 = vmatprep.subr.mxu0 0.0
  %3054 = vmatpush1.msra.mxu0 0.0
  %3055 = vmatprep.subr.mxu0 0.0
  %3056 = vmatpush1.msra.mxu0 0.0
  %3057 = vmatprep.subr.mxu0 0.0
  %3058 = vmatpush1.msra.mxu0 %v3022
  %3059 = vmatprep.subr.mxu0 0.0
  %3060 = vmatpush1.msra.mxu0 %v3021
  %3061 = vmatprep.subr.mxu0 0.0
  %3062 = vmatpush1.msra.mxu0 %v3020
  %3063 = vmatprep.subr.mxu0 0.0
  %3064 = vmatpush1.msra.mxu0 %v3019
  %3065 = vmatprep.subr.mxu0 0.0
  %3066 = vmatpush2.msra.mxu0 0.0
  %3067 = vmatprep.subr.mxu0 0.0
  %3068 = vmatpush2.msra.mxu0 0.0
  %3069 = vmatprep.subr.mxu0 0.0
  %3070 = vmatpush2.msra.mxu0 0.0
  %3071 = vmatprep.subr.mxu0 0.0
  %3072 = vmatpush2.msra.mxu0 0.0
  %3073 = vmatprep.subr.mxu0 0.0
  %3074 = vmatpush2.msra.mxu0 0.0
  %3075 = vmatprep.subr.mxu0 0.0
  %3076 = vmatpush2.msra.mxu0 0.0
  %3077 = vmatprep.subr.mxu0 0.0
  %3078 = vmatpush2.msra.mxu0 0.0
  %3079 = vmatprep.subr.mxu0 0.0
  %3080 = vmatpush2.msra.mxu0 0.0
  %3081 = vmatprep.subr.mxu0 0.0
  %3082 = vmatpush2.msra.mxu0 0.0
  %3083 = vmatprep.subr.mxu0 0.0
  %3084 = vmatpush2.msra.mxu0 0.0
  %3085 = vmatprep.subr.mxu0 0.0
  %3086 = vmatpush2.msra.mxu0 0.0
  %3087 = vmatprep.subr.mxu0 0.0
  %3088 = vmatpush2.msra.mxu0 0.0
  %3089 = vmatprep.subr.mxu0 0.0
  %3090 = vmatpush2.msra.mxu0 0.0
  %3091 = vmatprep.subr.mxu0 0.0
  %3092 = vmatpush2.msra.mxu0 0.0
  %3093 = vmatprep.subr.mxu0 0.0
  %3094 = vmatpush2.msra.mxu0 0.0
  %3095 = vmatprep.subr.mxu0 0.0
  %3096 = vmatpush2.msra.mxu0 0.0
  %3097 = vmatprep.mubr.f32.mxu0 0.0
  %3098 = vmatmul.mubr.f32.gmra.mxu0 %v3031
  %v3099 = vpop.f32.mrf.mxu0
  %v3100 = vadd.f32 %v3028, %v3099
  %v3101 = vpop.f32.mrf.mxu0
  %3102 = vdwg.mxu0
  %v3103 = vadd.f32 %v2753, %v3100
  %v3104 = vld [vmem:[%s33] sm:$0xff]
  %v3105 = vld [vmem:[%s33 + $0x8] sm:$0xff]
  %v3106 = vld [vmem:[%s33 + $0x10] sm:$0xff]
  %v3107 = vld [vmem:[%s33 + $0x18] sm:$0xff]
  %v3108 = vld [vmem:[%s35] sm:$0x1]
  %v3110 = vlaneseq
  %v3111 = vshrl.u32 %v3110, 7
  %v3112 = vsub.s32 0, %v3111
  %v3113 = vrot.slane %v3108, %v3112
  %v3116 = vsel %vm287, %v3103, 0
  %3118 = vmatprep.subr.mxu0 0.0
  %3119 = vmatpush1.msra.mxu0 0.0
  %3120 = vmatprep.subr.mxu0 0.0
  %3121 = vmatpush1.msra.mxu0 0.0
  %3122 = vmatprep.subr.mxu0 0.0
  %3123 = vmatpush1.msra.mxu0 0.0
  %3124 = vmatprep.subr.mxu0 0.0
  %3125 = vmatpush1.msra.mxu0 0.0
  %3126 = vmatprep.subr.mxu0 0.0
  %3127 = vmatpush1.msra.mxu0 0.0
  %3128 = vmatprep.subr.mxu0 0.0
  %3129 = vmatpush1.msra.mxu0 0.0
  %3130 = vmatprep.subr.mxu0 0.0
  %3131 = vmatpush1.msra.mxu0 0.0
  %3132 = vmatprep.subr.mxu0 0.0
  %3133 = vmatpush1.msra.mxu0 0.0
  %3134 = vmatprep.subr.mxu0 0.0
  %3135 = vmatpush1.msra.mxu0 0.0
  %3136 = vmatprep.subr.mxu0 0.0
  %3137 = vmatpush1.msra.mxu0 0.0
  %3138 = vmatprep.subr.mxu0 0.0
  %3139 = vmatpush1.msra.mxu0 0.0
  %3140 = vmatprep.subr.mxu0 0.0
  %3141 = vmatpush1.msra.mxu0 0.0
  %3142 = vmatprep.subr.mxu0 0.0
  %3143 = vmatpush1.msra.mxu0 %v3107
  %3144 = vmatprep.subr.mxu0 0.0
  %3145 = vmatpush1.msra.mxu0 %v3106
  %3146 = vmatprep.subr.mxu0 0.0
  %3147 = vmatpush1.msra.mxu0 %v3105
  %3148 = vmatprep.subr.mxu0 0.0
  %3149 = vmatpush1.msra.mxu0 %v3104
  %3150 = vmatprep.subr.mxu0 0.0
  %3151 = vmatpush2.msra.mxu0 0.0
  %3152 = vmatprep.subr.mxu0 0.0
  %3153 = vmatpush2.msra.mxu0 0.0
  %3154 = vmatprep.subr.mxu0 0.0
  %3155 = vmatpush2.msra.mxu0 0.0
  %3156 = vmatprep.subr.mxu0 0.0
  %3157 = vmatpush2.msra.mxu0 0.0
  %3158 = vmatprep.subr.mxu0 0.0
  %3159 = vmatpush2.msra.mxu0 0.0
  %3160 = vmatprep.subr.mxu0 0.0
  %3161 = vmatpush2.msra.mxu0 0.0
  %3162 = vmatprep.subr.mxu0 0.0
  %3163 = vmatpush2.msra.mxu0 0.0
  %3164 = vmatprep.subr.mxu0 0.0
  %3165 = vmatpush2.msra.mxu0 0.0
  %3166 = vmatprep.subr.mxu0 0.0
  %3167 = vmatpush2.msra.mxu0 0.0
  %3168 = vmatprep.subr.mxu0 0.0
  %3169 = vmatpush2.msra.mxu0 0.0
  %3170 = vmatprep.subr.mxu0 0.0
  %3171 = vmatpush2.msra.mxu0 0.0
  %3172 = vmatprep.subr.mxu0 0.0
  %3173 = vmatpush2.msra.mxu0 0.0
  %3174 = vmatprep.subr.mxu0 0.0
  %3175 = vmatpush2.msra.mxu0 0.0
  %3176 = vmatprep.subr.mxu0 0.0
  %3177 = vmatpush2.msra.mxu0 0.0
  %3178 = vmatprep.subr.mxu0 0.0
  %3179 = vmatpush2.msra.mxu0 0.0
  %3180 = vmatprep.subr.mxu0 0.0
  %3181 = vmatpush2.msra.mxu0 0.0
  %3182 = vmatprep.mubr.f32.mxu0 0.0
  %3183 = vmatmul.mubr.f32.gmra.mxu0 %v3116
  %v3184 = vpop.f32.mrf.mxu0
  %v3185 = vadd.f32 %v3113, %v3184
  %v3186 = vpop.f32.mrf.mxu0
  %3187 = vdwg.mxu0
  %v3188 = vmax.f32 %v3185, 0.0
  %v3189 = vld [vmem:[%s37] sm:$0xff]
  %v3190 = vld [vmem:[%s37 + $0x8] sm:$0xff]
  %v3191 = vld [vmem:[%s37 + $0x10] sm:$0xff]
  %v3192 = vld [vmem:[%s37 + $0x18] sm:$0xff]
  %v3193 = vld [vmem:[%s37 + $0x20] sm:$0xff]
  %v3194 = vld [vmem:[%s37 + $0x28] sm:$0xff]
  %v3195 = vld [vmem:[%s37 + $0x30] sm:$0xff]
  %v3196 = vld [vmem:[%s37 + $0x38] sm:$0xff]
  %v3197 = vld [vmem:[%s39] sm:$0x1]
  %v3199 = vlaneseq
  %v3200 = vshrl.u32 %v3199, 7
  %v3201 = vsub.s32 0, %v3200
  %v3202 = vrot.slane %v3197, %v3201
  %v3205 = vsel %vm1509, %v3188, 0
  %3207 = vmatprep.subr.mxu0 0.0
  %3208 = vmatpush1.msra.mxu0 0.0
  %3209 = vmatprep.subr.mxu0 0.0
  %3210 = vmatpush1.msra.mxu0 0.0
  %3211 = vmatprep.subr.mxu0 0.0
  %3212 = vmatpush1.msra.mxu0 0.0
  %3213 = vmatprep.subr.mxu0 0.0
  %3214 = vmatpush1.msra.mxu0 0.0
  %3215 = vmatprep.subr.mxu0 0.0
  %3216 = vmatpush1.msra.mxu0 0.0
  %3217 = vmatprep.subr.mxu0 0.0
  %3218 = vmatpush1.msra.mxu0 0.0
  %3219 = vmatprep.subr.mxu0 0.0
  %3220 = vmatpush1.msra.mxu0 0.0
  %3221 = vmatprep.subr.mxu0 0.0
  %3222 = vmatpush1.msra.mxu0 0.0
  %3223 = vmatprep.subr.mxu0 0.0
  %3224 = vmatpush1.msra.mxu0 %v3196
  %3225 = vmatprep.subr.mxu0 0.0
  %3226 = vmatpush1.msra.mxu0 %v3195
  %3227 = vmatprep.subr.mxu0 0.0
  %3228 = vmatpush1.msra.mxu0 %v3194
  %3229 = vmatprep.subr.mxu0 0.0
  %3230 = vmatpush1.msra.mxu0 %v3193
  %3231 = vmatprep.subr.mxu0 0.0
  %3232 = vmatpush1.msra.mxu0 %v3192
  %3233 = vmatprep.subr.mxu0 0.0
  %3234 = vmatpush1.msra.mxu0 %v3191
  %3235 = vmatprep.subr.mxu0 0.0
  %3236 = vmatpush1.msra.mxu0 %v3190
  %3237 = vmatprep.subr.mxu0 0.0
  %3238 = vmatpush1.msra.mxu0 %v3189
  %3239 = vmatprep.subr.mxu0 0.0
  %3240 = vmatpush2.msra.mxu0 0.0
  %3241 = vmatprep.subr.mxu0 0.0
  %3242 = vmatpush2.msra.mxu0 0.0
  %3243 = vmatprep.subr.mxu0 0.0
  %3244 = vmatpush2.msra.mxu0 0.0
  %3245 = vmatprep.subr.mxu0 0.0
  %3246 = vmatpush2.msra.mxu0 0.0
  %3247 = vmatprep.subr.mxu0 0.0
  %3248 = vmatpush2.msra.mxu0 0.0
  %3249 = vmatprep.subr.mxu0 0.0
  %3250 = vmatpush2.msra.mxu0 0.0
  %3251 = vmatprep.subr.mxu0 0.0
  %3252 = vmatpush2.msra.mxu0 0.0
  %3253 = vmatprep.subr.mxu0 0.0
  %3254 = vmatpush2.msra.mxu0 0.0
  %3255 = vmatprep.subr.mxu0 0.0
  %3256 = vmatpush2.msra.mxu0 0.0
  %3257 = vmatprep.subr.mxu0 0.0
  %3258 = vmatpush2.msra.mxu0 0.0
  %3259 = vmatprep.subr.mxu0 0.0
  %3260 = vmatpush2.msra.mxu0 0.0
  %3261 = vmatprep.subr.mxu0 0.0
  %3262 = vmatpush2.msra.mxu0 0.0
  %3263 = vmatprep.subr.mxu0 0.0
  %3264 = vmatpush2.msra.mxu0 0.0
  %3265 = vmatprep.subr.mxu0 0.0
  %3266 = vmatpush2.msra.mxu0 0.0
  %3267 = vmatprep.subr.mxu0 0.0
  %3268 = vmatpush2.msra.mxu0 0.0
  %3269 = vmatprep.subr.mxu0 0.0
  %3270 = vmatpush2.msra.mxu0 0.0
  %3271 = vmatprep.mubr.f32.mxu0 0.0
  %3272 = vmatmul.mubr.f32.gmra.mxu0 %v3205
  %v3273 = vpop.f32.mrf.mxu0
  %v3274 = vadd.f32 %v3202, %v3273
  %v3275 = vpop.f32.mrf.mxu0
  %3276 = vdwg.mxu0
  %v3277 = vadd.f32 %v3103, %v3274
  %v3278 = vld [vmem:[%s45] sm:$0xff]
  %v3279 = vld [vmem:[%s45 + $0x8] sm:$0xff]
  %v3280 = vld [vmem:[%s45 + $0x10] sm:$0xff]
  %v3281 = vld [vmem:[%s45 + $0x18] sm:$0xff]
  %v3282 = vld [vmem:[%s47] sm:$0x1]
  %v3284 = vlaneseq
  %v3285 = vshrl.u32 %v3284, 7
  %v3286 = vsub.s32 0, %v3285
  %v3287 = vrot.slane %v3282, %v3286
  %v3290 = vsel %vm287, %v3277, 0
  %3292 = vmatprep.subr.mxu0 0.0
  %3293 = vmatpush1.msra.mxu0 0.0
  %3294 = vmatprep.subr.mxu0 0.0
  %3295 = vmatpush1.msra.mxu0 0.0
  %3296 = vmatprep.subr.mxu0 0.0
  %3297 = vmatpush1.msra.mxu0 0.0
  %3298 = vmatprep.subr.mxu0 0.0
  %3299 = vmatpush1.msra.mxu0 0.0
  %3300 = vmatprep.subr.mxu0 0.0
  %3301 = vmatpush1.msra.mxu0 0.0
  %3302 = vmatprep.subr.mxu0 0.0
  %3303 = vmatpush1.msra.mxu0 0.0
  %3304 = vmatprep.subr.mxu0 0.0
  %3305 = vmatpush1.msra.mxu0 0.0
  %3306 = vmatprep.subr.mxu0 0.0
  %3307 = vmatpush1.msra.mxu0 0.0
  %3308 = vmatprep.subr.mxu0 0.0
  %3309 = vmatpush1.msra.mxu0 0.0
  %3310 = vmatprep.subr.mxu0 0.0
  %3311 = vmatpush1.msra.mxu0 0.0
  %3312 = vmatprep.subr.mxu0 0.0
  %3313 = vmatpush1.msra.mxu0 0.0
  %3314 = vmatprep.subr.mxu0 0.0
  %3315 = vmatpush1.msra.mxu0 0.0
  %3316 = vmatprep.subr.mxu0 0.0
  %3317 = vmatpush1.msra.mxu0 %v3281
  %3318 = vmatprep.subr.mxu0 0.0
  %3319 = vmatpush1.msra.mxu0 %v3280
  %3320 = vmatprep.subr.mxu0 0.0
  %3321 = vmatpush1.msra.mxu0 %v3279
  %3322 = vmatprep.subr.mxu0 0.0
  %3323 = vmatpush1.msra.mxu0 %v3278
  %3324 = vmatprep.subr.mxu0 0.0
  %3325 = vmatpush2.msra.mxu0 0.0
  %3326 = vmatprep.subr.mxu0 0.0
  %3327 = vmatpush2.msra.mxu0 0.0
  %3328 = vmatprep.subr.mxu0 0.0
  %3329 = vmatpush2.msra.mxu0 0.0
  %3330 = vmatprep.subr.mxu0 0.0
  %3331 = vmatpush2.msra.mxu0 0.0
  %3332 = vmatprep.subr.mxu0 0.0
  %3333 = vmatpush2.msra.mxu0 0.0
  %3334 = vmatprep.subr.mxu0 0.0
  %3335 = vmatpush2.msra.mxu0 0.0
  %3336 = vmatprep.subr.mxu0 0.0
  %3337 = vmatpush2.msra.mxu0 0.0
  %3338 = vmatprep.subr.mxu0 0.0
  %3339 = vmatpush2.msra.mxu0 0.0
  %3340 = vmatprep.subr.mxu0 0.0
  %3341 = vmatpush2.msra.mxu0 0.0
  %3342 = vmatprep.subr.mxu0 0.0
  %3343 = vmatpush2.msra.mxu0 0.0
  %3344 = vmatprep.subr.mxu0 0.0
  %3345 = vmatpush2.msra.mxu0 0.0
  %3346 = vmatprep.subr.mxu0 0.0
  %3347 = vmatpush2.msra.mxu0 0.0
  %3348 = vmatprep.subr.mxu0 0.0
  %3349 = vmatpush2.msra.mxu0 0.0
  %3350 = vmatprep.subr.mxu0 0.0
  %3351 = vmatpush2.msra.mxu0 0.0
  %3352 = vmatprep.subr.mxu0 0.0
  %3353 = vmatpush2.msra.mxu0 0.0
  %3354 = vmatprep.subr.mxu0 0.0
  %3355 = vmatpush2.msra.mxu0 0.0
  %3356 = vmatprep.mubr.f32.mxu0 0.0
  %3357 = vmatmul.mubr.f32.gmra.mxu0 %v3290
  %v3358 = vpop.f32.mrf.mxu0
  %v3359 = vadd.f32 %v3287, %v3358
  %v3360 = vpop.f32.mrf.mxu0
  %3361 = vdwg.mxu0
  %v3362 = vld [vmem:[%s49] sm:$0xff]
  %v3363 = vld [vmem:[%s49 + $0x8] sm:$0xff]
  %v3364 = vld [vmem:[%s49 + $0x10] sm:$0xff]
  %v3365 = vld [vmem:[%s49 + $0x18] sm:$0xff]
  %v3366 = vld [vmem:[%s51] sm:$0x1]
  %v3368 = vlaneseq
  %v3369 = vshrl.u32 %v3368, 7
  %v3370 = vsub.s32 0, %v3369
  %v3371 = vrot.slane %v3366, %v3370
  %3373 = vmatprep.subr.mxu0 0.0
  %3374 = vmatpush1.msra.mxu0 0.0
  %3375 = vmatprep.subr.mxu0 0.0
  %3376 = vmatpush1.msra.mxu0 0.0
  %3377 = vmatprep.subr.mxu0 0.0
  %3378 = vmatpush1.msra.mxu0 0.0
  %3379 = vmatprep.subr.mxu0 0.0
  %3380 = vmatpush1.msra.mxu0 0.0
  %3381 = vmatprep.subr.mxu0 0.0
  %3382 = vmatpush1.msra.mxu0 0.0
  %3383 = vmatprep.subr.mxu0 0.0
  %3384 = vmatpush1.msra.mxu0 0.0
  %3385 = vmatprep.subr.mxu0 0.0
  %3386 = vmatpush1.msra.mxu0 0.0
  %3387 = vmatprep.subr.mxu0 0.0
  %3388 = vmatpush1.msra.mxu0 0.0
  %3389 = vmatprep.subr.mxu0 0.0
  %3390 = vmatpush1.msra.mxu0 0.0
  %3391 = vmatprep.subr.mxu0 0.0
  %3392 = vmatpush1.msra.mxu0 0.0
  %3393 = vmatprep.subr.mxu0 0.0
  %3394 = vmatpush1.msra.mxu0 0.0
  %3395 = vmatprep.subr.mxu0 0.0
  %3396 = vmatpush1.msra.mxu0 0.0
  %3397 = vmatprep.subr.mxu0 0.0
  %3398 = vmatpush1.msra.mxu0 %v3365
  %3399 = vmatprep.subr.mxu0 0.0
  %3400 = vmatpush1.msra.mxu0 %v3364
  %3401 = vmatprep.subr.mxu0 0.0
  %3402 = vmatpush1.msra.mxu0 %v3363
  %3403 = vmatprep.subr.mxu0 0.0
  %3404 = vmatpush1.msra.mxu0 %v3362
  %3405 = vmatprep.subr.mxu0 0.0
  %3406 = vmatpush2.msra.mxu0 0.0
  %3407 = vmatprep.subr.mxu0 0.0
  %3408 = vmatpush2.msra.mxu0 0.0
  %3409 = vmatprep.subr.mxu0 0.0
  %3410 = vmatpush2.msra.mxu0 0.0
  %3411 = vmatprep.subr.mxu0 0.0
  %3412 = vmatpush2.msra.mxu0 0.0
  %3413 = vmatprep.subr.mxu0 0.0
  %3414 = vmatpush2.msra.mxu0 0.0
  %3415 = vmatprep.subr.mxu0 0.0
  %3416 = vmatpush2.msra.mxu0 0.0
  %3417 = vmatprep.subr.mxu0 0.0
  %3418 = vmatpush2.msra.mxu0 0.0
  %3419 = vmatprep.subr.mxu0 0.0
  %3420 = vmatpush2.msra.mxu0 0.0
  %3421 = vmatprep.subr.mxu0 0.0
  %3422 = vmatpush2.msra.mxu0 0.0
  %3423 = vmatprep.subr.mxu0 0.0
  %3424 = vmatpush2.msra.mxu0 0.0
  %3425 = vmatprep.subr.mxu0 0.0
  %3426 = vmatpush2.msra.mxu0 0.0
  %3427 = vmatprep.subr.mxu0 0.0
  %3428 = vmatpush2.msra.mxu0 0.0
  %3429 = vmatprep.subr.mxu0 0.0
  %3430 = vmatpush2.msra.mxu0 0.0
  %3431 = vmatprep.subr.mxu0 0.0
  %3432 = vmatpush2.msra.mxu0 0.0
  %3433 = vmatprep.subr.mxu0 0.0
  %3434 = vmatpush2.msra.mxu0 0.0
  %3435 = vmatprep.subr.mxu0 0.0
  %3436 = vmatpush2.msra.mxu0 0.0
  %3437 = vmatprep.mubr.f32.mxu0 0.0
  %3438 = vmatmul.mubr.f32.gmra.mxu0 %v3290
  %v3439 = vpop.f32.mrf.mxu0
  %v3440 = vadd.f32 %v3371, %v3439
  %v3441 = vpop.f32.mrf.mxu0
  %3442 = vdwg.mxu0
  %v3444 = vsel %vm287, %v1277, 0
  %v3447 = vsel %vm287, %v1282, 0
  %v3450 = vsel %vm287, %v1287, 0
  %v3453 = vsel %vm287, %v1292, 0
  %v3456 = vsel %vm287, %v1297, 0
  %v3459 = vsel %vm287, %v1302, 0
  %v3462 = vsel %vm287, %v1307, 0
  %v3465 = vsel %vm287, %v1312, 0
  %v3468 = vsel %vm287, %v3359, 0
  %3470 = vmatprep.subr.mxu0 0.0
  %3471 = vmatpush1.xpose.msra.mxu0 0.0
  %3472 = vmatprep.subr.mxu0 0.0
  %3473 = vmatpush1.xpose.msra.mxu0 0.0
  %3474 = vmatprep.subr.mxu0 0.0
  %3475 = vmatpush1.xpose.msra.mxu0 0.0
  %3476 = vmatprep.subr.mxu0 0.0
  %3477 = vmatpush1.xpose.msra.mxu0 0.0
  %3478 = vmatprep.subr.mxu0 0.0
  %3479 = vmatpush1.xpose.msra.mxu0 0.0
  %3480 = vmatprep.subr.mxu0 0.0
  %3481 = vmatpush1.xpose.msra.mxu0 0.0
  %3482 = vmatprep.subr.mxu0 0.0
  %3483 = vmatpush1.xpose.msra.mxu0 0.0
  %3484 = vmatprep.subr.mxu0 0.0
  %3485 = vmatpush1.xpose.msra.mxu0 0.0
  %3486 = vmatprep.subr.mxu0 0.0
  %3487 = vmatpush1.xpose.msra.mxu0 0.0
  %3488 = vmatprep.subr.mxu0 0.0
  %3489 = vmatpush1.xpose.msra.mxu0 0.0
  %3490 = vmatprep.subr.mxu0 0.0
  %3491 = vmatpush1.xpose.msra.mxu0 0.0
  %3492 = vmatprep.subr.mxu0 0.0
  %3493 = vmatpush1.xpose.msra.mxu0 0.0
  %3494 = vmatprep.subr.mxu0 0.0
  %3495 = vmatpush1.xpose.msra.mxu0 0.0
  %3496 = vmatprep.subr.mxu0 0.0
  %3497 = vmatpush1.xpose.msra.mxu0 0.0
  %3498 = vmatprep.subr.mxu0 0.0
  %3499 = vmatpush1.xpose.msra.mxu0 0.0
  %3500 = vmatprep.subr.mxu0 0.0
  %3501 = vmatpush1.xpose.msra.mxu0 %v3468
  %3502 = vmatprep.subr.mxu0 0.0
  %3503 = vmatpush2.xpose.msra.mxu0 0.0
  %3504 = vmatprep.subr.mxu0 0.0
  %3505 = vmatpush2.xpose.msra.mxu0 0.0
  %3506 = vmatprep.subr.mxu0 0.0
  %3507 = vmatpush2.xpose.msra.mxu0 0.0
  %3508 = vmatprep.subr.mxu0 0.0
  %3509 = vmatpush2.xpose.msra.mxu0 0.0
  %3510 = vmatprep.subr.mxu0 0.0
  %3511 = vmatpush2.xpose.msra.mxu0 0.0
  %3512 = vmatprep.subr.mxu0 0.0
  %3513 = vmatpush2.xpose.msra.mxu0 0.0
  %3514 = vmatprep.subr.mxu0 0.0
  %3515 = vmatpush2.xpose.msra.mxu0 0.0
  %3516 = vmatprep.subr.mxu0 0.0
  %3517 = vmatpush2.xpose.msra.mxu0 0.0
  %3518 = vmatprep.subr.mxu0 0.0
  %3519 = vmatpush2.xpose.msra.mxu0 0.0
  %3520 = vmatprep.subr.mxu0 0.0
  %3521 = vmatpush2.xpose.msra.mxu0 0.0
  %3522 = vmatprep.subr.mxu0 0.0
  %3523 = vmatpush2.xpose.msra.mxu0 0.0
  %3524 = vmatprep.subr.mxu0 0.0
  %3525 = vmatpush2.xpose.msra.mxu0 0.0
  %3526 = vmatprep.subr.mxu0 0.0
  %3527 = vmatpush2.xpose.msra.mxu0 0.0
  %3528 = vmatprep.subr.mxu0 0.0
  %3529 = vmatpush2.xpose.msra.mxu0 0.0
  %3530 = vmatprep.subr.mxu0 0.0
  %3531 = vmatpush2.xpose.msra.mxu0 0.0
  %3532 = vmatprep.subr.mxu0 0.0
  %3533 = vmatpush2.xpose.msra.mxu0 0.0
  %3534 = vmatprep.mubr.f32.mxu0 0.0
  %3535 = vmatmul.mubr.f32.gmra.mxu0 %v3444
  %v3536 = vpop.f32.mrf.mxu0
  %v3537 = vadd.f32 0.0, %v3536
  %v3538 = vpop.f32.mrf.mxu0
  %3539 = vmatprep.mubr.f32.mxu0 0.0
  %3540 = vmatmul.mubr.f32.gmra.mxu0 %v3447
  %v3541 = vpop.f32.mrf.mxu0
  %v3542 = vadd.f32 0.0, %v3541
  %v3543 = vpop.f32.mrf.mxu0
  %3544 = vmatprep.mubr.f32.mxu0 0.0
  %3545 = vmatmul.mubr.f32.gmra.mxu0 %v3450
  %v3546 = vpop.f32.mrf.mxu0
  %v3547 = vadd.f32 0.0, %v3546
  %v3548 = vpop.f32.mrf.mxu0
  %3549 = vmatprep.mubr.f32.mxu0 0.0
  %3550 = vmatmul.mubr.f32.gmra.mxu0 %v3453
  %v3551 = vpop.f32.mrf.mxu0
  %v3552 = vadd.f32 0.0, %v3551
  %v3553 = vpop.f32.mrf.mxu0
  %3554 = vmatprep.mubr.f32.mxu0 0.0
  %3555 = vmatmul.mubr.f32.gmra.mxu0 %v3456
  %v3556 = vpop.f32.mrf.mxu0
  %v3557 = vadd.f32 0.0, %v3556
  %v3558 = vpop.f32.mrf.mxu0
  %3559 = vmatprep.mubr.f32.mxu0 0.0
  %3560 = vmatmul.mubr.f32.gmra.mxu0 %v3459
  %v3561 = vpop.f32.mrf.mxu0
  %v3562 = vadd.f32 0.0, %v3561
  %v3563 = vpop.f32.mrf.mxu0
  %3564 = vmatprep.mubr.f32.mxu0 0.0
  %3565 = vmatmul.mubr.f32.gmra.mxu0 %v3462
  %v3566 = vpop.f32.mrf.mxu0
  %v3567 = vadd.f32 0.0, %v3566
  %v3568 = vpop.f32.mrf.mxu0
  %3569 = vmatprep.mubr.f32.mxu0 0.0
  %3570 = vmatmul.mubr.f32.gmra.mxu0 %v3465
  %v3571 = vpop.f32.mrf.mxu0
  %v3572 = vadd.f32 0.0, %v3571
  %v3573 = vpop.f32.mrf.mxu0
  %3574 = vdwg.mxu0
  %v3575 = vsel %vm2139, %v3537, -inf
  %3576 = vmax.xlane.f32.xlu0 %v3575
  %v3577 = vpop.xlane.xlu0 %3576
  %v3578 = vsel %vm2139, %v3542, -inf
  %3579 = vmax.xlane.f32.xlu0 %v3578
  %v3580 = vpop.xlane.xlu0 %3579
  %v3581 = vsel %vm2139, %v3547, -inf
  %3582 = vmax.xlane.f32.xlu0 %v3581
  %v3583 = vpop.xlane.xlu0 %3582
  %v3584 = vsel %vm2139, %v3552, -inf
  %3585 = vmax.xlane.f32.xlu0 %v3584
  %v3586 = vpop.xlane.xlu0 %3585
  %v3587 = vsel %vm2139, %v3557, -inf
  %3588 = vmax.xlane.f32.xlu0 %v3587
  %v3589 = vpop.xlane.xlu0 %3588
  %v3590 = vsel %vm2139, %v3562, -inf
  %3591 = vmax.xlane.f32.xlu0 %v3590
  %v3592 = vpop.xlane.xlu0 %3591
  %v3593 = vsel %vm2139, %v3567, -inf
  %3594 = vmax.xlane.f32.xlu0 %v3593
  %v3595 = vpop.xlane.xlu0 %3594
  %v3596 = vsel %vm2139, %v3572, -inf
  %3597 = vmax.xlane.f32.xlu0 %v3596
  %v3598 = vpop.xlane.xlu0 %3597
  %v3599 = vsub.f32 %v3537, %v3577
  %v3600 = vsub.f32 %v3542, %v3580
  %v3601 = vsub.f32 %v3547, %v3583
  %v3602 = vsub.f32 %v3552, %v3586
  %v3603 = vsub.f32 %v3557, %v3589
  %v3604 = vsub.f32 %v3562, %v3592
  %v3605 = vsub.f32 %v3567, %v3595
  %v3606 = vsub.f32 %v3572, %v3598
  %v3607 = vmul.f32 %v3599, 1.442695
  %v3608 = vpow.pop %v3607
  %v3609 = vmul.f32 %v3600, 1.442695
  %v3610 = vpow.pop %v3609
  %v3611 = vmul.f32 %v3601, 1.442695
  %v3612 = vpow.pop %v3611
  %v3613 = vmul.f32 %v3602, 1.442695
  %v3614 = vpow.pop %v3613
  %v3615 = vmul.f32 %v3603, 1.442695
  %v3616 = vpow.pop %v3615
  %v3617 = vmul.f32 %v3604, 1.442695
  %v3618 = vpow.pop %v3617
  %v3619 = vmul.f32 %v3605, 1.442695
  %v3620 = vpow.pop %v3619
  %v3621 = vmul.f32 %v3606, 1.442695
  %v3622 = vpow.pop %v3621
  %v3623 = vsel %vm2139, %v3608, 0.0
  %3624 = vadd.xlane.f32.xlu0 %v3623
  %v3625 = vpop.xlane.xlu0 %3624
  %v3626 = vsel %vm2139, %v3610, 0.0
  %3627 = vadd.xlane.f32.xlu0 %v3626
  %v3628 = vpop.xlane.xlu0 %3627
  %v3629 = vsel %vm2139, %v3612, 0.0
  %3630 = vadd.xlane.f32.xlu0 %v3629
  %v3631 = vpop.xlane.xlu0 %3630
  %v3632 = vsel %vm2139, %v3614, 0.0
  %3633 = vadd.xlane.f32.xlu0 %v3632
  %v3634 = vpop.xlane.xlu0 %3633
  %v3635 = vsel %vm2139, %v3616, 0.0
  %3636 = vadd.xlane.f32.xlu0 %v3635
  %v3637 = vpop.xlane.xlu0 %3636
  %v3638 = vsel %vm2139, %v3618, 0.0
  %3639 = vadd.xlane.f32.xlu0 %v3638
  %v3640 = vpop.xlane.xlu0 %3639
  %v3641 = vsel %vm2139, %v3620, 0.0
  %3642 = vadd.xlane.f32.xlu0 %v3641
  %v3643 = vpop.xlane.xlu0 %3642
  %v3644 = vsel %vm2139, %v3622, 0.0
  %3645 = vadd.xlane.f32.xlu0 %v3644
  %v3646 = vpop.xlane.xlu0 %3645
  %v3647 = vrcp.pop %v3625
  %v3648 = vrcp.pop %v3628
  %v3649 = vrcp.pop %v3631
  %v3650 = vrcp.pop %v3634
  %v3651 = vrcp.pop %v3637
  %v3652 = vrcp.pop %v3640
  %v3653 = vrcp.pop %v3643
  %v3654 = vrcp.pop %v3646
  %v3655 = vmul.f32 %v3608, %v3647
  %v3656 = vmul.f32 %v3610, %v3648
  %v3657 = vmul.f32 %v3612, %v3649
  %v3658 = vmul.f32 %v3614, %v3650
  %v3659 = vmul.f32 %v3616, %v3651
  %v3660 = vmul.f32 %v3618, %v3652
  %v3661 = vmul.f32 %v3620, %v3653
  %v3662 = vmul.f32 %v3622, %v3654
  %v3664 = vsel %vm2139, %v3655, 0
  %v3667 = vsel %vm2139, %v3656, 0
  %v3670 = vsel %vm2139, %v3657, 0
  %v3673 = vsel %vm2139, %v3658, 0
  %v3676 = vsel %vm2139, %v3659, 0
  %v3679 = vsel %vm2139, %v3660, 0
  %v3682 = vsel %vm2139, %v3661, 0
  %v3685 = vsel %vm2139, %v3662, 0
  %v3688 = vsel %vm2252, %v3440, 0
  %3690 = vmatprep.subr.mxu0 0.0
  %3691 = vmatpush1.msra.mxu0 0.0
  %3692 = vmatprep.subr.mxu0 0.0
  %3693 = vmatpush1.msra.mxu0 0.0
  %3694 = vmatprep.subr.mxu0 0.0
  %3695 = vmatpush1.msra.mxu0 0.0
  %3696 = vmatprep.subr.mxu0 0.0
  %3697 = vmatpush1.msra.mxu0 0.0
  %3698 = vmatprep.subr.mxu0 0.0
  %3699 = vmatpush1.msra.mxu0 0.0
  %3700 = vmatprep.subr.mxu0 0.0
  %3701 = vmatpush1.msra.mxu0 0.0
  %3702 = vmatprep.subr.mxu0 0.0
  %3703 = vmatpush1.msra.mxu0 0.0
  %3704 = vmatprep.subr.mxu0 0.0
  %3705 = vmatpush1.msra.mxu0 0.0
  %3706 = vmatprep.subr.mxu0 0.0
  %3707 = vmatpush1.msra.mxu0 0.0
  %3708 = vmatprep.subr.mxu0 0.0
  %3709 = vmatpush1.msra.mxu0 0.0
  %3710 = vmatprep.subr.mxu0 0.0
  %3711 = vmatpush1.msra.mxu0 0.0
  %3712 = vmatprep.subr.mxu0 0.0
  %3713 = vmatpush1.msra.mxu0 0.0
  %3714 = vmatprep.subr.mxu0 0.0
  %3715 = vmatpush1.msra.mxu0 0.0
  %3716 = vmatprep.subr.mxu0 0.0
  %3717 = vmatpush1.msra.mxu0 0.0
  %3718 = vmatprep.subr.mxu0 0.0
  %3719 = vmatpush1.msra.mxu0 0.0
  %3720 = vmatprep.subr.mxu0 0.0
  %3721 = vmatpush1.msra.mxu0 %v3688
  %3722 = vmatprep.subr.mxu0 0.0
  %3723 = vmatpush2.msra.mxu0 0.0
  %3724 = vmatprep.subr.mxu0 0.0
  %3725 = vmatpush2.msra.mxu0 0.0
  %3726 = vmatprep.subr.mxu0 0.0
  %3727 = vmatpush2.msra.mxu0 0.0
  %3728 = vmatprep.subr.mxu0 0.0
  %3729 = vmatpush2.msra.mxu0 0.0
  %3730 = vmatprep.subr.mxu0 0.0
  %3731 = vmatpush2.msra.mxu0 0.0
  %3732 = vmatprep.subr.mxu0 0.0
  %3733 = vmatpush2.msra.mxu0 0.0
  %3734 = vmatprep.subr.mxu0 0.0
  %3735 = vmatpush2.msra.mxu0 0.0
  %3736 = vmatprep.subr.mxu0 0.0
  %3737 = vmatpush2.msra.mxu0 0.0
  %3738 = vmatprep.subr.mxu0 0.0
  %3739 = vmatpush2.msra.mxu0 0.0
  %3740 = vmatprep.subr.mxu0 0.0
  %3741 = vmatpush2.msra.mxu0 0.0
  %3742 = vmatprep.subr.mxu0 0.0
  %3743 = vmatpush2.msra.mxu0 0.0
  %3744 = vmatprep.subr.mxu0 0.0
  %3745 = vmatpush2.msra.mxu0 0.0
  %3746 = vmatprep.subr.mxu0 0.0
  %3747 = vmatpush2.msra.mxu0 0.0
  %3748 = vmatprep.subr.mxu0 0.0
  %3749 = vmatpush2.msra.mxu0 0.0
  %3750 = vmatprep.subr.mxu0 0.0
  %3751 = vmatpush2.msra.mxu0 0.0
  %3752 = vmatprep.subr.mxu0 0.0
  %3753 = vmatpush2.msra.mxu0 0.0
  %3754 = vmatprep.mubr.f32.mxu0 0.0
  %3755 = vmatmul.mubr.f32.gmra.mxu0 %v3664
  %v3756 = vpop.f32.mrf.mxu0
  %v3757 = vadd.f32 0.0, %v3756
  %v3758 = vpop.f32.mrf.mxu0
  %3759 = vmatprep.mubr.f32.mxu0 0.0
  %3760 = vmatmul.mubr.f32.gmra.mxu0 %v3667
  %v3761 = vpop.f32.mrf.mxu0
  %v3762 = vadd.f32 0.0, %v3761
  %v3763 = vpop.f32.mrf.mxu0
  %3764 = vmatprep.mubr.f32.mxu0 0.0
  %3765 = vmatmul.mubr.f32.gmra.mxu0 %v3670
  %v3766 = vpop.f32.mrf.mxu0
  %v3767 = vadd.f32 0.0, %v3766
  %v3768 = vpop.f32.mrf.mxu0
  %3769 = vmatprep.mubr.f32.mxu0 0.0
  %3770 = vmatmul.mubr.f32.gmra.mxu0 %v3673
  %v3771 = vpop.f32.mrf.mxu0
  %v3772 = vadd.f32 0.0, %v3771
  %v3773 = vpop.f32.mrf.mxu0
  %3774 = vmatprep.mubr.f32.mxu0 0.0
  %3775 = vmatmul.mubr.f32.gmra.mxu0 %v3676
  %v3776 = vpop.f32.mrf.mxu0
  %v3777 = vadd.f32 0.0, %v3776
  %v3778 = vpop.f32.mrf.mxu0
  %3779 = vmatprep.mubr.f32.mxu0 0.0
  %3780 = vmatmul.mubr.f32.gmra.mxu0 %v3679
  %v3781 = vpop.f32.mrf.mxu0
  %v3782 = vadd.f32 0.0, %v3781
  %v3783 = vpop.f32.mrf.mxu0
  %3784 = vmatprep.mubr.f32.mxu0 0.0
  %3785 = vmatmul.mubr.f32.gmra.mxu0 %v3682
  %v3786 = vpop.f32.mrf.mxu0
  %v3787 = vadd.f32 0.0, %v3786
  %v3788 = vpop.f32.mrf.mxu0
  %3789 = vmatprep.mubr.f32.mxu0 0.0
  %3790 = vmatmul.mubr.f32.gmra.mxu0 %v3685
  %v3791 = vpop.f32.mrf.mxu0
  %v3792 = vadd.f32 0.0, %v3791
  %v3793 = vpop.f32.mrf.mxu0
  %3794 = vdwg.mxu0
  %v3795 = vld [vmem:[%s53] sm:$0xff]
  %v3796 = vld [vmem:[%s53 + $0x8] sm:$0xff]
  %v3797 = vld [vmem:[%s53 + $0x10] sm:$0xff]
  %v3798 = vld [vmem:[%s53 + $0x18] sm:$0xff]
  %v3799 = vld [vmem:[%s55] sm:$0x1]
  %v3801 = vlaneseq
  %v3802 = vshrl.u32 %v3801, 7
  %v3803 = vsub.s32 0, %v3802
  %v3804 = vrot.slane %v3799, %v3803
  %v3807 = vsel %vm287, %v3757, 0
  %v3810 = vsel %vm287, %v3762, 0
  %v3813 = vsel %vm287, %v3767, 0
  %v3816 = vsel %vm287, %v3772, 0
  %v3819 = vsel %vm287, %v3777, 0
  %v3822 = vsel %vm287, %v3782, 0
  %v3825 = vsel %vm287, %v3787, 0
  %v3828 = vsel %vm287, %v3792, 0
  %3830 = vmatprep.subr.mxu0 0.0
  %3831 = vmatpush1.msra.mxu0 0.0
  %3832 = vmatprep.subr.mxu0 0.0
  %3833 = vmatpush1.msra.mxu0 0.0
  %3834 = vmatprep.subr.mxu0 0.0
  %3835 = vmatpush1.msra.mxu0 0.0
  %3836 = vmatprep.subr.mxu0 0.0
  %3837 = vmatpush1.msra.mxu0 0.0
  %3838 = vmatprep.subr.mxu0 0.0
  %3839 = vmatpush1.msra.mxu0 0.0
  %3840 = vmatprep.subr.mxu0 0.0
  %3841 = vmatpush1.msra.mxu0 0.0
  %3842 = vmatprep.subr.mxu0 0.0
  %3843 = vmatpush1.msra.mxu0 0.0
  %3844 = vmatprep.subr.mxu0 0.0
  %3845 = vmatpush1.msra.mxu0 0.0
  %3846 = vmatprep.subr.mxu0 0.0
  %3847 = vmatpush1.msra.mxu0 0.0
  %3848 = vmatprep.subr.mxu0 0.0
  %3849 = vmatpush1.msra.mxu0 0.0
  %3850 = vmatprep.subr.mxu0 0.0
  %3851 = vmatpush1.msra.mxu0 0.0
  %3852 = vmatprep.subr.mxu0 0.0
  %3853 = vmatpush1.msra.mxu0 0.0
  %3854 = vmatprep.subr.mxu0 0.0
  %3855 = vmatpush1.msra.mxu0 %v3798
  %3856 = vmatprep.subr.mxu0 0.0
  %3857 = vmatpush1.msra.mxu0 %v3797
  %3858 = vmatprep.subr.mxu0 0.0
  %3859 = vmatpush1.msra.mxu0 %v3796
  %3860 = vmatprep.subr.mxu0 0.0
  %3861 = vmatpush1.msra.mxu0 %v3795
  %3862 = vmatprep.subr.mxu0 0.0
  %3863 = vmatpush2.msra.mxu0 0.0
  %3864 = vmatprep.subr.mxu0 0.0
  %3865 = vmatpush2.msra.mxu0 0.0
  %3866 = vmatprep.subr.mxu0 0.0
  %3867 = vmatpush2.msra.mxu0 0.0
  %3868 = vmatprep.subr.mxu0 0.0
  %3869 = vmatpush2.msra.mxu0 0.0
  %3870 = vmatprep.subr.mxu0 0.0
  %3871 = vmatpush2.msra.mxu0 0.0
  %3872 = vmatprep.subr.mxu0 0.0
  %3873 = vmatpush2.msra.mxu0 0.0
  %3874 = vmatprep.subr.mxu0 0.0
  %3875 = vmatpush2.msra.mxu0 0.0
  %3876 = vmatprep.subr.mxu0 0.0
  %3877 = vmatpush2.msra.mxu0 0.0
  %3878 = vmatprep.subr.mxu0 0.0
  %3879 = vmatpush2.msra.mxu0 0.0
  %3880 = vmatprep.subr.mxu0 0.0
  %3881 = vmatpush2.msra.mxu0 0.0
  %3882 = vmatprep.subr.mxu0 0.0
  %3883 = vmatpush2.msra.mxu0 0.0
  %3884 = vmatprep.subr.mxu0 0.0
  %3885 = vmatpush2.msra.mxu0 0.0
  %3886 = vmatprep.subr.mxu0 0.0
  %3887 = vmatpush2.msra.mxu0 0.0
  %3888 = vmatprep.subr.mxu0 0.0
  %3889 = vmatpush2.msra.mxu0 0.0
  %3890 = vmatprep.subr.mxu0 0.0
  %3891 = vmatpush2.msra.mxu0 0.0
  %3892 = vmatprep.subr.mxu0 0.0
  %3893 = vmatpush2.msra.mxu0 0.0
  %3894 = vmatprep.mubr.f32.mxu0 0.0
  %3895 = vmatmul.mubr.f32.gmra.mxu0 %v3807
  %v3896 = vpop.f32.mrf.mxu0
  %v3897 = vadd.f32 %v3804, %v3896
  %v3898 = vpop.f32.mrf.mxu0
  %3899 = vmatprep.mubr.f32.mxu0 0.0
  %3900 = vmatmul.mubr.f32.gmra.mxu0 %v3810
  %v3901 = vpop.f32.mrf.mxu0
  %v3902 = vadd.f32 %v3804, %v3901
  %v3903 = vpop.f32.mrf.mxu0
  %3904 = vmatprep.mubr.f32.mxu0 0.0
  %3905 = vmatmul.mubr.f32.gmra.mxu0 %v3813
  %v3906 = vpop.f32.mrf.mxu0
  %v3907 = vadd.f32 %v3804, %v3906
  %v3908 = vpop.f32.mrf.mxu0
  %3909 = vmatprep.mubr.f32.mxu0 0.0
  %3910 = vmatmul.mubr.f32.gmra.mxu0 %v3816
  %v3911 = vpop.f32.mrf.mxu0
  %v3912 = vadd.f32 %v3804, %v3911
  %v3913 = vpop.f32.mrf.mxu0
  %3914 = vmatprep.mubr.f32.mxu0 0.0
  %3915 = vmatmul.mubr.f32.gmra.mxu0 %v3819
  %v3916 = vpop.f32.mrf.mxu0
  %v3917 = vadd.f32 %v3804, %v3916
  %v3918 = vpop.f32.mrf.mxu0
  %3919 = vmatprep.mubr.f32.mxu0 0.0
  %3920 = vmatmul.mubr.f32.gmra.mxu0 %v3822
  %v3921 = vpop.f32.mrf.mxu0
  %v3922 = vadd.f32 %v3804, %v3921
  %v3923 = vpop.f32.mrf.mxu0
  %3924 = vmatprep.mubr.f32.mxu0 0.0
  %3925 = vmatmul.mubr.f32.gmra.mxu0 %v3825
  %v3926 = vpop.f32.mrf.mxu0
  %v3927 = vadd.f32 %v3804, %v3926
  %v3928 = vpop.f32.mrf.mxu0
  %3929 = vmatprep.mubr.f32.mxu0 0.0
  %3930 = vmatmul.mubr.f32.gmra.mxu0 %v3828
  %v3931 = vpop.f32.mrf.mxu0
  %v3932 = vadd.f32 %v3804, %v3931
  %v3933 = vpop.f32.mrf.mxu0
  %3934 = vdwg.mxu0
  %v3935 = vadd.f32 %v711, %v3897
  %v3936 = vadd.f32 %v712, %v3902
  %v3937 = vadd.f32 %v713, %v3907
  %v3938 = vadd.f32 %v714, %v3912
  %v3939 = vadd.f32 %v715, %v3917
  %v3940 = vadd.f32 %v716, %v3922
  %v3941 = vadd.f32 %v717, %v3927
  %v3942 = vadd.f32 %v718, %v3932
  %3943 = vst.msk [vmem:[%s69 + $0x40] sm:$0xff] %vm287, %v3935
  %3944 = vst.msk [vmem:[%s69 + $0x48] sm:$0xff] %vm287, %v3936
  %3945 = vst.msk [vmem:[%s69 + $0x50] sm:$0xff] %vm287, %v3937
  %3946 = vst.msk [vmem:[%s69 + $0x58] sm:$0xff] %vm287, %v3938
  %3947 = vst.msk [vmem:[%s69 + $0x60] sm:$0xff] %vm287, %v3939
  %3948 = vst.msk [vmem:[%s69 + $0x68] sm:$0xff] %vm287, %v3940
  %3949 = vst.msk [vmem:[%s69 + $0x70] sm:$0xff] %vm287, %v3941
  %3950 = vst.msk [vmem:[%s69 + $0x78] sm:$0xff] %vm287, %v3942
  %v3951 = vld [vmem:[%s57] sm:$0xff]
  %v3952 = vld [vmem:[%s57 + $0x8] sm:$0xff]
  %v3953 = vld [vmem:[%s57 + $0x10] sm:$0xff]
  %v3954 = vld [vmem:[%s57 + $0x18] sm:$0xff]
  %v3955 = vld [vmem:[%s59] sm:$0x1]
  %3956 = vmatprep.subr.mxu0 0.0
  %3957 = vmatpush1.msra.mxu0 0.0
  %3958 = vmatprep.subr.mxu0 0.0
  %3959 = vmatpush1.msra.mxu0 0.0
  %3960 = vmatprep.subr.mxu0 0.0
  %3961 = vmatpush1.msra.mxu0 0.0
  %3962 = vmatprep.subr.mxu0 0.0
  %3963 = vmatpush1.msra.mxu0 0.0
  %3964 = vmatprep.subr.mxu0 0.0
  %3965 = vmatpush1.msra.mxu0 0.0
  %3966 = vmatprep.subr.mxu0 0.0
  %3967 = vmatpush1.msra.mxu0 0.0
  %3968 = vmatprep.subr.mxu0 0.0
  %3969 = vmatpush1.msra.mxu0 0.0
  %3970 = vmatprep.subr.mxu0 0.0
  %3971 = vmatpush1.msra.mxu0 0.0
  %3972 = vmatprep.subr.mxu0 0.0
  %3973 = vmatpush1.msra.mxu0 0.0
  %3974 = vmatprep.subr.mxu0 0.0
  %3975 = vmatpush1.msra.mxu0 0.0
  %3976 = vmatprep.subr.mxu0 0.0
  %3977 = vmatpush1.msra.mxu0 0.0
  %3978 = vmatprep.subr.mxu0 0.0
  %3979 = vmatpush1.msra.mxu0 0.0
  %3980 = vmatprep.subr.mxu0 0.0
  %3981 = vmatpush1.msra.mxu0 %v3954
  %3982 = vmatprep.subr.mxu0 0.0
  %3983 = vmatpush1.msra.mxu0 %v3953
  %3984 = vmatprep.subr.mxu0 0.0
  %3985 = vmatpush1.msra.mxu0 %v3952
  %3986 = vmatprep.subr.mxu0 0.0
  %3987 = vmatpush1.msra.mxu0 %v3951
  %3988 = vmatprep.subr.mxu0 0.0
  %3989 = vmatpush2.msra.mxu0 0.0
  %3990 = vmatprep.subr.mxu0 0.0
  %3991 = vmatpush2.msra.mxu0 0.0
  %3992 = vmatprep.subr.mxu0 0.0
  %3993 = vmatpush2.msra.mxu0 0.0
  %3994 = vmatprep.subr.mxu0 0.0
  %3995 = vmatpush2.msra.mxu0 0.0
  %3996 = vmatprep.subr.mxu0 0.0
  %3997 = vmatpush2.msra.mxu0 0.0
  %3998 = vmatprep.subr.mxu0 0.0
  %3999 = vmatpush2.msra.mxu0 0.0
  %4000 = vmatprep.subr.mxu0 0.0
  %4001 = vmatpush2.msra.mxu0 0.0
  %4002 = vmatprep.subr.mxu0 0.0
  %4003 = vmatpush2.msra.mxu0 0.0
  %4004 = vmatprep.subr.mxu0 0.0
  %4005 = vmatpush2.msra.mxu0 0.0
  %4006 = vmatprep.subr.mxu0 0.0
  %4007 = vmatpush2.msra.mxu0 0.0
  %4008 = vmatprep.subr.mxu0 0.0
  %4009 = vmatpush2.msra.mxu0 0.0
  %4010 = vmatprep.subr.mxu0 0.0
  %4011 = vmatpush2.msra.mxu0 0.0
  %4012 = vmatprep.subr.mxu0 0.0
  %4013 = vmatpush2.msra.mxu0 0.0
  %4014 = vmatprep.subr.mxu0 0.0
  %4015 = vmatpush2.msra.mxu0 0.0
  %4016 = vmatprep.subr.mxu0 0.0
  %4017 = vmatpush2.msra.mxu0 0.0
  %4018 = vmatprep.subr.mxu0 0.0
  %4019 = vmatpush2.msra.mxu0 0.0
  %4020 = vmatprep.mubr.f32.mxu0 0.0
  %4021 = vmatmul.mubr.f32.gmra.mxu0 %v3290
  %v4022 = vpop.f32.mrf.mxu0
  %v4023 = vadd.f32 %v3955, %v4022
  %v4024 = vpop.f32.mrf.mxu0
  %4025 = vdwg.mxu0
  %v4026 = vmax.f32 %v4023, 0.0
  %v4027 = vld [vmem:[%s61] sm:$0xff]
  %v4028 = vld [vmem:[%s61 + $0x8] sm:$0xff]
  %v4029 = vld [vmem:[%s61 + $0x10] sm:$0xff]
  %v4030 = vld [vmem:[%s61 + $0x18] sm:$0xff]
  %v4031 = vld [vmem:[%s63] sm:$0x1]
  %v4033 = vsel %vm287, %v4026, 0
  %4035 = vmatprep.subr.mxu0 0.0
  %4036 = vmatpush1.msra.mxu0 0.0
  %4037 = vmatprep.subr.mxu0 0.0
  %4038 = vmatpush1.msra.mxu0 0.0
  %4039 = vmatprep.subr.mxu0 0.0
  %4040 = vmatpush1.msra.mxu0 0.0
  %4041 = vmatprep.subr.mxu0 0.0
  %4042 = vmatpush1.msra.mxu0 0.0
  %4043 = vmatprep.subr.mxu0 0.0
  %4044 = vmatpush1.msra.mxu0 0.0
  %4045 = vmatprep.subr.mxu0 0.0
  %4046 = vmatpush1.msra.mxu0 0.0
  %4047 = vmatprep.subr.mxu0 0.0
  %4048 = vmatpush1.msra.mxu0 0.0
  %4049 = vmatprep.subr.mxu0 0.0
  %4050 = vmatpush1.msra.mxu0 0.0
  %4051 = vmatprep.subr.mxu0 0.0
  %4052 = vmatpush1.msra.mxu0 0.0
  %4053 = vmatprep.subr.mxu0 0.0
  %4054 = vmatpush1.msra.mxu0 0.0
  %4055 = vmatprep.subr.mxu0 0.0
  %4056 = vmatpush1.msra.mxu0 0.0
  %4057 = vmatprep.subr.mxu0 0.0
  %4058 = vmatpush1.msra.mxu0 0.0
  %4059 = vmatprep.subr.mxu0 0.0
  %4060 = vmatpush1.msra.mxu0 %v4030
  %4061 = vmatprep.subr.mxu0 0.0
  %4062 = vmatpush1.msra.mxu0 %v4029
  %4063 = vmatprep.subr.mxu0 0.0
  %4064 = vmatpush1.msra.mxu0 %v4028
  %4065 = vmatprep.subr.mxu0 0.0
  %4066 = vmatpush1.msra.mxu0 %v4027
  %4067 = vmatprep.subr.mxu0 0.0
  %4068 = vmatpush2.msra.mxu0 0.0
  %4069 = vmatprep.subr.mxu0 0.0
  %4070 = vmatpush2.msra.mxu0 0.0
  %4071 = vmatprep.subr.mxu0 0.0
  %4072 = vmatpush2.msra.mxu0 0.0
  %4073 = vmatprep.subr.mxu0 0.0
  %4074 = vmatpush2.msra.mxu0 0.0
  %4075 = vmatprep.subr.mxu0 0.0
  %4076 = vmatpush2.msra.mxu0 0.0
  %4077 = vmatprep.subr.mxu0 0.0
  %4078 = vmatpush2.msra.mxu0 0.0
  %4079 = vmatprep.subr.mxu0 0.0
  %4080 = vmatpush2.msra.mxu0 0.0
  %4081 = vmatprep.subr.mxu0 0.0
  %4082 = vmatpush2.msra.mxu0 0.0
  %4083 = vmatprep.subr.mxu0 0.0
  %4084 = vmatpush2.msra.mxu0 0.0
  %4085 = vmatprep.subr.mxu0 0.0
  %4086 = vmatpush2.msra.mxu0 0.0
  %4087 = vmatprep.subr.mxu0 0.0
  %4088 = vmatpush2.msra.mxu0 0.0
  %4089 = vmatprep.subr.mxu0 0.0
  %4090 = vmatpush2.msra.mxu0 0.0
  %4091 = vmatprep.subr.mxu0 0.0
  %4092 = vmatpush2.msra.mxu0 0.0
  %4093 = vmatprep.subr.mxu0 0.0
  %4094 = vmatpush2.msra.mxu0 0.0
  %4095 = vmatprep.subr.mxu0 0.0
  %4096 = vmatpush2.msra.mxu0 0.0
  %4097 = vmatprep.subr.mxu0 0.0
  %4098 = vmatpush2.msra.mxu0 0.0
  %4099 = vmatprep.mubr.f32.mxu0 0.0
  %4100 = vmatmul.mubr.f32.gmra.mxu0 %v4033
  %v4101 = vpop.f32.mrf.mxu0
  %v4102 = vadd.f32 %v4031, %v4101
  %v4103 = vpop.f32.mrf.mxu0
  %4104 = vdwg.mxu0
  %v4105 = vmax.f32 %v4102, 0.0
  %v4106 = vld [vmem:[%s65] sm:$0xff]
  %v4107 = vld [vmem:[%s65 + $0x8] sm:$0xff]
  %v4108 = vld [vmem:[%s65 + $0x10] sm:$0xff]
  %v4109 = vld [vmem:[%s65 + $0x18] sm:$0xff]
  %v4110 = vld [vmem:[%s67] sm:$0x1]
  %v4112 = vsel %vm287, %v4105, 0
  %4114 = vmatprep.subr.mxu0 0.0
  %4115 = vmatpush1.msra.mxu0 0.0
  %4116 = vmatprep.subr.mxu0 0.0
  %4117 = vmatpush1.msra.mxu0 0.0
  %4118 = vmatprep.subr.mxu0 0.0
  %4119 = vmatpush1.msra.mxu0 0.0
  %4120 = vmatprep.subr.mxu0 0.0
  %4121 = vmatpush1.msra.mxu0 0.0
  %4122 = vmatprep.subr.mxu0 0.0
  %4123 = vmatpush1.msra.mxu0 0.0
  %4124 = vmatprep.subr.mxu0 0.0
  %4125 = vmatpush1.msra.mxu0 0.0
  %4126 = vmatprep.subr.mxu0 0.0
  %4127 = vmatpush1.msra.mxu0 0.0
  %4128 = vmatprep.subr.mxu0 0.0
  %4129 = vmatpush1.msra.mxu0 0.0
  %4130 = vmatprep.subr.mxu0 0.0
  %4131 = vmatpush1.msra.mxu0 0.0
  %4132 = vmatprep.subr.mxu0 0.0
  %4133 = vmatpush1.msra.mxu0 0.0
  %4134 = vmatprep.subr.mxu0 0.0
  %4135 = vmatpush1.msra.mxu0 0.0
  %4136 = vmatprep.subr.mxu0 0.0
  %4137 = vmatpush1.msra.mxu0 0.0
  %4138 = vmatprep.subr.mxu0 0.0
  %4139 = vmatpush1.msra.mxu0 %v4109
  %4140 = vmatprep.subr.mxu0 0.0
  %4141 = vmatpush1.msra.mxu0 %v4108
  %4142 = vmatprep.subr.mxu0 0.0
  %4143 = vmatpush1.msra.mxu0 %v4107
  %4144 = vmatprep.subr.mxu0 0.0
  %4145 = vmatpush1.msra.mxu0 %v4106
  %4146 = vmatprep.subr.mxu0 0.0
  %4147 = vmatpush2.msra.mxu0 0.0
  %4148 = vmatprep.subr.mxu0 0.0
  %4149 = vmatpush2.msra.mxu0 0.0
  %4150 = vmatprep.subr.mxu0 0.0
  %4151 = vmatpush2.msra.mxu0 0.0
  %4152 = vmatprep.subr.mxu0 0.0
  %4153 = vmatpush2.msra.mxu0 0.0
  %4154 = vmatprep.subr.mxu0 0.0
  %4155 = vmatpush2.msra.mxu0 0.0
  %4156 = vmatprep.subr.mxu0 0.0
  %4157 = vmatpush2.msra.mxu0 0.0
  %4158 = vmatprep.subr.mxu0 0.0
  %4159 = vmatpush2.msra.mxu0 0.0
  %4160 = vmatprep.subr.mxu0 0.0
  %4161 = vmatpush2.msra.mxu0 0.0
  %4162 = vmatprep.subr.mxu0 0.0
  %4163 = vmatpush2.msra.mxu0 0.0
  %4164 = vmatprep.subr.mxu0 0.0
  %4165 = vmatpush2.msra.mxu0 0.0
  %4166 = vmatprep.subr.mxu0 0.0
  %4167 = vmatpush2.msra.mxu0 0.0
  %4168 = vmatprep.subr.mxu0 0.0
  %4169 = vmatpush2.msra.mxu0 0.0
  %4170 = vmatprep.subr.mxu0 0.0
  %4171 = vmatpush2.msra.mxu0 0.0
  %4172 = vmatprep.subr.mxu0 0.0
  %4173 = vmatpush2.msra.mxu0 0.0
  %4174 = vmatprep.subr.mxu0 0.0
  %4175 = vmatpush2.msra.mxu0 0.0
  %4176 = vmatprep.subr.mxu0 0.0
  %4177 = vmatpush2.msra.mxu0 0.0
  %4178 = vmatprep.mubr.f32.mxu0 0.0
  %4179 = vmatmul.mubr.f32.gmra.mxu0 %v4112
  %v4180 = vpop.f32.mrf.mxu0
  %v4181 = vadd.f32 %v4110, %v4180
  %v4182 = vpop.f32.mrf.mxu0
  %4183 = vdwg.mxu0
  %4184 = vst.msk [vmem:[%s71 + $0x1] sm:$0x1] %vm2750, %v4181
  // Predicated region
  $region138: #{mask_decoder_forward.2} parent=0 // pred_check
    _
  $region139: #{mask_decoder_forward.2} parent=0 // pred_check_branch
    %4186 = sbr.rel (0) target = $region141
  $region140: #{mask_decoder_forward.2} parent=0 // pred_region
    _
  $region141: #{mask_decoder_forward.2} parent=0 // pred_fallthru
    _
  // Predicated region
  $region142: #{mask_decoder_forward.2} parent=0 // pred_check
    _
  $region143: #{mask_decoder_forward.2} parent=0 // pred_check_branch
    %4188 = sbr.rel (0) target = $region145
  $region144: #{mask_decoder_forward.2} parent=0 // pred_region
    _
  $region145: #{mask_decoder_forward.2} parent=0 // pred_fallthru
    _
  // Predicated region
  $region146: #{mask_decoder_forward.2} parent=0 // pred_check
    _
  $region147: #{mask_decoder_forward.2} parent=0 // pred_check_branch
    %4190 = sbr.rel (0) target = $region149
  $region148: #{mask_decoder_forward.2} parent=0 // pred_region
    _
  $region149: #{mask_decoder_forward.2} parent=0 // pred_fallthru
    _
  // Predicated region
  $region150: #{mask_decoder_forward.2} parent=0 // pred_check
    _
  $region151: #{mask_decoder_forward.2} parent=0 // pred_check_branch
    %4192 = sbr.rel (0) target = $region153
  $region152: #{mask_decoder_forward.2} parent=0 // pred_region
    _
  $region153: #{mask_decoder_forward.2} parent=0 // pred_fallthru
    _

// kernel: mask_decoder_forward.3
$region0: #{mask_decoder_forward.3}
  #allocation0 [shape = 'u32[]', space=smem, size = 0x4, offset = 0x4, fixed_abs, tag = 'smem constant byte address 0x4 - core index']
  #allocation1 [shape = 'u32[144,128]{1,0:T(1,128)}', space=vmem, size = 0x12000, scoped, tag = 'internal scratch']
  %s0 = inlined_call_operand.vmem [shape: f32[16,256], index: 0, kind: input, shape index: {}]
  %s1 = inlined_call_operand.vmem [shape: f32[2,4], index: 1, kind: input, shape index: {}]
  %s2 = inlined_call_operand.vmem [shape: f32[256,256], index: 2, kind: input, shape index: {}]
  %s3 = inlined_call_operand.vmem [shape: f32[1,256], index: 3, kind: input, shape index: {}]
  %s4 = inlined_call_operand.vmem [shape: f32[256,256], index: 4, kind: input, shape index: {}]
  %s5 = inlined_call_operand.vmem [shape: f32[1,256], index: 5, kind: input, shape index: {}]
  %s6 = inlined_call_operand.vmem [shape: f32[1,256], index: 6, kind: input, shape index: {}]
  %s7 = inlined_call_operand.vmem [shape: f32[256,512], index: 7, kind: input, shape index: {}]
  %s8 = inlined_call_operand.vmem [shape: f32[1,512], index: 8, kind: input, shape index: {}]
  %s9 = inlined_call_operand.vmem [shape: f32[32,48], index: 9, kind: input, shape index: {}]
  %s10 = inlined_call_operand.vmem [shape: f32[4,48,8], index: 10, kind: input, shape index: {}]
  %s11 = inlined_call_operand.hbm [shape: f32[2,48,48], index: 11, kind: output, shape index: {}]
  %s12 = sld [smem:[#allocation0]]
  $region54: #{mask_decoder_forward.3} parent=0
    _
  %s14 = ssub.s32 1, %s12
  %s15 = scalar_select 0, %s14, %s12
  $region1: #{mask_decoder_forward.3} parent=0
    #allocation2 [shape = 'u8[49152]{0}', space=vmem, size = 0xc000, scoped, tag = 'output window, operand 0, single buffered']
    #allocation3 [shape = 's32[1]{0}', space=sflag, size = 0x4, scoped, tag = 'scoped memory for mask_decoder_forward.3']
    %16 = vsyncpa [#allocation3], 0
    // Predicated region
    $region2: #{mask_decoder_forward.3} parent=1 // pred_check
      _
    $region3: #{mask_decoder_forward.3} parent=1 // pred_check_branch
      %18 = sbr.rel (0) target = $region5
    $region4: #{mask_decoder_forward.3} parent=1 // pred_region
      _
    $region5: #{mask_decoder_forward.3} parent=1 // pred_fallthru
      _
    // Predicated region
    $region6: #{mask_decoder_forward.3} parent=1 // pred_check
      _
    $region7: #{mask_decoder_forward.3} parent=1 // pred_check_branch
      %20 = sbr.rel (0) target = $region9
    $region8: #{mask_decoder_forward.3} parent=1 // pred_region
      _
    $region9: #{mask_decoder_forward.3} parent=1 // pred_fallthru
      _
    // Predicated region
    $region10: #{mask_decoder_forward.3} parent=1 // pred_check
      _
    $region11: #{mask_decoder_forward.3} parent=1 // pred_check_branch
      %22 = sbr.rel (0) target = $region13
    $region12: #{mask_decoder_forward.3} parent=1 // pred_region
      _
    $region13: #{mask_decoder_forward.3} parent=1 // pred_fallthru
      _
    // Predicated region
    $region14: #{mask_decoder_forward.3} parent=1 // pred_check
      _
    $region15: #{mask_decoder_forward.3} parent=1 // pred_check_branch
      %24 = sbr.rel (0) target = $region17
    $region16: #{mask_decoder_forward.3} parent=1 // pred_region
      _
    $region17: #{mask_decoder_forward.3} parent=1 // pred_fallthru
      _
    // Predicated region
    $region18: #{mask_decoder_forward.3} parent=1 // pred_check
      _
    $region19: #{mask_decoder_forward.3} parent=1 // pred_check_branch
      %26 = sbr.rel (0) target = $region21
    $region20: #{mask_decoder_forward.3} parent=1 // pred_region
      _
    $region21: #{mask_decoder_forward.3} parent=1 // pred_fallthru
      _
    // Predicated region
    $region22: #{mask_decoder_forward.3} parent=1 // pred_check
      _
    $region23: #{mask_decoder_forward.3} parent=1 // pred_check_branch
      %28 = sbr.rel (0) target = $region25
    $region24: #{mask_decoder_forward.3} parent=1 // pred_region
      _
    $region25: #{mask_decoder_forward.3} parent=1 // pred_fallthru
      _
    // Predicated region
    $region26: #{mask_decoder_forward.3} parent=1 // pred_check
      _
    $region27: #{mask_decoder_forward.3} parent=1 // pred_check_branch
      %30 = sbr.rel (0) target = $region29
    $region28: #{mask_decoder_forward.3} parent=1 // pred_region
      _
    $region29: #{mask_decoder_forward.3} parent=1 // pred_fallthru
      _
    // Predicated region
    $region30: #{mask_decoder_forward.3} parent=1 // pred_check
      _
    $region31: #{mask_decoder_forward.3} parent=1 // pred_check_branch
      %32 = sbr.rel (0) target = $region33
    $region32: #{mask_decoder_forward.3} parent=1 // pred_region
      _
    $region33: #{mask_decoder_forward.3} parent=1 // pred_fallthru
      _
    // Predicated region
    $region34: #{mask_decoder_forward.3} parent=1 // pred_check
      _
    $region35: #{mask_decoder_forward.3} parent=1 // pred_check_branch
      %34 = sbr.rel (0) target = $region37
    $region36: #{mask_decoder_forward.3} parent=1 // pred_region
      _
    $region37: #{mask_decoder_forward.3} parent=1 // pred_fallthru
      _
    // Predicated region
    $region38: #{mask_decoder_forward.3} parent=1 // pred_check
      _
    $region39: #{mask_decoder_forward.3} parent=1 // pred_check_branch
      %36 = sbr.rel (0) target = $region41
    $region40: #{mask_decoder_forward.3} parent=1 // pred_region
      _
    $region41: #{mask_decoder_forward.3} parent=1 // pred_fallthru
      _
    // Predicated region
    $region42: #{mask_decoder_forward.3} parent=1 // pred_check
      _
    $region43: #{mask_decoder_forward.3} parent=1 // pred_check_branch
      %38 = sbr.rel (0) target = $region45
    $region44: #{mask_decoder_forward.3} parent=1 // pred_region
      _
    $region45: #{mask_decoder_forward.3} parent=1 // pred_fallthru
      _
    %v39 = vld [vmem:[%s0] sm:$0xff]
    %v40 = vld [vmem:[%s0 + $0x8] sm:$0xff]
    %v41 = vld [vmem:[%s0 + $0x10] sm:$0xff]
    %v42 = vld [vmem:[%s0 + $0x18] sm:$0xff]
    %v43 = vld [vmem:[%s2] sm:$0xff]
    %v44 = vld [vmem:[%s2 + $0x8] sm:$0xff]
    %v45 = vld [vmem:[%s2 + $0x10] sm:$0xff]
    %v46 = vld [vmem:[%s2 + $0x18] sm:$0xff]
    %v47 = vld [vmem:[%s2 + $0x20] sm:$0xff]
    %v48 = vld [vmem:[%s2 + $0x28] sm:$0xff]
    %v49 = vld [vmem:[%s2 + $0x30] sm:$0xff]
    %v50 = vld [vmem:[%s2 + $0x38] sm:$0xff]
    %v51 = vld [vmem:[%s2 + $0x40] sm:$0xff]
    %v52 = vld [vmem:[%s2 + $0x48] sm:$0xff]
    %v53 = vld [vmem:[%s2 + $0x50] sm:$0xff]
    %v54 = vld [vmem:[%s2 + $0x58] sm:$0xff]
    %v55 = vld [vmem:[%s2 + $0x60] sm:$0xff]
    %v56 = vld [vmem:[%s2 + $0x68] sm:$0xff]
    %v57 = vld [vmem:[%s2 + $0x70] sm:$0xff]
    %v58 = vld [vmem:[%s2 + $0x78] sm:$0xff]
    %v59 = vld [vmem:[%s2 + $0x80] sm:$0xff]
    %v60 = vld [vmem:[%s2 + $0x88] sm:$0xff]
    %v61 = vld [vmem:[%s2 + $0x90] sm:$0xff]
    %v62 = vld [vmem:[%s2 + $0x98] sm:$0xff]
    %v63 = vld [vmem:[%s2 + $0xa0] sm:$0xff]
    %v64 = vld [vmem:[%s2 + $0xa8] sm:$0xff]
    %v65 = vld [vmem:[%s2 + $0xb0] sm:$0xff]
    %v66 = vld [vmem:[%s2 + $0xb8] sm:$0xff]
    %v67 = vld [vmem:[%s2 + $0xc0] sm:$0xff]
    %v68 = vld [vmem:[%s2 + $0xc8] sm:$0xff]
    %v69 = vld [vmem:[%s2 + $0xd0] sm:$0xff]
    %v70 = vld [vmem:[%s2 + $0xd8] sm:$0xff]
    %v71 = vld [vmem:[%s2 + $0xe0] sm:$0xff]
    %v72 = vld [vmem:[%s2 + $0xe8] sm:$0xff]
    %v73 = vld [vmem:[%s2 + $0xf0] sm:$0xff]
    %v74 = vld [vmem:[%s2 + $0xf8] sm:$0xff]
    %v75 = vld [vmem:[%s2 + $0x100] sm:$0xff]
    %v76 = vld [vmem:[%s2 + $0x108] sm:$0xff]
    %v77 = vld [vmem:[%s2 + $0x110] sm:$0xff]
    %v78 = vld [vmem:[%s2 + $0x118] sm:$0xff]
    %v79 = vld [vmem:[%s2 + $0x120] sm:$0xff]
    %v80 = vld [vmem:[%s2 + $0x128] sm:$0xff]
    %v81 = vld [vmem:[%s2 + $0x130] sm:$0xff]
    %v82 = vld [vmem:[%s2 + $0x138] sm:$0xff]
    %v83 = vld [vmem:[%s2 + $0x140] sm:$0xff]
    %v84 = vld [vmem:[%s2 + $0x148] sm:$0xff]
    %v85 = vld [vmem:[%s2 + $0x150] sm:$0xff]
    %v86 = vld [vmem:[%s2 + $0x158] sm:$0xff]
    %v87 = vld [vmem:[%s2 + $0x160] sm:$0xff]
    %v88 = vld [vmem:[%s2 + $0x168] sm:$0xff]
    %v89 = vld [vmem:[%s2 + $0x170] sm:$0xff]
    %v90 = vld [vmem:[%s2 + $0x178] sm:$0xff]
    %v91 = vld [vmem:[%s2 + $0x180] sm:$0xff]
    %v92 = vld [vmem:[%s2 + $0x188] sm:$0xff]
    %v93 = vld [vmem:[%s2 + $0x190] sm:$0xff]
    %v94 = vld [vmem:[%s2 + $0x198] sm:$0xff]
    %v95 = vld [vmem:[%s2 + $0x1a0] sm:$0xff]
    %v96 = vld [vmem:[%s2 + $0x1a8] sm:$0xff]
    %v97 = vld [vmem:[%s2 + $0x1b0] sm:$0xff]
    %v98 = vld [vmem:[%s2 + $0x1b8] sm:$0xff]
    %v99 = vld [vmem:[%s2 + $0x1c0] sm:$0xff]
    %v100 = vld [vmem:[%s2 + $0x1c8] sm:$0xff]
    %v101 = vld [vmem:[%s2 + $0x1d0] sm:$0xff]
    %v102 = vld [vmem:[%s2 + $0x1d8] sm:$0xff]
    %v103 = vld [vmem:[%s2 + $0x1e0] sm:$0xff]
    %v104 = vld [vmem:[%s2 + $0x1e8] sm:$0xff]
    %v105 = vld [vmem:[%s2 + $0x1f0] sm:$0xff]
    %v106 = vld [vmem:[%s2 + $0x1f8] sm:$0xff]
    %v107 = vld [vmem:[%s3] sm:$0x3]
    %v109 = vlaneseq
    %v110 = vshrl.u32 %v109, 7
    %v111 = vsub.s32 0, %v110
    %v112 = vrot.slane %v107, %v111
    %v113 = vlaneseq
    %v114 = vshrl.u32 %v113, 7
    %v115 = vsub.s32 1, %v114
    %v116 = vrot.slane %v107, %v115
    %119 = vmatprep.subr.mxu0 %v74
    %120 = vmatpush1.msra.mxu0 %v73
    %121 = vmatprep.subr.mxu0 %v72
    %122 = vmatpush1.msra.mxu0 %v71
    %123 = vmatprep.subr.mxu0 %v70
    %124 = vmatpush1.msra.mxu0 %v69
    %125 = vmatprep.subr.mxu0 %v68
    %126 = vmatpush1.msra.mxu0 %v67
    %127 = vmatprep.subr.mxu0 %v66
    %128 = vmatpush1.msra.mxu0 %v65
    %129 = vmatprep.subr.mxu0 %v64
    %130 = vmatpush1.msra.mxu0 %v63
    %131 = vmatprep.subr.mxu0 %v62
    %132 = vmatpush1.msra.mxu0 %v61
    %133 = vmatprep.subr.mxu0 %v60
    %134 = vmatpush1.msra.mxu0 %v59
    %135 = vmatprep.subr.mxu0 %v58
    %136 = vmatpush1.msra.mxu0 %v57
    %137 = vmatprep.subr.mxu0 %v56
    %138 = vmatpush1.msra.mxu0 %v55
    %139 = vmatprep.subr.mxu0 %v54
    %140 = vmatpush1.msra.mxu0 %v53
    %141 = vmatprep.subr.mxu0 %v52
    %142 = vmatpush1.msra.mxu0 %v51
    %143 = vmatprep.subr.mxu0 %v50
    %144 = vmatpush1.msra.mxu0 %v49
    %145 = vmatprep.subr.mxu0 %v48
    %146 = vmatpush1.msra.mxu0 %v47
    %147 = vmatprep.subr.mxu0 %v46
    %148 = vmatpush1.msra.mxu0 %v45
    %149 = vmatprep.subr.mxu0 %v44
    %150 = vmatpush1.msra.mxu0 %v43
    %151 = vmatprep.subr.mxu0 %v106
    %152 = vmatpush2.msra.mxu0 %v105
    %153 = vmatprep.subr.mxu0 %v104
    %154 = vmatpush2.msra.mxu0 %v103
    %155 = vmatprep.subr.mxu0 %v102
    %156 = vmatpush2.msra.mxu0 %v101
    %157 = vmatprep.subr.mxu0 %v100
    %158 = vmatpush2.msra.mxu0 %v99
    %159 = vmatprep.subr.mxu0 %v98
    %160 = vmatpush2.msra.mxu0 %v97
    %161 = vmatprep.subr.mxu0 %v96
    %162 = vmatpush2.msra.mxu0 %v95
    %163 = vmatprep.subr.mxu0 %v94
    %164 = vmatpush2.msra.mxu0 %v93
    %165 = vmatprep.subr.mxu0 %v92
    %166 = vmatpush2.msra.mxu0 %v91
    %167 = vmatprep.subr.mxu0 %v90
    %168 = vmatpush2.msra.mxu0 %v89
    %169 = vmatprep.subr.mxu0 %v88
    %170 = vmatpush2.msra.mxu0 %v87
    %171 = vmatprep.subr.mxu0 %v86
    %172 = vmatpush2.msra.mxu0 %v85
    %173 = vmatprep.subr.mxu0 %v84
    %174 = vmatpush2.msra.mxu0 %v83
    %175 = vmatprep.subr.mxu0 %v82
    %176 = vmatpush2.msra.mxu0 %v81
    %177 = vmatprep.subr.mxu0 %v80
    %178 = vmatpush2.msra.mxu0 %v79
    %179 = vmatprep.subr.mxu0 %v78
    %180 = vmatpush2.msra.mxu0 %v77
    %181 = vmatprep.subr.mxu0 %v76
    %182 = vmatpush2.msra.mxu0 %v75
    %183 = vmatprep.mubr.f32.mxu0 %v40
    %184 = vmatmul.mubr.f32.gmra.mxu0 %v39
    %v185 = vpop.f32.mrf.mxu0
    %v186 = vadd.f32 %v112, %v185
    %v187 = vpop.f32.mrf.mxu0
    %v188 = vadd.f32 %v116, %v187
    %189 = vmatprep.mubr.f32.mxu0 %v42
    %190 = vmatmul.mubr.f32.gmra.mxu0 %v41
    %v191 = vpop.f32.mrf.mxu0
    %v192 = vadd.f32 %v112, %v191
    %v193 = vpop.f32.mrf.mxu0
    %v194 = vadd.f32 %v116, %v193
    %195 = vdwg.mxu0
    %v196 = vld [vmem:[%s4] sm:$0xff]
    %v197 = vld [vmem:[%s4 + $0x8] sm:$0xff]
    %v198 = vld [vmem:[%s4 + $0x10] sm:$0xff]
    %v199 = vld [vmem:[%s4 + $0x18] sm:$0xff]
    %v200 = vld [vmem:[%s4 + $0x20] sm:$0xff]
    %v201 = vld [vmem:[%s4 + $0x28] sm:$0xff]
    %v202 = vld [vmem:[%s4 + $0x30] sm:$0xff]
    %v203 = vld [vmem:[%s4 + $0x38] sm:$0xff]
    %v204 = vld [vmem:[%s4 + $0x40] sm:$0xff]
    %v205 = vld [vmem:[%s4 + $0x48] sm:$0xff]
    %v206 = vld [vmem:[%s4 + $0x50] sm:$0xff]
    %v207 = vld [vmem:[%s4 + $0x58] sm:$0xff]
    %v208 = vld [vmem:[%s4 + $0x60] sm:$0xff]
    %v209 = vld [vmem:[%s4 + $0x68] sm:$0xff]
    %v210 = vld [vmem:[%s4 + $0x70] sm:$0xff]
    %v211 = vld [vmem:[%s4 + $0x78] sm:$0xff]
    %v212 = vld [vmem:[%s4 + $0x80] sm:$0xff]
    %v213 = vld [vmem:[%s4 + $0x88] sm:$0xff]
    %v214 = vld [vmem:[%s4 + $0x90] sm:$0xff]
    %v215 = vld [vmem:[%s4 + $0x98] sm:$0xff]
    %v216 = vld [vmem:[%s4 + $0xa0] sm:$0xff]
    %v217 = vld [vmem:[%s4 + $0xa8] sm:$0xff]
    %v218 = vld [vmem:[%s4 + $0xb0] sm:$0xff]
    %v219 = vld [vmem:[%s4 + $0xb8] sm:$0xff]
    %v220 = vld [vmem:[%s4 + $0xc0] sm:$0xff]
    %v221 = vld [vmem:[%s4 + $0xc8] sm:$0xff]
    %v222 = vld [vmem:[%s4 + $0xd0] sm:$0xff]
    %v223 = vld [vmem:[%s4 + $0xd8] sm:$0xff]
    %v224 = vld [vmem:[%s4 + $0xe0] sm:$0xff]
    %v225 = vld [vmem:[%s4 + $0xe8] sm:$0xff]
    %v226 = vld [vmem:[%s4 + $0xf0] sm:$0xff]
    %v227 = vld [vmem:[%s4 + $0xf8] sm:$0xff]
    %v228 = vld [vmem:[%s4 + $0x100] sm:$0xff]
    %v229 = vld [vmem:[%s4 + $0x108] sm:$0xff]
    %v230 = vld [vmem:[%s4 + $0x110] sm:$0xff]
    %v231 = vld [vmem:[%s4 + $0x118] sm:$0xff]
    %v232 = vld [vmem:[%s4 + $0x120] sm:$0xff]
    %v233 = vld [vmem:[%s4 + $0x128] sm:$0xff]
    %v234 = vld [vmem:[%s4 + $0x130] sm:$0xff]
    %v235 = vld [vmem:[%s4 + $0x138] sm:$0xff]
    %v236 = vld [vmem:[%s4 + $0x140] sm:$0xff]
    %v237 = vld [vmem:[%s4 + $0x148] sm:$0xff]
    %v238 = vld [vmem:[%s4 + $0x150] sm:$0xff]
    %v239 = vld [vmem:[%s4 + $0x158] sm:$0xff]
    %v240 = vld [vmem:[%s4 + $0x160] sm:$0xff]
    %v241 = vld [vmem:[%s4 + $0x168] sm:$0xff]
    %v242 = vld [vmem:[%s4 + $0x170] sm:$0xff]
    %v243 = vld [vmem:[%s4 + $0x178] sm:$0xff]
    %v244 = vld [vmem:[%s4 + $0x180] sm:$0xff]
    %v245 = vld [vmem:[%s4 + $0x188] sm:$0xff]
    %v246 = vld [vmem:[%s4 + $0x190] sm:$0xff]
    %v247 = vld [vmem:[%s4 + $0x198] sm:$0xff]
    %v248 = vld [vmem:[%s4 + $0x1a0] sm:$0xff]
    %v249 = vld [vmem:[%s4 + $0x1a8] sm:$0xff]
    %v250 = vld [vmem:[%s4 + $0x1b0] sm:$0xff]
    %v251 = vld [vmem:[%s4 + $0x1b8] sm:$0xff]
    %v252 = vld [vmem:[%s4 + $0x1c0] sm:$0xff]
    %v253 = vld [vmem:[%s4 + $0x1c8] sm:$0xff]
    %v254 = vld [vmem:[%s4 + $0x1d0] sm:$0xff]
    %v255 = vld [vmem:[%s4 + $0x1d8] sm:$0xff]
    %v256 = vld [vmem:[%s4 + $0x1e0] sm:$0xff]
    %v257 = vld [vmem:[%s4 + $0x1e8] sm:$0xff]
    %v258 = vld [vmem:[%s4 + $0x1f0] sm:$0xff]
    %v259 = vld [vmem:[%s4 + $0x1f8] sm:$0xff]
    %260 = vmatprep.subr.mxu0 %v227
    %261 = vmatpush1.msra.mxu0 %v226
    %262 = vmatprep.subr.mxu0 %v225
    %263 = vmatpush1.msra.mxu0 %v224
    %264 = vmatprep.subr.mxu0 %v223
    %265 = vmatpush1.msra.mxu0 %v222
    %266 = vmatprep.subr.mxu0 %v221
    %267 = vmatpush1.msra.mxu0 %v220
    %268 = vmatprep.subr.mxu0 %v219
    %269 = vmatpush1.msra.mxu0 %v218
    %270 = vmatprep.subr.mxu0 %v217
    %271 = vmatpush1.msra.mxu0 %v216
    %272 = vmatprep.subr.mxu0 %v215
    %273 = vmatpush1.msra.mxu0 %v214
    %274 = vmatprep.subr.mxu0 %v213
    %275 = vmatpush1.msra.mxu0 %v212
    %276 = vmatprep.subr.mxu0 %v211
    %277 = vmatpush1.msra.mxu0 %v210
    %278 = vmatprep.subr.mxu0 %v209
    %279 = vmatpush1.msra.mxu0 %v208
    %280 = vmatprep.subr.mxu0 %v207
    %281 = vmatpush1.msra.mxu0 %v206
    %282 = vmatprep.subr.mxu0 %v205
    %283 = vmatpush1.msra.mxu0 %v204
    %284 = vmatprep.subr.mxu0 %v203
    %285 = vmatpush1.msra.mxu0 %v202
    %286 = vmatprep.subr.mxu0 %v201
    %287 = vmatpush1.msra.mxu0 %v200
    %288 = vmatprep.subr.mxu0 %v199
    %289 = vmatpush1.msra.mxu0 %v198
    %290 = vmatprep.subr.mxu0 %v197
    %291 = vmatpush1.msra.mxu0 %v196
    %292 = vmatprep.subr.mxu0 %v259
    %293 = vmatpush2.msra.mxu0 %v258
    %294 = vmatprep.subr.mxu0 %v257
    %295 = vmatpush2.msra.mxu0 %v256
    %296 = vmatprep.subr.mxu0 %v255
    %297 = vmatpush2.msra.mxu0 %v254
    %298 = vmatprep.subr.mxu0 %v253
    %299 = vmatpush2.msra.mxu0 %v252
    %300 = vmatprep.subr.mxu0 %v251
    %301 = vmatpush2.msra.mxu0 %v250
    %302 = vmatprep.subr.mxu0 %v249
    %303 = vmatpush2.msra.mxu0 %v248
    %304 = vmatprep.subr.mxu0 %v247
    %305 = vmatpush2.msra.mxu0 %v246
    %306 = vmatprep.subr.mxu0 %v245
    %307 = vmatpush2.msra.mxu0 %v244
    %308 = vmatprep.subr.mxu0 %v243
    %309 = vmatpush2.msra.mxu0 %v242
    %310 = vmatprep.subr.mxu0 %v241
    %311 = vmatpush2.msra.mxu0 %v240
    %312 = vmatprep.subr.mxu0 %v239
    %313 = vmatpush2.msra.mxu0 %v238
    %314 = vmatprep.subr.mxu0 %v237
    %315 = vmatpush2.msra.mxu0 %v236
    %316 = vmatprep.subr.mxu0 %v235
    %317 = vmatpush2.msra.mxu0 %v234
    %318 = vmatprep.subr.mxu0 %v233
    %319 = vmatpush2.msra.mxu0 %v232
    %320 = vmatprep.subr.mxu0 %v231
    %321 = vmatpush2.msra.mxu0 %v230
    %322 = vmatprep.subr.mxu0 %v229
    %323 = vmatpush2.msra.mxu0 %v228
    %324 = vmatprep.mubr.f32.mxu0 %v188
    %325 = vmatmul.mubr.f32.gmra.mxu0 %v186
    %v326 = vpop.f32.mrf.mxu0
    %v327 = vadd.f32 0.0, %v326
    %v328 = vpop.f32.mrf.mxu0
    %v329 = vadd.f32 0.0, %v328
    %330 = vmatprep.mubr.f32.mxu0 %v194
    %331 = vmatmul.mubr.f32.gmra.mxu0 %v192
    %v332 = vpop.f32.mrf.mxu0
    %v333 = vadd.f32 0.0, %v332
    %v334 = vpop.f32.mrf.mxu0
    %v335 = vadd.f32 0.0, %v334
    %336 = vdwg.mxu0
    %v337 = vsub.f32 %v186, %v327
    %v338 = vsub.f32 %v188, %v329
    %v339 = vsub.f32 %v192, %v333
    %v340 = vsub.f32 %v194, %v335
    %v341 = vmul.f32 %v337, %v337
    %v342 = vmul.f32 %v338, %v338
    %v343 = vmul.f32 %v339, %v339
    %v344 = vmul.f32 %v340, %v340
    %345 = vmatprep.subr.mxu0 %v227
    %346 = vmatpush1.msra.mxu0 %v226
    %347 = vmatprep.subr.mxu0 %v225
    %348 = vmatpush1.msra.mxu0 %v224
    %349 = vmatprep.subr.mxu0 %v223
    %350 = vmatpush1.msra.mxu0 %v222
    %351 = vmatprep.subr.mxu0 %v221
    %352 = vmatpush1.msra.mxu0 %v220
    %353 = vmatprep.subr.mxu0 %v219
    %354 = vmatpush1.msra.mxu0 %v218
    %355 = vmatprep.subr.mxu0 %v217
    %356 = vmatpush1.msra.mxu0 %v216
    %357 = vmatprep.subr.mxu0 %v215
    %358 = vmatpush1.msra.mxu0 %v214
    %359 = vmatprep.subr.mxu0 %v213
    %360 = vmatpush1.msra.mxu0 %v212
    %361 = vmatprep.subr.mxu0 %v211
    %362 = vmatpush1.msra.mxu0 %v210
    %363 = vmatprep.subr.mxu0 %v209
    %364 = vmatpush1.msra.mxu0 %v208
    %365 = vmatprep.subr.mxu0 %v207
    %366 = vmatpush1.msra.mxu0 %v206
    %367 = vmatprep.subr.mxu0 %v205
    %368 = vmatpush1.msra.mxu0 %v204
    %369 = vmatprep.subr.mxu0 %v203
    %370 = vmatpush1.msra.mxu0 %v202
    %371 = vmatprep.subr.mxu0 %v201
    %372 = vmatpush1.msra.mxu0 %v200
    %373 = vmatprep.subr.mxu0 %v199
    %374 = vmatpush1.msra.mxu0 %v198
    %375 = vmatprep.subr.mxu0 %v197
    %376 = vmatpush1.msra.mxu0 %v196
    %377 = vmatprep.subr.mxu0 %v259
    %378 = vmatpush2.msra.mxu0 %v258
    %379 = vmatprep.subr.mxu0 %v257
    %380 = vmatpush2.msra.mxu0 %v256
    %381 = vmatprep.subr.mxu0 %v255
    %382 = vmatpush2.msra.mxu0 %v254
    %383 = vmatprep.subr.mxu0 %v253
    %384 = vmatpush2.msra.mxu0 %v252
    %385 = vmatprep.subr.mxu0 %v251
    %386 = vmatpush2.msra.mxu0 %v250
    %387 = vmatprep.subr.mxu0 %v249
    %388 = vmatpush2.msra.mxu0 %v248
    %389 = vmatprep.subr.mxu0 %v247
    %390 = vmatpush2.msra.mxu0 %v246
    %391 = vmatprep.subr.mxu0 %v245
    %392 = vmatpush2.msra.mxu0 %v244
    %393 = vmatprep.subr.mxu0 %v243
    %394 = vmatpush2.msra.mxu0 %v242
    %395 = vmatprep.subr.mxu0 %v241
    %396 = vmatpush2.msra.mxu0 %v240
    %397 = vmatprep.subr.mxu0 %v239
    %398 = vmatpush2.msra.mxu0 %v238
    %399 = vmatprep.subr.mxu0 %v237
    %400 = vmatpush2.msra.mxu0 %v236
    %401 = vmatprep.subr.mxu0 %v235
    %402 = vmatpush2.msra.mxu0 %v234
    %403 = vmatprep.subr.mxu0 %v233
    %404 = vmatpush2.msra.mxu0 %v232
    %405 = vmatprep.subr.mxu0 %v231
    %406 = vmatpush2.msra.mxu0 %v230
    %407 = vmatprep.subr.mxu0 %v229
    %408 = vmatpush2.msra.mxu0 %v228
    %409 = vmatprep.mubr.f32.mxu0 %v342
    %410 = vmatmul.mubr.f32.gmra.mxu0 %v341
    %v411 = vpop.f32.mrf.mxu0
    %v412 = vadd.f32 1e-06, %v411
    %v413 = vpop.f32.mrf.mxu0
    %v414 = vadd.f32 1e-06, %v413
    %415 = vmatprep.mubr.f32.mxu0 %v344
    %416 = vmatmul.mubr.f32.gmra.mxu0 %v343
    %v417 = vpop.f32.mrf.mxu0
    %v418 = vadd.f32 1e-06, %v417
    %v419 = vpop.f32.mrf.mxu0
    %v420 = vadd.f32 1e-06, %v419
    %421 = vdwg.mxu0
    %v422 = vrsqrt.pop %v412
    %v423 = vrsqrt.pop %v414
    %v424 = vrsqrt.pop %v418
    %v425 = vrsqrt.pop %v420
    %v426 = vmul.f32 %v337, %v422
    %v427 = vmul.f32 %v338, %v423
    %v428 = vmul.f32 %v339, %v424
    %v429 = vmul.f32 %v340, %v425
    %v430 = vld [vmem:[%s5] sm:$0x3]
    %v432 = vlaneseq
    %v433 = vshrl.u32 %v432, 7
    %v434 = vsub.s32 0, %v433
    %v435 = vrot.slane %v430, %v434
    %v436 = vlaneseq
    %v437 = vshrl.u32 %v436, 7
    %v438 = vsub.s32 1, %v437
    %v439 = vrot.slane %v430, %v438
    %v442 = vmul.f32 %v426, %v435
    %v443 = vmul.f32 %v427, %v439
    %v444 = vmul.f32 %v428, %v435
    %v445 = vmul.f32 %v429, %v439
    %v446 = vld [vmem:[%s6] sm:$0x3]
    %v448 = vlaneseq
    %v449 = vshrl.u32 %v448, 7
    %v450 = vsub.s32 0, %v449
    %v451 = vrot.slane %v446, %v450
    %v452 = vlaneseq
    %v453 = vshrl.u32 %v452, 7
    %v454 = vsub.s32 1, %v453
    %v455 = vrot.slane %v446, %v454
    %v458 = vadd.f32 %v442, %v451
    %v459 = vadd.f32 %v443, %v455
    %v460 = vadd.f32 %v444, %v451
    %v461 = vadd.f32 %v445, %v455
    %v462 = vmul.f32 %v458, 0.5
    %v463 = vmul.f32 %v459, 0.5
    %v464 = vmul.f32 %v460, 0.5
    %v465 = vmul.f32 %v461, 0.5
    %v466 = vmul.f32 %v458, 0.044715
    %v467 = vmul.f32 %v459, 0.044715
    %v468 = vmul.f32 %v460, 0.044715
    %v469 = vmul.f32 %v461, 0.044715
    %v470 = vmul.f32 %v466, %v458
    %v471 = vmul.f32 %v467, %v459
    %v472 = vmul.f32 %v468, %v460
    %v473 = vmul.f32 %v469, %v461
    %v474 = vmul.f32 %v470, %v458
    %v475 = vmul.f32 %v471, %v459
    %v476 = vmul.f32 %v472, %v460
    %v477 = vmul.f32 %v473, %v461
    %v478 = vadd.f32 %v458, %v474
    %v479 = vadd.f32 %v459, %v475
    %v480 = vadd.f32 %v460, %v476
    %v481 = vadd.f32 %v461, %v477
    %v482 = vmul.f32 %v478, 0.7978846
    %v483 = vmul.f32 %v479, 0.7978846
    %v484 = vmul.f32 %v480, 0.7978846
    %v485 = vmul.f32 %v481, 0.7978846
    %v486 = vtanh.pop %v482
    %v487 = vtanh.pop %v483
    %v488 = vtanh.pop %v484
    %v489 = vtanh.pop %v485
    %v490 = vadd.f32 %v486, 1.0
    %v491 = vadd.f32 %v487, 1.0
    %v492 = vadd.f32 %v488, 1.0
    %v493 = vadd.f32 %v489, 1.0
    %v494 = vmul.f32 %v462, %v490
    %v495 = vmul.f32 %v463, %v491
    %v496 = vmul.f32 %v464, %v492
    %v497 = vmul.f32 %v465, %v493
    %v498 = vld [vmem:[%s7] sm:$0xff]
    %v499 = vld [vmem:[%s7 + $0x8] sm:$0xff]
    %v500 = vld [vmem:[%s7 + $0x10] sm:$0xff]
    %v501 = vld [vmem:[%s7 + $0x18] sm:$0xff]
    %v502 = vld [vmem:[%s7 + $0x20] sm:$0xff]
    %v503 = vld [vmem:[%s7 + $0x28] sm:$0xff]
    %v504 = vld [vmem:[%s7 + $0x30] sm:$0xff]
    %v505 = vld [vmem:[%s7 + $0x38] sm:$0xff]
    %v506 = vld [vmem:[%s7 + $0x40] sm:$0xff]
    %v507 = vld [vmem:[%s7 + $0x48] sm:$0xff]
    %v508 = vld [vmem:[%s7 + $0x50] sm:$0xff]
    %v509 = vld [vmem:[%s7 + $0x58] sm:$0xff]
    %v510 = vld [vmem:[%s7 + $0x60] sm:$0xff]
    %v511 = vld [vmem:[%s7 + $0x68] sm:$0xff]
    %v512 = vld [vmem:[%s7 + $0x70] sm:$0xff]
    %v513 = vld [vmem:[%s7 + $0x78] sm:$0xff]
    %v514 = vld [vmem:[%s7 + $0x80] sm:$0xff]
    %v515 = vld [vmem:[%s7 + $0x88] sm:$0xff]
    %v516 = vld [vmem:[%s7 + $0x90] sm:$0xff]
    %v517 = vld [vmem:[%s7 + $0x98] sm:$0xff]
    %v518 = vld [vmem:[%s7 + $0xa0] sm:$0xff]
    %v519 = vld [vmem:[%s7 + $0xa8] sm:$0xff]
    %v520 = vld [vmem:[%s7 + $0xb0] sm:$0xff]
    %v521 = vld [vmem:[%s7 + $0xb8] sm:$0xff]
    %v522 = vld [vmem:[%s7 + $0xc0] sm:$0xff]
    %v523 = vld [vmem:[%s7 + $0xc8] sm:$0xff]
    %v524 = vld [vmem:[%s7 + $0xd0] sm:$0xff]
    %v525 = vld [vmem:[%s7 + $0xd8] sm:$0xff]
    %v526 = vld [vmem:[%s7 + $0xe0] sm:$0xff]
    %v527 = vld [vmem:[%s7 + $0xe8] sm:$0xff]
    %v528 = vld [vmem:[%s7 + $0xf0] sm:$0xff]
    %v529 = vld [vmem:[%s7 + $0xf8] sm:$0xff]
    %v530 = vld [vmem:[%s7 + $0x100] sm:$0xff]
    %v531 = vld [vmem:[%s7 + $0x108] sm:$0xff]
    %v532 = vld [vmem:[%s7 + $0x110] sm:$0xff]
    %v533 = vld [vmem:[%s7 + $0x118] sm:$0xff]
    %v534 = vld [vmem:[%s7 + $0x120] sm:$0xff]
    %v535 = vld [vmem:[%s7 + $0x128] sm:$0xff]
    %v536 = vld [vmem:[%s7 + $0x130] sm:$0xff]
    %v537 = vld [vmem:[%s7 + $0x138] sm:$0xff]
    %v538 = vld [vmem:[%s7 + $0x140] sm:$0xff]
    %v539 = vld [vmem:[%s7 + $0x148] sm:$0xff]
    %v540 = vld [vmem:[%s7 + $0x150] sm:$0xff]
    %v541 = vld [vmem:[%s7 + $0x158] sm:$0xff]
    %v542 = vld [vmem:[%s7 + $0x160] sm:$0xff]
    %v543 = vld [vmem:[%s7 + $0x168] sm:$0xff]
    %v544 = vld [vmem:[%s7 + $0x170] sm:$0xff]
    %v545 = vld [vmem:[%s7 + $0x178] sm:$0xff]
    %v546 = vld [vmem:[%s7 + $0x180] sm:$0xff]
    %v547 = vld [vmem:[%s7 + $0x188] sm:$0xff]
    %v548 = vld [vmem:[%s7 + $0x190] sm:$0xff]
    %v549 = vld [vmem:[%s7 + $0x198] sm:$0xff]
    %v550 = vld [vmem:[%s7 + $0x1a0] sm:$0xff]
    %v551 = vld [vmem:[%s7 + $0x1a8] sm:$0xff]
    %v552 = vld [vmem:[%s7 + $0x1b0] sm:$0xff]
    %v553 = vld [vmem:[%s7 + $0x1b8] sm:$0xff]
    %v554 = vld [vmem:[%s7 + $0x1c0] sm:$0xff]
    %v555 = vld [vmem:[%s7 + $0x1c8] sm:$0xff]
    %v556 = vld [vmem:[%s7 + $0x1d0] sm:$0xff]
    %v557 = vld [vmem:[%s7 + $0x1d8] sm:$0xff]
    %v558 = vld [vmem:[%s7 + $0x1e0] sm:$0xff]
    %v559 = vld [vmem:[%s7 + $0x1e8] sm:$0xff]
    %v560 = vld [vmem:[%s7 + $0x1f0] sm:$0xff]
    %v561 = vld [vmem:[%s7 + $0x1f8] sm:$0xff]
    %v562 = vld [vmem:[%s7 + $0x200] sm:$0xff]
    %v563 = vld [vmem:[%s7 + $0x208] sm:$0xff]
    %v564 = vld [vmem:[%s7 + $0x210] sm:$0xff]
    %v565 = vld [vmem:[%s7 + $0x218] sm:$0xff]
    %v566 = vld [vmem:[%s7 + $0x220] sm:$0xff]
    %v567 = vld [vmem:[%s7 + $0x228] sm:$0xff]
    %v568 = vld [vmem:[%s7 + $0x230] sm:$0xff]
    %v569 = vld [vmem:[%s7 + $0x238] sm:$0xff]
    %v570 = vld [vmem:[%s7 + $0x240] sm:$0xff]
    %v571 = vld [vmem:[%s7 + $0x248] sm:$0xff]
    %v572 = vld [vmem:[%s7 + $0x250] sm:$0xff]
    %v573 = vld [vmem:[%s7 + $0x258] sm:$0xff]
    %v574 = vld [vmem:[%s7 + $0x260] sm:$0xff]
    %v575 = vld [vmem:[%s7 + $0x268] sm:$0xff]
    %v576 = vld [vmem:[%s7 + $0x270] sm:$0xff]
    %v577 = vld [vmem:[%s7 + $0x278] sm:$0xff]
    %v578 = vld [vmem:[%s7 + $0x280] sm:$0xff]
    %v579 = vld [vmem:[%s7 + $0x288] sm:$0xff]
    %v580 = vld [vmem:[%s7 + $0x290] sm:$0xff]
    %v581 = vld [vmem:[%s7 + $0x298] sm:$0xff]
    %v582 = vld [vmem:[%s7 + $0x2a0] sm:$0xff]
    %v583 = vld [vmem:[%s7 + $0x2a8] sm:$0xff]
    %v584 = vld [vmem:[%s7 + $0x2b0] sm:$0xff]
    %v585 = vld [vmem:[%s7 + $0x2b8] sm:$0xff]
    %v586 = vld [vmem:[%s7 + $0x2c0] sm:$0xff]
    %v587 = vld [vmem:[%s7 + $0x2c8] sm:$0xff]
    %v588 = vld [vmem:[%s7 + $0x2d0] sm:$0xff]
    %v589 = vld [vmem:[%s7 + $0x2d8] sm:$0xff]
    %v590 = vld [vmem:[%s7 + $0x2e0] sm:$0xff]
    %v591 = vld [vmem:[%s7 + $0x2e8] sm:$0xff]
    %v592 = vld [vmem:[%s7 + $0x2f0] sm:$0xff]
    %v593 = vld [vmem:[%s7 + $0x2f8] sm:$0xff]
    %v594 = vld [vmem:[%s7 + $0x300] sm:$0xff]
    %v595 = vld [vmem:[%s7 + $0x308] sm:$0xff]
    %v596 = vld [vmem:[%s7 + $0x310] sm:$0xff]
    %v597 = vld [vmem:[%s7 + $0x318] sm:$0xff]
    %v598 = vld [vmem:[%s7 + $0x320] sm:$0xff]
    %v599 = vld [vmem:[%s7 + $0x328] sm:$0xff]
    %v600 = vld [vmem:[%s7 + $0x330] sm:$0xff]
    %v601 = vld [vmem:[%s7 + $0x338] sm:$0xff]
    %v602 = vld [vmem:[%s7 + $0x340] sm:$0xff]
    %v603 = vld [vmem:[%s7 + $0x348] sm:$0xff]
    %v604 = vld [vmem:[%s7 + $0x350] sm:$0xff]
    %v605 = vld [vmem:[%s7 + $0x358] sm:$0xff]
    %v606 = vld [vmem:[%s7 + $0x360] sm:$0xff]
    %v607 = vld [vmem:[%s7 + $0x368] sm:$0xff]
    %v608 = vld [vmem:[%s7 + $0x370] sm:$0xff]
    %v609 = vld [vmem:[%s7 + $0x378] sm:$0xff]
    %v610 = vld [vmem:[%s7 + $0x380] sm:$0xff]
    %v611 = vld [vmem:[%s7 + $0x388] sm:$0xff]
    %v612 = vld [vmem:[%s7 + $0x390] sm:$0xff]
    %v613 = vld [vmem:[%s7 + $0x398] sm:$0xff]
    %v614 = vld [vmem:[%s7 + $0x3a0] sm:$0xff]
    %v615 = vld [vmem:[%s7 + $0x3a8] sm:$0xff]
    %v616 = vld [vmem:[%s7 + $0x3b0] sm:$0xff]
    %v617 = vld [vmem:[%s7 + $0x3b8] sm:$0xff]
    %v618 = vld [vmem:[%s7 + $0x3c0] sm:$0xff]
    %v619 = vld [vmem:[%s7 + $0x3c8] sm:$0xff]
    %v620 = vld [vmem:[%s7 + $0x3d0] sm:$0xff]
    %v621 = vld [vmem:[%s7 + $0x3d8] sm:$0xff]
    %v622 = vld [vmem:[%s7 + $0x3e0] sm:$0xff]
    %v623 = vld [vmem:[%s7 + $0x3e8] sm:$0xff]
    %v624 = vld [vmem:[%s7 + $0x3f0] sm:$0xff]
    %v625 = vld [vmem:[%s7 + $0x3f8] sm:$0xff]
    %v626 = vld [vmem:[%s8] sm:$0xf]
    %v628 = vlaneseq
    %v629 = vshrl.u32 %v628, 7
    %v630 = vsub.s32 0, %v629
    %v631 = vrot.slane %v626, %v630
    %v632 = vlaneseq
    %v633 = vshrl.u32 %v632, 7
    %v634 = vsub.s32 1, %v633
    %v635 = vrot.slane %v626, %v634
    %v636 = vlaneseq
    %v637 = vshrl.u32 %v636, 7
    %v638 = vsub.s32 2, %v637
    %v639 = vrot.slane %v626, %v638
    %v640 = vlaneseq
    %v641 = vshrl.u32 %v640, 7
    %v642 = vsub.s32 3, %v641
    %v643 = vrot.slane %v626, %v642
    %648 = vmatprep.subr.mxu0 %v559
    %649 = vmatpush1.msra.mxu0 %v558
    %650 = vmatprep.subr.mxu0 %v555
    %651 = vmatpush1.msra.mxu0 %v554
    %652 = vmatprep.subr.mxu0 %v551
    %653 = vmatpush1.msra.mxu0 %v550
    %654 = vmatprep.subr.mxu0 %v547
    %655 = vmatpush1.msra.mxu0 %v546
    %656 = vmatprep.subr.mxu0 %v543
    %657 = vmatpush1.msra.mxu0 %v542
    %658 = vmatprep.subr.mxu0 %v539
    %659 = vmatpush1.msra.mxu0 %v538
    %660 = vmatprep.subr.mxu0 %v535
    %661 = vmatpush1.msra.mxu0 %v534
    %662 = vmatprep.subr.mxu0 %v531
    %663 = vmatpush1.msra.mxu0 %v530
    %664 = vmatprep.subr.mxu0 %v527
    %665 = vmatpush1.msra.mxu0 %v526
    %666 = vmatprep.subr.mxu0 %v523
    %667 = vmatpush1.msra.mxu0 %v522
    %668 = vmatprep.subr.mxu0 %v519
    %669 = vmatpush1.msra.mxu0 %v518
    %670 = vmatprep.subr.mxu0 %v515
    %671 = vmatpush1.msra.mxu0 %v514
    %672 = vmatprep.subr.mxu0 %v511
    %673 = vmatpush1.msra.mxu0 %v510
    %674 = vmatprep.subr.mxu0 %v507
    %675 = vmatpush1.msra.mxu0 %v506
    %676 = vmatprep.subr.mxu0 %v503
    %677 = vmatpush1.msra.mxu0 %v502
    %678 = vmatprep.subr.mxu0 %v499
    %679 = vmatpush1.msra.mxu0 %v498
    %680 = vmatprep.subr.mxu0 %v623
    %681 = vmatpush2.msra.mxu0 %v622
    %682 = vmatprep.subr.mxu0 %v619
    %683 = vmatpush2.msra.mxu0 %v618
    %684 = vmatprep.subr.mxu0 %v615
    %685 = vmatpush2.msra.mxu0 %v614
    %686 = vmatprep.subr.mxu0 %v611
    %687 = vmatpush2.msra.mxu0 %v610
    %688 = vmatprep.subr.mxu0 %v607
    %689 = vmatpush2.msra.mxu0 %v606
    %690 = vmatprep.subr.mxu0 %v603
    %691 = vmatpush2.msra.mxu0 %v602
    %692 = vmatprep.subr.mxu0 %v599
    %693 = vmatpush2.msra.mxu0 %v598
    %694 = vmatprep.subr.mxu0 %v595
    %695 = vmatpush2.msra.mxu0 %v594
    %696 = vmatprep.subr.mxu0 %v591
    %697 = vmatpush2.msra.mxu0 %v590
    %698 = vmatprep.subr.mxu0 %v587
    %699 = vmatpush2.msra.mxu0 %v586
    %700 = vmatprep.subr.mxu0 %v583
    %701 = vmatpush2.msra.mxu0 %v582
    %702 = vmatprep.subr.mxu0 %v579
    %703 = vmatpush2.msra.mxu0 %v578
    %704 = vmatprep.subr.mxu0 %v575
    %705 = vmatpush2.msra.mxu0 %v574
    %706 = vmatprep.subr.mxu0 %v571
    %707 = vmatpush2.msra.mxu0 %v570
    %708 = vmatprep.subr.mxu0 %v567
    %709 = vmatpush2.msra.mxu0 %v566
    %710 = vmatprep.subr.mxu0 %v563
    %711 = vmatpush2.msra.mxu0 %v562
    %712 = vmatprep.mubr.f32.mxu0 %v495
    %713 = vmatmul.mubr.f32.gmra.mxu0 %v494
    %v714 = vpop.f32.mrf.mxu0
    %v715 = vadd.f32 %v631, %v714
    %v716 = vpop.f32.mrf.mxu0
    %v717 = vadd.f32 %v635, %v716
    %718 = vmatprep.mubr.f32.mxu0 %v497
    %719 = vmatmul.mubr.f32.gmra.mxu0 %v496
    %v720 = vpop.f32.mrf.mxu0
    %v721 = vadd.f32 %v631, %v720
    %v722 = vpop.f32.mrf.mxu0
    %v723 = vadd.f32 %v635, %v722
    %724 = vdwg.mxu0
    %725 = vmatprep.subr.mxu0 %v561
    %726 = vmatpush1.msra.mxu0 %v560
    %727 = vmatprep.subr.mxu0 %v557
    %728 = vmatpush1.msra.mxu0 %v556
    %729 = vmatprep.subr.mxu0 %v553
    %730 = vmatpush1.msra.mxu0 %v552
    %731 = vmatprep.subr.mxu0 %v549
    %732 = vmatpush1.msra.mxu0 %v548
    %733 = vmatprep.subr.mxu0 %v545
    %734 = vmatpush1.msra.mxu0 %v544
    %735 = vmatprep.subr.mxu0 %v541
    %736 = vmatpush1.msra.mxu0 %v540
    %737 = vmatprep.subr.mxu0 %v537
    %738 = vmatpush1.msra.mxu0 %v536
    %739 = vmatprep.subr.mxu0 %v533
    %740 = vmatpush1.msra.mxu0 %v532
    %741 = vmatprep.subr.mxu0 %v529
    %742 = vmatpush1.msra.mxu0 %v528
    %743 = vmatprep.subr.mxu0 %v525
    %744 = vmatpush1.msra.mxu0 %v524
    %745 = vmatprep.subr.mxu0 %v521
    %746 = vmatpush1.msra.mxu0 %v520
    %747 = vmatprep.subr.mxu0 %v517
    %748 = vmatpush1.msra.mxu0 %v516
    %749 = vmatprep.subr.mxu0 %v513
    %750 = vmatpush1.msra.mxu0 %v512
    %751 = vmatprep.subr.mxu0 %v509
    %752 = vmatpush1.msra.mxu0 %v508
    %753 = vmatprep.subr.mxu0 %v505
    %754 = vmatpush1.msra.mxu0 %v504
    %755 = vmatprep.subr.mxu0 %v501
    %756 = vmatpush1.msra.mxu0 %v500
    %757 = vmatprep.subr.mxu0 %v625
    %758 = vmatpush2.msra.mxu0 %v624
    %759 = vmatprep.subr.mxu0 %v621
    %760 = vmatpush2.msra.mxu0 %v620
    %761 = vmatprep.subr.mxu0 %v617
    %762 = vmatpush2.msra.mxu0 %v616
    %763 = vmatprep.subr.mxu0 %v613
    %764 = vmatpush2.msra.mxu0 %v612
    %765 = vmatprep.subr.mxu0 %v609
    %766 = vmatpush2.msra.mxu0 %v608
    %767 = vmatprep.subr.mxu0 %v605
    %768 = vmatpush2.msra.mxu0 %v604
    %769 = vmatprep.subr.mxu0 %v601
    %770 = vmatpush2.msra.mxu0 %v600
    %771 = vmatprep.subr.mxu0 %v597
    %772 = vmatpush2.msra.mxu0 %v596
    %773 = vmatprep.subr.mxu0 %v593
    %774 = vmatpush2.msra.mxu0 %v592
    %775 = vmatprep.subr.mxu0 %v589
    %776 = vmatpush2.msra.mxu0 %v588
    %777 = vmatprep.subr.mxu0 %v585
    %778 = vmatpush2.msra.mxu0 %v584
    %779 = vmatprep.subr.mxu0 %v581
    %780 = vmatpush2.msra.mxu0 %v580
    %781 = vmatprep.subr.mxu0 %v577
    %782 = vmatpush2.msra.mxu0 %v576
    %783 = vmatprep.subr.mxu0 %v573
    %784 = vmatpush2.msra.mxu0 %v572
    %785 = vmatprep.subr.mxu0 %v569
    %786 = vmatpush2.msra.mxu0 %v568
    %787 = vmatprep.subr.mxu0 %v565
    %788 = vmatpush2.msra.mxu0 %v564
    %789 = vmatprep.mubr.f32.mxu0 %v495
    %790 = vmatmul.mubr.f32.gmra.mxu0 %v494
    %v791 = vpop.f32.mrf.mxu0
    %v792 = vadd.f32 %v639, %v791
    %v793 = vpop.f32.mrf.mxu0
    %v794 = vadd.f32 %v643, %v793
    %795 = vmatprep.mubr.f32.mxu0 %v497
    %796 = vmatmul.mubr.f32.gmra.mxu0 %v496
    %v797 = vpop.f32.mrf.mxu0
    %v798 = vadd.f32 %v639, %v797
    %v799 = vpop.f32.mrf.mxu0
    %v800 = vadd.f32 %v643, %v799
    %801 = vdwg.mxu0
    %v802 = vmul.f32 %v715, 0.5
    %v803 = vmul.f32 %v717, 0.5
    %v804 = vmul.f32 %v792, 0.5
    %v805 = vmul.f32 %v794, 0.5
    %v806 = vmul.f32 %v721, 0.5
    %v807 = vmul.f32 %v723, 0.5
    %v808 = vmul.f32 %v798, 0.5
    %v809 = vmul.f32 %v800, 0.5
    %v810 = vmul.f32 %v715, 0.044715
    %v811 = vmul.f32 %v717, 0.044715
    %v812 = vmul.f32 %v792, 0.044715
    %v813 = vmul.f32 %v794, 0.044715
    %v814 = vmul.f32 %v721, 0.044715
    %v815 = vmul.f32 %v723, 0.044715
    %v816 = vmul.f32 %v798, 0.044715
    %v817 = vmul.f32 %v800, 0.044715
    %v818 = vmul.f32 %v810, %v715
    %v819 = vmul.f32 %v811, %v717
    %v820 = vmul.f32 %v812, %v792
    %v821 = vmul.f32 %v813, %v794
    %v822 = vmul.f32 %v814, %v721
    %v823 = vmul.f32 %v815, %v723
    %v824 = vmul.f32 %v816, %v798
    %v825 = vmul.f32 %v817, %v800
    %v826 = vmul.f32 %v818, %v715
    %v827 = vmul.f32 %v819, %v717
    %v828 = vmul.f32 %v820, %v792
    %v829 = vmul.f32 %v821, %v794
    %v830 = vmul.f32 %v822, %v721
    %v831 = vmul.f32 %v823, %v723
    %v832 = vmul.f32 %v824, %v798
    %v833 = vmul.f32 %v825, %v800
    %v834 = vadd.f32 %v715, %v826
    %v835 = vadd.f32 %v717, %v827
    %v836 = vadd.f32 %v792, %v828
    %v837 = vadd.f32 %v794, %v829
    %v838 = vadd.f32 %v721, %v830
    %v839 = vadd.f32 %v723, %v831
    %v840 = vadd.f32 %v798, %v832
    %v841 = vadd.f32 %v800, %v833
    %v842 = vmul.f32 %v834, 0.7978846
    %v843 = vmul.f32 %v835, 0.7978846
    %v844 = vmul.f32 %v836, 0.7978846
    %v845 = vmul.f32 %v837, 0.7978846
    %v846 = vmul.f32 %v838, 0.7978846
    %v847 = vmul.f32 %v839, 0.7978846
    %v848 = vmul.f32 %v840, 0.7978846
    %v849 = vmul.f32 %v841, 0.7978846
    %v850 = vtanh.pop %v842
    %v851 = vtanh.pop %v843
    %v852 = vtanh.pop %v844
    %v853 = vtanh.pop %v845
    %v854 = vtanh.pop %v846
    %v855 = vtanh.pop %v847
    %v856 = vtanh.pop %v848
    %v857 = vtanh.pop %v849
    %v858 = vadd.f32 %v850, 1.0
    %v859 = vadd.f32 %v851, 1.0
    %v860 = vadd.f32 %v852, 1.0
    %v861 = vadd.f32 %v853, 1.0
    %v862 = vadd.f32 %v854, 1.0
    %v863 = vadd.f32 %v855, 1.0
    %v864 = vadd.f32 %v856, 1.0
    %v865 = vadd.f32 %v857, 1.0
    %v866 = vmul.f32 %v802, %v858
    %v867 = vmul.f32 %v803, %v859
    %v868 = vmul.f32 %v804, %v860
    %v869 = vmul.f32 %v805, %v861
    %v870 = vmul.f32 %v806, %v862
    %v871 = vmul.f32 %v807, %v863
    %v872 = vmul.f32 %v808, %v864
    %v873 = vmul.f32 %v809, %v865
    %v874 = vld [vmem:[%s1] sm:$0x3]
    %v875 = vld [vmem:[%s9] sm:$0xff]
    %v876 = vld [vmem:[%s9 + $0x8] sm:$0xff]
    %v877 = vld [vmem:[%s9 + $0x10] sm:$0xff]
    %v878 = vld [vmem:[%s9 + $0x18] sm:$0xff]
    %s880 = vtos %v874
    %v881 = vstv %s880
    %v883 = vmul.f32 %v866, %v881
    %884 = vrot.lane.b32.xlu0 %v874, 127
    %v885 = vpop.permute.xlu0 %884
    %s886 = vtos %v885
    %v887 = vstv %s886
    %v889 = vmul.f32 %v867, %v887
    %v890 = vadd.f32 %v883, %v889
    %891 = vrot.lane.b32.xlu0 %v874, 126
    %v892 = vpop.permute.xlu0 %891
    %s893 = vtos %v892
    %v894 = vstv %s893
    %v896 = vmul.f32 %v868, %v894
    %v897 = vadd.f32 %v890, %v896
    %898 = vrot.lane.b32.xlu0 %v874, 125
    %v899 = vpop.permute.xlu0 %898
    %s900 = vtos %v899
    %v901 = vstv %s900
    %v903 = vmul.f32 %v869, %v901
    %v904 = vadd.f32 %v897, %v903
    %vm905 = vcmask 261120
    %v907 = vsel %vm905, %v904, 0
    %909 = vmatprep.subr.mxu0 0.0
    %910 = vmatpush1.msra.mxu0 0.0
    %911 = vmatprep.subr.mxu0 0.0
    %912 = vmatpush1.msra.mxu0 0.0
    %913 = vmatprep.subr.mxu0 0.0
    %914 = vmatpush1.msra.mxu0 0.0
    %915 = vmatprep.subr.mxu0 0.0
    %916 = vmatpush1.msra.mxu0 0.0
    %917 = vmatprep.subr.mxu0 0.0
    %918 = vmatpush1.msra.mxu0 0.0
    %919 = vmatprep.subr.mxu0 0.0
    %920 = vmatpush1.msra.mxu0 0.0
    %921 = vmatprep.subr.mxu0 0.0
    %922 = vmatpush1.msra.mxu0 0.0
    %923 = vmatprep.subr.mxu0 0.0
    %924 = vmatpush1.msra.mxu0 0.0
    %925 = vmatprep.subr.mxu0 0.0
    %926 = vmatpush1.msra.mxu0 0.0
    %927 = vmatprep.subr.mxu0 0.0
    %928 = vmatpush1.msra.mxu0 0.0
    %929 = vmatprep.subr.mxu0 0.0
    %930 = vmatpush1.msra.mxu0 0.0
    %931 = vmatprep.subr.mxu0 0.0
    %932 = vmatpush1.msra.mxu0 0.0
    %933 = vmatprep.subr.mxu0 0.0
    %934 = vmatpush1.msra.mxu0 %v878
    %935 = vmatprep.subr.mxu0 0.0
    %936 = vmatpush1.msra.mxu0 %v877
    %937 = vmatprep.subr.mxu0 0.0
    %938 = vmatpush1.msra.mxu0 %v876
    %939 = vmatprep.subr.mxu0 0.0
    %940 = vmatpush1.msra.mxu0 %v875
    %941 = vmatprep.subr.mxu0 0.0
    %942 = vmatpush2.msra.mxu0 0.0
    %943 = vmatprep.subr.mxu0 0.0
    %944 = vmatpush2.msra.mxu0 0.0
    %945 = vmatprep.subr.mxu0 0.0
    %946 = vmatpush2.msra.mxu0 0.0
    %947 = vmatprep.subr.mxu0 0.0
    %948 = vmatpush2.msra.mxu0 0.0
    %949 = vmatprep.subr.mxu0 0.0
    %950 = vmatpush2.msra.mxu0 0.0
    %951 = vmatprep.subr.mxu0 0.0
    %952 = vmatpush2.msra.mxu0 0.0
    %953 = vmatprep.subr.mxu0 0.0
    %954 = vmatpush2.msra.mxu0 0.0
    %955 = vmatprep.subr.mxu0 0.0
    %956 = vmatpush2.msra.mxu0 0.0
    %957 = vmatprep.subr.mxu0 0.0
    %958 = vmatpush2.msra.mxu0 0.0
    %959 = vmatprep.subr.mxu0 0.0
    %960 = vmatpush2.msra.mxu0 0.0
    %961 = vmatprep.subr.mxu0 0.0
    %962 = vmatpush2.msra.mxu0 0.0
    %963 = vmatprep.subr.mxu0 0.0
    %964 = vmatpush2.msra.mxu0 0.0
    %965 = vmatprep.subr.mxu0 0.0
    %966 = vmatpush2.msra.mxu0 0.0
    %967 = vmatprep.subr.mxu0 0.0
    %968 = vmatpush2.msra.mxu0 0.0
    %969 = vmatprep.subr.mxu0 0.0
    %970 = vmatpush2.msra.mxu0 0.0
    %971 = vmatprep.subr.mxu0 0.0
    %972 = vmatpush2.msra.mxu0 0.0
    %973 = vmatprep.mubr.f32.mxu0 0.0
    %974 = vmatmul.mubr.f32.gmra.mxu0 %v907
    %v975 = vpop.f32.mrf.mxu0
    %v976 = vadd.f32 0.0, %v975
    %v977 = vpop.f32.mrf.mxu0
    %978 = vdwg.mxu0
    %v979 = vld [vmem:[%s10] sm:$0xff]
    %v980 = vld [vmem:[%s10 + $0x8] sm:$0xff]
    %v981 = vld [vmem:[%s10 + $0x10] sm:$0xff]
    %v982 = vld [vmem:[%s10 + $0x18] sm:$0xff]
    %v983 = vld [vmem:[%s10 + $0x20] sm:$0xff]
    %v984 = vld [vmem:[%s10 + $0x28] sm:$0xff]
    %985 = vrot.lane.b32.xlu0 %v904, 96
    %v986 = vpop.permute.xlu0 %985
    %v987 = vsel %vm905, %v986, 0
    %989 = vmatprep.subr.mxu0 0.0
    %990 = vmatpush1.msra.mxu0 0.0
    %991 = vmatprep.subr.mxu0 0.0
    %992 = vmatpush1.msra.mxu0 0.0
    %993 = vmatprep.subr.mxu0 0.0
    %994 = vmatpush1.msra.mxu0 0.0
    %995 = vmatprep.subr.mxu0 0.0
    %996 = vmatpush1.msra.mxu0 0.0
    %997 = vmatprep.subr.mxu0 0.0
    %998 = vmatpush1.msra.mxu0 0.0
    %999 = vmatprep.subr.mxu0 0.0
    %1000 = vmatpush1.msra.mxu0 0.0
    %1001 = vmatprep.subr.mxu0 0.0
    %1002 = vmatpush1.msra.mxu0 0.0
    %1003 = vmatprep.subr.mxu0 0.0
    %1004 = vmatpush1.msra.mxu0 0.0
    %1005 = vmatprep.subr.mxu0 0.0
    %1006 = vmatpush1.msra.mxu0 0.0
    %1007 = vmatprep.subr.mxu0 0.0
    %1008 = vmatpush1.msra.mxu0 0.0
    %1009 = vmatprep.subr.mxu0 0.0
    %1010 = vmatpush1.msra.mxu0 0.0
    %1011 = vmatprep.subr.mxu0 0.0
    %1012 = vmatpush1.msra.mxu0 0.0
    %1013 = vmatprep.subr.mxu0 0.0
    %1014 = vmatpush1.msra.mxu0 %v878
    %1015 = vmatprep.subr.mxu0 0.0
    %1016 = vmatpush1.msra.mxu0 %v877
    %1017 = vmatprep.subr.mxu0 0.0
    %1018 = vmatpush1.msra.mxu0 %v876
    %1019 = vmatprep.subr.mxu0 0.0
    %1020 = vmatpush1.msra.mxu0 %v875
    %1021 = vmatprep.subr.mxu0 0.0
    %1022 = vmatpush2.msra.mxu0 0.0
    %1023 = vmatprep.subr.mxu0 0.0
    %1024 = vmatpush2.msra.mxu0 0.0
    %1025 = vmatprep.subr.mxu0 0.0
    %1026 = vmatpush2.msra.mxu0 0.0
    %1027 = vmatprep.subr.mxu0 0.0
    %1028 = vmatpush2.msra.mxu0 0.0
    %1029 = vmatprep.subr.mxu0 0.0
    %1030 = vmatpush2.msra.mxu0 0.0
    %1031 = vmatprep.subr.mxu0 0.0
    %1032 = vmatpush2.msra.mxu0 0.0
    %1033 = vmatprep.subr.mxu0 0.0
    %1034 = vmatpush2.msra.mxu0 0.0
    %1035 = vmatprep.subr.mxu0 0.0
    %1036 = vmatpush2.msra.mxu0 0.0
    %1037 = vmatprep.subr.mxu0 0.0
    %1038 = vmatpush2.msra.mxu0 0.0
    %1039 = vmatprep.subr.mxu0 0.0
    %1040 = vmatpush2.msra.mxu0 0.0
    %1041 = vmatprep.subr.mxu0 0.0
    %1042 = vmatpush2.msra.mxu0 0.0
    %1043 = vmatprep.subr.mxu0 0.0
    %1044 = vmatpush2.msra.mxu0 0.0
    %1045 = vmatprep.subr.mxu0 0.0
    %1046 = vmatpush2.msra.mxu0 0.0
    %1047 = vmatprep.subr.mxu0 0.0
    %1048 = vmatpush2.msra.mxu0 0.0
    %1049 = vmatprep.subr.mxu0 0.0
    %1050 = vmatpush2.msra.mxu0 0.0
    %1051 = vmatprep.subr.mxu0 0.0
    %1052 = vmatpush2.msra.mxu0 0.0
    %1053 = vmatprep.mubr.f32.mxu0 0.0
    %1054 = vmatmul.mubr.f32.gmra.mxu0 %v987
    %v1055 = vpop.f32.mrf.mxu0
    %v1056 = vadd.f32 0.0, %v1055
    %v1057 = vpop.f32.mrf.mxu0
    %1058 = vdwg.mxu0
    %s1059 = scalar_lea.vmem %s10, 48
    %v1060 = vld [vmem:[%s1059] sm:$0xff]
    %v1061 = vld [vmem:[%s1059 + $0x8] sm:$0xff]
    %v1062 = vld [vmem:[%s1059 + $0x10] sm:$0xff]
    %v1063 = vld [vmem:[%s1059 + $0x18] sm:$0xff]
    %v1064 = vld [vmem:[%s1059 + $0x20] sm:$0xff]
    %v1065 = vld [vmem:[%s1059 + $0x28] sm:$0xff]
    %vm1066 = vcmask 64512
    %v1068 = vsel %vm1066, %v1060, 0
    %v1071 = vsel %vm1066, %v1061, 0
    %v1074 = vsel %vm1066, %v1062, 0
    %v1077 = vsel %vm1066, %v1063, 0
    %v1080 = vsel %vm1066, %v1064, 0
    %v1083 = vsel %vm1066, %v1065, 0
    %1085 = vmatprep.subr.mxu0 0.0
    %1086 = vmatpush1.msra.mxu0 0.0
    %1087 = vmatprep.subr.mxu0 0.0
    %1088 = vmatpush1.msra.mxu0 0.0
    %1089 = vmatprep.subr.mxu0 0.0
    %1090 = vmatpush1.msra.mxu0 0.0
    %1091 = vmatprep.subr.mxu0 0.0
    %1092 = vmatpush1.msra.mxu0 0.0
    %1093 = vmatprep.subr.mxu0 0.0
    %1094 = vmatpush1.msra.mxu0 0.0
    %1095 = vmatprep.subr.mxu0 0.0
    %1096 = vmatpush1.msra.mxu0 0.0
    %1097 = vmatprep.subr.mxu0 0.0
    %1098 = vmatpush1.msra.mxu0 0.0
    %1099 = vmatprep.subr.mxu0 0.0
    %1100 = vmatpush1.msra.mxu0 0.0
    %1101 = vmatprep.subr.mxu0 0.0
    %1102 = vmatpush1.msra.mxu0 0.0
    %1103 = vmatprep.subr.mxu0 0.0
    %1104 = vmatpush1.msra.mxu0 0.0
    %1105 = vmatprep.subr.mxu0 0.0
    %1106 = vmatpush1.msra.mxu0 0.0
    %1107 = vmatprep.subr.mxu0 0.0
    %1108 = vmatpush1.msra.mxu0 0.0
    %1109 = vmatprep.subr.mxu0 0.0
    %1110 = vmatpush1.msra.mxu0 0.0
    %1111 = vmatprep.subr.mxu0 0.0
    %1112 = vmatpush1.msra.mxu0 0.0
    %1113 = vmatprep.subr.mxu0 0.0
    %1114 = vmatpush1.msra.mxu0 0.0
    %1115 = vmatprep.subr.mxu0 0.0
    %1116 = vmatpush1.msra.mxu0 %v1056
    %1117 = vmatprep.subr.mxu0 0.0
    %1118 = vmatpush2.msra.mxu0 0.0
    %1119 = vmatprep.subr.mxu0 0.0
    %1120 = vmatpush2.msra.mxu0 0.0
    %1121 = vmatprep.subr.mxu0 0.0
    %1122 = vmatpush2.msra.mxu0 0.0
    %1123 = vmatprep.subr.mxu0 0.0
    %1124 = vmatpush2.msra.mxu0 0.0
    %1125 = vmatprep.subr.mxu0 0.0
    %1126 = vmatpush2.msra.mxu0 0.0
    %1127 = vmatprep.subr.mxu0 0.0
    %1128 = vmatpush2.msra.mxu0 0.0
    %1129 = vmatprep.subr.mxu0 0.0
    %1130 = vmatpush2.msra.mxu0 0.0
    %1131 = vmatprep.subr.mxu0 0.0
    %1132 = vmatpush2.msra.mxu0 0.0
    %1133 = vmatprep.subr.mxu0 0.0
    %1134 = vmatpush2.msra.mxu0 0.0
    %1135 = vmatprep.subr.mxu0 0.0
    %1136 = vmatpush2.msra.mxu0 0.0
    %1137 = vmatprep.subr.mxu0 0.0
    %1138 = vmatpush2.msra.mxu0 0.0
    %1139 = vmatprep.subr.mxu0 0.0
    %1140 = vmatpush2.msra.mxu0 0.0
    %1141 = vmatprep.subr.mxu0 0.0
    %1142 = vmatpush2.msra.mxu0 0.0
    %1143 = vmatprep.subr.mxu0 0.0
    %1144 = vmatpush2.msra.mxu0 0.0
    %1145 = vmatprep.subr.mxu0 0.0
    %1146 = vmatpush2.msra.mxu0 0.0
    %1147 = vmatprep.subr.mxu0 0.0
    %1148 = vmatpush2.msra.mxu0 0.0
    %1149 = vmatprep.mubr.f32.mxu0 0.0
    %1150 = vmatmul.mubr.f32.gmra.mxu0 %v1068
    %v1151 = vpop.f32.mrf.mxu0
    %v1152 = vadd.f32 0.0, %v1151
    %v1153 = vpop.f32.mrf.mxu0
    %1154 = vmatprep.mubr.f32.mxu0 0.0
    %1155 = vmatmul.mubr.f32.gmra.mxu0 %v1071
    %v1156 = vpop.f32.mrf.mxu0
    %v1157 = vadd.f32 0.0, %v1156
    %v1158 = vpop.f32.mrf.mxu0
    %1159 = vmatprep.mubr.f32.mxu0 0.0
    %1160 = vmatmul.mubr.f32.gmra.mxu0 %v1074
    %v1161 = vpop.f32.mrf.mxu0
    %v1162 = vadd.f32 0.0, %v1161
    %v1163 = vpop.f32.mrf.mxu0
    %1164 = vmatprep.mubr.f32.mxu0 0.0
    %1165 = vmatmul.mubr.f32.gmra.mxu0 %v1077
    %v1166 = vpop.f32.mrf.mxu0
    %v1167 = vadd.f32 0.0, %v1166
    %v1168 = vpop.f32.mrf.mxu0
    %1169 = vmatprep.mubr.f32.mxu0 0.0
    %1170 = vmatmul.mubr.f32.gmra.mxu0 %v1080
    %v1171 = vpop.f32.mrf.mxu0
    %v1172 = vadd.f32 0.0, %v1171
    %v1173 = vpop.f32.mrf.mxu0
    %1174 = vmatprep.mubr.f32.mxu0 0.0
    %1175 = vmatmul.mubr.f32.gmra.mxu0 %v1083
    %v1176 = vpop.f32.mrf.mxu0
    %v1177 = vadd.f32 0.0, %v1176
    %v1178 = vpop.f32.mrf.mxu0
    %1179 = vdwg.mxu0
    %v1181 = vsel %vm1066, %v979, 0
    %v1184 = vsel %vm1066, %v980, 0
    %v1187 = vsel %vm1066, %v981, 0
    %v1190 = vsel %vm1066, %v982, 0
    %v1193 = vsel %vm1066, %v983, 0
    %v1196 = vsel %vm1066, %v984, 0
    %1198 = vmatprep.subr.mxu0 0.0
    %1199 = vmatpush1.msra.mxu0 0.0
    %1200 = vmatprep.subr.mxu0 0.0
    %1201 = vmatpush1.msra.mxu0 0.0
    %1202 = vmatprep.subr.mxu0 0.0
    %1203 = vmatpush1.msra.mxu0 0.0
    %1204 = vmatprep.subr.mxu0 0.0
    %1205 = vmatpush1.msra.mxu0 0.0
    %1206 = vmatprep.subr.mxu0 0.0
    %1207 = vmatpush1.msra.mxu0 0.0
    %1208 = vmatprep.subr.mxu0 0.0
    %1209 = vmatpush1.msra.mxu0 0.0
    %1210 = vmatprep.subr.mxu0 0.0
    %1211 = vmatpush1.msra.mxu0 0.0
    %1212 = vmatprep.subr.mxu0 0.0
    %1213 = vmatpush1.msra.mxu0 0.0
    %1214 = vmatprep.subr.mxu0 0.0
    %1215 = vmatpush1.msra.mxu0 0.0
    %1216 = vmatprep.subr.mxu0 0.0
    %1217 = vmatpush1.msra.mxu0 0.0
    %1218 = vmatprep.subr.mxu0 0.0
    %1219 = vmatpush1.msra.mxu0 0.0
    %1220 = vmatprep.subr.mxu0 0.0
    %1221 = vmatpush1.msra.mxu0 0.0
    %1222 = vmatprep.subr.mxu0 0.0
    %1223 = vmatpush1.msra.mxu0 0.0
    %1224 = vmatprep.subr.mxu0 0.0
    %1225 = vmatpush1.msra.mxu0 0.0
    %1226 = vmatprep.subr.mxu0 0.0
    %1227 = vmatpush1.msra.mxu0 0.0
    %1228 = vmatprep.subr.mxu0 0.0
    %1229 = vmatpush1.msra.mxu0 %v976
    %1230 = vmatprep.subr.mxu0 0.0
    %1231 = vmatpush2.msra.mxu0 0.0
    %1232 = vmatprep.subr.mxu0 0.0
    %1233 = vmatpush2.msra.mxu0 0.0
    %1234 = vmatprep.subr.mxu0 0.0
    %1235 = vmatpush2.msra.mxu0 0.0
    %1236 = vmatprep.subr.mxu0 0.0
    %1237 = vmatpush2.msra.mxu0 0.0
    %1238 = vmatprep.subr.mxu0 0.0
    %1239 = vmatpush2.msra.mxu0 0.0
    %1240 = vmatprep.subr.mxu0 0.0
    %1241 = vmatpush2.msra.mxu0 0.0
    %1242 = vmatprep.subr.mxu0 0.0
    %1243 = vmatpush2.msra.mxu0 0.0
    %1244 = vmatprep.subr.mxu0 0.0
    %1245 = vmatpush2.msra.mxu0 0.0
    %1246 = vmatprep.subr.mxu0 0.0
    %1247 = vmatpush2.msra.mxu0 0.0
    %1248 = vmatprep.subr.mxu0 0.0
    %1249 = vmatpush2.msra.mxu0 0.0
    %1250 = vmatprep.subr.mxu0 0.0
    %1251 = vmatpush2.msra.mxu0 0.0
    %1252 = vmatprep.subr.mxu0 0.0
    %1253 = vmatpush2.msra.mxu0 0.0
    %1254 = vmatprep.subr.mxu0 0.0
    %1255 = vmatpush2.msra.mxu0 0.0
    %1256 = vmatprep.subr.mxu0 0.0
    %1257 = vmatpush2.msra.mxu0 0.0
    %1258 = vmatprep.subr.mxu0 0.0
    %1259 = vmatpush2.msra.mxu0 0.0
    %1260 = vmatprep.subr.mxu0 0.0
    %1261 = vmatpush2.msra.mxu0 0.0
    %1262 = vmatprep.mubr.f32.mxu0 0.0
    %1263 = vmatmul.mubr.f32.gmra.mxu0 %v1181
    %v1264 = vpop.f32.mrf.mxu0
    %v1265 = vadd.f32 %v1152, %v1264
    %v1266 = vpop.f32.mrf.mxu0
    %1267 = vmatprep.mubr.f32.mxu0 0.0
    %1268 = vmatmul.mubr.f32.gmra.mxu0 %v1184
    %v1269 = vpop.f32.mrf.mxu0
    %v1270 = vadd.f32 %v1157, %v1269
    %v1271 = vpop.f32.mrf.mxu0
    %1272 = vmatprep.mubr.f32.mxu0 0.0
    %1273 = vmatmul.mubr.f32.gmra.mxu0 %v1187
    %v1274 = vpop.f32.mrf.mxu0
    %v1275 = vadd.f32 %v1162, %v1274
    %v1276 = vpop.f32.mrf.mxu0
    %1277 = vmatprep.mubr.f32.mxu0 0.0
    %1278 = vmatmul.mubr.f32.gmra.mxu0 %v1190
    %v1279 = vpop.f32.mrf.mxu0
    %v1280 = vadd.f32 %v1167, %v1279
    %v1281 = vpop.f32.mrf.mxu0
    %1282 = vmatprep.mubr.f32.mxu0 0.0
    %1283 = vmatmul.mubr.f32.gmra.mxu0 %v1193
    %v1284 = vpop.f32.mrf.mxu0
    %v1285 = vadd.f32 %v1172, %v1284
    %v1286 = vpop.f32.mrf.mxu0
    %1287 = vmatprep.mubr.f32.mxu0 0.0
    %1288 = vmatmul.mubr.f32.gmra.mxu0 %v1196
    %v1289 = vpop.f32.mrf.mxu0
    %v1290 = vadd.f32 %v1177, %v1289
    %v1291 = vpop.f32.mrf.mxu0
    %1292 = vdwg.mxu0
    %1293 = vrot.lane.b32.xlu0 %v904, 64
    %v1294 = vpop.permute.xlu0 %1293
    %v1295 = vsel %vm905, %v1294, 0
    %1297 = vmatprep.subr.mxu0 0.0
    %1298 = vmatpush1.msra.mxu0 0.0
    %1299 = vmatprep.subr.mxu0 0.0
    %1300 = vmatpush1.msra.mxu0 0.0
    %1301 = vmatprep.subr.mxu0 0.0
    %1302 = vmatpush1.msra.mxu0 0.0
    %1303 = vmatprep.subr.mxu0 0.0
    %1304 = vmatpush1.msra.mxu0 0.0
    %1305 = vmatprep.subr.mxu0 0.0
    %1306 = vmatpush1.msra.mxu0 0.0
    %1307 = vmatprep.subr.mxu0 0.0
    %1308 = vmatpush1.msra.mxu0 0.0
    %1309 = vmatprep.subr.mxu0 0.0
    %1310 = vmatpush1.msra.mxu0 0.0
    %1311 = vmatprep.subr.mxu0 0.0
    %1312 = vmatpush1.msra.mxu0 0.0
    %1313 = vmatprep.subr.mxu0 0.0
    %1314 = vmatpush1.msra.mxu0 0.0
    %1315 = vmatprep.subr.mxu0 0.0
    %1316 = vmatpush1.msra.mxu0 0.0
    %1317 = vmatprep.subr.mxu0 0.0
    %1318 = vmatpush1.msra.mxu0 0.0
    %1319 = vmatprep.subr.mxu0 0.0
    %1320 = vmatpush1.msra.mxu0 0.0
    %1321 = vmatprep.subr.mxu0 0.0
    %1322 = vmatpush1.msra.mxu0 %v878
    %1323 = vmatprep.subr.mxu0 0.0
    %1324 = vmatpush1.msra.mxu0 %v877
    %1325 = vmatprep.subr.mxu0 0.0
    %1326 = vmatpush1.msra.mxu0 %v876
    %1327 = vmatprep.subr.mxu0 0.0
    %1328 = vmatpush1.msra.mxu0 %v875
    %1329 = vmatprep.subr.mxu0 0.0
    %1330 = vmatpush2.msra.mxu0 0.0
    %1331 = vmatprep.subr.mxu0 0.0
    %1332 = vmatpush2.msra.mxu0 0.0
    %1333 = vmatprep.subr.mxu0 0.0
    %1334 = vmatpush2.msra.mxu0 0.0
    %1335 = vmatprep.subr.mxu0 0.0
    %1336 = vmatpush2.msra.mxu0 0.0
    %1337 = vmatprep.subr.mxu0 0.0
    %1338 = vmatpush2.msra.mxu0 0.0
    %1339 = vmatprep.subr.mxu0 0.0
    %1340 = vmatpush2.msra.mxu0 0.0
    %1341 = vmatprep.subr.mxu0 0.0
    %1342 = vmatpush2.msra.mxu0 0.0
    %1343 = vmatprep.subr.mxu0 0.0
    %1344 = vmatpush2.msra.mxu0 0.0
    %1345 = vmatprep.subr.mxu0 0.0
    %1346 = vmatpush2.msra.mxu0 0.0
    %1347 = vmatprep.subr.mxu0 0.0
    %1348 = vmatpush2.msra.mxu0 0.0
    %1349 = vmatprep.subr.mxu0 0.0
    %1350 = vmatpush2.msra.mxu0 0.0
    %1351 = vmatprep.subr.mxu0 0.0
    %1352 = vmatpush2.msra.mxu0 0.0
    %1353 = vmatprep.subr.mxu0 0.0
    %1354 = vmatpush2.msra.mxu0 0.0
    %1355 = vmatprep.subr.mxu0 0.0
    %1356 = vmatpush2.msra.mxu0 0.0
    %1357 = vmatprep.subr.mxu0 0.0
    %1358 = vmatpush2.msra.mxu0 0.0
    %1359 = vmatprep.subr.mxu0 0.0
    %1360 = vmatpush2.msra.mxu0 0.0
    %1361 = vmatprep.mubr.f32.mxu0 0.0
    %1362 = vmatmul.mubr.f32.gmra.mxu0 %v1295
    %v1363 = vpop.f32.mrf.mxu0
    %v1364 = vadd.f32 0.0, %v1363
    %v1365 = vpop.f32.mrf.mxu0
    %1366 = vdwg.mxu0
    %s1367 = scalar_lea.vmem %s10, 96
    %v1368 = vld [vmem:[%s1367] sm:$0xff]
    %v1369 = vld [vmem:[%s1367 + $0x8] sm:$0xff]
    %v1370 = vld [vmem:[%s1367 + $0x10] sm:$0xff]
    %v1371 = vld [vmem:[%s1367 + $0x18] sm:$0xff]
    %v1372 = vld [vmem:[%s1367 + $0x20] sm:$0xff]
    %v1373 = vld [vmem:[%s1367 + $0x28] sm:$0xff]
    %v1375 = vsel %vm1066, %v1368, 0
    %v1378 = vsel %vm1066, %v1369, 0
    %v1381 = vsel %vm1066, %v1370, 0
    %v1384 = vsel %vm1066, %v1371, 0
    %v1387 = vsel %vm1066, %v1372, 0
    %v1390 = vsel %vm1066, %v1373, 0
    %1392 = vmatprep.subr.mxu0 0.0
    %1393 = vmatpush1.msra.mxu0 0.0
    %1394 = vmatprep.subr.mxu0 0.0
    %1395 = vmatpush1.msra.mxu0 0.0
    %1396 = vmatprep.subr.mxu0 0.0
    %1397 = vmatpush1.msra.mxu0 0.0
    %1398 = vmatprep.subr.mxu0 0.0
    %1399 = vmatpush1.msra.mxu0 0.0
    %1400 = vmatprep.subr.mxu0 0.0
    %1401 = vmatpush1.msra.mxu0 0.0
    %1402 = vmatprep.subr.mxu0 0.0
    %1403 = vmatpush1.msra.mxu0 0.0
    %1404 = vmatprep.subr.mxu0 0.0
    %1405 = vmatpush1.msra.mxu0 0.0
    %1406 = vmatprep.subr.mxu0 0.0
    %1407 = vmatpush1.msra.mxu0 0.0
    %1408 = vmatprep.subr.mxu0 0.0
    %1409 = vmatpush1.msra.mxu0 0.0
    %1410 = vmatprep.subr.mxu0 0.0
    %1411 = vmatpush1.msra.mxu0 0.0
    %1412 = vmatprep.subr.mxu0 0.0
    %1413 = vmatpush1.msra.mxu0 0.0
    %1414 = vmatprep.subr.mxu0 0.0
    %1415 = vmatpush1.msra.mxu0 0.0
    %1416 = vmatprep.subr.mxu0 0.0
    %1417 = vmatpush1.msra.mxu0 0.0
    %1418 = vmatprep.subr.mxu0 0.0
    %1419 = vmatpush1.msra.mxu0 0.0
    %1420 = vmatprep.subr.mxu0 0.0
    %1421 = vmatpush1.msra.mxu0 0.0
    %1422 = vmatprep.subr.mxu0 0.0
    %1423 = vmatpush1.msra.mxu0 %v1364
    %1424 = vmatprep.subr.mxu0 0.0
    %1425 = vmatpush2.msra.mxu0 0.0
    %1426 = vmatprep.subr.mxu0 0.0
    %1427 = vmatpush2.msra.mxu0 0.0
    %1428 = vmatprep.subr.mxu0 0.0
    %1429 = vmatpush2.msra.mxu0 0.0
    %1430 = vmatprep.subr.mxu0 0.0
    %1431 = vmatpush2.msra.mxu0 0.0
    %1432 = vmatprep.subr.mxu0 0.0
    %1433 = vmatpush2.msra.mxu0 0.0
    %1434 = vmatprep.subr.mxu0 0.0
    %1435 = vmatpush2.msra.mxu0 0.0
    %1436 = vmatprep.subr.mxu0 0.0
    %1437 = vmatpush2.msra.mxu0 0.0
    %1438 = vmatprep.subr.mxu0 0.0
    %1439 = vmatpush2.msra.mxu0 0.0
    %1440 = vmatprep.subr.mxu0 0.0
    %1441 = vmatpush2.msra.mxu0 0.0
    %1442 = vmatprep.subr.mxu0 0.0
    %1443 = vmatpush2.msra.mxu0 0.0
    %1444 = vmatprep.subr.mxu0 0.0
    %1445 = vmatpush2.msra.mxu0 0.0
    %1446 = vmatprep.subr.mxu0 0.0
    %1447 = vmatpush2.msra.mxu0 0.0
    %1448 = vmatprep.subr.mxu0 0.0
    %1449 = vmatpush2.msra.mxu0 0.0
    %1450 = vmatprep.subr.mxu0 0.0
    %1451 = vmatpush2.msra.mxu0 0.0
    %1452 = vmatprep.subr.mxu0 0.0
    %1453 = vmatpush2.msra.mxu0 0.0
    %1454 = vmatprep.subr.mxu0 0.0
    %1455 = vmatpush2.msra.mxu0 0.0
    %1456 = vmatprep.mubr.f32.mxu0 0.0
    %1457 = vmatmul.mubr.f32.gmra.mxu0 %v1375
    %v1458 = vpop.f32.mrf.mxu0
    %v1459 = vadd.f32 0.0, %v1458
    %v1460 = vpop.f32.mrf.mxu0
    %1461 = vmatprep.mubr.f32.mxu0 0.0
    %1462 = vmatmul.mubr.f32.gmra.mxu0 %v1378
    %v1463 = vpop.f32.mrf.mxu0
    %v1464 = vadd.f32 0.0, %v1463
    %v1465 = vpop.f32.mrf.mxu0
    %1466 = vmatprep.mubr.f32.mxu0 0.0
    %1467 = vmatmul.mubr.f32.gmra.mxu0 %v1381
    %v1468 = vpop.f32.mrf.mxu0
    %v1469 = vadd.f32 0.0, %v1468
    %v1470 = vpop.f32.mrf.mxu0
    %1471 = vmatprep.mubr.f32.mxu0 0.0
    %1472 = vmatmul.mubr.f32.gmra.mxu0 %v1384
    %v1473 = vpop.f32.mrf.mxu0
    %v1474 = vadd.f32 0.0, %v1473
    %v1475 = vpop.f32.mrf.mxu0
    %1476 = vmatprep.mubr.f32.mxu0 0.0
    %1477 = vmatmul.mubr.f32.gmra.mxu0 %v1387
    %v1478 = vpop.f32.mrf.mxu0
    %v1479 = vadd.f32 0.0, %v1478
    %v1480 = vpop.f32.mrf.mxu0
    %1481 = vmatprep.mubr.f32.mxu0 0.0
    %1482 = vmatmul.mubr.f32.gmra.mxu0 %v1390
    %v1483 = vpop.f32.mrf.mxu0
    %v1484 = vadd.f32 0.0, %v1483
    %v1485 = vpop.f32.mrf.mxu0
    %1486 = vdwg.mxu0
    %v1487 = vadd.f32 %v1265, %v1459
    %v1488 = vadd.f32 %v1270, %v1464
    %v1489 = vadd.f32 %v1275, %v1469
    %v1490 = vadd.f32 %v1280, %v1474
    %v1491 = vadd.f32 %v1285, %v1479
    %v1492 = vadd.f32 %v1290, %v1484
    %1493 = vrot.lane.b32.xlu0 %v904, 32
    %v1494 = vpop.permute.xlu0 %1493
    %v1495 = vsel %vm905, %v1494, 0
    %1497 = vmatprep.subr.mxu0 0.0
    %1498 = vmatpush1.msra.mxu0 0.0
    %1499 = vmatprep.subr.mxu0 0.0
    %1500 = vmatpush1.msra.mxu0 0.0
    %1501 = vmatprep.subr.mxu0 0.0
    %1502 = vmatpush1.msra.mxu0 0.0
    %1503 = vmatprep.subr.mxu0 0.0
    %1504 = vmatpush1.msra.mxu0 0.0
    %1505 = vmatprep.subr.mxu0 0.0
    %1506 = vmatpush1.msra.mxu0 0.0
    %1507 = vmatprep.subr.mxu0 0.0
    %1508 = vmatpush1.msra.mxu0 0.0
    %1509 = vmatprep.subr.mxu0 0.0
    %1510 = vmatpush1.msra.mxu0 0.0
    %1511 = vmatprep.subr.mxu0 0.0
    %1512 = vmatpush1.msra.mxu0 0.0
    %1513 = vmatprep.subr.mxu0 0.0
    %1514 = vmatpush1.msra.mxu0 0.0
    %1515 = vmatprep.subr.mxu0 0.0
    %1516 = vmatpush1.msra.mxu0 0.0
    %1517 = vmatprep.subr.mxu0 0.0
    %1518 = vmatpush1.msra.mxu0 0.0
    %1519 = vmatprep.subr.mxu0 0.0
    %1520 = vmatpush1.msra.mxu0 0.0
    %1521 = vmatprep.subr.mxu0 0.0
    %1522 = vmatpush1.msra.mxu0 %v878
    %1523 = vmatprep.subr.mxu0 0.0
    %1524 = vmatpush1.msra.mxu0 %v877
    %1525 = vmatprep.subr.mxu0 0.0
    %1526 = vmatpush1.msra.mxu0 %v876
    %1527 = vmatprep.subr.mxu0 0.0
    %1528 = vmatpush1.msra.mxu0 %v875
    %1529 = vmatprep.subr.mxu0 0.0
    %1530 = vmatpush2.msra.mxu0 0.0
    %1531 = vmatprep.subr.mxu0 0.0
    %1532 = vmatpush2.msra.mxu0 0.0
    %1533 = vmatprep.subr.mxu0 0.0
    %1534 = vmatpush2.msra.mxu0 0.0
    %1535 = vmatprep.subr.mxu0 0.0
    %1536 = vmatpush2.msra.mxu0 0.0
    %1537 = vmatprep.subr.mxu0 0.0
    %1538 = vmatpush2.msra.mxu0 0.0
    %1539 = vmatprep.subr.mxu0 0.0
    %1540 = vmatpush2.msra.mxu0 0.0
    %1541 = vmatprep.subr.mxu0 0.0
    %1542 = vmatpush2.msra.mxu0 0.0
    %1543 = vmatprep.subr.mxu0 0.0
    %1544 = vmatpush2.msra.mxu0 0.0
    %1545 = vmatprep.subr.mxu0 0.0
    %1546 = vmatpush2.msra.mxu0 0.0
    %1547 = vmatprep.subr.mxu0 0.0
    %1548 = vmatpush2.msra.mxu0 0.0
    %1549 = vmatprep.subr.mxu0 0.0
    %1550 = vmatpush2.msra.mxu0 0.0
    %1551 = vmatprep.subr.mxu0 0.0
    %1552 = vmatpush2.msra.mxu0 0.0
    %1553 = vmatprep.subr.mxu0 0.0
    %1554 = vmatpush2.msra.mxu0 0.0
    %1555 = vmatprep.subr.mxu0 0.0
    %1556 = vmatpush2.msra.mxu0 0.0
    %1557 = vmatprep.subr.mxu0 0.0
    %1558 = vmatpush2.msra.mxu0 0.0
    %1559 = vmatprep.subr.mxu0 0.0
    %1560 = vmatpush2.msra.mxu0 0.0
    %1561 = vmatprep.mubr.f32.mxu0 0.0
    %1562 = vmatmul.mubr.f32.gmra.mxu0 %v1495
    %v1563 = vpop.f32.mrf.mxu0
    %v1564 = vadd.f32 0.0, %v1563
    %v1565 = vpop.f32.mrf.mxu0
    %1566 = vdwg.mxu0
    %s1567 = scalar_lea.vmem %s10, 144
    %v1568 = vld [vmem:[%s1567] sm:$0xff]
    %v1569 = vld [vmem:[%s1567 + $0x8] sm:$0xff]
    %v1570 = vld [vmem:[%s1567 + $0x10] sm:$0xff]
    %v1571 = vld [vmem:[%s1567 + $0x18] sm:$0xff]
    %v1572 = vld [vmem:[%s1567 + $0x20] sm:$0xff]
    %v1573 = vld [vmem:[%s1567 + $0x28] sm:$0xff]
    %v1575 = vsel %vm1066, %v1568, 0
    %v1578 = vsel %vm1066, %v1569, 0
    %v1581 = vsel %vm1066, %v1570, 0
    %v1584 = vsel %vm1066, %v1571, 0
    %v1587 = vsel %vm1066, %v1572, 0
    %v1590 = vsel %vm1066, %v1573, 0
    %1592 = vmatprep.subr.mxu0 0.0
    %1593 = vmatpush1.msra.mxu0 0.0
    %1594 = vmatprep.subr.mxu0 0.0
    %1595 = vmatpush1.msra.mxu0 0.0
    %1596 = vmatprep.subr.mxu0 0.0
    %1597 = vmatpush1.msra.mxu0 0.0
    %1598 = vmatprep.subr.mxu0 0.0
    %1599 = vmatpush1.msra.mxu0 0.0
    %1600 = vmatprep.subr.mxu0 0.0
    %1601 = vmatpush1.msra.mxu0 0.0
    %1602 = vmatprep.subr.mxu0 0.0
    %1603 = vmatpush1.msra.mxu0 0.0
    %1604 = vmatprep.subr.mxu0 0.0
    %1605 = vmatpush1.msra.mxu0 0.0
    %1606 = vmatprep.subr.mxu0 0.0
    %1607 = vmatpush1.msra.mxu0 0.0
    %1608 = vmatprep.subr.mxu0 0.0
    %1609 = vmatpush1.msra.mxu0 0.0
    %1610 = vmatprep.subr.mxu0 0.0
    %1611 = vmatpush1.msra.mxu0 0.0
    %1612 = vmatprep.subr.mxu0 0.0
    %1613 = vmatpush1.msra.mxu0 0.0
    %1614 = vmatprep.subr.mxu0 0.0
    %1615 = vmatpush1.msra.mxu0 0.0
    %1616 = vmatprep.subr.mxu0 0.0
    %1617 = vmatpush1.msra.mxu0 0.0
    %1618 = vmatprep.subr.mxu0 0.0
    %1619 = vmatpush1.msra.mxu0 0.0
    %1620 = vmatprep.subr.mxu0 0.0
    %1621 = vmatpush1.msra.mxu0 0.0
    %1622 = vmatprep.subr.mxu0 0.0
    %1623 = vmatpush1.msra.mxu0 %v1564
    %1624 = vmatprep.subr.mxu0 0.0
    %1625 = vmatpush2.msra.mxu0 0.0
    %1626 = vmatprep.subr.mxu0 0.0
    %1627 = vmatpush2.msra.mxu0 0.0
    %1628 = vmatprep.subr.mxu0 0.0
    %1629 = vmatpush2.msra.mxu0 0.0
    %1630 = vmatprep.subr.mxu0 0.0
    %1631 = vmatpush2.msra.mxu0 0.0
    %1632 = vmatprep.subr.mxu0 0.0
    %1633 = vmatpush2.msra.mxu0 0.0
    %1634 = vmatprep.subr.mxu0 0.0
    %1635 = vmatpush2.msra.mxu0 0.0
    %1636 = vmatprep.subr.mxu0 0.0
    %1637 = vmatpush2.msra.mxu0 0.0
    %1638 = vmatprep.subr.mxu0 0.0
    %1639 = vmatpush2.msra.mxu0 0.0
    %1640 = vmatprep.subr.mxu0 0.0
    %1641 = vmatpush2.msra.mxu0 0.0
    %1642 = vmatprep.subr.mxu0 0.0
    %1643 = vmatpush2.msra.mxu0 0.0
    %1644 = vmatprep.subr.mxu0 0.0
    %1645 = vmatpush2.msra.mxu0 0.0
    %1646 = vmatprep.subr.mxu0 0.0
    %1647 = vmatpush2.msra.mxu0 0.0
    %1648 = vmatprep.subr.mxu0 0.0
    %1649 = vmatpush2.msra.mxu0 0.0
    %1650 = vmatprep.subr.mxu0 0.0
    %1651 = vmatpush2.msra.mxu0 0.0
    %1652 = vmatprep.subr.mxu0 0.0
    %1653 = vmatpush2.msra.mxu0 0.0
    %1654 = vmatprep.subr.mxu0 0.0
    %1655 = vmatpush2.msra.mxu0 0.0
    %1656 = vmatprep.mubr.f32.mxu0 0.0
    %1657 = vmatmul.mubr.f32.gmra.mxu0 %v1575
    %v1658 = vpop.f32.mrf.mxu0
    %v1659 = vadd.f32 0.0, %v1658
    %v1660 = vpop.f32.mrf.mxu0
    %1661 = vmatprep.mubr.f32.mxu0 0.0
    %1662 = vmatmul.mubr.f32.gmra.mxu0 %v1578
    %v1663 = vpop.f32.mrf.mxu0
    %v1664 = vadd.f32 0.0, %v1663
    %v1665 = vpop.f32.mrf.mxu0
    %1666 = vmatprep.mubr.f32.mxu0 0.0
    %1667 = vmatmul.mubr.f32.gmra.mxu0 %v1581
    %v1668 = vpop.f32.mrf.mxu0
    %v1669 = vadd.f32 0.0, %v1668
    %v1670 = vpop.f32.mrf.mxu0
    %1671 = vmatprep.mubr.f32.mxu0 0.0
    %1672 = vmatmul.mubr.f32.gmra.mxu0 %v1584
    %v1673 = vpop.f32.mrf.mxu0
    %v1674 = vadd.f32 0.0, %v1673
    %v1675 = vpop.f32.mrf.mxu0
    %1676 = vmatprep.mubr.f32.mxu0 0.0
    %1677 = vmatmul.mubr.f32.gmra.mxu0 %v1587
    %v1678 = vpop.f32.mrf.mxu0
    %v1679 = vadd.f32 0.0, %v1678
    %v1680 = vpop.f32.mrf.mxu0
    %1681 = vmatprep.mubr.f32.mxu0 0.0
    %1682 = vmatmul.mubr.f32.gmra.mxu0 %v1590
    %v1683 = vpop.f32.mrf.mxu0
    %v1684 = vadd.f32 0.0, %v1683
    %v1685 = vpop.f32.mrf.mxu0
    %1686 = vdwg.mxu0
    %v1687 = vadd.f32 %v1487, %v1659
    %v1688 = vadd.f32 %v1488, %v1664
    %v1689 = vadd.f32 %v1489, %v1669
    %v1690 = vadd.f32 %v1490, %v1674
    %v1691 = vadd.f32 %v1491, %v1679
    %v1692 = vadd.f32 %v1492, %v1684
    %vm1693 = vcmask 392192
    %1694 = vst.msk [vmem:[#allocation2] sm:$0xff] %vm1693, %v1687
    %1695 = vst.msk [vmem:[#allocation2 + $0x8] sm:$0xff] %vm1693, %v1688
    %1696 = vst.msk [vmem:[#allocation2 + $0x10] sm:$0xff] %vm1693, %v1689
    %1697 = vst.msk [vmem:[#allocation2 + $0x18] sm:$0xff] %vm1693, %v1690
    %1698 = vst.msk [vmem:[#allocation2 + $0x20] sm:$0xff] %vm1693, %v1691
    %1699 = vst.msk [vmem:[#allocation2 + $0x28] sm:$0xff] %vm1693, %v1692
    %v1700 = vrot.slane %v874, 1
    %s1701 = vtos %v1700
    %v1702 = vstv %s1701
    %v1704 = vmul.f32 %v870, %v1702
    %1705 = vrot.lane.b32.xlu0 %v1700, 127
    %v1706 = vpop.permute.xlu0 %1705
    %s1707 = vtos %v1706
    %v1708 = vstv %s1707
    %v1710 = vmul.f32 %v871, %v1708
    %v1711 = vadd.f32 %v1704, %v1710
    %1712 = vrot.lane.b32.xlu0 %v1700, 126
    %v1713 = vpop.permute.xlu0 %1712
    %s1714 = vtos %v1713
    %v1715 = vstv %s1714
    %v1717 = vmul.f32 %v872, %v1715
    %v1718 = vadd.f32 %v1711, %v1717
    %1719 = vrot.lane.b32.xlu0 %v1700, 125
    %v1720 = vpop.permute.xlu0 %1719
    %s1721 = vtos %v1720
    %v1722 = vstv %s1721
    %v1724 = vmul.f32 %v873, %v1722
    %v1725 = vadd.f32 %v1718, %v1724
    %v1727 = vsel %vm905, %v1725, 0
    %1729 = vmatprep.subr.mxu0 0.0
    %1730 = vmatpush1.msra.mxu0 0.0
    %1731 = vmatprep.subr.mxu0 0.0
    %1732 = vmatpush1.msra.mxu0 0.0
    %1733 = vmatprep.subr.mxu0 0.0
    %1734 = vmatpush1.msra.mxu0 0.0
    %1735 = vmatprep.subr.mxu0 0.0
    %1736 = vmatpush1.msra.mxu0 0.0
    %1737 = vmatprep.subr.mxu0 0.0
    %1738 = vmatpush1.msra.mxu0 0.0
    %1739 = vmatprep.subr.mxu0 0.0
    %1740 = vmatpush1.msra.mxu0 0.0
    %1741 = vmatprep.subr.mxu0 0.0
    %1742 = vmatpush1.msra.mxu0 0.0
    %1743 = vmatprep.subr.mxu0 0.0
    %1744 = vmatpush1.msra.mxu0 0.0
    %1745 = vmatprep.subr.mxu0 0.0
    %1746 = vmatpush1.msra.mxu0 0.0
    %1747 = vmatprep.subr.mxu0 0.0
    %1748 = vmatpush1.msra.mxu0 0.0
    %1749 = vmatprep.subr.mxu0 0.0
    %1750 = vmatpush1.msra.mxu0 0.0
    %1751 = vmatprep.subr.mxu0 0.0
    %1752 = vmatpush1.msra.mxu0 0.0
    %1753 = vmatprep.subr.mxu0 0.0
    %1754 = vmatpush1.msra.mxu0 %v878
    %1755 = vmatprep.subr.mxu0 0.0
    %1756 = vmatpush1.msra.mxu0 %v877
    %1757 = vmatprep.subr.mxu0 0.0
    %1758 = vmatpush1.msra.mxu0 %v876
    %1759 = vmatprep.subr.mxu0 0.0
    %1760 = vmatpush1.msra.mxu0 %v875
    %1761 = vmatprep.subr.mxu0 0.0
    %1762 = vmatpush2.msra.mxu0 0.0
    %1763 = vmatprep.subr.mxu0 0.0
    %1764 = vmatpush2.msra.mxu0 0.0
    %1765 = vmatprep.subr.mxu0 0.0
    %1766 = vmatpush2.msra.mxu0 0.0
    %1767 = vmatprep.subr.mxu0 0.0
    %1768 = vmatpush2.msra.mxu0 0.0
    %1769 = vmatprep.subr.mxu0 0.0
    %1770 = vmatpush2.msra.mxu0 0.0
    %1771 = vmatprep.subr.mxu0 0.0
    %1772 = vmatpush2.msra.mxu0 0.0
    %1773 = vmatprep.subr.mxu0 0.0
    %1774 = vmatpush2.msra.mxu0 0.0
    %1775 = vmatprep.subr.mxu0 0.0
    %1776 = vmatpush2.msra.mxu0 0.0
    %1777 = vmatprep.subr.mxu0 0.0
    %1778 = vmatpush2.msra.mxu0 0.0
    %1779 = vmatprep.subr.mxu0 0.0
    %1780 = vmatpush2.msra.mxu0 0.0
    %1781 = vmatprep.subr.mxu0 0.0
    %1782 = vmatpush2.msra.mxu0 0.0
    %1783 = vmatprep.subr.mxu0 0.0
    %1784 = vmatpush2.msra.mxu0 0.0
    %1785 = vmatprep.subr.mxu0 0.0
    %1786 = vmatpush2.msra.mxu0 0.0
    %1787 = vmatprep.subr.mxu0 0.0
    %1788 = vmatpush2.msra.mxu0 0.0
    %1789 = vmatprep.subr.mxu0 0.0
    %1790 = vmatpush2.msra.mxu0 0.0
    %1791 = vmatprep.subr.mxu0 0.0
    %1792 = vmatpush2.msra.mxu0 0.0
    %1793 = vmatprep.mubr.f32.mxu0 0.0
    %1794 = vmatmul.mubr.f32.gmra.mxu0 %v1727
    %v1795 = vpop.f32.mrf.mxu0
    %v1796 = vadd.f32 0.0, %v1795
    %v1797 = vpop.f32.mrf.mxu0
    %1798 = vdwg.mxu0
    %v1799 = vld [vmem:[%s10] sm:$0xff]
    %v1800 = vld [vmem:[%s10 + $0x8] sm:$0xff]
    %v1801 = vld [vmem:[%s10 + $0x10] sm:$0xff]
    %v1802 = vld [vmem:[%s10 + $0x18] sm:$0xff]
    %v1803 = vld [vmem:[%s10 + $0x20] sm:$0xff]
    %v1804 = vld [vmem:[%s10 + $0x28] sm:$0xff]
    %1805 = vrot.lane.b32.xlu0 %v1725, 96
    %v1806 = vpop.permute.xlu0 %1805
    %v1807 = vsel %vm905, %v1806, 0
    %1809 = vmatprep.subr.mxu0 0.0
    %1810 = vmatpush1.msra.mxu0 0.0
    %1811 = vmatprep.subr.mxu0 0.0
    %1812 = vmatpush1.msra.mxu0 0.0
    %1813 = vmatprep.subr.mxu0 0.0
    %1814 = vmatpush1.msra.mxu0 0.0
    %1815 = vmatprep.subr.mxu0 0.0
    %1816 = vmatpush1.msra.mxu0 0.0
    %1817 = vmatprep.subr.mxu0 0.0
    %1818 = vmatpush1.msra.mxu0 0.0
    %1819 = vmatprep.subr.mxu0 0.0
    %1820 = vmatpush1.msra.mxu0 0.0
    %1821 = vmatprep.subr.mxu0 0.0
    %1822 = vmatpush1.msra.mxu0 0.0
    %1823 = vmatprep.subr.mxu0 0.0
    %1824 = vmatpush1.msra.mxu0 0.0
    %1825 = vmatprep.subr.mxu0 0.0
    %1826 = vmatpush1.msra.mxu0 0.0
    %1827 = vmatprep.subr.mxu0 0.0
    %1828 = vmatpush1.msra.mxu0 0.0
    %1829 = vmatprep.subr.mxu0 0.0
    %1830 = vmatpush1.msra.mxu0 0.0
    %1831 = vmatprep.subr.mxu0 0.0
    %1832 = vmatpush1.msra.mxu0 0.0
    %1833 = vmatprep.subr.mxu0 0.0
    %1834 = vmatpush1.msra.mxu0 %v878
    %1835 = vmatprep.subr.mxu0 0.0
    %1836 = vmatpush1.msra.mxu0 %v877
    %1837 = vmatprep.subr.mxu0 0.0
    %1838 = vmatpush1.msra.mxu0 %v876
    %1839 = vmatprep.subr.mxu0 0.0
    %1840 = vmatpush1.msra.mxu0 %v875
    %1841 = vmatprep.subr.mxu0 0.0
    %1842 = vmatpush2.msra.mxu0 0.0
    %1843 = vmatprep.subr.mxu0 0.0
    %1844 = vmatpush2.msra.mxu0 0.0
    %1845 = vmatprep.subr.mxu0 0.0
    %1846 = vmatpush2.msra.mxu0 0.0
    %1847 = vmatprep.subr.mxu0 0.0
    %1848 = vmatpush2.msra.mxu0 0.0
    %1849 = vmatprep.subr.mxu0 0.0
    %1850 = vmatpush2.msra.mxu0 0.0
    %1851 = vmatprep.subr.mxu0 0.0
    %1852 = vmatpush2.msra.mxu0 0.0
    %1853 = vmatprep.subr.mxu0 0.0
    %1854 = vmatpush2.msra.mxu0 0.0
    %1855 = vmatprep.subr.mxu0 0.0
    %1856 = vmatpush2.msra.mxu0 0.0
    %1857 = vmatprep.subr.mxu0 0.0
    %1858 = vmatpush2.msra.mxu0 0.0
    %1859 = vmatprep.subr.mxu0 0.0
    %1860 = vmatpush2.msra.mxu0 0.0
    %1861 = vmatprep.subr.mxu0 0.0
    %1862 = vmatpush2.msra.mxu0 0.0
    %1863 = vmatprep.subr.mxu0 0.0
    %1864 = vmatpush2.msra.mxu0 0.0
    %1865 = vmatprep.subr.mxu0 0.0
    %1866 = vmatpush2.msra.mxu0 0.0
    %1867 = vmatprep.subr.mxu0 0.0
    %1868 = vmatpush2.msra.mxu0 0.0
    %1869 = vmatprep.subr.mxu0 0.0
    %1870 = vmatpush2.msra.mxu0 0.0
    %1871 = vmatprep.subr.mxu0 0.0
    %1872 = vmatpush2.msra.mxu0 0.0
    %1873 = vmatprep.mubr.f32.mxu0 0.0
    %1874 = vmatmul.mubr.f32.gmra.mxu0 %v1807
    %v1875 = vpop.f32.mrf.mxu0
    %v1876 = vadd.f32 0.0, %v1875
    %v1877 = vpop.f32.mrf.mxu0
    %1878 = vdwg.mxu0
    %v1879 = vld [vmem:[%s1059] sm:$0xff]
    %v1880 = vld [vmem:[%s1059 + $0x8] sm:$0xff]
    %v1881 = vld [vmem:[%s1059 + $0x10] sm:$0xff]
    %v1882 = vld [vmem:[%s1059 + $0x18] sm:$0xff]
    %v1883 = vld [vmem:[%s1059 + $0x20] sm:$0xff]
    %v1884 = vld [vmem:[%s1059 + $0x28] sm:$0xff]
    %v1886 = vsel %vm1066, %v1879, 0
    %v1889 = vsel %vm1066, %v1880, 0
    %v1892 = vsel %vm1066, %v1881, 0
    %v1895 = vsel %vm1066, %v1882, 0
    %v1898 = vsel %vm1066, %v1883, 0
    %v1901 = vsel %vm1066, %v1884, 0
    %1903 = vmatprep.subr.mxu0 0.0
    %1904 = vmatpush1.msra.mxu0 0.0
    %1905 = vmatprep.subr.mxu0 0.0
    %1906 = vmatpush1.msra.mxu0 0.0
    %1907 = vmatprep.subr.mxu0 0.0
    %1908 = vmatpush1.msra.mxu0 0.0
    %1909 = vmatprep.subr.mxu0 0.0
    %1910 = vmatpush1.msra.mxu0 0.0
    %1911 = vmatprep.subr.mxu0 0.0
    %1912 = vmatpush1.msra.mxu0 0.0
    %1913 = vmatprep.subr.mxu0 0.0
    %1914 = vmatpush1.msra.mxu0 0.0
    %1915 = vmatprep.subr.mxu0 0.0
    %1916 = vmatpush1.msra.mxu0 0.0
    %1917 = vmatprep.subr.mxu0 0.0
    %1918 = vmatpush1.msra.mxu0 0.0
    %1919 = vmatprep.subr.mxu0 0.0
    %1920 = vmatpush1.msra.mxu0 0.0
    %1921 = vmatprep.subr.mxu0 0.0
    %1922 = vmatpush1.msra.mxu0 0.0
    %1923 = vmatprep.subr.mxu0 0.0
    %1924 = vmatpush1.msra.mxu0 0.0
    %1925 = vmatprep.subr.mxu0 0.0
    %1926 = vmatpush1.msra.mxu0 0.0
    %1927 = vmatprep.subr.mxu0 0.0
    %1928 = vmatpush1.msra.mxu0 0.0
    %1929 = vmatprep.subr.mxu0 0.0
    %1930 = vmatpush1.msra.mxu0 0.0
    %1931 = vmatprep.subr.mxu0 0.0
    %1932 = vmatpush1.msra.mxu0 0.0
    %1933 = vmatprep.subr.mxu0 0.0
    %1934 = vmatpush1.msra.mxu0 %v1876
    %1935 = vmatprep.subr.mxu0 0.0
    %1936 = vmatpush2.msra.mxu0 0.0
    %1937 = vmatprep.subr.mxu0 0.0
    %1938 = vmatpush2.msra.mxu0 0.0
    %1939 = vmatprep.subr.mxu0 0.0
    %1940 = vmatpush2.msra.mxu0 0.0
    %1941 = vmatprep.subr.mxu0 0.0
    %1942 = vmatpush2.msra.mxu0 0.0
    %1943 = vmatprep.subr.mxu0 0.0
    %1944 = vmatpush2.msra.mxu0 0.0
    %1945 = vmatprep.subr.mxu0 0.0
    %1946 = vmatpush2.msra.mxu0 0.0
    %1947 = vmatprep.subr.mxu0 0.0
    %1948 = vmatpush2.msra.mxu0 0.0
    %1949 = vmatprep.subr.mxu0 0.0
    %1950 = vmatpush2.msra.mxu0 0.0
    %1951 = vmatprep.subr.mxu0 0.0
    %1952 = vmatpush2.msra.mxu0 0.0
    %1953 = vmatprep.subr.mxu0 0.0
    %1954 = vmatpush2.msra.mxu0 0.0
    %1955 = vmatprep.subr.mxu0 0.0
    %1956 = vmatpush2.msra.mxu0 0.0
    %1957 = vmatprep.subr.mxu0 0.0
    %1958 = vmatpush2.msra.mxu0 0.0
    %1959 = vmatprep.subr.mxu0 0.0
    %1960 = vmatpush2.msra.mxu0 0.0
    %1961 = vmatprep.subr.mxu0 0.0
    %1962 = vmatpush2.msra.mxu0 0.0
    %1963 = vmatprep.subr.mxu0 0.0
    %1964 = vmatpush2.msra.mxu0 0.0
    %1965 = vmatprep.subr.mxu0 0.0
    %1966 = vmatpush2.msra.mxu0 0.0
    %1967 = vmatprep.mubr.f32.mxu0 0.0
    %1968 = vmatmul.mubr.f32.gmra.mxu0 %v1886
    %v1969 = vpop.f32.mrf.mxu0
    %v1970 = vadd.f32 0.0, %v1969
    %v1971 = vpop.f32.mrf.mxu0
    %1972 = vmatprep.mubr.f32.mxu0 0.0
    %1973 = vmatmul.mubr.f32.gmra.mxu0 %v1889
    %v1974 = vpop.f32.mrf.mxu0
    %v1975 = vadd.f32 0.0, %v1974
    %v1976 = vpop.f32.mrf.mxu0
    %1977 = vmatprep.mubr.f32.mxu0 0.0
    %1978 = vmatmul.mubr.f32.gmra.mxu0 %v1892
    %v1979 = vpop.f32.mrf.mxu0
    %v1980 = vadd.f32 0.0, %v1979
    %v1981 = vpop.f32.mrf.mxu0
    %1982 = vmatprep.mubr.f32.mxu0 0.0
    %1983 = vmatmul.mubr.f32.gmra.mxu0 %v1895
    %v1984 = vpop.f32.mrf.mxu0
    %v1985 = vadd.f32 0.0, %v1984
    %v1986 = vpop.f32.mrf.mxu0
    %1987 = vmatprep.mubr.f32.mxu0 0.0
    %1988 = vmatmul.mubr.f32.gmra.mxu0 %v1898
    %v1989 = vpop.f32.mrf.mxu0
    %v1990 = vadd.f32 0.0, %v1989
    %v1991 = vpop.f32.mrf.mxu0
    %1992 = vmatprep.mubr.f32.mxu0 0.0
    %1993 = vmatmul.mubr.f32.gmra.mxu0 %v1901
    %v1994 = vpop.f32.mrf.mxu0
    %v1995 = vadd.f32 0.0, %v1994
    %v1996 = vpop.f32.mrf.mxu0
    %1997 = vdwg.mxu0
    %v1999 = vsel %vm1066, %v1799, 0
    %v2002 = vsel %vm1066, %v1800, 0
    %v2005 = vsel %vm1066, %v1801, 0
    %v2008 = vsel %vm1066, %v1802, 0
    %v2011 = vsel %vm1066, %v1803, 0
    %v2014 = vsel %vm1066, %v1804, 0
    %2016 = vmatprep.subr.mxu0 0.0
    %2017 = vmatpush1.msra.mxu0 0.0
    %2018 = vmatprep.subr.mxu0 0.0
    %2019 = vmatpush1.msra.mxu0 0.0
    %2020 = vmatprep.subr.mxu0 0.0
    %2021 = vmatpush1.msra.mxu0 0.0
    %2022 = vmatprep.subr.mxu0 0.0
    %2023 = vmatpush1.msra.mxu0 0.0
    %2024 = vmatprep.subr.mxu0 0.0
    %2025 = vmatpush1.msra.mxu0 0.0
    %2026 = vmatprep.subr.mxu0 0.0
    %2027 = vmatpush1.msra.mxu0 0.0
    %2028 = vmatprep.subr.mxu0 0.0
    %2029 = vmatpush1.msra.mxu0 0.0
    %2030 = vmatprep.subr.mxu0 0.0
    %2031 = vmatpush1.msra.mxu0 0.0
    %2032 = vmatprep.subr.mxu0 0.0
    %2033 = vmatpush1.msra.mxu0 0.0
    %2034 = vmatprep.subr.mxu0 0.0
    %2035 = vmatpush1.msra.mxu0 0.0
    %2036 = vmatprep.subr.mxu0 0.0
    %2037 = vmatpush1.msra.mxu0 0.0
    %2038 = vmatprep.subr.mxu0 0.0
    %2039 = vmatpush1.msra.mxu0 0.0
    %2040 = vmatprep.subr.mxu0 0.0
    %2041 = vmatpush1.msra.mxu0 0.0
    %2042 = vmatprep.subr.mxu0 0.0
    %2043 = vmatpush1.msra.mxu0 0.0
    %2044 = vmatprep.subr.mxu0 0.0
    %2045 = vmatpush1.msra.mxu0 0.0
    %2046 = vmatprep.subr.mxu0 0.0
    %2047 = vmatpush1.msra.mxu0 %v1796
    %2048 = vmatprep.subr.mxu0 0.0
    %2049 = vmatpush2.msra.mxu0 0.0
    %2050 = vmatprep.subr.mxu0 0.0
    %2051 = vmatpush2.msra.mxu0 0.0
    %2052 = vmatprep.subr.mxu0 0.0
    %2053 = vmatpush2.msra.mxu0 0.0
    %2054 = vmatprep.subr.mxu0 0.0
    %2055 = vmatpush2.msra.mxu0 0.0
    %2056 = vmatprep.subr.mxu0 0.0
    %2057 = vmatpush2.msra.mxu0 0.0
    %2058 = vmatprep.subr.mxu0 0.0
    %2059 = vmatpush2.msra.mxu0 0.0
    %2060 = vmatprep.subr.mxu0 0.0
    %2061 = vmatpush2.msra.mxu0 0.0
    %2062 = vmatprep.subr.mxu0 0.0
    %2063 = vmatpush2.msra.mxu0 0.0
    %2064 = vmatprep.subr.mxu0 0.0
    %2065 = vmatpush2.msra.mxu0 0.0
    %2066 = vmatprep.subr.mxu0 0.0
    %2067 = vmatpush2.msra.mxu0 0.0
    %2068 = vmatprep.subr.mxu0 0.0
    %2069 = vmatpush2.msra.mxu0 0.0
    %2070 = vmatprep.subr.mxu0 0.0
    %2071 = vmatpush2.msra.mxu0 0.0
    %2072 = vmatprep.subr.mxu0 0.0
    %2073 = vmatpush2.msra.mxu0 0.0
    %2074 = vmatprep.subr.mxu0 0.0
    %2075 = vmatpush2.msra.mxu0 0.0
    %2076 = vmatprep.subr.mxu0 0.0
    %2077 = vmatpush2.msra.mxu0 0.0
    %2078 = vmatprep.subr.mxu0 0.0
    %2079 = vmatpush2.msra.mxu0 0.0
    %2080 = vmatprep.mubr.f32.mxu0 0.0
    %2081 = vmatmul.mubr.f32.gmra.mxu0 %v1999
    %v2082 = vpop.f32.mrf.mxu0
    %v2083 = vadd.f32 %v1970, %v2082
    %v2084 = vpop.f32.mrf.mxu0
    %2085 = vmatprep.mubr.f32.mxu0 0.0
    %2086 = vmatmul.mubr.f32.gmra.mxu0 %v2002
    %v2087 = vpop.f32.mrf.mxu0
    %v2088 = vadd.f32 %v1975, %v2087
    %v2089 = vpop.f32.mrf.mxu0
    %2090 = vmatprep.mubr.f32.mxu0 0.0
    %2091 = vmatmul.mubr.f32.gmra.mxu0 %v2005
    %v2092 = vpop.f32.mrf.mxu0
    %v2093 = vadd.f32 %v1980, %v2092
    %v2094 = vpop.f32.mrf.mxu0
    %2095 = vmatprep.mubr.f32.mxu0 0.0
    %2096 = vmatmul.mubr.f32.gmra.mxu0 %v2008
    %v2097 = vpop.f32.mrf.mxu0
    %v2098 = vadd.f32 %v1985, %v2097
    %v2099 = vpop.f32.mrf.mxu0
    %2100 = vmatprep.mubr.f32.mxu0 0.0
    %2101 = vmatmul.mubr.f32.gmra.mxu0 %v2011
    %v2102 = vpop.f32.mrf.mxu0
    %v2103 = vadd.f32 %v1990, %v2102
    %v2104 = vpop.f32.mrf.mxu0
    %2105 = vmatprep.mubr.f32.mxu0 0.0
    %2106 = vmatmul.mubr.f32.gmra.mxu0 %v2014
    %v2107 = vpop.f32.mrf.mxu0
    %v2108 = vadd.f32 %v1995, %v2107
    %v2109 = vpop.f32.mrf.mxu0
    %2110 = vdwg.mxu0
    %2111 = vrot.lane.b32.xlu0 %v1725, 64
    %v2112 = vpop.permute.xlu0 %2111
    %v2113 = vsel %vm905, %v2112, 0
    %2115 = vmatprep.subr.mxu0 0.0
    %2116 = vmatpush1.msra.mxu0 0.0
    %2117 = vmatprep.subr.mxu0 0.0
    %2118 = vmatpush1.msra.mxu0 0.0
    %2119 = vmatprep.subr.mxu0 0.0
    %2120 = vmatpush1.msra.mxu0 0.0
    %2121 = vmatprep.subr.mxu0 0.0
    %2122 = vmatpush1.msra.mxu0 0.0
    %2123 = vmatprep.subr.mxu0 0.0
    %2124 = vmatpush1.msra.mxu0 0.0
    %2125 = vmatprep.subr.mxu0 0.0
    %2126 = vmatpush1.msra.mxu0 0.0
    %2127 = vmatprep.subr.mxu0 0.0
    %2128 = vmatpush1.msra.mxu0 0.0
    %2129 = vmatprep.subr.mxu0 0.0
    %2130 = vmatpush1.msra.mxu0 0.0
    %2131 = vmatprep.subr.mxu0 0.0
    %2132 = vmatpush1.msra.mxu0 0.0
    %2133 = vmatprep.subr.mxu0 0.0
    %2134 = vmatpush1.msra.mxu0 0.0
    %2135 = vmatprep.subr.mxu0 0.0
    %2136 = vmatpush1.msra.mxu0 0.0
    %2137 = vmatprep.subr.mxu0 0.0
    %2138 = vmatpush1.msra.mxu0 0.0
    %2139 = vmatprep.subr.mxu0 0.0
    %2140 = vmatpush1.msra.mxu0 %v878
    %2141 = vmatprep.subr.mxu0 0.0
    %2142 = vmatpush1.msra.mxu0 %v877
    %2143 = vmatprep.subr.mxu0 0.0
    %2144 = vmatpush1.msra.mxu0 %v876
    %2145 = vmatprep.subr.mxu0 0.0
    %2146 = vmatpush1.msra.mxu0 %v875
    %2147 = vmatprep.subr.mxu0 0.0
    %2148 = vmatpush2.msra.mxu0 0.0
    %2149 = vmatprep.subr.mxu0 0.0
    %2150 = vmatpush2.msra.mxu0 0.0
    %2151 = vmatprep.subr.mxu0 0.0
    %2152 = vmatpush2.msra.mxu0 0.0
    %2153 = vmatprep.subr.mxu0 0.0
    %2154 = vmatpush2.msra.mxu0 0.0
    %2155 = vmatprep.subr.mxu0 0.0
    %2156 = vmatpush2.msra.mxu0 0.0
    %2157 = vmatprep.subr.mxu0 0.0
    %2158 = vmatpush2.msra.mxu0 0.0
    %2159 = vmatprep.subr.mxu0 0.0
    %2160 = vmatpush2.msra.mxu0 0.0
    %2161 = vmatprep.subr.mxu0 0.0
    %2162 = vmatpush2.msra.mxu0 0.0
    %2163 = vmatprep.subr.mxu0 0.0
    %2164 = vmatpush2.msra.mxu0 0.0
    %2165 = vmatprep.subr.mxu0 0.0
    %2166 = vmatpush2.msra.mxu0 0.0
    %2167 = vmatprep.subr.mxu0 0.0
    %2168 = vmatpush2.msra.mxu0 0.0
    %2169 = vmatprep.subr.mxu0 0.0
    %2170 = vmatpush2.msra.mxu0 0.0
    %2171 = vmatprep.subr.mxu0 0.0
    %2172 = vmatpush2.msra.mxu0 0.0
    %2173 = vmatprep.subr.mxu0 0.0
    %2174 = vmatpush2.msra.mxu0 0.0
    %2175 = vmatprep.subr.mxu0 0.0
    %2176 = vmatpush2.msra.mxu0 0.0
    %2177 = vmatprep.subr.mxu0 0.0
    %2178 = vmatpush2.msra.mxu0 0.0
    %2179 = vmatprep.mubr.f32.mxu0 0.0
    %2180 = vmatmul.mubr.f32.gmra.mxu0 %v2113
    %v2181 = vpop.f32.mrf.mxu0
    %v2182 = vadd.f32 0.0, %v2181
    %v2183 = vpop.f32.mrf.mxu0
    %2184 = vdwg.mxu0
    %v2185 = vld [vmem:[%s1367] sm:$0xff]
    %v2186 = vld [vmem:[%s1367 + $0x8] sm:$0xff]
    %v2187 = vld [vmem:[%s1367 + $0x10] sm:$0xff]
    %v2188 = vld [vmem:[%s1367 + $0x18] sm:$0xff]
    %v2189 = vld [vmem:[%s1367 + $0x20] sm:$0xff]
    %v2190 = vld [vmem:[%s1367 + $0x28] sm:$0xff]
    %v2192 = vsel %vm1066, %v2185, 0
    %v2195 = vsel %vm1066, %v2186, 0
    %v2198 = vsel %vm1066, %v2187, 0
    %v2201 = vsel %vm1066, %v2188, 0
    %v2204 = vsel %vm1066, %v2189, 0
    %v2207 = vsel %vm1066, %v2190, 0
    %2209 = vmatprep.subr.mxu0 0.0
    %2210 = vmatpush1.msra.mxu0 0.0
    %2211 = vmatprep.subr.mxu0 0.0
    %2212 = vmatpush1.msra.mxu0 0.0
    %2213 = vmatprep.subr.mxu0 0.0
    %2214 = vmatpush1.msra.mxu0 0.0
    %2215 = vmatprep.subr.mxu0 0.0
    %2216 = vmatpush1.msra.mxu0 0.0
    %2217 = vmatprep.subr.mxu0 0.0
    %2218 = vmatpush1.msra.mxu0 0.0
    %2219 = vmatprep.subr.mxu0 0.0
    %2220 = vmatpush1.msra.mxu0 0.0
    %2221 = vmatprep.subr.mxu0 0.0
    %2222 = vmatpush1.msra.mxu0 0.0
    %2223 = vmatprep.subr.mxu0 0.0
    %2224 = vmatpush1.msra.mxu0 0.0
    %2225 = vmatprep.subr.mxu0 0.0
    %2226 = vmatpush1.msra.mxu0 0.0
    %2227 = vmatprep.subr.mxu0 0.0
    %2228 = vmatpush1.msra.mxu0 0.0
    %2229 = vmatprep.subr.mxu0 0.0
    %2230 = vmatpush1.msra.mxu0 0.0
    %2231 = vmatprep.subr.mxu0 0.0
    %2232 = vmatpush1.msra.mxu0 0.0
    %2233 = vmatprep.subr.mxu0 0.0
    %2234 = vmatpush1.msra.mxu0 0.0
    %2235 = vmatprep.subr.mxu0 0.0
    %2236 = vmatpush1.msra.mxu0 0.0
    %2237 = vmatprep.subr.mxu0 0.0
    %2238 = vmatpush1.msra.mxu0 0.0
    %2239 = vmatprep.subr.mxu0 0.0
    %2240 = vmatpush1.msra.mxu0 %v2182
    %2241 = vmatprep.subr.mxu0 0.0
    %2242 = vmatpush2.msra.mxu0 0.0
    %2243 = vmatprep.subr.mxu0 0.0
    %2244 = vmatpush2.msra.mxu0 0.0
    %2245 = vmatprep.subr.mxu0 0.0
    %2246 = vmatpush2.msra.mxu0 0.0
    %2247 = vmatprep.subr.mxu0 0.0
    %2248 = vmatpush2.msra.mxu0 0.0
    %2249 = vmatprep.subr.mxu0 0.0
    %2250 = vmatpush2.msra.mxu0 0.0
    %2251 = vmatprep.subr.mxu0 0.0
    %2252 = vmatpush2.msra.mxu0 0.0
    %2253 = vmatprep.subr.mxu0 0.0
    %2254 = vmatpush2.msra.mxu0 0.0
    %2255 = vmatprep.subr.mxu0 0.0
    %2256 = vmatpush2.msra.mxu0 0.0
    %2257 = vmatprep.subr.mxu0 0.0
    %2258 = vmatpush2.msra.mxu0 0.0
    %2259 = vmatprep.subr.mxu0 0.0
    %2260 = vmatpush2.msra.mxu0 0.0
    %2261 = vmatprep.subr.mxu0 0.0
    %2262 = vmatpush2.msra.mxu0 0.0
    %2263 = vmatprep.subr.mxu0 0.0
    %2264 = vmatpush2.msra.mxu0 0.0
    %2265 = vmatprep.subr.mxu0 0.0
    %2266 = vmatpush2.msra.mxu0 0.0
    %2267 = vmatprep.subr.mxu0 0.0
    %2268 = vmatpush2.msra.mxu0 0.0
    %2269 = vmatprep.subr.mxu0 0.0
    %2270 = vmatpush2.msra.mxu0 0.0
    %2271 = vmatprep.subr.mxu0 0.0
    %2272 = vmatpush2.msra.mxu0 0.0
    %2273 = vmatprep.mubr.f32.mxu0 0.0
    %2274 = vmatmul.mubr.f32.gmra.mxu0 %v2192
    %v2275 = vpop.f32.mrf.mxu0
    %v2276 = vadd.f32 0.0, %v2275
    %v2277 = vpop.f32.mrf.mxu0
    %2278 = vmatprep.mubr.f32.mxu0 0.0
    %2279 = vmatmul.mubr.f32.gmra.mxu0 %v2195
    %v2280 = vpop.f32.mrf.mxu0
    %v2281 = vadd.f32 0.0, %v2280
    %v2282 = vpop.f32.mrf.mxu0
    %2283 = vmatprep.mubr.f32.mxu0 0.0
    %2284 = vmatmul.mubr.f32.gmra.mxu0 %v2198
    %v2285 = vpop.f32.mrf.mxu0
    %v2286 = vadd.f32 0.0, %v2285
    %v2287 = vpop.f32.mrf.mxu0
    %2288 = vmatprep.mubr.f32.mxu0 0.0
    %2289 = vmatmul.mubr.f32.gmra.mxu0 %v2201
    %v2290 = vpop.f32.mrf.mxu0
    %v2291 = vadd.f32 0.0, %v2290
    %v2292 = vpop.f32.mrf.mxu0
    %2293 = vmatprep.mubr.f32.mxu0 0.0
    %2294 = vmatmul.mubr.f32.gmra.mxu0 %v2204
    %v2295 = vpop.f32.mrf.mxu0
    %v2296 = vadd.f32 0.0, %v2295
    %v2297 = vpop.f32.mrf.mxu0
    %2298 = vmatprep.mubr.f32.mxu0 0.0
    %2299 = vmatmul.mubr.f32.gmra.mxu0 %v2207
    %v2300 = vpop.f32.mrf.mxu0
    %v2301 = vadd.f32 0.0, %v2300
    %v2302 = vpop.f32.mrf.mxu0
    %2303 = vdwg.mxu0
    %v2304 = vadd.f32 %v2083, %v2276
    %v2305 = vadd.f32 %v2088, %v2281
    %v2306 = vadd.f32 %v2093, %v2286
    %v2307 = vadd.f32 %v2098, %v2291
    %v2308 = vadd.f32 %v2103, %v2296
    %v2309 = vadd.f32 %v2108, %v2301
    %2310 = vrot.lane.b32.xlu0 %v1725, 32
    %v2311 = vpop.permute.xlu0 %2310
    %v2312 = vsel %vm905, %v2311, 0
    %2314 = vmatprep.subr.mxu0 0.0
    %2315 = vmatpush1.msra.mxu0 0.0
    %2316 = vmatprep.subr.mxu0 0.0
    %2317 = vmatpush1.msra.mxu0 0.0
    %2318 = vmatprep.subr.mxu0 0.0
    %2319 = vmatpush1.msra.mxu0 0.0
    %2320 = vmatprep.subr.mxu0 0.0
    %2321 = vmatpush1.msra.mxu0 0.0
    %2322 = vmatprep.subr.mxu0 0.0
    %2323 = vmatpush1.msra.mxu0 0.0
    %2324 = vmatprep.subr.mxu0 0.0
    %2325 = vmatpush1.msra.mxu0 0.0
    %2326 = vmatprep.subr.mxu0 0.0
    %2327 = vmatpush1.msra.mxu0 0.0
    %2328 = vmatprep.subr.mxu0 0.0
    %2329 = vmatpush1.msra.mxu0 0.0
    %2330 = vmatprep.subr.mxu0 0.0
    %2331 = vmatpush1.msra.mxu0 0.0
    %2332 = vmatprep.subr.mxu0 0.0
    %2333 = vmatpush1.msra.mxu0 0.0
    %2334 = vmatprep.subr.mxu0 0.0
    %2335 = vmatpush1.msra.mxu0 0.0
    %2336 = vmatprep.subr.mxu0 0.0
    %2337 = vmatpush1.msra.mxu0 0.0
    %2338 = vmatprep.subr.mxu0 0.0
    %2339 = vmatpush1.msra.mxu0 %v878
    %2340 = vmatprep.subr.mxu0 0.0
    %2341 = vmatpush1.msra.mxu0 %v877
    %2342 = vmatprep.subr.mxu0 0.0
    %2343 = vmatpush1.msra.mxu0 %v876
    %2344 = vmatprep.subr.mxu0 0.0
    %2345 = vmatpush1.msra.mxu0 %v875
    %2346 = vmatprep.subr.mxu0 0.0
    %2347 = vmatpush2.msra.mxu0 0.0
    %2348 = vmatprep.subr.mxu0 0.0
    %2349 = vmatpush2.msra.mxu0 0.0
    %2350 = vmatprep.subr.mxu0 0.0
    %2351 = vmatpush2.msra.mxu0 0.0
    %2352 = vmatprep.subr.mxu0 0.0
    %2353 = vmatpush2.msra.mxu0 0.0
    %2354 = vmatprep.subr.mxu0 0.0
    %2355 = vmatpush2.msra.mxu0 0.0
    %2356 = vmatprep.subr.mxu0 0.0
    %2357 = vmatpush2.msra.mxu0 0.0
    %2358 = vmatprep.subr.mxu0 0.0
    %2359 = vmatpush2.msra.mxu0 0.0
    %2360 = vmatprep.subr.mxu0 0.0
    %2361 = vmatpush2.msra.mxu0 0.0
    %2362 = vmatprep.subr.mxu0 0.0
    %2363 = vmatpush2.msra.mxu0 0.0
    %2364 = vmatprep.subr.mxu0 0.0
    %2365 = vmatpush2.msra.mxu0 0.0
    %2366 = vmatprep.subr.mxu0 0.0
    %2367 = vmatpush2.msra.mxu0 0.0
    %2368 = vmatprep.subr.mxu0 0.0
    %2369 = vmatpush2.msra.mxu0 0.0
    %2370 = vmatprep.subr.mxu0 0.0
    %2371 = vmatpush2.msra.mxu0 0.0
    %2372 = vmatprep.subr.mxu0 0.0
    %2373 = vmatpush2.msra.mxu0 0.0
    %2374 = vmatprep.subr.mxu0 0.0
    %2375 = vmatpush2.msra.mxu0 0.0
    %2376 = vmatprep.subr.mxu0 0.0
    %2377 = vmatpush2.msra.mxu0 0.0
    %2378 = vmatprep.mubr.f32.mxu0 0.0
    %2379 = vmatmul.mubr.f32.gmra.mxu0 %v2312
    %v2380 = vpop.f32.mrf.mxu0
    %v2381 = vadd.f32 0.0, %v2380
    %v2382 = vpop.f32.mrf.mxu0
    %2383 = vdwg.mxu0
    %v2384 = vld [vmem:[%s1567] sm:$0xff]
    %v2385 = vld [vmem:[%s1567 + $0x8] sm:$0xff]
    %v2386 = vld [vmem:[%s1567 + $0x10] sm:$0xff]
    %v2387 = vld [vmem:[%s1567 + $0x18] sm:$0xff]
    %v2388 = vld [vmem:[%s1567 + $0x20] sm:$0xff]
    %v2389 = vld [vmem:[%s1567 + $0x28] sm:$0xff]
    %v2391 = vsel %vm1066, %v2384, 0
    %v2394 = vsel %vm1066, %v2385, 0
    %v2397 = vsel %vm1066, %v2386, 0
    %v2400 = vsel %vm1066, %v2387, 0
    %v2403 = vsel %vm1066, %v2388, 0
    %v2406 = vsel %vm1066, %v2389, 0
    %2408 = vmatprep.subr.mxu0 0.0
    %2409 = vmatpush1.msra.mxu0 0.0
    %2410 = vmatprep.subr.mxu0 0.0
    %2411 = vmatpush1.msra.mxu0 0.0
    %2412 = vmatprep.subr.mxu0 0.0
    %2413 = vmatpush1.msra.mxu0 0.0
    %2414 = vmatprep.subr.mxu0 0.0
    %2415 = vmatpush1.msra.mxu0 0.0
    %2416 = vmatprep.subr.mxu0 0.0
    %2417 = vmatpush1.msra.mxu0 0.0
    %2418 = vmatprep.subr.mxu0 0.0
    %2419 = vmatpush1.msra.mxu0 0.0
    %2420 = vmatprep.subr.mxu0 0.0
    %2421 = vmatpush1.msra.mxu0 0.0
    %2422 = vmatprep.subr.mxu0 0.0
    %2423 = vmatpush1.msra.mxu0 0.0
    %2424 = vmatprep.subr.mxu0 0.0
    %2425 = vmatpush1.msra.mxu0 0.0
    %2426 = vmatprep.subr.mxu0 0.0
    %2427 = vmatpush1.msra.mxu0 0.0
    %2428 = vmatprep.subr.mxu0 0.0
    %2429 = vmatpush1.msra.mxu0 0.0
    %2430 = vmatprep.subr.mxu0 0.0
    %2431 = vmatpush1.msra.mxu0 0.0
    %2432 = vmatprep.subr.mxu0 0.0
    %2433 = vmatpush1.msra.mxu0 0.0
    %2434 = vmatprep.subr.mxu0 0.0
    %2435 = vmatpush1.msra.mxu0 0.0
    %2436 = vmatprep.subr.mxu0 0.0
    %2437 = vmatpush1.msra.mxu0 0.0
    %2438 = vmatprep.subr.mxu0 0.0
    %2439 = vmatpush1.msra.mxu0 %v2381
    %2440 = vmatprep.subr.mxu0 0.0
    %2441 = vmatpush2.msra.mxu0 0.0
    %2442 = vmatprep.subr.mxu0 0.0
    %2443 = vmatpush2.msra.mxu0 0.0
    %2444 = vmatprep.subr.mxu0 0.0
    %2445 = vmatpush2.msra.mxu0 0.0
    %2446 = vmatprep.subr.mxu0 0.0
    %2447 = vmatpush2.msra.mxu0 0.0
    %2448 = vmatprep.subr.mxu0 0.0
    %2449 = vmatpush2.msra.mxu0 0.0
    %2450 = vmatprep.subr.mxu0 0.0
    %2451 = vmatpush2.msra.mxu0 0.0
    %2452 = vmatprep.subr.mxu0 0.0
    %2453 = vmatpush2.msra.mxu0 0.0
    %2454 = vmatprep.subr.mxu0 0.0
    %2455 = vmatpush2.msra.mxu0 0.0
    %2456 = vmatprep.subr.mxu0 0.0
    %2457 = vmatpush2.msra.mxu0 0.0
    %2458 = vmatprep.subr.mxu0 0.0
    %2459 = vmatpush2.msra.mxu0 0.0
    %2460 = vmatprep.subr.mxu0 0.0
    %2461 = vmatpush2.msra.mxu0 0.0
    %2462 = vmatprep.subr.mxu0 0.0
    %2463 = vmatpush2.msra.mxu0 0.0
    %2464 = vmatprep.subr.mxu0 0.0
    %2465 = vmatpush2.msra.mxu0 0.0
    %2466 = vmatprep.subr.mxu0 0.0
    %2467 = vmatpush2.msra.mxu0 0.0
    %2468 = vmatprep.subr.mxu0 0.0
    %2469 = vmatpush2.msra.mxu0 0.0
    %2470 = vmatprep.subr.mxu0 0.0
    %2471 = vmatpush2.msra.mxu0 0.0
    %2472 = vmatprep.mubr.f32.mxu0 0.0
    %2473 = vmatmul.mubr.f32.gmra.mxu0 %v2391
    %v2474 = vpop.f32.mrf.mxu0
    %v2475 = vadd.f32 0.0, %v2474
    %v2476 = vpop.f32.mrf.mxu0
    %2477 = vmatprep.mubr.f32.mxu0 0.0
    %2478 = vmatmul.mubr.f32.gmra.mxu0 %v2394
    %v2479 = vpop.f32.mrf.mxu0
    %v2480 = vadd.f32 0.0, %v2479
    %v2481 = vpop.f32.mrf.mxu0
    %2482 = vmatprep.mubr.f32.mxu0 0.0
    %2483 = vmatmul.mubr.f32.gmra.mxu0 %v2397
    %v2484 = vpop.f32.mrf.mxu0
    %v2485 = vadd.f32 0.0, %v2484
    %v2486 = vpop.f32.mrf.mxu0
    %2487 = vmatprep.mubr.f32.mxu0 0.0
    %2488 = vmatmul.mubr.f32.gmra.mxu0 %v2400
    %v2489 = vpop.f32.mrf.mxu0
    %v2490 = vadd.f32 0.0, %v2489
    %v2491 = vpop.f32.mrf.mxu0
    %2492 = vmatprep.mubr.f32.mxu0 0.0
    %2493 = vmatmul.mubr.f32.gmra.mxu0 %v2403
    %v2494 = vpop.f32.mrf.mxu0
    %v2495 = vadd.f32 0.0, %v2494
    %v2496 = vpop.f32.mrf.mxu0
    %2497 = vmatprep.mubr.f32.mxu0 0.0
    %2498 = vmatmul.mubr.f32.gmra.mxu0 %v2406
    %v2499 = vpop.f32.mrf.mxu0
    %v2500 = vadd.f32 0.0, %v2499
    %v2501 = vpop.f32.mrf.mxu0
    %2502 = vdwg.mxu0
    %v2503 = vadd.f32 %v2304, %v2475
    %v2504 = vadd.f32 %v2305, %v2480
    %v2505 = vadd.f32 %v2306, %v2485
    %v2506 = vadd.f32 %v2307, %v2490
    %v2507 = vadd.f32 %v2308, %v2495
    %v2508 = vadd.f32 %v2309, %v2500
    %s2509 = scalar_lea.vmem [#allocation2], 48
    %2510 = vst.msk [vmem:[%s2509] sm:$0xff] %vm1693, %v2503
    %2511 = vst.msk [vmem:[%s2509 + $0x8] sm:$0xff] %vm1693, %v2504
    %2512 = vst.msk [vmem:[%s2509 + $0x10] sm:$0xff] %vm1693, %v2505
    %2513 = vst.msk [vmem:[%s2509 + $0x18] sm:$0xff] %vm1693, %v2506
    %2514 = vst.msk [vmem:[%s2509 + $0x20] sm:$0xff] %vm1693, %v2507
    %2515 = vst.msk [vmem:[%s2509 + $0x28] sm:$0xff] %vm1693, %v2508
    // Predicated region
    $region46: #{mask_decoder_forward.3} parent=1 // pred_check
      _
    $region47: #{mask_decoder_forward.3} parent=1 // pred_check_branch
      %2517 = sbr.rel (0) target = $region49
    $region48: #{mask_decoder_forward.3} parent=1 // pred_region
      %s2519 = ssub.s32 1536, 1536
      %2520 = vsyncadd [#allocation3], %s2519
      %s2521 = sshll.u32 [#allocation2], 4
      %s2522 = int_to_ptr.vmem [resolvable:$true] %s2521
      %2527 = dma.vmem_to_hbm [thread:$0]  %s2522, 1536, %s11, [#allocation3], 128, 128, 8
    $region49: #{mask_decoder_forward.3} parent=1 // pred_fallthru
      _
    // Predicated region
    $region50: #{mask_decoder_forward.3} parent=1 // pred_check
      _
    $region51: #{mask_decoder_forward.3} parent=1 // pred_check_branch
      %2529 = sbr.rel (0) target = $region53
    $region52: #{mask_decoder_forward.3} parent=1 // pred_region
      %2530 = dma.done [#allocation3], 1536
    $region53: #{mask_decoder_forward.3} parent=1 // pred_fallthru
      _
    %2531 = vsyncpa [#allocation3], 1

</llo_original>
